<compile_context>
chip_gen: v6e
topology: v6e:2x2x1
jax: 0.10.0
libtpu: 0.0.40
codegen_flags: <defaults>
</compile_context>

<pallas_src>
import functools

import jax
import jax.numpy as jnp
from jax import lax
from jax.experimental import pallas as pl
from jax.experimental.pallas import tpu as pltpu

_EPS = 1e-5
# W halo of the VMEM scratch holding the conv1 activation.  8 keeps the centre
# store sublane-aligned; the depthwise taps then read at offsets 7/8/9.
_WPAD = 8


def _gelayer_s1_kernel(xp_ref, w1_ref, b1_ref, w2_ref, b2_ref, w3_ref, b3_ref,
                       o_ref, mid_ref, *, h, w):
    """Fused GELayerS1 forward for one batch element.

    xp_ref : (1, H+2, W+2, C)        input, zero-padded by 1 spatially (NHWC)
    w1_ref : (9, C, C)               conv1 3x3 weights, BN scale folded in
    b1_ref : (1, C)                  conv1 folded BN bias
    w2_ref : (9, C, C*r)             depthwise conv expanded to block-diagonal
                                     dense weights, BN scale folded in
    b2_ref : (1, C*r)
    w3_ref : (C*r, C)                1x1 conv weights, BN scale folded in
    b3_ref : (1, C)
    o_ref  : (1, H, W, C)            layer output
    mid_ref: (H+2, W+2*_WPAD, C)     VMEM scratch: conv1 activation + zero halo
    """
    cin = xp_ref.shape[-1]
    cout = o_ref.shape[-1]
    hw = h * w

    def conv3x3(tap, w_ref, b_ref, relu):
        """9 accumulating MXU dots with M = H*W; tap(kh, kw) -> (H*W, Cin)."""
        nco = w_ref.shape[-1]
        acc = jnp.zeros((hw, nco), jnp.float32)
        for kh in range(3):
            for kw in range(3):
                acc = acc + jnp.dot(tap(kh, kw), w_ref[kh * 3 + kw],
                                    preferred_element_type=jnp.float32)
        y = acc + b_ref[...]
        return jnp.maximum(y, 0.0) if relu else y

    # ---- conv1: 3x3, C -> C, folded BN, ReLU --------------------------------
    def tap_x(kh, kw):
        return xp_ref[0, kh:kh + h, kw:kw + w, :].reshape(hw, cin)

    y1 = conv3x3(tap_x, w1_ref, b1_ref, relu=True)

    # Stash conv1 output in the zero-haloed VMEM scratch (aligned centre store).
    mid_ref[...] = jnp.zeros(mid_ref.shape, jnp.float32)
    mid_ref[1:h + 1, _WPAD:_WPAD + w, :] = y1.reshape(h, w, cin)

    # ---- dwconv: 3x3 depthwise (groups=C) -> C*r, folded BN, no ReLU --------
    def tap_mid(kh, kw):
        c0 = _WPAD - 1 + kw
        return mid_ref[kh:kh + h, c0:c0 + w, :].reshape(hw, cin)

    y2 = conv3x3(tap_mid, w2_ref, b2_ref, relu=False)

    # ---- conv2: 1x1, C*r -> C, folded BN; residual add; ReLU ----------------
    y3 = jnp.dot(y2, w3_ref[...], preferred_element_type=jnp.float32) + b3_ref[...]
    x_res = xp_ref[0, 1:h + 1, 1:w + 1, :].reshape(hw, cin).astype(jnp.float32)
    out = jnp.maximum(y3 + x_res, 0.0)
    o_ref[0] = out.reshape(h, w, cout).astype(o_ref.dtype)


def gelayer_s1(x_nchw, params):
    """GELayerS1 forward.  x_nchw: (N, C, H, W); params: output of fold_params."""
    w1, b1, w2, b2, w3, b3 = params
    x = jnp.transpose(x_nchw, (0, 2, 3, 1))                 # NCHW -> NHWC
    n, h, w, cin = x.shape
    cmid = w2.shape[-1]
    cout = w3.shape[-1]
    assert cout == cin, "GELayerS1 residual needs out_channels == in_channels"
    assert h % 8 == 0 and w % 8 == 0, "this wrapper assumes H, W multiples of 8"

    xp = jnp.pad(x, ((0, 0), (1, 1), (1, 1), (0, 0)))       # conv padding = 1
    kernel = functools.partial(_gelayer_s1_kernel, h=h, w=w)
    out = pl.pallas_call(
        kernel,
        out_shape=jax.ShapeDtypeStruct((n, h, w, cout), x.dtype),
        grid_spec=pltpu.PrefetchScalarGridSpec(
            num_scalar_prefetch=0,
            grid=(n,),
            in_specs=[
                pl.BlockSpec((1, h + 2, w + 2, cin), lambda b: (b, 0, 0, 0)),
                pl.BlockSpec((9, cin, cin), lambda b: (0, 0, 0)),
                pl.BlockSpec((1, cin), lambda b: (0, 0)),
                pl.BlockSpec((9, cin, cmid), lambda b: (0, 0, 0)),
                pl.BlockSpec((1, cmid), lambda b: (0, 0)),
                pl.BlockSpec((cmid, cout), lambda b: (0, 0)),
                pl.BlockSpec((1, cout), lambda b: (0, 0)),
            ],
            out_specs=pl.BlockSpec((1, h, w, cout), lambda b: (b, 0, 0, 0)),
            scratch_shapes=[
                pltpu.VMEM((h + 2, w + 2 * _WPAD, cin), jnp.float32)],
        ),
        compiler_params=pltpu.CompilerParams(
            dimension_semantics=("parallel",)),
    )(xp, w1, b1, w2, b2, w3, b3)
    return jnp.transpose(out, (0, 3, 1, 2))                 # NHWC -> NCHW


# ---------------------------- parameters -------------------------------------
def init_params(key, in_channels, exp_ratio=6):
    """Random PyTorch-equivalent parameters (conv weights + BN running stats)."""
    mid = in_channels * exp_ratio
    k = jax.random.split(key, 6)

    def bn_params(kk, c):
        kg, kb, km, kv = jax.random.split(kk, 4)
        return (1.0 + 0.1 * jax.random.normal(kg, (c,), jnp.float32),    # gamma
                0.1 * jax.random.normal(kb, (c,), jnp.float32),          # beta
                0.1 * jax.random.normal(km, (c,), jnp.float32),          # mean
                jnp.abs(jax.random.normal(kv, (c,), jnp.float32)) + 0.5)  # var

    w1 = jax.random.normal(k[0], (3, 3, in_channels, in_channels),
                           jnp.float32) / jnp.sqrt(9.0 * in_channels)
    # Depthwise weights stored per group: (kh, kw, group, exp_ratio).
    wdw = jax.random.normal(k[1], (3, 3, in_channels, exp_ratio),
                            jnp.float32) / 3.0
    w3 = jax.random.normal(k[2], (mid, in_channels),
                           jnp.float32) / jnp.sqrt(float(mid))
    return dict(w1=w1, bn1=bn_params(k[3], in_channels),
                wdw=wdw, bn2=bn_params(k[4], mid),
                w3=w3, bn3=bn_params(k[5], in_channels))


def fold_params(raw):
    """Fold eval-mode BN into conv weights/bias; expand the grouped depthwise
    conv into a block-diagonal dense weight; reshape to kernel layout."""
    def fold(bn):
        gamma, beta, mean, var = bn
        s = gamma / jnp.sqrt(var + _EPS)
        return s, beta - mean * s

    w1, wdw, w3 = raw["w1"], raw["wdw"], raw["w3"]
    cin = w1.shape[2]
    r = wdw.shape[-1]
    mid = cin * r
    cout = w3.shape[-1]

    s1, b1 = fold(raw["bn1"])
    w1f = (w1 * s1[None, None, None, :]).reshape(9, cin, cin)

    s2, b2 = fold(raw["bn2"])
    eye = jnp.eye(cin, dtype=wdw.dtype)
    wdw_dense = (wdw[:, :, :, None, :]            # (3,3,ci,1,r)
                 * eye[None, None, :, :, None]    # (1,1,ci,cg,1)
                 ).reshape(3, 3, cin, mid)        # dense HWIO, block-diagonal
    w2f = (wdw_dense * s2[None, None, None, :]).reshape(9, cin, mid)

    s3, b3 = fold(raw["bn3"])
    w3f = w3 * s3[None, :]

    return (w1f, b1.reshape(1, cin), w2f, b2.reshape(1, mid),
            w3f, b3.reshape(1, cout))


# ---------------------------- pure-JAX reference -----------------------------
def gelayer_s1_ref(x_nchw, raw):
    """Eval-mode reference using XLA convolutions (NCHW in/out)."""
    x = jnp.transpose(x_nchw, (0, 2, 3, 1))
    cin = x.shape[-1]
    hi = lax.Precision.HIGHEST

    def bn(y, p):
        gamma, beta, mean, var = p
        return (y - mean) * (gamma / jnp.sqrt(var + _EPS)) + beta

    f = lax.conv_general_dilated(
        x, raw["w1"], (1, 1), ((1, 1), (1, 1)),
        dimension_numbers=("NHWC", "HWIO", "NHWC"), precision=hi)
    f = jnp.maximum(bn(f, raw["bn1"]), 0.0)

    r = raw["wdw"].shape[-1]
    wdw_hwio = raw["wdw"].reshape(3, 3, 1, cin * r)     # one input ch per group
    f = lax.conv_general_dilated(
        f, wdw_hwio, (1, 1), ((1, 1), (1, 1)),
        dimension_numbers=("NHWC", "HWIO", "NHWC"),
        feature_group_count=cin, precision=hi)
    f = bn(f, raw["bn2"])

    f = lax.conv_general_dilated(
        f, raw["w3"][None, None], (1, 1), ((0, 0), (0, 0)),
        dimension_numbers=("NHWC", "HWIO", "NHWC"), precision=hi)
    f = bn(f, raw["bn3"])

    f = jnp.maximum(f + x, 0.0)
    return jnp.transpose(f, (0, 3, 1, 2))


if __name__ == "__main__":
    key = jax.random.PRNGKey(0)
    kx, kp = jax.random.split(key)
    N, C, H, W = 2, 16, 16, 16            # NCHW, exp_ratio=6 -> mid channels 96
    x = jax.random.normal(kx, (N, C, H, W), jnp.float32)

    raw = init_params(kp, C, exp_ratio=6)
    params = fold_params(raw)

    out = jax.jit(gelayer_s1)(x, params)
    out = jax.block_until_ready(out)
    assert out.shape == (N, C, H, W), out.shape

    ref = gelayer_s1_ref(x, raw)
    max_err = float(jnp.max(jnp.abs(out - ref)))
    # Tolerance covers TPU default-precision MXU matmuls vs the HIGHEST-precision
    # XLA reference; any logic error would be orders of magnitude larger.
    assert max_err < 5e-2, f"mismatch vs reference: max abs err {max_err}"
    print("KERNEL_OK")
</pallas_src>

<mosaic_0001>
module attributes {stable_mosaic.version = 11 : i64} {
  func.func @_gelayer_s1_kernel(%arg0: i32, %arg1: memref<1x18x18x16xf32, #tpu.memory_space<vmem>>, %arg2: memref<9x16x16xf32, #tpu.memory_space<vmem>>, %arg3: memref<1x16xf32, #tpu.memory_space<vmem>>, %arg4: memref<9x16x96xf32, #tpu.memory_space<vmem>>, %arg5: memref<1x96xf32, #tpu.memory_space<vmem>>, %arg6: memref<96x16xf32, #tpu.memory_space<vmem>>, %arg7: memref<1x16xf32, #tpu.memory_space<vmem>>, %arg8: memref<1x16x16x16xf32, #tpu.memory_space<vmem>>, %arg9: memref<18x32x16xf32, #tpu.memory_space<vmem>>) attributes {dimension_semantics = [#tpu.dimension_semantics<parallel>], iteration_bounds = array<i64: 2>, scalar_prefetch = 0 : i64, scratch_operands = 1 : i64, tpu.core_type = #tpu.core_type<tc>, window_params = [{transform_indices = @transform_0, window_bounds = array<i64: 1, 18, 18, 16>}, {pipeline_mode = #tpu.pipeline_mode<synchronous>, transform_indices = @transform_1, window_bounds = array<i64: 9, 16, 16>}, {pipeline_mode = #tpu.pipeline_mode<synchronous>, transform_indices = @transform_2, window_bounds = array<i64: 1, 16>}, {pipeline_mode = #tpu.pipeline_mode<synchronous>, transform_indices = @transform_3, window_bounds = array<i64: 9, 16, 96>}, {pipeline_mode = #tpu.pipeline_mode<synchronous>, transform_indices = @transform_4, window_bounds = array<i64: 1, 96>}, {pipeline_mode = #tpu.pipeline_mode<synchronous>, transform_indices = @transform_5, window_bounds = array<i64: 96, 16>}, {pipeline_mode = #tpu.pipeline_mode<synchronous>, transform_indices = @transform_6, window_bounds = array<i64: 1, 16>}, {transform_indices = @transform_7, window_bounds = array<i64: 1, 16, 16, 16>}]} {
    %cst = arith.constant 0.000000e+00 : f32
    %0 = vector.broadcast %cst : f32 to vector<256x16xf32>
    %c0 = arith.constant 0 : index
    %c0_0 = arith.constant 0 : index
    %c0_1 = arith.constant 0 : index
    %c0_2 = arith.constant 0 : index
    %1 = vector.load %arg1[%c0, %c0_0, %c0_1, %c0_2] : memref<1x18x18x16xf32, #tpu.memory_space<vmem>>, vector<1x16x16x16xf32>
    %2 = vector.shape_cast %1 : vector<1x16x16x16xf32> to vector<16x16x16xf32>
    %3 = vector.shape_cast %2 : vector<16x16x16xf32> to vector<256x16xf32>
    %c0_3 = arith.constant 0 : index
    %c0_4 = arith.constant 0 : index
    %c0_5 = arith.constant 0 : index
    %4 = vector.load %arg2[%c0_3, %c0_4, %c0_5] : memref<9x16x16xf32, #tpu.memory_space<vmem>>, vector<1x16x16xf32>
    %5 = vector.shape_cast %4 : vector<1x16x16xf32> to vector<16x16xf32>
    %cst_6 = arith.constant dense<0.000000e+00> : vector<256x16xf32>
    %6 = tpu.matmul %3, %5, %cst_6 {dimension_numbers = #tpu.dot_dimension_numbers<[1], [0], [0], [1], [0, 0, 1, 1], [], []>} : vector<256x16xf32>, vector<16x16xf32>, vector<256x16xf32> -> vector<256x16xf32>
    %7 = arith.addf %0, %6 : vector<256x16xf32>
    %c0_7 = arith.constant 0 : index
    %c0_8 = arith.constant 0 : index
    %c1 = arith.constant 1 : index
    %c0_9 = arith.constant 0 : index
    %8 = vector.load %arg1[%c0_7, %c0_8, %c1, %c0_9] : memref<1x18x18x16xf32, #tpu.memory_space<vmem>>, vector<1x16x16x16xf32>
    %9 = vector.shape_cast %8 : vector<1x16x16x16xf32> to vector<16x16x16xf32>
    %10 = vector.shape_cast %9 : vector<16x16x16xf32> to vector<256x16xf32>
    %c1_10 = arith.constant 1 : index
    %c0_11 = arith.constant 0 : index
    %c0_12 = arith.constant 0 : index
    %11 = vector.load %arg2[%c1_10, %c0_11, %c0_12] : memref<9x16x16xf32, #tpu.memory_space<vmem>>, vector<1x16x16xf32>
    %12 = vector.shape_cast %11 : vector<1x16x16xf32> to vector<16x16xf32>
    %cst_13 = arith.constant dense<0.000000e+00> : vector<256x16xf32>
    %13 = tpu.matmul %10, %12, %cst_13 {dimension_numbers = #tpu.dot_dimension_numbers<[1], [0], [0], [1], [0, 0, 1, 1], [], []>} : vector<256x16xf32>, vector<16x16xf32>, vector<256x16xf32> -> vector<256x16xf32>
    %14 = arith.addf %7, %13 : vector<256x16xf32>
    %c0_14 = arith.constant 0 : index
    %c0_15 = arith.constant 0 : index
    %c2 = arith.constant 2 : index
    %c0_16 = arith.constant 0 : index
    %15 = vector.load %arg1[%c0_14, %c0_15, %c2, %c0_16] : memref<1x18x18x16xf32, #tpu.memory_space<vmem>>, vector<1x16x16x16xf32>
    %16 = vector.shape_cast %15 : vector<1x16x16x16xf32> to vector<16x16x16xf32>
    %17 = vector.shape_cast %16 : vector<16x16x16xf32> to vector<256x16xf32>
    %c2_17 = arith.constant 2 : index
    %c0_18 = arith.constant 0 : index
    %c0_19 = arith.constant 0 : index
    %18 = vector.load %arg2[%c2_17, %c0_18, %c0_19] : memref<9x16x16xf32, #tpu.memory_space<vmem>>, vector<1x16x16xf32>
    %19 = vector.shape_cast %18 : vector<1x16x16xf32> to vector<16x16xf32>
    %cst_20 = arith.constant dense<0.000000e+00> : vector<256x16xf32>
    %20 = tpu.matmul %17, %19, %cst_20 {dimension_numbers = #tpu.dot_dimension_numbers<[1], [0], [0], [1], [0, 0, 1, 1], [], []>} : vector<256x16xf32>, vector<16x16xf32>, vector<256x16xf32> -> vector<256x16xf32>
    %21 = arith.addf %14, %20 : vector<256x16xf32>
    %c0_21 = arith.constant 0 : index
    %c1_22 = arith.constant 1 : index
    %c0_23 = arith.constant 0 : index
    %c0_24 = arith.constant 0 : index
    %22 = vector.load %arg1[%c0_21, %c1_22, %c0_23, %c0_24] : memref<1x18x18x16xf32, #tpu.memory_space<vmem>>, vector<1x16x16x16xf32>
    %23 = vector.shape_cast %22 : vector<1x16x16x16xf32> to vector<16x16x16xf32>
    %24 = vector.shape_cast %23 : vector<16x16x16xf32> to vector<256x16xf32>
    %c3 = arith.constant 3 : index
    %c0_25 = arith.constant 0 : index
    %c0_26 = arith.constant 0 : index
    %25 = vector.load %arg2[%c3, %c0_25, %c0_26] : memref<9x16x16xf32, #tpu.memory_space<vmem>>, vector<1x16x16xf32>
    %26 = vector.shape_cast %25 : vector<1x16x16xf32> to vector<16x16xf32>
    %cst_27 = arith.constant dense<0.000000e+00> : vector<256x16xf32>
    %27 = tpu.matmul %24, %26, %cst_27 {dimension_numbers = #tpu.dot_dimension_numbers<[1], [0], [0], [1], [0, 0, 1, 1], [], []>} : vector<256x16xf32>, vector<16x16xf32>, vector<256x16xf32> -> vector<256x16xf32>
    %28 = arith.addf %21, %27 : vector<256x16xf32>
    %c0_28 = arith.constant 0 : index
    %c1_29 = arith.constant 1 : index
    %c1_30 = arith.constant 1 : index
    %c0_31 = arith.constant 0 : index
    %29 = vector.load %arg1[%c0_28, %c1_29, %c1_30, %c0_31] : memref<1x18x18x16xf32, #tpu.memory_space<vmem>>, vector<1x16x16x16xf32>
    %30 = vector.shape_cast %29 : vector<1x16x16x16xf32> to vector<16x16x16xf32>
    %31 = vector.shape_cast %30 : vector<16x16x16xf32> to vector<256x16xf32>
    %c4 = arith.constant 4 : index
    %c0_32 = arith.constant 0 : index
    %c0_33 = arith.constant 0 : index
    %32 = vector.load %arg2[%c4, %c0_32, %c0_33] : memref<9x16x16xf32, #tpu.memory_space<vmem>>, vector<1x16x16xf32>
    %33 = vector.shape_cast %32 : vector<1x16x16xf32> to vector<16x16xf32>
    %cst_34 = arith.constant dense<0.000000e+00> : vector<256x16xf32>
    %34 = tpu.matmul %31, %33, %cst_34 {dimension_numbers = #tpu.dot_dimension_numbers<[1], [0], [0], [1], [0, 0, 1, 1], [], []>} : vector<256x16xf32>, vector<16x16xf32>, vector<256x16xf32> -> vector<256x16xf32>
    %35 = arith.addf %28, %34 : vector<256x16xf32>
    %c0_35 = arith.constant 0 : index
    %c1_36 = arith.constant 1 : index
    %c2_37 = arith.constant 2 : index
    %c0_38 = arith.constant 0 : index
    %36 = vector.load %arg1[%c0_35, %c1_36, %c2_37, %c0_38] : memref<1x18x18x16xf32, #tpu.memory_space<vmem>>, vector<1x16x16x16xf32>
    %37 = vector.shape_cast %36 : vector<1x16x16x16xf32> to vector<16x16x16xf32>
    %38 = vector.shape_cast %37 : vector<16x16x16xf32> to vector<256x16xf32>
    %c5 = arith.constant 5 : index
    %c0_39 = arith.constant 0 : index
    %c0_40 = arith.constant 0 : index
    %39 = vector.load %arg2[%c5, %c0_39, %c0_40] : memref<9x16x16xf32, #tpu.memory_space<vmem>>, vector<1x16x16xf32>
    %40 = vector.shape_cast %39 : vector<1x16x16xf32> to vector<16x16xf32>
    %cst_41 = arith.constant dense<0.000000e+00> : vector<256x16xf32>
    %41 = tpu.matmul %38, %40, %cst_41 {dimension_numbers = #tpu.dot_dimension_numbers<[1], [0], [0], [1], [0, 0, 1, 1], [], []>} : vector<256x16xf32>, vector<16x16xf32>, vector<256x16xf32> -> vector<256x16xf32>
    %42 = arith.addf %35, %41 : vector<256x16xf32>
    %c0_42 = arith.constant 0 : index
    %c2_43 = arith.constant 2 : index
    %c0_44 = arith.constant 0 : index
    %c0_45 = arith.constant 0 : index
    %43 = vector.load %arg1[%c0_42, %c2_43, %c0_44, %c0_45] : memref<1x18x18x16xf32, #tpu.memory_space<vmem>>, vector<1x16x16x16xf32>
    %44 = vector.shape_cast %43 : vector<1x16x16x16xf32> to vector<16x16x16xf32>
    %45 = vector.shape_cast %44 : vector<16x16x16xf32> to vector<256x16xf32>
    %c6 = arith.constant 6 : index
    %c0_46 = arith.constant 0 : index
    %c0_47 = arith.constant 0 : index
    %46 = vector.load %arg2[%c6, %c0_46, %c0_47] : memref<9x16x16xf32, #tpu.memory_space<vmem>>, vector<1x16x16xf32>
    %47 = vector.shape_cast %46 : vector<1x16x16xf32> to vector<16x16xf32>
    %cst_48 = arith.constant dense<0.000000e+00> : vector<256x16xf32>
    %48 = tpu.matmul %45, %47, %cst_48 {dimension_numbers = #tpu.dot_dimension_numbers<[1], [0], [0], [1], [0, 0, 1, 1], [], []>} : vector<256x16xf32>, vector<16x16xf32>, vector<256x16xf32> -> vector<256x16xf32>
    %49 = arith.addf %42, %48 : vector<256x16xf32>
    %c0_49 = arith.constant 0 : index
    %c2_50 = arith.constant 2 : index
    %c1_51 = arith.constant 1 : index
    %c0_52 = arith.constant 0 : index
    %50 = vector.load %arg1[%c0_49, %c2_50, %c1_51, %c0_52] : memref<1x18x18x16xf32, #tpu.memory_space<vmem>>, vector<1x16x16x16xf32>
    %51 = vector.shape_cast %50 : vector<1x16x16x16xf32> to vector<16x16x16xf32>
    %52 = vector.shape_cast %51 : vector<16x16x16xf32> to vector<256x16xf32>
    %c7 = arith.constant 7 : index
    %c0_53 = arith.constant 0 : index
    %c0_54 = arith.constant 0 : index
    %53 = vector.load %arg2[%c7, %c0_53, %c0_54] : memref<9x16x16xf32, #tpu.memory_space<vmem>>, vector<1x16x16xf32>
    %54 = vector.shape_cast %53 : vector<1x16x16xf32> to vector<16x16xf32>
    %cst_55 = arith.constant dense<0.000000e+00> : vector<256x16xf32>
    %55 = tpu.matmul %52, %54, %cst_55 {dimension_numbers = #tpu.dot_dimension_numbers<[1], [0], [0], [1], [0, 0, 1, 1], [], []>} : vector<256x16xf32>, vector<16x16xf32>, vector<256x16xf32> -> vector<256x16xf32>
    %56 = arith.addf %49, %55 : vector<256x16xf32>
    %c0_56 = arith.constant 0 : index
    %c2_57 = arith.constant 2 : index
    %c2_58 = arith.constant 2 : index
    %c0_59 = arith.constant 0 : index
    %57 = vector.load %arg1[%c0_56, %c2_57, %c2_58, %c0_59] : memref<1x18x18x16xf32, #tpu.memory_space<vmem>>, vector<1x16x16x16xf32>
    %58 = vector.shape_cast %57 : vector<1x16x16x16xf32> to vector<16x16x16xf32>
    %59 = vector.shape_cast %58 : vector<16x16x16xf32> to vector<256x16xf32>
    %c8 = arith.constant 8 : index
    %c0_60 = arith.constant 0 : index
    %c0_61 = arith.constant 0 : index
    %60 = vector.load %arg2[%c8, %c0_60, %c0_61] : memref<9x16x16xf32, #tpu.memory_space<vmem>>, vector<1x16x16xf32>
    %61 = vector.shape_cast %60 : vector<1x16x16xf32> to vector<16x16xf32>
    %cst_62 = arith.constant dense<0.000000e+00> : vector<256x16xf32>
    %62 = tpu.matmul %59, %61, %cst_62 {dimension_numbers = #tpu.dot_dimension_numbers<[1], [0], [0], [1], [0, 0, 1, 1], [], []>} : vector<256x16xf32>, vector<16x16xf32>, vector<256x16xf32> -> vector<256x16xf32>
    %63 = arith.addf %56, %62 : vector<256x16xf32>
    %c0_63 = arith.constant 0 : index
    %c0_64 = arith.constant 0 : index
    %64 = vector.load %arg3[%c0_63, %c0_64] : memref<1x16xf32, #tpu.memory_space<vmem>>, vector<1x16xf32>
    %65 = vector.broadcast %64 : vector<1x16xf32> to vector<256x16xf32>
    %66 = arith.addf %63, %65 : vector<256x16xf32>
    %cst_65 = arith.constant 0.000000e+00 : f32
    %67 = vector.broadcast %cst_65 : f32 to vector<256x16xf32>
    %68 = arith.maximumf %66, %67 : vector<256x16xf32>
    %cst_66 = arith.constant 0.000000e+00 : f32
    %69 = vector.broadcast %cst_66 : f32 to vector<18x32x16xf32>
    %c0_67 = arith.constant 0 : index
    %c0_68 = arith.constant 0 : index
    %c0_69 = arith.constant 0 : index
    %70 = vector.load %arg9[%c0_67, %c0_68, %c0_69] : memref<18x32x16xf32, #tpu.memory_space<vmem>>, vector<18x32x16xf32>
    tpu.vector_store %arg9[%c0_67, %c0_68, %c0_69], %69 {strides = array<i32>} : memref<18x32x16xf32, #tpu.memory_space<vmem>>, vector<18x32x16xf32>,
    %71 = vector.shape_cast %68 : vector<256x16xf32> to vector<16x16x16xf32>
    %c1_70 = arith.constant 1 : index
    %c8_71 = arith.constant 8 : index
    %c0_72 = arith.constant 0 : index
    %72 = vector.load %arg9[%c1_70, %c8_71, %c0_72] : memref<18x32x16xf32, #tpu.memory_space<vmem>>, vector<16x16x16xf32>
    tpu.vector_store %arg9[%c1_70, %c8_71, %c0_72], %71 {strides = array<i32>} : memref<18x32x16xf32, #tpu.memory_space<vmem>>, vector<16x16x16xf32>,
    %cst_73 = arith.constant 0.000000e+00 : f32
    %73 = vector.broadcast %cst_73 : f32 to vector<256x96xf32>
    %c0_74 = arith.constant 0 : index
    %c7_75 = arith.constant 7 : index
    %c0_76 = arith.constant 0 : index
    %74 = vector.load %arg9[%c0_74, %c7_75, %c0_76] : memref<18x32x16xf32, #tpu.memory_space<vmem>>, vector<16x16x16xf32>
    %75 = vector.shape_cast %74 : vector<16x16x16xf32> to vector<256x16xf32>
    %c0_77 = arith.constant 0 : index
    %c0_78 = arith.constant 0 : index
    %c0_79 = arith.constant 0 : index
    %76 = vector.load %arg4[%c0_77, %c0_78, %c0_79] : memref<9x16x96xf32, #tpu.memory_space<vmem>>, vector<1x16x96xf32>
    %77 = vector.shape_cast %76 : vector<1x16x96xf32> to vector<16x96xf32>
    %cst_80 = arith.constant dense<0.000000e+00> : vector<256x96xf32>
    %78 = tpu.matmul %75, %77, %cst_80 {dimension_numbers = #tpu.dot_dimension_numbers<[1], [0], [0], [1], [0, 0, 1, 1], [], []>} : vector<256x16xf32>, vector<16x96xf32>, vector<256x96xf32> -> vector<256x96xf32>
    %79 = arith.addf %73, %78 : vector<256x96xf32>
    %c0_81 = arith.constant 0 : index
    %c8_82 = arith.constant 8 : index
    %c0_83 = arith.constant 0 : index
    %80 = vector.load %arg9[%c0_81, %c8_82, %c0_83] : memref<18x32x16xf32, #tpu.memory_space<vmem>>, vector<16x16x16xf32>
    %81 = vector.shape_cast %80 : vector<16x16x16xf32> to vector<256x16xf32>
    %c1_84 = arith.constant 1 : index
    %c0_85 = arith.constant 0 : index
    %c0_86 = arith.constant 0 : index
    %82 = vector.load %arg4[%c1_84, %c0_85, %c0_86] : memref<9x16x96xf32, #tpu.memory_space<vmem>>, vector<1x16x96xf32>
    %83 = vector.shape_cast %82 : vector<1x16x96xf32> to vector<16x96xf32>
    %cst_87 = arith.constant dense<0.000000e+00> : vector<256x96xf32>
    %84 = tpu.matmul %81, %83, %cst_87 {dimension_numbers = #tpu.dot_dimension_numbers<[1], [0], [0], [1], [0, 0, 1, 1], [], []>} : vector<256x16xf32>, vector<16x96xf32>, vector<256x96xf32> -> vector<256x96xf32>
    %85 = arith.addf %79, %84 : vector<256x96xf32>
    %c0_88 = arith.constant 0 : index
    %c9 = arith.constant 9 : index
    %c0_89 = arith.constant 0 : index
    %86 = vector.load %arg9[%c0_88, %c9, %c0_89] : memref<18x32x16xf32, #tpu.memory_space<vmem>>, vector<16x16x16xf32>
    %87 = vector.shape_cast %86 : vector<16x16x16xf32> to vector<256x16xf32>
    %c2_90 = arith.constant 2 : index
    %c0_91 = arith.constant 0 : index
    %c0_92 = arith.constant 0 : index
    %88 = vector.load %arg4[%c2_90, %c0_91, %c0_92] : memref<9x16x96xf32, #tpu.memory_space<vmem>>, vector<1x16x96xf32>
    %89 = vector.shape_cast %88 : vector<1x16x96xf32> to vector<16x96xf32>
    %cst_93 = arith.constant dense<0.000000e+00> : vector<256x96xf32>
    %90 = tpu.matmul %87, %89, %cst_93 {dimension_numbers = #tpu.dot_dimension_numbers<[1], [0], [0], [1], [0, 0, 1, 1], [], []>} : vector<256x16xf32>, vector<16x96xf32>, vector<256x96xf32> -> vector<256x96xf32>
    %91 = arith.addf %85, %90 : vector<256x96xf32>
    %c1_94 = arith.constant 1 : index
    %c7_95 = arith.constant 7 : index
    %c0_96 = arith.constant 0 : index
    %92 = vector.load %arg9[%c1_94, %c7_95, %c0_96] : memref<18x32x16xf32, #tpu.memory_space<vmem>>, vector<16x16x16xf32>
    %93 = vector.shape_cast %92 : vector<16x16x16xf32> to vector<256x16xf32>
    %c3_97 = arith.constant 3 : index
    %c0_98 = arith.constant 0 : index
    %c0_99 = arith.constant 0 : index
    %94 = vector.load %arg4[%c3_97, %c0_98, %c0_99] : memref<9x16x96xf32, #tpu.memory_space<vmem>>, vector<1x16x96xf32>
    %95 = vector.shape_cast %94 : vector<1x16x96xf32> to vector<16x96xf32>
    %cst_100 = arith.constant dense<0.000000e+00> : vector<256x96xf32>
    %96 = tpu.matmul %93, %95, %cst_100 {dimension_numbers = #tpu.dot_dimension_numbers<[1], [0], [0], [1], [0, 0, 1, 1], [], []>} : vector<256x16xf32>, vector<16x96xf32>, vector<256x96xf32> -> vector<256x96xf32>
    %97 = arith.addf %91, %96 : vector<256x96xf32>
    %c1_101 = arith.constant 1 : index
    %c8_102 = arith.constant 8 : index
    %c0_103 = arith.constant 0 : index
    %98 = vector.load %arg9[%c1_101, %c8_102, %c0_103] : memref<18x32x16xf32, #tpu.memory_space<vmem>>, vector<16x16x16xf32>
    %99 = vector.shape_cast %98 : vector<16x16x16xf32> to vector<256x16xf32>
    %c4_104 = arith.constant 4 : index
    %c0_105 = arith.constant 0 : index
    %c0_106 = arith.constant 0 : index
    %100 = vector.load %arg4[%c4_104, %c0_105, %c0_106] : memref<9x16x96xf32, #tpu.memory_space<vmem>>, vector<1x16x96xf32>
    %101 = vector.shape_cast %100 : vector<1x16x96xf32> to vector<16x96xf32>
    %cst_107 = arith.constant dense<0.000000e+00> : vector<256x96xf32>
    %102 = tpu.matmul %99, %101, %cst_107 {dimension_numbers = #tpu.dot_dimension_numbers<[1], [0], [0], [1], [0, 0, 1, 1], [], []>} : vector<256x16xf32>, vector<16x96xf32>, vector<256x96xf32> -> vector<256x96xf32>
    %103 = arith.addf %97, %102 : vector<256x96xf32>
    %c1_108 = arith.constant 1 : index
    %c9_109 = arith.constant 9 : index
    %c0_110 = arith.constant 0 : index
    %104 = vector.load %arg9[%c1_108, %c9_109, %c0_110] : memref<18x32x16xf32, #tpu.memory_space<vmem>>, vector<16x16x16xf32>
    %105 = vector.shape_cast %104 : vector<16x16x16xf32> to vector<256x16xf32>
    %c5_111 = arith.constant 5 : index
    %c0_112 = arith.constant 0 : index
    %c0_113 = arith.constant 0 : index
    %106 = vector.load %arg4[%c5_111, %c0_112, %c0_113] : memref<9x16x96xf32, #tpu.memory_space<vmem>>, vector<1x16x96xf32>
    %107 = vector.shape_cast %106 : vector<1x16x96xf32> to vector<16x96xf32>
    %cst_114 = arith.constant dense<0.000000e+00> : vector<256x96xf32>
    %108 = tpu.matmul %105, %107, %cst_114 {dimension_numbers = #tpu.dot_dimension_numbers<[1], [0], [0], [1], [0, 0, 1, 1], [], []>} : vector<256x16xf32>, vector<16x96xf32>, vector<256x96xf32> -> vector<256x96xf32>
    %109 = arith.addf %103, %108 : vector<256x96xf32>
    %c2_115 = arith.constant 2 : index
    %c7_116 = arith.constant 7 : index
    %c0_117 = arith.constant 0 : index
    %110 = vector.load %arg9[%c2_115, %c7_116, %c0_117] : memref<18x32x16xf32, #tpu.memory_space<vmem>>, vector<16x16x16xf32>
    %111 = vector.shape_cast %110 : vector<16x16x16xf32> to vector<256x16xf32>
    %c6_118 = arith.constant 6 : index
    %c0_119 = arith.constant 0 : index
    %c0_120 = arith.constant 0 : index
    %112 = vector.load %arg4[%c6_118, %c0_119, %c0_120] : memref<9x16x96xf32, #tpu.memory_space<vmem>>, vector<1x16x96xf32>
    %113 = vector.shape_cast %112 : vector<1x16x96xf32> to vector<16x96xf32>
    %cst_121 = arith.constant dense<0.000000e+00> : vector<256x96xf32>
    %114 = tpu.matmul %111, %113, %cst_121 {dimension_numbers = #tpu.dot_dimension_numbers<[1], [0], [0], [1], [0, 0, 1, 1], [], []>} : vector<256x16xf32>, vector<16x96xf32>, vector<256x96xf32> -> vector<256x96xf32>
    %115 = arith.addf %109, %114 : vector<256x96xf32>
    %c2_122 = arith.constant 2 : index
    %c8_123 = arith.constant 8 : index
    %c0_124 = arith.constant 0 : index
    %116 = vector.load %arg9[%c2_122, %c8_123, %c0_124] : memref<18x32x16xf32, #tpu.memory_space<vmem>>, vector<16x16x16xf32>
    %117 = vector.shape_cast %116 : vector<16x16x16xf32> to vector<256x16xf32>
    %c7_125 = arith.constant 7 : index
    %c0_126 = arith.constant 0 : index
    %c0_127 = arith.constant 0 : index
    %118 = vector.load %arg4[%c7_125, %c0_126, %c0_127] : memref<9x16x96xf32, #tpu.memory_space<vmem>>, vector<1x16x96xf32>
    %119 = vector.shape_cast %118 : vector<1x16x96xf32> to vector<16x96xf32>
    %cst_128 = arith.constant dense<0.000000e+00> : vector<256x96xf32>
    %120 = tpu.matmul %117, %119, %cst_128 {dimension_numbers = #tpu.dot_dimension_numbers<[1], [0], [0], [1], [0, 0, 1, 1], [], []>} : vector<256x16xf32>, vector<16x96xf32>, vector<256x96xf32> -> vector<256x96xf32>
    %121 = arith.addf %115, %120 : vector<256x96xf32>
    %c2_129 = arith.constant 2 : index
    %c9_130 = arith.constant 9 : index
    %c0_131 = arith.constant 0 : index
    %122 = vector.load %arg9[%c2_129, %c9_130, %c0_131] : memref<18x32x16xf32, #tpu.memory_space<vmem>>, vector<16x16x16xf32>
    %123 = vector.shape_cast %122 : vector<16x16x16xf32> to vector<256x16xf32>
    %c8_132 = arith.constant 8 : index
    %c0_133 = arith.constant 0 : index
    %c0_134 = arith.constant 0 : index
    %124 = vector.load %arg4[%c8_132, %c0_133, %c0_134] : memref<9x16x96xf32, #tpu.memory_space<vmem>>, vector<1x16x96xf32>
    %125 = vector.shape_cast %124 : vector<1x16x96xf32> to vector<16x96xf32>
    %cst_135 = arith.constant dense<0.000000e+00> : vector<256x96xf32>
    %126 = tpu.matmul %123, %125, %cst_135 {dimension_numbers = #tpu.dot_dimension_numbers<[1], [0], [0], [1], [0, 0, 1, 1], [], []>} : vector<256x16xf32>, vector<16x96xf32>, vector<256x96xf32> -> vector<256x96xf32>
    %127 = arith.addf %121, %126 : vector<256x96xf32>
    %c0_136 = arith.constant 0 : index
    %c0_137 = arith.constant 0 : index
    %128 = vector.load %arg5[%c0_136, %c0_137] : memref<1x96xf32, #tpu.memory_space<vmem>>, vector<1x96xf32>
    %129 = vector.broadcast %128 : vector<1x96xf32> to vector<256x96xf32>
    %130 = arith.addf %127, %129 : vector<256x96xf32>
    %c0_138 = arith.constant 0 : index
    %c0_139 = arith.constant 0 : index
    %131 = vector.load %arg6[%c0_138, %c0_139] : memref<96x16xf32, #tpu.memory_space<vmem>>, vector<96x16xf32>
    %cst_140 = arith.constant dense<0.000000e+00> : vector<256x16xf32>
    %132 = tpu.matmul %130, %131, %cst_140 {dimension_numbers = #tpu.dot_dimension_numbers<[1], [0], [0], [1], [0, 0, 1, 1], [], []>} : vector<256x96xf32>, vector<96x16xf32>, vector<256x16xf32> -> vector<256x16xf32>
    %c0_141 = arith.constant 0 : index
    %c0_142 = arith.constant 0 : index
    %133 = vector.load %arg7[%c0_141, %c0_142] : memref<1x16xf32, #tpu.memory_space<vmem>>, vector<1x16xf32>
    %134 = vector.broadcast %133 : vector<1x16xf32> to vector<256x16xf32>
    %135 = arith.addf %132, %134 : vector<256x16xf32>
    %c0_143 = arith.constant 0 : index
    %c1_144 = arith.constant 1 : index
    %c1_145 = arith.constant 1 : index
    %c0_146 = arith.constant 0 : index
    %136 = vector.load %arg1[%c0_143, %c1_144, %c1_145, %c0_146] : memref<1x18x18x16xf32, #tpu.memory_space<vmem>>, vector<1x16x16x16xf32>
    %137 = vector.shape_cast %136 : vector<1x16x16x16xf32> to vector<16x16x16xf32>
    %138 = vector.shape_cast %137 : vector<16x16x16xf32> to vector<256x16xf32>
    %139 = arith.addf %135, %138 : vector<256x16xf32>
    %cst_147 = arith.constant 0.000000e+00 : f32
    %140 = vector.broadcast %cst_147 : f32 to vector<256x16xf32>
    %141 = arith.maximumf %139, %140 : vector<256x16xf32>
    %142 = vector.shape_cast %141 : vector<256x16xf32> to vector<16x16x16xf32>
    %c0_148 = arith.constant 0 : index
    %c0_149 = arith.constant 0 : index
    %c0_150 = arith.constant 0 : index
    %c0_151 = arith.constant 0 : index
    %143 = vector.load %arg8[%c0_148, %c0_149, %c0_150, %c0_151] : memref<1x16x16x16xf32, #tpu.memory_space<vmem>>, vector<1x16x16x16xf32>
    %144 = vector.shape_cast %143 : vector<1x16x16x16xf32> to vector<16x16x16xf32>
    %145 = vector.shape_cast %142 : vector<16x16x16xf32> to vector<1x16x16x16xf32>
    tpu.vector_store %arg8[%c0_148, %c0_149, %c0_150, %c0_151], %145 {strides = array<i32>} : memref<1x16x16x16xf32, #tpu.memory_space<vmem>>, vector<1x16x16x16xf32>,
    return
  }
  func.func @transform_0(%arg0: i32) -> (i32, i32, i32, i32) {
    %c0_i32 = arith.constant 0 : i32
    %c0_i32_0 = arith.constant 0 : i32
    %c0_i32_1 = arith.constant 0 : i32
    %c0_i32_2 = arith.constant 0 : i32
    return %arg0, %c0_i32, %c0_i32_0, %c0_i32_1 : i32, i32, i32, i32
  }
  func.func @transform_1(%arg0: i32) -> (i32, i32, i32) {
    %c0_i32 = arith.constant 0 : i32
    %c0_i32_0 = arith.constant 0 : i32
    %c0_i32_1 = arith.constant 0 : i32
    %c0_i32_2 = arith.constant 0 : i32
    return %c0_i32, %c0_i32_0, %c0_i32_1 : i32, i32, i32
  }
  func.func @transform_2(%arg0: i32) -> (i32, i32) {
    %c0_i32 = arith.constant 0 : i32
    %c0_i32_0 = arith.constant 0 : i32
    %c0_i32_1 = arith.constant 0 : i32
    return %c0_i32, %c0_i32_0 : i32, i32
  }
  func.func @transform_3(%arg0: i32) -> (i32, i32, i32) {
    %c0_i32 = arith.constant 0 : i32
    %c0_i32_0 = arith.constant 0 : i32
    %c0_i32_1 = arith.constant 0 : i32
    %c0_i32_2 = arith.constant 0 : i32
    return %c0_i32, %c0_i32_0, %c0_i32_1 : i32, i32, i32
  }
  func.func @transform_4(%arg0: i32) -> (i32, i32) {
    %c0_i32 = arith.constant 0 : i32
    %c0_i32_0 = arith.constant 0 : i32
    %c0_i32_1 = arith.constant 0 : i32
    return %c0_i32, %c0_i32_0 : i32, i32
  }
  func.func @transform_5(%arg0: i32) -> (i32, i32) {
    %c0_i32 = arith.constant 0 : i32
    %c0_i32_0 = arith.constant 0 : i32
    %c0_i32_1 = arith.constant 0 : i32
    return %c0_i32, %c0_i32_0 : i32, i32
  }
  func.func @transform_6(%arg0: i32) -> (i32, i32) {
    %c0_i32 = arith.constant 0 : i32
    %c0_i32_0 = arith.constant 0 : i32
    %c0_i32_1 = arith.constant 0 : i32
    return %c0_i32, %c0_i32_0 : i32, i32
  }
  func.func @transform_7(%arg0: i32) -> (i32, i32, i32, i32) {
    %c0_i32 = arith.constant 0 : i32
    %c0_i32_0 = arith.constant 0 : i32
    %c0_i32_1 = arith.constant 0 : i32
    %c0_i32_2 = arith.constant 0 : i32
    return %arg0, %c0_i32, %c0_i32_0, %c0_i32_1 : i32, i32, i32, i32
  }
}

</mosaic_0001>

<llo_original>
// kernel: gelayer_s1.1
$region0: #{gelayer_s1.1}
  #allocation0 [shape = 'u32[]', space=smem, size = 0x4, offset = 0x4, fixed_abs, tag = 'smem constant byte address 0x4 - core index']
  #allocation1 [shape = 'u32[144,128]{1,0:T(1,128)}', space=vmem, size = 0x12000, scoped, tag = 'internal scratch']
  #allocation2 [shape = 'f32[18,32,16]{2,1,0:T(8,128)}', space=vmem, size = 0x48000, scoped, tag = 'scratch operand']
  %s0 = inlined_call_operand.vmem [shape: f32[2,18,18,16], index: 0, kind: input, shape index: {}]
  %s1 = inlined_call_operand.vmem [shape: f32[9,16,16], index: 1, kind: input, shape index: {}]
  %s2 = inlined_call_operand.vmem [shape: f32[1,16], index: 2, kind: input, shape index: {}]
  %s3 = inlined_call_operand.vmem [shape: f32[9,16,96], index: 3, kind: input, shape index: {}]
  %s4 = inlined_call_operand.vmem [shape: f32[1,96], index: 4, kind: input, shape index: {}]
  %s5 = inlined_call_operand.vmem [shape: f32[96,16], index: 5, kind: input, shape index: {}]
  %s6 = inlined_call_operand.vmem [shape: f32[1,16], index: 6, kind: input, shape index: {}]
  %s7 = inlined_call_operand.vmem [shape: f32[2,16,16,16], index: 7, kind: output, shape index: {}]
  %s8 = sld [smem:[#allocation0]]
  $region61: #{gelayer_s1.1} parent=0
    _
  %s10 = ssub.s32 1, %s8
  %s11 = scalar_select 0, %s10, %s8
  loop: start=0, step=1, limit=4
  $region2: #{gelayer_s1.1} parent=0 // loop_pre_header
    _
  $region3: #{gelayer_s1.1} parent=0 // loop_header
    %s13 = sphi 0, %s17
    %p14 = scmp.ge.s32.totalorder %s13, 4
    %s23 = sphi 0, %s25
    %s26 = sphi 0, %s23
    %s27 = sphi 0, %s26
    %s43 = sphi 0, %s27
    %s47 = sphi 0, %s47
    %s49 = sphi 0, %s47
    %s50 = sphi 0, %s49
    %s64 = sphi 0, %s50
    %s68 = sphi 0, %s68
    %s70 = sphi 0, %s68
    %s71 = sphi 0, %s70
    %s85 = sphi 0, %s71
    %s89 = sphi 0, %s89
    %s91 = sphi 0, %s89
    %s92 = sphi 0, %s91
    %s106 = sphi 0, %s92
    %s110 = sphi 0, %s110
    %s112 = sphi 0, %s110
    %s113 = sphi 0, %s112
    %s127 = sphi 0, %s113
    %s131 = sphi 0, %s131
    %s133 = sphi 0, %s131
    %s134 = sphi 0, %s133
    %s148 = sphi 0, %s134
    %s152 = sphi 0, %s152
    %s154 = sphi 0, %s152
    %s155 = sphi 0, %s154
    %s169 = sphi 0, %s155
    %s175 = sphi 0, %s177
    %s178 = sphi 0, %s175
    %s179 = sphi 0, %s178
    %s195 = sphi 0, %s179
  $region4: #{gelayer_s1.1} parent=0 // loop_header_branch
    %16 = sbr.rel (%p14) target = $region8
  $region5: #{gelayer_s1.1} parent=0 // loop_body
    %s18 = ssub.s32 %s13, 1
    %s19 = ssub.s32 %s13, 2
    %s20 = sadd.s32 %s13, 1
    %s21 = ssub.s32 %s13, %s20
    %p22 = scmp.eq.s32.totalorder %s21, 0
    %s24 = sadd.s32 %s23, 1
    %s25 = scalar_select %p22, %s23, %s24
    %p28 = pneg %p22
    %p29 = scmp.eq.s32.totalorder %s13, 1
    %p30 = por %p28, %p29
    %p31 = scmp.ne.s32.totalorder %s23, %s26
    %p32 = scmp.eq.s32.totalorder %s13, 0
    %p33 = por %p31, %p32
    %p34 = scmp.ne.s32.totalorder %s23, %s26
    %p35 = scmp.eq.s32.totalorder %s18, 1
    %p36 = por %p34, %p35
    %p37 = scmp.ne.s32.totalorder %s26, %s27
    %p38 = scmp.eq.s32.totalorder %s18, 0
    %p39 = por %p37, %p38
    %p40 = scmp.ne.s32.totalorder %s26, %s27
    %p41 = scmp.eq.s32.totalorder %s19, 1
    %p42 = por %p40, %p41
    %p44 = scmp.ne.s32.totalorder %s27, %s43
    %p45 = scmp.eq.s32.totalorder %s19, 0
    %p46 = por %p44, %p45
    %s48 = sadd.s32 %s47, 1
    %p51 = scmp.eq.s32.totalorder %s13, 1
    %p52 = scmp.ne.s32.totalorder %s47, %s49
    %p53 = scmp.eq.s32.totalorder %s13, 0
    %p54 = por %p52, %p53
    %p55 = scmp.ne.s32.totalorder %s47, %s49
    %p56 = scmp.eq.s32.totalorder %s18, 1
    %p57 = por %p55, %p56
    %p58 = scmp.ne.s32.totalorder %s49, %s50
    %p59 = scmp.eq.s32.totalorder %s18, 0
    %p60 = por %p58, %p59
    %p61 = scmp.ne.s32.totalorder %s49, %s50
    %p62 = scmp.eq.s32.totalorder %s19, 1
    %p63 = por %p61, %p62
    %p65 = scmp.ne.s32.totalorder %s50, %s64
    %p66 = scmp.eq.s32.totalorder %s19, 0
    %p67 = por %p65, %p66
    %s69 = sadd.s32 %s68, 1
    %p72 = scmp.eq.s32.totalorder %s13, 1
    %p73 = scmp.ne.s32.totalorder %s68, %s70
    %p74 = scmp.eq.s32.totalorder %s13, 0
    %p75 = por %p73, %p74
    %p76 = scmp.ne.s32.totalorder %s68, %s70
    %p77 = scmp.eq.s32.totalorder %s18, 1
    %p78 = por %p76, %p77
    %p79 = scmp.ne.s32.totalorder %s70, %s71
    %p80 = scmp.eq.s32.totalorder %s18, 0
    %p81 = por %p79, %p80
    %p82 = scmp.ne.s32.totalorder %s70, %s71
    %p83 = scmp.eq.s32.totalorder %s19, 1
    %p84 = por %p82, %p83
    %p86 = scmp.ne.s32.totalorder %s71, %s85
    %p87 = scmp.eq.s32.totalorder %s19, 0
    %p88 = por %p86, %p87
    %s90 = sadd.s32 %s89, 1
    %p93 = scmp.eq.s32.totalorder %s13, 1
    %p94 = scmp.ne.s32.totalorder %s89, %s91
    %p95 = scmp.eq.s32.totalorder %s13, 0
    %p96 = por %p94, %p95
    %p97 = scmp.ne.s32.totalorder %s89, %s91
    %p98 = scmp.eq.s32.totalorder %s18, 1
    %p99 = por %p97, %p98
    %p100 = scmp.ne.s32.totalorder %s91, %s92
    %p101 = scmp.eq.s32.totalorder %s18, 0
    %p102 = por %p100, %p101
    %p103 = scmp.ne.s32.totalorder %s91, %s92
    %p104 = scmp.eq.s32.totalorder %s19, 1
    %p105 = por %p103, %p104
    %p107 = scmp.ne.s32.totalorder %s92, %s106
    %p108 = scmp.eq.s32.totalorder %s19, 0
    %p109 = por %p107, %p108
    %s111 = sadd.s32 %s110, 1
    %p114 = scmp.eq.s32.totalorder %s13, 1
    %p115 = scmp.ne.s32.totalorder %s110, %s112
    %p116 = scmp.eq.s32.totalorder %s13, 0
    %p117 = por %p115, %p116
    %p118 = scmp.ne.s32.totalorder %s110, %s112
    %p119 = scmp.eq.s32.totalorder %s18, 1
    %p120 = por %p118, %p119
    %p121 = scmp.ne.s32.totalorder %s112, %s113
    %p122 = scmp.eq.s32.totalorder %s18, 0
    %p123 = por %p121, %p122
    %p124 = scmp.ne.s32.totalorder %s112, %s113
    %p125 = scmp.eq.s32.totalorder %s19, 1
    %p126 = por %p124, %p125
    %p128 = scmp.ne.s32.totalorder %s113, %s127
    %p129 = scmp.eq.s32.totalorder %s19, 0
    %p130 = por %p128, %p129
    %s132 = sadd.s32 %s131, 1
    %p135 = scmp.eq.s32.totalorder %s13, 1
    %p136 = scmp.ne.s32.totalorder %s131, %s133
    %p137 = scmp.eq.s32.totalorder %s13, 0
    %p138 = por %p136, %p137
    %p139 = scmp.ne.s32.totalorder %s131, %s133
    %p140 = scmp.eq.s32.totalorder %s18, 1
    %p141 = por %p139, %p140
    %p142 = scmp.ne.s32.totalorder %s133, %s134
    %p143 = scmp.eq.s32.totalorder %s18, 0
    %p144 = por %p142, %p143
    %p145 = scmp.ne.s32.totalorder %s133, %s134
    %p146 = scmp.eq.s32.totalorder %s19, 1
    %p147 = por %p145, %p146
    %p149 = scmp.ne.s32.totalorder %s134, %s148
    %p150 = scmp.eq.s32.totalorder %s19, 0
    %p151 = por %p149, %p150
    %s153 = sadd.s32 %s152, 1
    %p156 = scmp.eq.s32.totalorder %s13, 1
    %p157 = scmp.ne.s32.totalorder %s152, %s154
    %p158 = scmp.eq.s32.totalorder %s13, 0
    %p159 = por %p157, %p158
    %p160 = scmp.ne.s32.totalorder %s152, %s154
    %p161 = scmp.eq.s32.totalorder %s18, 1
    %p162 = por %p160, %p161
    %p163 = scmp.ne.s32.totalorder %s154, %s155
    %p164 = scmp.eq.s32.totalorder %s18, 0
    %p165 = por %p163, %p164
    %p166 = scmp.ne.s32.totalorder %s154, %s155
    %p167 = scmp.eq.s32.totalorder %s19, 1
    %p168 = por %p166, %p167
    %p170 = scmp.ne.s32.totalorder %s155, %s169
    %p171 = scmp.eq.s32.totalorder %s19, 0
    %p172 = por %p170, %p171
    %s173 = ssub.s32 %s13, %s20
    %p174 = scmp.eq.s32.totalorder %s173, 0
    %s176 = sadd.s32 %s175, 1
    %s177 = scalar_select %p174, %s175, %s176
    %p180 = pneg %p174
    %p181 = scmp.eq.s32.totalorder %s13, 1
    %p182 = por %p180, %p181
    %p183 = scmp.ne.s32.totalorder %s175, %s178
    %p184 = scmp.eq.s32.totalorder %s13, 0
    %p185 = por %p183, %p184
    %p186 = scmp.ne.s32.totalorder %s175, %s178
    %p187 = scmp.eq.s32.totalorder %s18, 1
    %p188 = por %p186, %p187
    %p189 = scmp.ne.s32.totalorder %s178, %s179
    %p190 = scmp.eq.s32.totalorder %s18, 0
    %p191 = por %p189, %p190
    %p192 = scmp.ne.s32.totalorder %s178, %s179
    %p193 = scmp.eq.s32.totalorder %s19, 1
    %p194 = por %p192, %p193
    %p196 = scmp.ne.s32.totalorder %s179, %s195
    %p197 = scmp.eq.s32.totalorder %s19, 0
    %p198 = por %p196, %p197
    %p199 = scmp.le.s32.totalorder 1, %s13
    %p200 = scmp.lt.s32.totalorder %s13, 3
    %p201 = pnand %p199, %p200
    %p202 = pneg %p201
    // Predicated region
    $region9: #{gelayer_s1.1} parent=5 // pred_check
      _
    $region10: #{gelayer_s1.1} parent=5 // pred_check_branch
      %204 = sbr.rel (%p201) target = $region12
    $region11: #{gelayer_s1.1} parent=5 // pred_region
      %s205 = ssub.s32 %s13, 1
      // Predicated region
      $region13: #{gelayer_s1.1} parent=11 // pred_check
        %p206 = pneg %p60
      $region14: #{gelayer_s1.1} parent=11 // pred_check_branch
        %208 = sbr.rel (%p206) target = $region16
      $region15: #{gelayer_s1.1} parent=11 // pred_region
        _
      $region16: #{gelayer_s1.1} parent=11 // pred_fallthru
        _
      // Predicated region
      $region17: #{gelayer_s1.1} parent=11 // pred_check
        %p209 = pneg %p81
      $region18: #{gelayer_s1.1} parent=11 // pred_check_branch
        %211 = sbr.rel (%p209) target = $region20
      $region19: #{gelayer_s1.1} parent=11 // pred_region
        _
      $region20: #{gelayer_s1.1} parent=11 // pred_fallthru
        _
      // Predicated region
      $region21: #{gelayer_s1.1} parent=11 // pred_check
        %p212 = pneg %p102
      $region22: #{gelayer_s1.1} parent=11 // pred_check_branch
        %214 = sbr.rel (%p212) target = $region24
      $region23: #{gelayer_s1.1} parent=11 // pred_region
        _
      $region24: #{gelayer_s1.1} parent=11 // pred_fallthru
        _
      // Predicated region
      $region25: #{gelayer_s1.1} parent=11 // pred_check
        %p215 = pneg %p123
      $region26: #{gelayer_s1.1} parent=11 // pred_check_branch
        %217 = sbr.rel (%p215) target = $region28
      $region27: #{gelayer_s1.1} parent=11 // pred_region
        _
      $region28: #{gelayer_s1.1} parent=11 // pred_fallthru
        _
      // Predicated region
      $region29: #{gelayer_s1.1} parent=11 // pred_check
        %p218 = pneg %p144
      $region30: #{gelayer_s1.1} parent=11 // pred_check_branch
        %220 = sbr.rel (%p218) target = $region32
      $region31: #{gelayer_s1.1} parent=11 // pred_region
        _
      $region32: #{gelayer_s1.1} parent=11 // pred_fallthru
        _
      // Predicated region
      $region33: #{gelayer_s1.1} parent=11 // pred_check
        %p221 = pneg %p165
      $region34: #{gelayer_s1.1} parent=11 // pred_check_branch
        %223 = sbr.rel (%p221) target = $region36
      $region35: #{gelayer_s1.1} parent=11 // pred_region
        _
      $region36: #{gelayer_s1.1} parent=11 // pred_fallthru
        _
    $region12: #{gelayer_s1.1} parent=5 // pred_fallthru
      _
    %p224 = scmp.lt.s32.totalorder %s13, 2
    // Predicated region
    $region37: #{gelayer_s1.1} parent=5 // pred_check
      %p225 = pneg %p224
    $region38: #{gelayer_s1.1} parent=5 // pred_check_branch
      %227 = sbr.rel (%p225) target = $region40
    $region39: #{gelayer_s1.1} parent=5 // pred_region
      // Predicated region
      $region41: #{gelayer_s1.1} parent=39 // pred_check
        %p228 = pneg %p33
      $region42: #{gelayer_s1.1} parent=39 // pred_check_branch
        %230 = sbr.rel (%p228) target = $region44
      $region43: #{gelayer_s1.1} parent=39 // pred_region
        %p231 = scmp.lt.s32.totalorder %s13, 1
        %s232 = scalar_select %p231, %s13, 1
        %s233 = smul.addr %s232, 54
        %s234 = smul.addr %s233, 8
        %s235 = scalar_lea.vmem %s0, %s234
      $region44: #{gelayer_s1.1} parent=39 // pred_fallthru
        _
    $region40: #{gelayer_s1.1} parent=5 // pred_fallthru
      _
    %p236 = scmp.le.s32.totalorder 1, %s13
    %p237 = scmp.lt.s32.totalorder %s13, 3
    %p238 = pnand %p236, %p237
    %p239 = pneg %p238
    // Predicated region
    $region45: #{gelayer_s1.1} parent=5 // pred_check
      _
    $region46: #{gelayer_s1.1} parent=5 // pred_check_branch
      %241 = sbr.rel (%p238) target = $region48
    $region47: #{gelayer_s1.1} parent=5 // pred_region
      %s242 = ssub.s32 %s13, 1
      %p243 = scmp.lt.s32.totalorder %s18, 1
      %s244 = scalar_select %p243, %s18, 1
      %s245 = smul.addr %s244, 54
      %s246 = smul.addr %s245, 8
      %s247 = scalar_lea.vmem %s0, %s246
      %p248 = pneg %p39
      %p249 = pneg %p36
      %p250 = pneg %p60
      %p251 = pneg %p57
      %p252 = pneg %p81
      %p253 = pneg %p78
      %p254 = pneg %p102
      %p255 = pneg %p99
      %p256 = pneg %p123
      %p257 = pneg %p120
      %p258 = pneg %p144
      %p259 = pneg %p141
      %p260 = pneg %p165
      %p261 = pneg %p162
      %p262 = pneg %p191
      %p263 = pneg %p188
      %p264 = scmp.lt.s32.totalorder %s18, 1
      %s265 = scalar_select %p264, %s18, 1
      %s266 = smul.addr %s265, 32
      %s267 = smul.addr %s266, 8
      %s268 = scalar_lea.vmem %s7, %s267
      %p269 = scmp.lt.s32.totalorder %s18, 1
      %s270 = scalar_select %p269, %s18, 1
      %s271 = smul.addr %s270, 54
      %s272 = smul.addr %s271, 8
      %s273 = scalar_lea.vmem %s0, %s272
      %p274 = scmp.lt.s32.totalorder %s18, 1
      %s275 = scalar_select %p274, %s18, 1
      %s276 = smul.addr %s275, 32
      %s277 = smul.addr %s276, 8
      %s278 = scalar_lea.vmem %s7, %s277
      %v279 = vld [vmem:[%s273] sm:$0xff]
      %v280 = vld [vmem:[%s273 + $0x8] sm:$0xff]
      %v281 = vld [vmem:[%s273 + $0x18] sm:$0xff]
      %v282 = vld [vmem:[%s273 + $0x20] sm:$0xff]
      %v283 = vld [vmem:[%s273 + $0x30] sm:$0xff]
      %v284 = vld [vmem:[%s273 + $0x38] sm:$0xff]
      %v285 = vld [vmem:[%s273 + $0x48] sm:$0xff]
      %v286 = vld [vmem:[%s273 + $0x50] sm:$0xff]
      %v287 = vld [vmem:[%s273 + $0x60] sm:$0xff]
      %v288 = vld [vmem:[%s273 + $0x68] sm:$0xff]
      %v289 = vld [vmem:[%s273 + $0x78] sm:$0xff]
      %v290 = vld [vmem:[%s273 + $0x80] sm:$0xff]
      %v291 = vld [vmem:[%s273 + $0x90] sm:$0xff]
      %v292 = vld [vmem:[%s273 + $0x98] sm:$0xff]
      %v293 = vld [vmem:[%s273 + $0xa8] sm:$0xff]
      %v294 = vld [vmem:[%s273 + $0xb0] sm:$0xff]
      %v295 = vld [vmem:[%s273 + $0xc0] sm:$0xff]
      %v296 = vld [vmem:[%s273 + $0xc8] sm:$0xff]
      %v297 = vld [vmem:[%s273 + $0xd8] sm:$0xff]
      %v298 = vld [vmem:[%s273 + $0xe0] sm:$0xff]
      %v299 = vld [vmem:[%s273 + $0xf0] sm:$0xff]
      %v300 = vld [vmem:[%s273 + $0xf8] sm:$0xff]
      %v301 = vld [vmem:[%s273 + $0x108] sm:$0xff]
      %v302 = vld [vmem:[%s273 + $0x110] sm:$0xff]
      %v303 = vld [vmem:[%s273 + $0x120] sm:$0xff]
      %v304 = vld [vmem:[%s273 + $0x128] sm:$0xff]
      %v305 = vld [vmem:[%s273 + $0x138] sm:$0xff]
      %v306 = vld [vmem:[%s273 + $0x140] sm:$0xff]
      %v307 = vld [vmem:[%s273 + $0x150] sm:$0xff]
      %v308 = vld [vmem:[%s273 + $0x158] sm:$0xff]
      %v309 = vld [vmem:[%s273 + $0x168] sm:$0xff]
      %v310 = vld [vmem:[%s273 + $0x170] sm:$0xff]
      %v311 = vld [vmem:[%s1] sm:$0xff]
      %v312 = vld [vmem:[%s1 + $0x8] sm:$0xff]
      %v313 = vld [vmem:[%s273 + $0x1] sm:$0xff]
      %v314 = vld [vmem:[%s273 + $0x9] sm:$0xff]
      %v315 = vld [vmem:[%s273 + $0x19] sm:$0xff]
      %v316 = vld [vmem:[%s273 + $0x21] sm:$0xff]
      %v317 = vld [vmem:[%s273 + $0x31] sm:$0xff]
      %v318 = vld [vmem:[%s273 + $0x39] sm:$0xff]
      %v319 = vld [vmem:[%s273 + $0x49] sm:$0xff]
      %v320 = vld [vmem:[%s273 + $0x51] sm:$0xff]
      %v321 = vld [vmem:[%s273 + $0x61] sm:$0xff]
      %v322 = vld [vmem:[%s273 + $0x69] sm:$0xff]
      %v323 = vld [vmem:[%s273 + $0x79] sm:$0xff]
      %v324 = vld [vmem:[%s273 + $0x81] sm:$0xff]
      %v325 = vld [vmem:[%s273 + $0x91] sm:$0xff]
      %v326 = vld [vmem:[%s273 + $0x99] sm:$0xff]
      %v327 = vld [vmem:[%s273 + $0xa9] sm:$0xff]
      %v328 = vld [vmem:[%s273 + $0xb1] sm:$0xff]
      %v329 = vld [vmem:[%s273 + $0xc1] sm:$0xff]
      %v330 = vld [vmem:[%s273 + $0xc9] sm:$0xff]
      %v331 = vld [vmem:[%s273 + $0xd9] sm:$0xff]
      %v332 = vld [vmem:[%s273 + $0xe1] sm:$0xff]
      %v333 = vld [vmem:[%s273 + $0xf1] sm:$0xff]
      %v334 = vld [vmem:[%s273 + $0xf9] sm:$0xff]
      %v335 = vld [vmem:[%s273 + $0x109] sm:$0xff]
      %v336 = vld [vmem:[%s273 + $0x111] sm:$0xff]
      %v337 = vld [vmem:[%s273 + $0x121] sm:$0xff]
      %v338 = vld [vmem:[%s273 + $0x129] sm:$0xff]
      %v339 = vld [vmem:[%s273 + $0x139] sm:$0xff]
      %v340 = vld [vmem:[%s273 + $0x141] sm:$0xff]
      %v341 = vld [vmem:[%s273 + $0x151] sm:$0xff]
      %v342 = vld [vmem:[%s273 + $0x159] sm:$0xff]
      %v343 = vld [vmem:[%s273 + $0x169] sm:$0xff]
      %v344 = vld [vmem:[%s273 + $0x171] sm:$0xff]
      %s345 = scalar_lea.vmem %s1, 16
      %v346 = vld [vmem:[%s345] sm:$0xff]
      %v347 = vld [vmem:[%s345 + $0x8] sm:$0xff]
      %vm348 = vcmask 130048
      %v350 = vsel %vm348, %v313, 0
      %v353 = vsel %vm348, %v314, 0
      %v356 = vsel %vm348, %v315, 0
      %v359 = vsel %vm348, %v316, 0
      %v362 = vsel %vm348, %v317, 0
      %v365 = vsel %vm348, %v318, 0
      %v368 = vsel %vm348, %v319, 0
      %v371 = vsel %vm348, %v320, 0
      %v374 = vsel %vm348, %v321, 0
      %v377 = vsel %vm348, %v322, 0
      %v380 = vsel %vm348, %v323, 0
      %v383 = vsel %vm348, %v324, 0
      %v386 = vsel %vm348, %v325, 0
      %v389 = vsel %vm348, %v326, 0
      %v392 = vsel %vm348, %v327, 0
      %v395 = vsel %vm348, %v328, 0
      %v398 = vsel %vm348, %v329, 0
      %v401 = vsel %vm348, %v330, 0
      %v404 = vsel %vm348, %v331, 0
      %v407 = vsel %vm348, %v332, 0
      %v410 = vsel %vm348, %v333, 0
      %v413 = vsel %vm348, %v334, 0
      %v416 = vsel %vm348, %v335, 0
      %v419 = vsel %vm348, %v336, 0
      %v422 = vsel %vm348, %v337, 0
      %v425 = vsel %vm348, %v338, 0
      %v428 = vsel %vm348, %v339, 0
      %v431 = vsel %vm348, %v340, 0
      %v434 = vsel %vm348, %v341, 0
      %v437 = vsel %vm348, %v342, 0
      %v440 = vsel %vm348, %v343, 0
      %v443 = vsel %vm348, %v344, 0
      %445 = vmatprep.subr.mxu0 0.0
      %446 = vmatpush1.msra.mxu0 0.0
      %447 = vmatprep.subr.mxu0 0.0
      %448 = vmatpush1.msra.mxu0 0.0
      %449 = vmatprep.subr.mxu0 0.0
      %450 = vmatpush1.msra.mxu0 0.0
      %451 = vmatprep.subr.mxu0 0.0
      %452 = vmatpush1.msra.mxu0 0.0
      %453 = vmatprep.subr.mxu0 0.0
      %454 = vmatpush1.msra.mxu0 0.0
      %455 = vmatprep.subr.mxu0 0.0
      %456 = vmatpush1.msra.mxu0 0.0
      %457 = vmatprep.subr.mxu0 0.0
      %458 = vmatpush1.msra.mxu0 0.0
      %459 = vmatprep.subr.mxu0 0.0
      %460 = vmatpush1.msra.mxu0 0.0
      %461 = vmatprep.subr.mxu0 0.0
      %462 = vmatpush1.msra.mxu0 0.0
      %463 = vmatprep.subr.mxu0 0.0
      %464 = vmatpush1.msra.mxu0 0.0
      %465 = vmatprep.subr.mxu0 0.0
      %466 = vmatpush1.msra.mxu0 0.0
      %467 = vmatprep.subr.mxu0 0.0
      %468 = vmatpush1.msra.mxu0 0.0
      %469 = vmatprep.subr.mxu0 0.0
      %470 = vmatpush1.msra.mxu0 0.0
      %471 = vmatprep.subr.mxu0 0.0
      %472 = vmatpush1.msra.mxu0 0.0
      %473 = vmatprep.subr.mxu0 0.0
      %474 = vmatpush1.msra.mxu0 %v347
      %475 = vmatprep.subr.mxu0 0.0
      %476 = vmatpush1.msra.mxu0 %v346
      %477 = vmatprep.subr.mxu0 0.0
      %478 = vmatpush2.msra.mxu0 0.0
      %479 = vmatprep.subr.mxu0 0.0
      %480 = vmatpush2.msra.mxu0 0.0
      %481 = vmatprep.subr.mxu0 0.0
      %482 = vmatpush2.msra.mxu0 0.0
      %483 = vmatprep.subr.mxu0 0.0
      %484 = vmatpush2.msra.mxu0 0.0
      %485 = vmatprep.subr.mxu0 0.0
      %486 = vmatpush2.msra.mxu0 0.0
      %487 = vmatprep.subr.mxu0 0.0
      %488 = vmatpush2.msra.mxu0 0.0
      %489 = vmatprep.subr.mxu0 0.0
      %490 = vmatpush2.msra.mxu0 0.0
      %491 = vmatprep.subr.mxu0 0.0
      %492 = vmatpush2.msra.mxu0 0.0
      %493 = vmatprep.subr.mxu0 0.0
      %494 = vmatpush2.msra.mxu0 0.0
      %495 = vmatprep.subr.mxu0 0.0
      %496 = vmatpush2.msra.mxu0 0.0
      %497 = vmatprep.subr.mxu0 0.0
      %498 = vmatpush2.msra.mxu0 0.0
      %499 = vmatprep.subr.mxu0 0.0
      %500 = vmatpush2.msra.mxu0 0.0
      %501 = vmatprep.subr.mxu0 0.0
      %502 = vmatpush2.msra.mxu0 0.0
      %503 = vmatprep.subr.mxu0 0.0
      %504 = vmatpush2.msra.mxu0 0.0
      %505 = vmatprep.subr.mxu0 0.0
      %506 = vmatpush2.msra.mxu0 0.0
      %507 = vmatprep.subr.mxu0 0.0
      %508 = vmatpush2.msra.mxu0 0.0
      %509 = vmatprep.mubr.f32.mxu0 0.0
      %510 = vmatmul.mubr.f32.gmra.mxu0 %v350
      %v511 = vpop.f32.mrf.mxu0
      %v512 = vadd.f32 0.0, %v511
      %v513 = vpop.f32.mrf.mxu0
      %514 = vmatprep.mubr.f32.mxu0 0.0
      %515 = vmatmul.mubr.f32.gmra.mxu0 %v353
      %v516 = vpop.f32.mrf.mxu0
      %v517 = vadd.f32 0.0, %v516
      %v518 = vpop.f32.mrf.mxu0
      %519 = vmatprep.mubr.f32.mxu0 0.0
      %520 = vmatmul.mubr.f32.gmra.mxu0 %v356
      %v521 = vpop.f32.mrf.mxu0
      %v522 = vadd.f32 0.0, %v521
      %v523 = vpop.f32.mrf.mxu0
      %524 = vmatprep.mubr.f32.mxu0 0.0
      %525 = vmatmul.mubr.f32.gmra.mxu0 %v359
      %v526 = vpop.f32.mrf.mxu0
      %v527 = vadd.f32 0.0, %v526
      %v528 = vpop.f32.mrf.mxu0
      %529 = vmatprep.mubr.f32.mxu0 0.0
      %530 = vmatmul.mubr.f32.gmra.mxu0 %v362
      %v531 = vpop.f32.mrf.mxu0
      %v532 = vadd.f32 0.0, %v531
      %v533 = vpop.f32.mrf.mxu0
      %534 = vmatprep.mubr.f32.mxu0 0.0
      %535 = vmatmul.mubr.f32.gmra.mxu0 %v365
      %v536 = vpop.f32.mrf.mxu0
      %v537 = vadd.f32 0.0, %v536
      %v538 = vpop.f32.mrf.mxu0
      %539 = vmatprep.mubr.f32.mxu0 0.0
      %540 = vmatmul.mubr.f32.gmra.mxu0 %v368
      %v541 = vpop.f32.mrf.mxu0
      %v542 = vadd.f32 0.0, %v541
      %v543 = vpop.f32.mrf.mxu0
      %544 = vmatprep.mubr.f32.mxu0 0.0
      %545 = vmatmul.mubr.f32.gmra.mxu0 %v371
      %v546 = vpop.f32.mrf.mxu0
      %v547 = vadd.f32 0.0, %v546
      %v548 = vpop.f32.mrf.mxu0
      %549 = vmatprep.mubr.f32.mxu0 0.0
      %550 = vmatmul.mubr.f32.gmra.mxu0 %v374
      %v551 = vpop.f32.mrf.mxu0
      %v552 = vadd.f32 0.0, %v551
      %v553 = vpop.f32.mrf.mxu0
      %554 = vmatprep.mubr.f32.mxu0 0.0
      %555 = vmatmul.mubr.f32.gmra.mxu0 %v377
      %v556 = vpop.f32.mrf.mxu0
      %v557 = vadd.f32 0.0, %v556
      %v558 = vpop.f32.mrf.mxu0
      %559 = vmatprep.mubr.f32.mxu0 0.0
      %560 = vmatmul.mubr.f32.gmra.mxu0 %v380
      %v561 = vpop.f32.mrf.mxu0
      %v562 = vadd.f32 0.0, %v561
      %v563 = vpop.f32.mrf.mxu0
      %564 = vmatprep.mubr.f32.mxu0 0.0
      %565 = vmatmul.mubr.f32.gmra.mxu0 %v383
      %v566 = vpop.f32.mrf.mxu0
      %v567 = vadd.f32 0.0, %v566
      %v568 = vpop.f32.mrf.mxu0
      %569 = vmatprep.mubr.f32.mxu0 0.0
      %570 = vmatmul.mubr.f32.gmra.mxu0 %v386
      %v571 = vpop.f32.mrf.mxu0
      %v572 = vadd.f32 0.0, %v571
      %v573 = vpop.f32.mrf.mxu0
      %574 = vmatprep.mubr.f32.mxu0 0.0
      %575 = vmatmul.mubr.f32.gmra.mxu0 %v389
      %v576 = vpop.f32.mrf.mxu0
      %v577 = vadd.f32 0.0, %v576
      %v578 = vpop.f32.mrf.mxu0
      %579 = vmatprep.mubr.f32.mxu0 0.0
      %580 = vmatmul.mubr.f32.gmra.mxu0 %v392
      %v581 = vpop.f32.mrf.mxu0
      %v582 = vadd.f32 0.0, %v581
      %v583 = vpop.f32.mrf.mxu0
      %584 = vmatprep.mubr.f32.mxu0 0.0
      %585 = vmatmul.mubr.f32.gmra.mxu0 %v395
      %v586 = vpop.f32.mrf.mxu0
      %v587 = vadd.f32 0.0, %v586
      %v588 = vpop.f32.mrf.mxu0
      %589 = vmatprep.mubr.f32.mxu0 0.0
      %590 = vmatmul.mubr.f32.gmra.mxu0 %v398
      %v591 = vpop.f32.mrf.mxu0
      %v592 = vadd.f32 0.0, %v591
      %v593 = vpop.f32.mrf.mxu0
      %594 = vmatprep.mubr.f32.mxu0 0.0
      %595 = vmatmul.mubr.f32.gmra.mxu0 %v401
      %v596 = vpop.f32.mrf.mxu0
      %v597 = vadd.f32 0.0, %v596
      %v598 = vpop.f32.mrf.mxu0
      %599 = vmatprep.mubr.f32.mxu0 0.0
      %600 = vmatmul.mubr.f32.gmra.mxu0 %v404
      %v601 = vpop.f32.mrf.mxu0
      %v602 = vadd.f32 0.0, %v601
      %v603 = vpop.f32.mrf.mxu0
      %604 = vmatprep.mubr.f32.mxu0 0.0
      %605 = vmatmul.mubr.f32.gmra.mxu0 %v407
      %v606 = vpop.f32.mrf.mxu0
      %v607 = vadd.f32 0.0, %v606
      %v608 = vpop.f32.mrf.mxu0
      %609 = vmatprep.mubr.f32.mxu0 0.0
      %610 = vmatmul.mubr.f32.gmra.mxu0 %v410
      %v611 = vpop.f32.mrf.mxu0
      %v612 = vadd.f32 0.0, %v611
      %v613 = vpop.f32.mrf.mxu0
      %614 = vmatprep.mubr.f32.mxu0 0.0
      %615 = vmatmul.mubr.f32.gmra.mxu0 %v413
      %v616 = vpop.f32.mrf.mxu0
      %v617 = vadd.f32 0.0, %v616
      %v618 = vpop.f32.mrf.mxu0
      %619 = vmatprep.mubr.f32.mxu0 0.0
      %620 = vmatmul.mubr.f32.gmra.mxu0 %v416
      %v621 = vpop.f32.mrf.mxu0
      %v622 = vadd.f32 0.0, %v621
      %v623 = vpop.f32.mrf.mxu0
      %624 = vmatprep.mubr.f32.mxu0 0.0
      %625 = vmatmul.mubr.f32.gmra.mxu0 %v419
      %v626 = vpop.f32.mrf.mxu0
      %v627 = vadd.f32 0.0, %v626
      %v628 = vpop.f32.mrf.mxu0
      %629 = vmatprep.mubr.f32.mxu0 0.0
      %630 = vmatmul.mubr.f32.gmra.mxu0 %v422
      %v631 = vpop.f32.mrf.mxu0
      %v632 = vadd.f32 0.0, %v631
      %v633 = vpop.f32.mrf.mxu0
      %634 = vmatprep.mubr.f32.mxu0 0.0
      %635 = vmatmul.mubr.f32.gmra.mxu0 %v425
      %v636 = vpop.f32.mrf.mxu0
      %v637 = vadd.f32 0.0, %v636
      %v638 = vpop.f32.mrf.mxu0
      %639 = vmatprep.mubr.f32.mxu0 0.0
      %640 = vmatmul.mubr.f32.gmra.mxu0 %v428
      %v641 = vpop.f32.mrf.mxu0
      %v642 = vadd.f32 0.0, %v641
      %v643 = vpop.f32.mrf.mxu0
      %644 = vmatprep.mubr.f32.mxu0 0.0
      %645 = vmatmul.mubr.f32.gmra.mxu0 %v431
      %v646 = vpop.f32.mrf.mxu0
      %v647 = vadd.f32 0.0, %v646
      %v648 = vpop.f32.mrf.mxu0
      %649 = vmatprep.mubr.f32.mxu0 0.0
      %650 = vmatmul.mubr.f32.gmra.mxu0 %v434
      %v651 = vpop.f32.mrf.mxu0
      %v652 = vadd.f32 0.0, %v651
      %v653 = vpop.f32.mrf.mxu0
      %654 = vmatprep.mubr.f32.mxu0 0.0
      %655 = vmatmul.mubr.f32.gmra.mxu0 %v437
      %v656 = vpop.f32.mrf.mxu0
      %v657 = vadd.f32 0.0, %v656
      %v658 = vpop.f32.mrf.mxu0
      %659 = vmatprep.mubr.f32.mxu0 0.0
      %660 = vmatmul.mubr.f32.gmra.mxu0 %v440
      %v661 = vpop.f32.mrf.mxu0
      %v662 = vadd.f32 0.0, %v661
      %v663 = vpop.f32.mrf.mxu0
      %664 = vmatprep.mubr.f32.mxu0 0.0
      %665 = vmatmul.mubr.f32.gmra.mxu0 %v443
      %v666 = vpop.f32.mrf.mxu0
      %v667 = vadd.f32 0.0, %v666
      %v668 = vpop.f32.mrf.mxu0
      %669 = vdwg.mxu0
      %v671 = vsel %vm348, %v279, 0
      %v674 = vsel %vm348, %v280, 0
      %v677 = vsel %vm348, %v281, 0
      %v680 = vsel %vm348, %v282, 0
      %v683 = vsel %vm348, %v283, 0
      %v686 = vsel %vm348, %v284, 0
      %v689 = vsel %vm348, %v285, 0
      %v692 = vsel %vm348, %v286, 0
      %v695 = vsel %vm348, %v287, 0
      %v698 = vsel %vm348, %v288, 0
      %v701 = vsel %vm348, %v289, 0
      %v704 = vsel %vm348, %v290, 0
      %v707 = vsel %vm348, %v291, 0
      %v710 = vsel %vm348, %v292, 0
      %v713 = vsel %vm348, %v293, 0
      %v716 = vsel %vm348, %v294, 0
      %v719 = vsel %vm348, %v295, 0
      %v722 = vsel %vm348, %v296, 0
      %v725 = vsel %vm348, %v297, 0
      %v728 = vsel %vm348, %v298, 0
      %v731 = vsel %vm348, %v299, 0
      %v734 = vsel %vm348, %v300, 0
      %v737 = vsel %vm348, %v301, 0
      %v740 = vsel %vm348, %v302, 0
      %v743 = vsel %vm348, %v303, 0
      %v746 = vsel %vm348, %v304, 0
      %v749 = vsel %vm348, %v305, 0
      %v752 = vsel %vm348, %v306, 0
      %v755 = vsel %vm348, %v307, 0
      %v758 = vsel %vm348, %v308, 0
      %v761 = vsel %vm348, %v309, 0
      %v764 = vsel %vm348, %v310, 0
      %766 = vmatprep.subr.mxu0 0.0
      %767 = vmatpush1.msra.mxu0 0.0
      %768 = vmatprep.subr.mxu0 0.0
      %769 = vmatpush1.msra.mxu0 0.0
      %770 = vmatprep.subr.mxu0 0.0
      %771 = vmatpush1.msra.mxu0 0.0
      %772 = vmatprep.subr.mxu0 0.0
      %773 = vmatpush1.msra.mxu0 0.0
      %774 = vmatprep.subr.mxu0 0.0
      %775 = vmatpush1.msra.mxu0 0.0
      %776 = vmatprep.subr.mxu0 0.0
      %777 = vmatpush1.msra.mxu0 0.0
      %778 = vmatprep.subr.mxu0 0.0
      %779 = vmatpush1.msra.mxu0 0.0
      %780 = vmatprep.subr.mxu0 0.0
      %781 = vmatpush1.msra.mxu0 0.0
      %782 = vmatprep.subr.mxu0 0.0
      %783 = vmatpush1.msra.mxu0 0.0
      %784 = vmatprep.subr.mxu0 0.0
      %785 = vmatpush1.msra.mxu0 0.0
      %786 = vmatprep.subr.mxu0 0.0
      %787 = vmatpush1.msra.mxu0 0.0
      %788 = vmatprep.subr.mxu0 0.0
      %789 = vmatpush1.msra.mxu0 0.0
      %790 = vmatprep.subr.mxu0 0.0
      %791 = vmatpush1.msra.mxu0 0.0
      %792 = vmatprep.subr.mxu0 0.0
      %793 = vmatpush1.msra.mxu0 0.0
      %794 = vmatprep.subr.mxu0 0.0
      %795 = vmatpush1.msra.mxu0 %v312
      %796 = vmatprep.subr.mxu0 0.0
      %797 = vmatpush1.msra.mxu0 %v311
      %798 = vmatprep.subr.mxu0 0.0
      %799 = vmatpush2.msra.mxu0 0.0
      %800 = vmatprep.subr.mxu0 0.0
      %801 = vmatpush2.msra.mxu0 0.0
      %802 = vmatprep.subr.mxu0 0.0
      %803 = vmatpush2.msra.mxu0 0.0
      %804 = vmatprep.subr.mxu0 0.0
      %805 = vmatpush2.msra.mxu0 0.0
      %806 = vmatprep.subr.mxu0 0.0
      %807 = vmatpush2.msra.mxu0 0.0
      %808 = vmatprep.subr.mxu0 0.0
      %809 = vmatpush2.msra.mxu0 0.0
      %810 = vmatprep.subr.mxu0 0.0
      %811 = vmatpush2.msra.mxu0 0.0
      %812 = vmatprep.subr.mxu0 0.0
      %813 = vmatpush2.msra.mxu0 0.0
      %814 = vmatprep.subr.mxu0 0.0
      %815 = vmatpush2.msra.mxu0 0.0
      %816 = vmatprep.subr.mxu0 0.0
      %817 = vmatpush2.msra.mxu0 0.0
      %818 = vmatprep.subr.mxu0 0.0
      %819 = vmatpush2.msra.mxu0 0.0
      %820 = vmatprep.subr.mxu0 0.0
      %821 = vmatpush2.msra.mxu0 0.0
      %822 = vmatprep.subr.mxu0 0.0
      %823 = vmatpush2.msra.mxu0 0.0
      %824 = vmatprep.subr.mxu0 0.0
      %825 = vmatpush2.msra.mxu0 0.0
      %826 = vmatprep.subr.mxu0 0.0
      %827 = vmatpush2.msra.mxu0 0.0
      %828 = vmatprep.subr.mxu0 0.0
      %829 = vmatpush2.msra.mxu0 0.0
      %830 = vmatprep.mubr.f32.mxu0 0.0
      %831 = vmatmul.mubr.f32.gmra.mxu0 %v671
      %v832 = vpop.f32.mrf.mxu0
      %v833 = vadd.f32 %v512, %v832
      %v834 = vpop.f32.mrf.mxu0
      %835 = vmatprep.mubr.f32.mxu0 0.0
      %836 = vmatmul.mubr.f32.gmra.mxu0 %v674
      %v837 = vpop.f32.mrf.mxu0
      %v838 = vadd.f32 %v517, %v837
      %v839 = vpop.f32.mrf.mxu0
      %840 = vmatprep.mubr.f32.mxu0 0.0
      %841 = vmatmul.mubr.f32.gmra.mxu0 %v677
      %v842 = vpop.f32.mrf.mxu0
      %v843 = vadd.f32 %v522, %v842
      %v844 = vpop.f32.mrf.mxu0
      %845 = vmatprep.mubr.f32.mxu0 0.0
      %846 = vmatmul.mubr.f32.gmra.mxu0 %v680
      %v847 = vpop.f32.mrf.mxu0
      %v848 = vadd.f32 %v527, %v847
      %v849 = vpop.f32.mrf.mxu0
      %850 = vmatprep.mubr.f32.mxu0 0.0
      %851 = vmatmul.mubr.f32.gmra.mxu0 %v683
      %v852 = vpop.f32.mrf.mxu0
      %v853 = vadd.f32 %v532, %v852
      %v854 = vpop.f32.mrf.mxu0
      %855 = vmatprep.mubr.f32.mxu0 0.0
      %856 = vmatmul.mubr.f32.gmra.mxu0 %v686
      %v857 = vpop.f32.mrf.mxu0
      %v858 = vadd.f32 %v537, %v857
      %v859 = vpop.f32.mrf.mxu0
      %860 = vmatprep.mubr.f32.mxu0 0.0
      %861 = vmatmul.mubr.f32.gmra.mxu0 %v689
      %v862 = vpop.f32.mrf.mxu0
      %v863 = vadd.f32 %v542, %v862
      %v864 = vpop.f32.mrf.mxu0
      %865 = vmatprep.mubr.f32.mxu0 0.0
      %866 = vmatmul.mubr.f32.gmra.mxu0 %v692
      %v867 = vpop.f32.mrf.mxu0
      %v868 = vadd.f32 %v547, %v867
      %v869 = vpop.f32.mrf.mxu0
      %870 = vmatprep.mubr.f32.mxu0 0.0
      %871 = vmatmul.mubr.f32.gmra.mxu0 %v695
      %v872 = vpop.f32.mrf.mxu0
      %v873 = vadd.f32 %v552, %v872
      %v874 = vpop.f32.mrf.mxu0
      %875 = vmatprep.mubr.f32.mxu0 0.0
      %876 = vmatmul.mubr.f32.gmra.mxu0 %v698
      %v877 = vpop.f32.mrf.mxu0
      %v878 = vadd.f32 %v557, %v877
      %v879 = vpop.f32.mrf.mxu0
      %880 = vmatprep.mubr.f32.mxu0 0.0
      %881 = vmatmul.mubr.f32.gmra.mxu0 %v701
      %v882 = vpop.f32.mrf.mxu0
      %v883 = vadd.f32 %v562, %v882
      %v884 = vpop.f32.mrf.mxu0
      %885 = vmatprep.mubr.f32.mxu0 0.0
      %886 = vmatmul.mubr.f32.gmra.mxu0 %v704
      %v887 = vpop.f32.mrf.mxu0
      %v888 = vadd.f32 %v567, %v887
      %v889 = vpop.f32.mrf.mxu0
      %890 = vmatprep.mubr.f32.mxu0 0.0
      %891 = vmatmul.mubr.f32.gmra.mxu0 %v707
      %v892 = vpop.f32.mrf.mxu0
      %v893 = vadd.f32 %v572, %v892
      %v894 = vpop.f32.mrf.mxu0
      %895 = vmatprep.mubr.f32.mxu0 0.0
      %896 = vmatmul.mubr.f32.gmra.mxu0 %v710
      %v897 = vpop.f32.mrf.mxu0
      %v898 = vadd.f32 %v577, %v897
      %v899 = vpop.f32.mrf.mxu0
      %900 = vmatprep.mubr.f32.mxu0 0.0
      %901 = vmatmul.mubr.f32.gmra.mxu0 %v713
      %v902 = vpop.f32.mrf.mxu0
      %v903 = vadd.f32 %v582, %v902
      %v904 = vpop.f32.mrf.mxu0
      %905 = vmatprep.mubr.f32.mxu0 0.0
      %906 = vmatmul.mubr.f32.gmra.mxu0 %v716
      %v907 = vpop.f32.mrf.mxu0
      %v908 = vadd.f32 %v587, %v907
      %v909 = vpop.f32.mrf.mxu0
      %910 = vmatprep.mubr.f32.mxu0 0.0
      %911 = vmatmul.mubr.f32.gmra.mxu0 %v719
      %v912 = vpop.f32.mrf.mxu0
      %v913 = vadd.f32 %v592, %v912
      %v914 = vpop.f32.mrf.mxu0
      %915 = vmatprep.mubr.f32.mxu0 0.0
      %916 = vmatmul.mubr.f32.gmra.mxu0 %v722
      %v917 = vpop.f32.mrf.mxu0
      %v918 = vadd.f32 %v597, %v917
      %v919 = vpop.f32.mrf.mxu0
      %920 = vmatprep.mubr.f32.mxu0 0.0
      %921 = vmatmul.mubr.f32.gmra.mxu0 %v725
      %v922 = vpop.f32.mrf.mxu0
      %v923 = vadd.f32 %v602, %v922
      %v924 = vpop.f32.mrf.mxu0
      %925 = vmatprep.mubr.f32.mxu0 0.0
      %926 = vmatmul.mubr.f32.gmra.mxu0 %v728
      %v927 = vpop.f32.mrf.mxu0
      %v928 = vadd.f32 %v607, %v927
      %v929 = vpop.f32.mrf.mxu0
      %930 = vmatprep.mubr.f32.mxu0 0.0
      %931 = vmatmul.mubr.f32.gmra.mxu0 %v731
      %v932 = vpop.f32.mrf.mxu0
      %v933 = vadd.f32 %v612, %v932
      %v934 = vpop.f32.mrf.mxu0
      %935 = vmatprep.mubr.f32.mxu0 0.0
      %936 = vmatmul.mubr.f32.gmra.mxu0 %v734
      %v937 = vpop.f32.mrf.mxu0
      %v938 = vadd.f32 %v617, %v937
      %v939 = vpop.f32.mrf.mxu0
      %940 = vmatprep.mubr.f32.mxu0 0.0
      %941 = vmatmul.mubr.f32.gmra.mxu0 %v737
      %v942 = vpop.f32.mrf.mxu0
      %v943 = vadd.f32 %v622, %v942
      %v944 = vpop.f32.mrf.mxu0
      %945 = vmatprep.mubr.f32.mxu0 0.0
      %946 = vmatmul.mubr.f32.gmra.mxu0 %v740
      %v947 = vpop.f32.mrf.mxu0
      %v948 = vadd.f32 %v627, %v947
      %v949 = vpop.f32.mrf.mxu0
      %950 = vmatprep.mubr.f32.mxu0 0.0
      %951 = vmatmul.mubr.f32.gmra.mxu0 %v743
      %v952 = vpop.f32.mrf.mxu0
      %v953 = vadd.f32 %v632, %v952
      %v954 = vpop.f32.mrf.mxu0
      %955 = vmatprep.mubr.f32.mxu0 0.0
      %956 = vmatmul.mubr.f32.gmra.mxu0 %v746
      %v957 = vpop.f32.mrf.mxu0
      %v958 = vadd.f32 %v637, %v957
      %v959 = vpop.f32.mrf.mxu0
      %960 = vmatprep.mubr.f32.mxu0 0.0
      %961 = vmatmul.mubr.f32.gmra.mxu0 %v749
      %v962 = vpop.f32.mrf.mxu0
      %v963 = vadd.f32 %v642, %v962
      %v964 = vpop.f32.mrf.mxu0
      %965 = vmatprep.mubr.f32.mxu0 0.0
      %966 = vmatmul.mubr.f32.gmra.mxu0 %v752
      %v967 = vpop.f32.mrf.mxu0
      %v968 = vadd.f32 %v647, %v967
      %v969 = vpop.f32.mrf.mxu0
      %970 = vmatprep.mubr.f32.mxu0 0.0
      %971 = vmatmul.mubr.f32.gmra.mxu0 %v755
      %v972 = vpop.f32.mrf.mxu0
      %v973 = vadd.f32 %v652, %v972
      %v974 = vpop.f32.mrf.mxu0
      %975 = vmatprep.mubr.f32.mxu0 0.0
      %976 = vmatmul.mubr.f32.gmra.mxu0 %v758
      %v977 = vpop.f32.mrf.mxu0
      %v978 = vadd.f32 %v657, %v977
      %v979 = vpop.f32.mrf.mxu0
      %980 = vmatprep.mubr.f32.mxu0 0.0
      %981 = vmatmul.mubr.f32.gmra.mxu0 %v761
      %v982 = vpop.f32.mrf.mxu0
      %v983 = vadd.f32 %v662, %v982
      %v984 = vpop.f32.mrf.mxu0
      %985 = vmatprep.mubr.f32.mxu0 0.0
      %986 = vmatmul.mubr.f32.gmra.mxu0 %v764
      %v987 = vpop.f32.mrf.mxu0
      %v988 = vadd.f32 %v667, %v987
      %v989 = vpop.f32.mrf.mxu0
      %990 = vdwg.mxu0
      %v991 = vld [vmem:[%s273 + $0x2] sm:$0xff]
      %v992 = vld [vmem:[%s273 + $0xa] sm:$0xff]
      %v993 = vld [vmem:[%s273 + $0x1a] sm:$0xff]
      %v994 = vld [vmem:[%s273 + $0x22] sm:$0xff]
      %v995 = vld [vmem:[%s273 + $0x32] sm:$0xff]
      %v996 = vld [vmem:[%s273 + $0x3a] sm:$0xff]
      %v997 = vld [vmem:[%s273 + $0x4a] sm:$0xff]
      %v998 = vld [vmem:[%s273 + $0x52] sm:$0xff]
      %v999 = vld [vmem:[%s273 + $0x62] sm:$0xff]
      %v1000 = vld [vmem:[%s273 + $0x6a] sm:$0xff]
      %v1001 = vld [vmem:[%s273 + $0x7a] sm:$0xff]
      %v1002 = vld [vmem:[%s273 + $0x82] sm:$0xff]
      %v1003 = vld [vmem:[%s273 + $0x92] sm:$0xff]
      %v1004 = vld [vmem:[%s273 + $0x9a] sm:$0xff]
      %v1005 = vld [vmem:[%s273 + $0xaa] sm:$0xff]
      %v1006 = vld [vmem:[%s273 + $0xb2] sm:$0xff]
      %v1007 = vld [vmem:[%s273 + $0xc2] sm:$0xff]
      %v1008 = vld [vmem:[%s273 + $0xca] sm:$0xff]
      %v1009 = vld [vmem:[%s273 + $0xda] sm:$0xff]
      %v1010 = vld [vmem:[%s273 + $0xe2] sm:$0xff]
      %v1011 = vld [vmem:[%s273 + $0xf2] sm:$0xff]
      %v1012 = vld [vmem:[%s273 + $0xfa] sm:$0xff]
      %v1013 = vld [vmem:[%s273 + $0x10a] sm:$0xff]
      %v1014 = vld [vmem:[%s273 + $0x112] sm:$0xff]
      %v1015 = vld [vmem:[%s273 + $0x122] sm:$0xff]
      %v1016 = vld [vmem:[%s273 + $0x12a] sm:$0xff]
      %v1017 = vld [vmem:[%s273 + $0x13a] sm:$0xff]
      %v1018 = vld [vmem:[%s273 + $0x142] sm:$0xff]
      %v1019 = vld [vmem:[%s273 + $0x152] sm:$0xff]
      %v1020 = vld [vmem:[%s273 + $0x15a] sm:$0xff]
      %v1021 = vld [vmem:[%s273 + $0x16a] sm:$0xff]
      %v1022 = vld [vmem:[%s273 + $0x172] sm:$0xff]
      %s1023 = scalar_lea.vmem %s1, 32
      %v1024 = vld [vmem:[%s1023] sm:$0xff]
      %v1025 = vld [vmem:[%s1023 + $0x8] sm:$0xff]
      %v1027 = vsel %vm348, %v991, 0
      %v1030 = vsel %vm348, %v992, 0
      %v1033 = vsel %vm348, %v993, 0
      %v1036 = vsel %vm348, %v994, 0
      %v1039 = vsel %vm348, %v995, 0
      %v1042 = vsel %vm348, %v996, 0
      %v1045 = vsel %vm348, %v997, 0
      %v1048 = vsel %vm348, %v998, 0
      %v1051 = vsel %vm348, %v999, 0
      %v1054 = vsel %vm348, %v1000, 0
      %v1057 = vsel %vm348, %v1001, 0
      %v1060 = vsel %vm348, %v1002, 0
      %v1063 = vsel %vm348, %v1003, 0
      %v1066 = vsel %vm348, %v1004, 0
      %v1069 = vsel %vm348, %v1005, 0
      %v1072 = vsel %vm348, %v1006, 0
      %v1075 = vsel %vm348, %v1007, 0
      %v1078 = vsel %vm348, %v1008, 0
      %v1081 = vsel %vm348, %v1009, 0
      %v1084 = vsel %vm348, %v1010, 0
      %v1087 = vsel %vm348, %v1011, 0
      %v1090 = vsel %vm348, %v1012, 0
      %v1093 = vsel %vm348, %v1013, 0
      %v1096 = vsel %vm348, %v1014, 0
      %v1099 = vsel %vm348, %v1015, 0
      %v1102 = vsel %vm348, %v1016, 0
      %v1105 = vsel %vm348, %v1017, 0
      %v1108 = vsel %vm348, %v1018, 0
      %v1111 = vsel %vm348, %v1019, 0
      %v1114 = vsel %vm348, %v1020, 0
      %v1117 = vsel %vm348, %v1021, 0
      %v1120 = vsel %vm348, %v1022, 0
      %1122 = vmatprep.subr.mxu0 0.0
      %1123 = vmatpush1.msra.mxu0 0.0
      %1124 = vmatprep.subr.mxu0 0.0
      %1125 = vmatpush1.msra.mxu0 0.0
      %1126 = vmatprep.subr.mxu0 0.0
      %1127 = vmatpush1.msra.mxu0 0.0
      %1128 = vmatprep.subr.mxu0 0.0
      %1129 = vmatpush1.msra.mxu0 0.0
      %1130 = vmatprep.subr.mxu0 0.0
      %1131 = vmatpush1.msra.mxu0 0.0
      %1132 = vmatprep.subr.mxu0 0.0
      %1133 = vmatpush1.msra.mxu0 0.0
      %1134 = vmatprep.subr.mxu0 0.0
      %1135 = vmatpush1.msra.mxu0 0.0
      %1136 = vmatprep.subr.mxu0 0.0
      %1137 = vmatpush1.msra.mxu0 0.0
      %1138 = vmatprep.subr.mxu0 0.0
      %1139 = vmatpush1.msra.mxu0 0.0
      %1140 = vmatprep.subr.mxu0 0.0
      %1141 = vmatpush1.msra.mxu0 0.0
      %1142 = vmatprep.subr.mxu0 0.0
      %1143 = vmatpush1.msra.mxu0 0.0
      %1144 = vmatprep.subr.mxu0 0.0
      %1145 = vmatpush1.msra.mxu0 0.0
      %1146 = vmatprep.subr.mxu0 0.0
      %1147 = vmatpush1.msra.mxu0 0.0
      %1148 = vmatprep.subr.mxu0 0.0
      %1149 = vmatpush1.msra.mxu0 0.0
      %1150 = vmatprep.subr.mxu0 0.0
      %1151 = vmatpush1.msra.mxu0 %v1025
      %1152 = vmatprep.subr.mxu0 0.0
      %1153 = vmatpush1.msra.mxu0 %v1024
      %1154 = vmatprep.subr.mxu0 0.0
      %1155 = vmatpush2.msra.mxu0 0.0
      %1156 = vmatprep.subr.mxu0 0.0
      %1157 = vmatpush2.msra.mxu0 0.0
      %1158 = vmatprep.subr.mxu0 0.0
      %1159 = vmatpush2.msra.mxu0 0.0
      %1160 = vmatprep.subr.mxu0 0.0
      %1161 = vmatpush2.msra.mxu0 0.0
      %1162 = vmatprep.subr.mxu0 0.0
      %1163 = vmatpush2.msra.mxu0 0.0
      %1164 = vmatprep.subr.mxu0 0.0
      %1165 = vmatpush2.msra.mxu0 0.0
      %1166 = vmatprep.subr.mxu0 0.0
      %1167 = vmatpush2.msra.mxu0 0.0
      %1168 = vmatprep.subr.mxu0 0.0
      %1169 = vmatpush2.msra.mxu0 0.0
      %1170 = vmatprep.subr.mxu0 0.0
      %1171 = vmatpush2.msra.mxu0 0.0
      %1172 = vmatprep.subr.mxu0 0.0
      %1173 = vmatpush2.msra.mxu0 0.0
      %1174 = vmatprep.subr.mxu0 0.0
      %1175 = vmatpush2.msra.mxu0 0.0
      %1176 = vmatprep.subr.mxu0 0.0
      %1177 = vmatpush2.msra.mxu0 0.0
      %1178 = vmatprep.subr.mxu0 0.0
      %1179 = vmatpush2.msra.mxu0 0.0
      %1180 = vmatprep.subr.mxu0 0.0
      %1181 = vmatpush2.msra.mxu0 0.0
      %1182 = vmatprep.subr.mxu0 0.0
      %1183 = vmatpush2.msra.mxu0 0.0
      %1184 = vmatprep.subr.mxu0 0.0
      %1185 = vmatpush2.msra.mxu0 0.0
      %1186 = vmatprep.mubr.f32.mxu0 0.0
      %1187 = vmatmul.mubr.f32.gmra.mxu0 %v1027
      %v1188 = vpop.f32.mrf.mxu0
      %v1189 = vadd.f32 0.0, %v1188
      %v1190 = vpop.f32.mrf.mxu0
      %1191 = vmatprep.mubr.f32.mxu0 0.0
      %1192 = vmatmul.mubr.f32.gmra.mxu0 %v1030
      %v1193 = vpop.f32.mrf.mxu0
      %v1194 = vadd.f32 0.0, %v1193
      %v1195 = vpop.f32.mrf.mxu0
      %1196 = vmatprep.mubr.f32.mxu0 0.0
      %1197 = vmatmul.mubr.f32.gmra.mxu0 %v1033
      %v1198 = vpop.f32.mrf.mxu0
      %v1199 = vadd.f32 0.0, %v1198
      %v1200 = vpop.f32.mrf.mxu0
      %1201 = vmatprep.mubr.f32.mxu0 0.0
      %1202 = vmatmul.mubr.f32.gmra.mxu0 %v1036
      %v1203 = vpop.f32.mrf.mxu0
      %v1204 = vadd.f32 0.0, %v1203
      %v1205 = vpop.f32.mrf.mxu0
      %1206 = vmatprep.mubr.f32.mxu0 0.0
      %1207 = vmatmul.mubr.f32.gmra.mxu0 %v1039
      %v1208 = vpop.f32.mrf.mxu0
      %v1209 = vadd.f32 0.0, %v1208
      %v1210 = vpop.f32.mrf.mxu0
      %1211 = vmatprep.mubr.f32.mxu0 0.0
      %1212 = vmatmul.mubr.f32.gmra.mxu0 %v1042
      %v1213 = vpop.f32.mrf.mxu0
      %v1214 = vadd.f32 0.0, %v1213
      %v1215 = vpop.f32.mrf.mxu0
      %1216 = vmatprep.mubr.f32.mxu0 0.0
      %1217 = vmatmul.mubr.f32.gmra.mxu0 %v1045
      %v1218 = vpop.f32.mrf.mxu0
      %v1219 = vadd.f32 0.0, %v1218
      %v1220 = vpop.f32.mrf.mxu0
      %1221 = vmatprep.mubr.f32.mxu0 0.0
      %1222 = vmatmul.mubr.f32.gmra.mxu0 %v1048
      %v1223 = vpop.f32.mrf.mxu0
      %v1224 = vadd.f32 0.0, %v1223
      %v1225 = vpop.f32.mrf.mxu0
      %1226 = vmatprep.mubr.f32.mxu0 0.0
      %1227 = vmatmul.mubr.f32.gmra.mxu0 %v1051
      %v1228 = vpop.f32.mrf.mxu0
      %v1229 = vadd.f32 0.0, %v1228
      %v1230 = vpop.f32.mrf.mxu0
      %1231 = vmatprep.mubr.f32.mxu0 0.0
      %1232 = vmatmul.mubr.f32.gmra.mxu0 %v1054
      %v1233 = vpop.f32.mrf.mxu0
      %v1234 = vadd.f32 0.0, %v1233
      %v1235 = vpop.f32.mrf.mxu0
      %1236 = vmatprep.mubr.f32.mxu0 0.0
      %1237 = vmatmul.mubr.f32.gmra.mxu0 %v1057
      %v1238 = vpop.f32.mrf.mxu0
      %v1239 = vadd.f32 0.0, %v1238
      %v1240 = vpop.f32.mrf.mxu0
      %1241 = vmatprep.mubr.f32.mxu0 0.0
      %1242 = vmatmul.mubr.f32.gmra.mxu0 %v1060
      %v1243 = vpop.f32.mrf.mxu0
      %v1244 = vadd.f32 0.0, %v1243
      %v1245 = vpop.f32.mrf.mxu0
      %1246 = vmatprep.mubr.f32.mxu0 0.0
      %1247 = vmatmul.mubr.f32.gmra.mxu0 %v1063
      %v1248 = vpop.f32.mrf.mxu0
      %v1249 = vadd.f32 0.0, %v1248
      %v1250 = vpop.f32.mrf.mxu0
      %1251 = vmatprep.mubr.f32.mxu0 0.0
      %1252 = vmatmul.mubr.f32.gmra.mxu0 %v1066
      %v1253 = vpop.f32.mrf.mxu0
      %v1254 = vadd.f32 0.0, %v1253
      %v1255 = vpop.f32.mrf.mxu0
      %1256 = vmatprep.mubr.f32.mxu0 0.0
      %1257 = vmatmul.mubr.f32.gmra.mxu0 %v1069
      %v1258 = vpop.f32.mrf.mxu0
      %v1259 = vadd.f32 0.0, %v1258
      %v1260 = vpop.f32.mrf.mxu0
      %1261 = vmatprep.mubr.f32.mxu0 0.0
      %1262 = vmatmul.mubr.f32.gmra.mxu0 %v1072
      %v1263 = vpop.f32.mrf.mxu0
      %v1264 = vadd.f32 0.0, %v1263
      %v1265 = vpop.f32.mrf.mxu0
      %1266 = vmatprep.mubr.f32.mxu0 0.0
      %1267 = vmatmul.mubr.f32.gmra.mxu0 %v1075
      %v1268 = vpop.f32.mrf.mxu0
      %v1269 = vadd.f32 0.0, %v1268
      %v1270 = vpop.f32.mrf.mxu0
      %1271 = vmatprep.mubr.f32.mxu0 0.0
      %1272 = vmatmul.mubr.f32.gmra.mxu0 %v1078
      %v1273 = vpop.f32.mrf.mxu0
      %v1274 = vadd.f32 0.0, %v1273
      %v1275 = vpop.f32.mrf.mxu0
      %1276 = vmatprep.mubr.f32.mxu0 0.0
      %1277 = vmatmul.mubr.f32.gmra.mxu0 %v1081
      %v1278 = vpop.f32.mrf.mxu0
      %v1279 = vadd.f32 0.0, %v1278
      %v1280 = vpop.f32.mrf.mxu0
      %1281 = vmatprep.mubr.f32.mxu0 0.0
      %1282 = vmatmul.mubr.f32.gmra.mxu0 %v1084
      %v1283 = vpop.f32.mrf.mxu0
      %v1284 = vadd.f32 0.0, %v1283
      %v1285 = vpop.f32.mrf.mxu0
      %1286 = vmatprep.mubr.f32.mxu0 0.0
      %1287 = vmatmul.mubr.f32.gmra.mxu0 %v1087
      %v1288 = vpop.f32.mrf.mxu0
      %v1289 = vadd.f32 0.0, %v1288
      %v1290 = vpop.f32.mrf.mxu0
      %1291 = vmatprep.mubr.f32.mxu0 0.0
      %1292 = vmatmul.mubr.f32.gmra.mxu0 %v1090
      %v1293 = vpop.f32.mrf.mxu0
      %v1294 = vadd.f32 0.0, %v1293
      %v1295 = vpop.f32.mrf.mxu0
      %1296 = vmatprep.mubr.f32.mxu0 0.0
      %1297 = vmatmul.mubr.f32.gmra.mxu0 %v1093
      %v1298 = vpop.f32.mrf.mxu0
      %v1299 = vadd.f32 0.0, %v1298
      %v1300 = vpop.f32.mrf.mxu0
      %1301 = vmatprep.mubr.f32.mxu0 0.0
      %1302 = vmatmul.mubr.f32.gmra.mxu0 %v1096
      %v1303 = vpop.f32.mrf.mxu0
      %v1304 = vadd.f32 0.0, %v1303
      %v1305 = vpop.f32.mrf.mxu0
      %1306 = vmatprep.mubr.f32.mxu0 0.0
      %1307 = vmatmul.mubr.f32.gmra.mxu0 %v1099
      %v1308 = vpop.f32.mrf.mxu0
      %v1309 = vadd.f32 0.0, %v1308
      %v1310 = vpop.f32.mrf.mxu0
      %1311 = vmatprep.mubr.f32.mxu0 0.0
      %1312 = vmatmul.mubr.f32.gmra.mxu0 %v1102
      %v1313 = vpop.f32.mrf.mxu0
      %v1314 = vadd.f32 0.0, %v1313
      %v1315 = vpop.f32.mrf.mxu0
      %1316 = vmatprep.mubr.f32.mxu0 0.0
      %1317 = vmatmul.mubr.f32.gmra.mxu0 %v1105
      %v1318 = vpop.f32.mrf.mxu0
      %v1319 = vadd.f32 0.0, %v1318
      %v1320 = vpop.f32.mrf.mxu0
      %1321 = vmatprep.mubr.f32.mxu0 0.0
      %1322 = vmatmul.mubr.f32.gmra.mxu0 %v1108
      %v1323 = vpop.f32.mrf.mxu0
      %v1324 = vadd.f32 0.0, %v1323
      %v1325 = vpop.f32.mrf.mxu0
      %1326 = vmatprep.mubr.f32.mxu0 0.0
      %1327 = vmatmul.mubr.f32.gmra.mxu0 %v1111
      %v1328 = vpop.f32.mrf.mxu0
      %v1329 = vadd.f32 0.0, %v1328
      %v1330 = vpop.f32.mrf.mxu0
      %1331 = vmatprep.mubr.f32.mxu0 0.0
      %1332 = vmatmul.mubr.f32.gmra.mxu0 %v1114
      %v1333 = vpop.f32.mrf.mxu0
      %v1334 = vadd.f32 0.0, %v1333
      %v1335 = vpop.f32.mrf.mxu0
      %1336 = vmatprep.mubr.f32.mxu0 0.0
      %1337 = vmatmul.mubr.f32.gmra.mxu0 %v1117
      %v1338 = vpop.f32.mrf.mxu0
      %v1339 = vadd.f32 0.0, %v1338
      %v1340 = vpop.f32.mrf.mxu0
      %1341 = vmatprep.mubr.f32.mxu0 0.0
      %1342 = vmatmul.mubr.f32.gmra.mxu0 %v1120
      %v1343 = vpop.f32.mrf.mxu0
      %v1344 = vadd.f32 0.0, %v1343
      %v1345 = vpop.f32.mrf.mxu0
      %1346 = vdwg.mxu0
      %v1347 = vadd.f32 %v833, %v1189
      %v1348 = vadd.f32 %v838, %v1194
      %v1349 = vadd.f32 %v843, %v1199
      %v1350 = vadd.f32 %v848, %v1204
      %v1351 = vadd.f32 %v853, %v1209
      %v1352 = vadd.f32 %v858, %v1214
      %v1353 = vadd.f32 %v863, %v1219
      %v1354 = vadd.f32 %v868, %v1224
      %v1355 = vadd.f32 %v873, %v1229
      %v1356 = vadd.f32 %v878, %v1234
      %v1357 = vadd.f32 %v883, %v1239
      %v1358 = vadd.f32 %v888, %v1244
      %v1359 = vadd.f32 %v893, %v1249
      %v1360 = vadd.f32 %v898, %v1254
      %v1361 = vadd.f32 %v903, %v1259
      %v1362 = vadd.f32 %v908, %v1264
      %v1363 = vadd.f32 %v913, %v1269
      %v1364 = vadd.f32 %v918, %v1274
      %v1365 = vadd.f32 %v923, %v1279
      %v1366 = vadd.f32 %v928, %v1284
      %v1367 = vadd.f32 %v933, %v1289
      %v1368 = vadd.f32 %v938, %v1294
      %v1369 = vadd.f32 %v943, %v1299
      %v1370 = vadd.f32 %v948, %v1304
      %v1371 = vadd.f32 %v953, %v1309
      %v1372 = vadd.f32 %v958, %v1314
      %v1373 = vadd.f32 %v963, %v1319
      %v1374 = vadd.f32 %v968, %v1324
      %v1375 = vadd.f32 %v973, %v1329
      %v1376 = vadd.f32 %v978, %v1334
      %v1377 = vadd.f32 %v983, %v1339
      %v1378 = vadd.f32 %v988, %v1344
      %s1379 = scalar_lea.vmem %s273, 24
      %v1380 = vld [vmem:[%s1379] sm:$0xff]
      %v1381 = vld [vmem:[%s1379 + $0x8] sm:$0xff]
      %v1382 = vld [vmem:[%s1379 + $0x18] sm:$0xff]
      %v1383 = vld [vmem:[%s1379 + $0x20] sm:$0xff]
      %v1384 = vld [vmem:[%s1379 + $0x30] sm:$0xff]
      %v1385 = vld [vmem:[%s1379 + $0x38] sm:$0xff]
      %v1386 = vld [vmem:[%s1379 + $0x48] sm:$0xff]
      %v1387 = vld [vmem:[%s1379 + $0x50] sm:$0xff]
      %v1388 = vld [vmem:[%s1379 + $0x60] sm:$0xff]
      %v1389 = vld [vmem:[%s1379 + $0x68] sm:$0xff]
      %v1390 = vld [vmem:[%s1379 + $0x78] sm:$0xff]
      %v1391 = vld [vmem:[%s1379 + $0x80] sm:$0xff]
      %v1392 = vld [vmem:[%s1379 + $0x90] sm:$0xff]
      %v1393 = vld [vmem:[%s1379 + $0x98] sm:$0xff]
      %v1394 = vld [vmem:[%s1379 + $0xa8] sm:$0xff]
      %v1395 = vld [vmem:[%s1379 + $0xb0] sm:$0xff]
      %v1396 = vld [vmem:[%s1379 + $0xc0] sm:$0xff]
      %v1397 = vld [vmem:[%s1379 + $0xc8] sm:$0xff]
      %v1398 = vld [vmem:[%s1379 + $0xd8] sm:$0xff]
      %v1399 = vld [vmem:[%s1379 + $0xe0] sm:$0xff]
      %v1400 = vld [vmem:[%s1379 + $0xf0] sm:$0xff]
      %v1401 = vld [vmem:[%s1379 + $0xf8] sm:$0xff]
      %v1402 = vld [vmem:[%s1379 + $0x108] sm:$0xff]
      %v1403 = vld [vmem:[%s1379 + $0x110] sm:$0xff]
      %v1404 = vld [vmem:[%s1379 + $0x120] sm:$0xff]
      %v1405 = vld [vmem:[%s1379 + $0x128] sm:$0xff]
      %v1406 = vld [vmem:[%s1379 + $0x138] sm:$0xff]
      %v1407 = vld [vmem:[%s1379 + $0x140] sm:$0xff]
      %v1408 = vld [vmem:[%s1379 + $0x150] sm:$0xff]
      %v1409 = vld [vmem:[%s1379 + $0x158] sm:$0xff]
      %v1410 = vld [vmem:[%s1379 + $0x168] sm:$0xff]
      %v1411 = vld [vmem:[%s1379 + $0x170] sm:$0xff]
      %s1412 = scalar_lea.vmem %s1, 48
      %v1413 = vld [vmem:[%s1412] sm:$0xff]
      %v1414 = vld [vmem:[%s1412 + $0x8] sm:$0xff]
      %v1416 = vsel %vm348, %v1380, 0
      %v1419 = vsel %vm348, %v1381, 0
      %v1422 = vsel %vm348, %v1382, 0
      %v1425 = vsel %vm348, %v1383, 0
      %v1428 = vsel %vm348, %v1384, 0
      %v1431 = vsel %vm348, %v1385, 0
      %v1434 = vsel %vm348, %v1386, 0
      %v1437 = vsel %vm348, %v1387, 0
      %v1440 = vsel %vm348, %v1388, 0
      %v1443 = vsel %vm348, %v1389, 0
      %v1446 = vsel %vm348, %v1390, 0
      %v1449 = vsel %vm348, %v1391, 0
      %v1452 = vsel %vm348, %v1392, 0
      %v1455 = vsel %vm348, %v1393, 0
      %v1458 = vsel %vm348, %v1394, 0
      %v1461 = vsel %vm348, %v1395, 0
      %v1464 = vsel %vm348, %v1396, 0
      %v1467 = vsel %vm348, %v1397, 0
      %v1470 = vsel %vm348, %v1398, 0
      %v1473 = vsel %vm348, %v1399, 0
      %v1476 = vsel %vm348, %v1400, 0
      %v1479 = vsel %vm348, %v1401, 0
      %v1482 = vsel %vm348, %v1402, 0
      %v1485 = vsel %vm348, %v1403, 0
      %v1488 = vsel %vm348, %v1404, 0
      %v1491 = vsel %vm348, %v1405, 0
      %v1494 = vsel %vm348, %v1406, 0
      %v1497 = vsel %vm348, %v1407, 0
      %v1500 = vsel %vm348, %v1408, 0
      %v1503 = vsel %vm348, %v1409, 0
      %v1506 = vsel %vm348, %v1410, 0
      %v1509 = vsel %vm348, %v1411, 0
      %1511 = vmatprep.subr.mxu0 0.0
      %1512 = vmatpush1.msra.mxu0 0.0
      %1513 = vmatprep.subr.mxu0 0.0
      %1514 = vmatpush1.msra.mxu0 0.0
      %1515 = vmatprep.subr.mxu0 0.0
      %1516 = vmatpush1.msra.mxu0 0.0
      %1517 = vmatprep.subr.mxu0 0.0
      %1518 = vmatpush1.msra.mxu0 0.0
      %1519 = vmatprep.subr.mxu0 0.0
      %1520 = vmatpush1.msra.mxu0 0.0
      %1521 = vmatprep.subr.mxu0 0.0
      %1522 = vmatpush1.msra.mxu0 0.0
      %1523 = vmatprep.subr.mxu0 0.0
      %1524 = vmatpush1.msra.mxu0 0.0
      %1525 = vmatprep.subr.mxu0 0.0
      %1526 = vmatpush1.msra.mxu0 0.0
      %1527 = vmatprep.subr.mxu0 0.0
      %1528 = vmatpush1.msra.mxu0 0.0
      %1529 = vmatprep.subr.mxu0 0.0
      %1530 = vmatpush1.msra.mxu0 0.0
      %1531 = vmatprep.subr.mxu0 0.0
      %1532 = vmatpush1.msra.mxu0 0.0
      %1533 = vmatprep.subr.mxu0 0.0
      %1534 = vmatpush1.msra.mxu0 0.0
      %1535 = vmatprep.subr.mxu0 0.0
      %1536 = vmatpush1.msra.mxu0 0.0
      %1537 = vmatprep.subr.mxu0 0.0
      %1538 = vmatpush1.msra.mxu0 0.0
      %1539 = vmatprep.subr.mxu0 0.0
      %1540 = vmatpush1.msra.mxu0 %v1414
      %1541 = vmatprep.subr.mxu0 0.0
      %1542 = vmatpush1.msra.mxu0 %v1413
      %1543 = vmatprep.subr.mxu0 0.0
      %1544 = vmatpush2.msra.mxu0 0.0
      %1545 = vmatprep.subr.mxu0 0.0
      %1546 = vmatpush2.msra.mxu0 0.0
      %1547 = vmatprep.subr.mxu0 0.0
      %1548 = vmatpush2.msra.mxu0 0.0
      %1549 = vmatprep.subr.mxu0 0.0
      %1550 = vmatpush2.msra.mxu0 0.0
      %1551 = vmatprep.subr.mxu0 0.0
      %1552 = vmatpush2.msra.mxu0 0.0
      %1553 = vmatprep.subr.mxu0 0.0
      %1554 = vmatpush2.msra.mxu0 0.0
      %1555 = vmatprep.subr.mxu0 0.0
      %1556 = vmatpush2.msra.mxu0 0.0
      %1557 = vmatprep.subr.mxu0 0.0
      %1558 = vmatpush2.msra.mxu0 0.0
      %1559 = vmatprep.subr.mxu0 0.0
      %1560 = vmatpush2.msra.mxu0 0.0
      %1561 = vmatprep.subr.mxu0 0.0
      %1562 = vmatpush2.msra.mxu0 0.0
      %1563 = vmatprep.subr.mxu0 0.0
      %1564 = vmatpush2.msra.mxu0 0.0
      %1565 = vmatprep.subr.mxu0 0.0
      %1566 = vmatpush2.msra.mxu0 0.0
      %1567 = vmatprep.subr.mxu0 0.0
      %1568 = vmatpush2.msra.mxu0 0.0
      %1569 = vmatprep.subr.mxu0 0.0
      %1570 = vmatpush2.msra.mxu0 0.0
      %1571 = vmatprep.subr.mxu0 0.0
      %1572 = vmatpush2.msra.mxu0 0.0
      %1573 = vmatprep.subr.mxu0 0.0
      %1574 = vmatpush2.msra.mxu0 0.0
      %1575 = vmatprep.mubr.f32.mxu0 0.0
      %1576 = vmatmul.mubr.f32.gmra.mxu0 %v1416
      %v1577 = vpop.f32.mrf.mxu0
      %v1578 = vadd.f32 0.0, %v1577
      %v1579 = vpop.f32.mrf.mxu0
      %1580 = vmatprep.mubr.f32.mxu0 0.0
      %1581 = vmatmul.mubr.f32.gmra.mxu0 %v1419
      %v1582 = vpop.f32.mrf.mxu0
      %v1583 = vadd.f32 0.0, %v1582
      %v1584 = vpop.f32.mrf.mxu0
      %1585 = vmatprep.mubr.f32.mxu0 0.0
      %1586 = vmatmul.mubr.f32.gmra.mxu0 %v1422
      %v1587 = vpop.f32.mrf.mxu0
      %v1588 = vadd.f32 0.0, %v1587
      %v1589 = vpop.f32.mrf.mxu0
      %1590 = vmatprep.mubr.f32.mxu0 0.0
      %1591 = vmatmul.mubr.f32.gmra.mxu0 %v1425
      %v1592 = vpop.f32.mrf.mxu0
      %v1593 = vadd.f32 0.0, %v1592
      %v1594 = vpop.f32.mrf.mxu0
      %1595 = vmatprep.mubr.f32.mxu0 0.0
      %1596 = vmatmul.mubr.f32.gmra.mxu0 %v1428
      %v1597 = vpop.f32.mrf.mxu0
      %v1598 = vadd.f32 0.0, %v1597
      %v1599 = vpop.f32.mrf.mxu0
      %1600 = vmatprep.mubr.f32.mxu0 0.0
      %1601 = vmatmul.mubr.f32.gmra.mxu0 %v1431
      %v1602 = vpop.f32.mrf.mxu0
      %v1603 = vadd.f32 0.0, %v1602
      %v1604 = vpop.f32.mrf.mxu0
      %1605 = vmatprep.mubr.f32.mxu0 0.0
      %1606 = vmatmul.mubr.f32.gmra.mxu0 %v1434
      %v1607 = vpop.f32.mrf.mxu0
      %v1608 = vadd.f32 0.0, %v1607
      %v1609 = vpop.f32.mrf.mxu0
      %1610 = vmatprep.mubr.f32.mxu0 0.0
      %1611 = vmatmul.mubr.f32.gmra.mxu0 %v1437
      %v1612 = vpop.f32.mrf.mxu0
      %v1613 = vadd.f32 0.0, %v1612
      %v1614 = vpop.f32.mrf.mxu0
      %1615 = vmatprep.mubr.f32.mxu0 0.0
      %1616 = vmatmul.mubr.f32.gmra.mxu0 %v1440
      %v1617 = vpop.f32.mrf.mxu0
      %v1618 = vadd.f32 0.0, %v1617
      %v1619 = vpop.f32.mrf.mxu0
      %1620 = vmatprep.mubr.f32.mxu0 0.0
      %1621 = vmatmul.mubr.f32.gmra.mxu0 %v1443
      %v1622 = vpop.f32.mrf.mxu0
      %v1623 = vadd.f32 0.0, %v1622
      %v1624 = vpop.f32.mrf.mxu0
      %1625 = vmatprep.mubr.f32.mxu0 0.0
      %1626 = vmatmul.mubr.f32.gmra.mxu0 %v1446
      %v1627 = vpop.f32.mrf.mxu0
      %v1628 = vadd.f32 0.0, %v1627
      %v1629 = vpop.f32.mrf.mxu0
      %1630 = vmatprep.mubr.f32.mxu0 0.0
      %1631 = vmatmul.mubr.f32.gmra.mxu0 %v1449
      %v1632 = vpop.f32.mrf.mxu0
      %v1633 = vadd.f32 0.0, %v1632
      %v1634 = vpop.f32.mrf.mxu0
      %1635 = vmatprep.mubr.f32.mxu0 0.0
      %1636 = vmatmul.mubr.f32.gmra.mxu0 %v1452
      %v1637 = vpop.f32.mrf.mxu0
      %v1638 = vadd.f32 0.0, %v1637
      %v1639 = vpop.f32.mrf.mxu0
      %1640 = vmatprep.mubr.f32.mxu0 0.0
      %1641 = vmatmul.mubr.f32.gmra.mxu0 %v1455
      %v1642 = vpop.f32.mrf.mxu0
      %v1643 = vadd.f32 0.0, %v1642
      %v1644 = vpop.f32.mrf.mxu0
      %1645 = vmatprep.mubr.f32.mxu0 0.0
      %1646 = vmatmul.mubr.f32.gmra.mxu0 %v1458
      %v1647 = vpop.f32.mrf.mxu0
      %v1648 = vadd.f32 0.0, %v1647
      %v1649 = vpop.f32.mrf.mxu0
      %1650 = vmatprep.mubr.f32.mxu0 0.0
      %1651 = vmatmul.mubr.f32.gmra.mxu0 %v1461
      %v1652 = vpop.f32.mrf.mxu0
      %v1653 = vadd.f32 0.0, %v1652
      %v1654 = vpop.f32.mrf.mxu0
      %1655 = vmatprep.mubr.f32.mxu0 0.0
      %1656 = vmatmul.mubr.f32.gmra.mxu0 %v1464
      %v1657 = vpop.f32.mrf.mxu0
      %v1658 = vadd.f32 0.0, %v1657
      %v1659 = vpop.f32.mrf.mxu0
      %1660 = vmatprep.mubr.f32.mxu0 0.0
      %1661 = vmatmul.mubr.f32.gmra.mxu0 %v1467
      %v1662 = vpop.f32.mrf.mxu0
      %v1663 = vadd.f32 0.0, %v1662
      %v1664 = vpop.f32.mrf.mxu0
      %1665 = vmatprep.mubr.f32.mxu0 0.0
      %1666 = vmatmul.mubr.f32.gmra.mxu0 %v1470
      %v1667 = vpop.f32.mrf.mxu0
      %v1668 = vadd.f32 0.0, %v1667
      %v1669 = vpop.f32.mrf.mxu0
      %1670 = vmatprep.mubr.f32.mxu0 0.0
      %1671 = vmatmul.mubr.f32.gmra.mxu0 %v1473
      %v1672 = vpop.f32.mrf.mxu0
      %v1673 = vadd.f32 0.0, %v1672
      %v1674 = vpop.f32.mrf.mxu0
      %1675 = vmatprep.mubr.f32.mxu0 0.0
      %1676 = vmatmul.mubr.f32.gmra.mxu0 %v1476
      %v1677 = vpop.f32.mrf.mxu0
      %v1678 = vadd.f32 0.0, %v1677
      %v1679 = vpop.f32.mrf.mxu0
      %1680 = vmatprep.mubr.f32.mxu0 0.0
      %1681 = vmatmul.mubr.f32.gmra.mxu0 %v1479
      %v1682 = vpop.f32.mrf.mxu0
      %v1683 = vadd.f32 0.0, %v1682
      %v1684 = vpop.f32.mrf.mxu0
      %1685 = vmatprep.mubr.f32.mxu0 0.0
      %1686 = vmatmul.mubr.f32.gmra.mxu0 %v1482
      %v1687 = vpop.f32.mrf.mxu0
      %v1688 = vadd.f32 0.0, %v1687
      %v1689 = vpop.f32.mrf.mxu0
      %1690 = vmatprep.mubr.f32.mxu0 0.0
      %1691 = vmatmul.mubr.f32.gmra.mxu0 %v1485
      %v1692 = vpop.f32.mrf.mxu0
      %v1693 = vadd.f32 0.0, %v1692
      %v1694 = vpop.f32.mrf.mxu0
      %1695 = vmatprep.mubr.f32.mxu0 0.0
      %1696 = vmatmul.mubr.f32.gmra.mxu0 %v1488
      %v1697 = vpop.f32.mrf.mxu0
      %v1698 = vadd.f32 0.0, %v1697
      %v1699 = vpop.f32.mrf.mxu0
      %1700 = vmatprep.mubr.f32.mxu0 0.0
      %1701 = vmatmul.mubr.f32.gmra.mxu0 %v1491
      %v1702 = vpop.f32.mrf.mxu0
      %v1703 = vadd.f32 0.0, %v1702
      %v1704 = vpop.f32.mrf.mxu0
      %1705 = vmatprep.mubr.f32.mxu0 0.0
      %1706 = vmatmul.mubr.f32.gmra.mxu0 %v1494
      %v1707 = vpop.f32.mrf.mxu0
      %v1708 = vadd.f32 0.0, %v1707
      %v1709 = vpop.f32.mrf.mxu0
      %1710 = vmatprep.mubr.f32.mxu0 0.0
      %1711 = vmatmul.mubr.f32.gmra.mxu0 %v1497
      %v1712 = vpop.f32.mrf.mxu0
      %v1713 = vadd.f32 0.0, %v1712
      %v1714 = vpop.f32.mrf.mxu0
      %1715 = vmatprep.mubr.f32.mxu0 0.0
      %1716 = vmatmul.mubr.f32.gmra.mxu0 %v1500
      %v1717 = vpop.f32.mrf.mxu0
      %v1718 = vadd.f32 0.0, %v1717
      %v1719 = vpop.f32.mrf.mxu0
      %1720 = vmatprep.mubr.f32.mxu0 0.0
      %1721 = vmatmul.mubr.f32.gmra.mxu0 %v1503
      %v1722 = vpop.f32.mrf.mxu0
      %v1723 = vadd.f32 0.0, %v1722
      %v1724 = vpop.f32.mrf.mxu0
      %1725 = vmatprep.mubr.f32.mxu0 0.0
      %1726 = vmatmul.mubr.f32.gmra.mxu0 %v1506
      %v1727 = vpop.f32.mrf.mxu0
      %v1728 = vadd.f32 0.0, %v1727
      %v1729 = vpop.f32.mrf.mxu0
      %1730 = vmatprep.mubr.f32.mxu0 0.0
      %1731 = vmatmul.mubr.f32.gmra.mxu0 %v1509
      %v1732 = vpop.f32.mrf.mxu0
      %v1733 = vadd.f32 0.0, %v1732
      %v1734 = vpop.f32.mrf.mxu0
      %1735 = vdwg.mxu0
      %v1736 = vadd.f32 %v1347, %v1578
      %v1737 = vadd.f32 %v1348, %v1583
      %v1738 = vadd.f32 %v1349, %v1588
      %v1739 = vadd.f32 %v1350, %v1593
      %v1740 = vadd.f32 %v1351, %v1598
      %v1741 = vadd.f32 %v1352, %v1603
      %v1742 = vadd.f32 %v1353, %v1608
      %v1743 = vadd.f32 %v1354, %v1613
      %v1744 = vadd.f32 %v1355, %v1618
      %v1745 = vadd.f32 %v1356, %v1623
      %v1746 = vadd.f32 %v1357, %v1628
      %v1747 = vadd.f32 %v1358, %v1633
      %v1748 = vadd.f32 %v1359, %v1638
      %v1749 = vadd.f32 %v1360, %v1643
      %v1750 = vadd.f32 %v1361, %v1648
      %v1751 = vadd.f32 %v1362, %v1653
      %v1752 = vadd.f32 %v1363, %v1658
      %v1753 = vadd.f32 %v1364, %v1663
      %v1754 = vadd.f32 %v1365, %v1668
      %v1755 = vadd.f32 %v1366, %v1673
      %v1756 = vadd.f32 %v1367, %v1678
      %v1757 = vadd.f32 %v1368, %v1683
      %v1758 = vadd.f32 %v1369, %v1688
      %v1759 = vadd.f32 %v1370, %v1693
      %v1760 = vadd.f32 %v1371, %v1698
      %v1761 = vadd.f32 %v1372, %v1703
      %v1762 = vadd.f32 %v1373, %v1708
      %v1763 = vadd.f32 %v1374, %v1713
      %v1764 = vadd.f32 %v1375, %v1718
      %v1765 = vadd.f32 %v1376, %v1723
      %v1766 = vadd.f32 %v1377, %v1728
      %v1767 = vadd.f32 %v1378, %v1733
      %v1768 = vld [vmem:[%s1379 + $0x1] sm:$0xff]
      %v1769 = vld [vmem:[%s1379 + $0x9] sm:$0xff]
      %v1770 = vld [vmem:[%s1379 + $0x19] sm:$0xff]
      %v1771 = vld [vmem:[%s1379 + $0x21] sm:$0xff]
      %v1772 = vld [vmem:[%s1379 + $0x31] sm:$0xff]
      %v1773 = vld [vmem:[%s1379 + $0x39] sm:$0xff]
      %v1774 = vld [vmem:[%s1379 + $0x49] sm:$0xff]
      %v1775 = vld [vmem:[%s1379 + $0x51] sm:$0xff]
      %v1776 = vld [vmem:[%s1379 + $0x61] sm:$0xff]
      %v1777 = vld [vmem:[%s1379 + $0x69] sm:$0xff]
      %v1778 = vld [vmem:[%s1379 + $0x79] sm:$0xff]
      %v1779 = vld [vmem:[%s1379 + $0x81] sm:$0xff]
      %v1780 = vld [vmem:[%s1379 + $0x91] sm:$0xff]
      %v1781 = vld [vmem:[%s1379 + $0x99] sm:$0xff]
      %v1782 = vld [vmem:[%s1379 + $0xa9] sm:$0xff]
      %v1783 = vld [vmem:[%s1379 + $0xb1] sm:$0xff]
      %v1784 = vld [vmem:[%s1379 + $0xc1] sm:$0xff]
      %v1785 = vld [vmem:[%s1379 + $0xc9] sm:$0xff]
      %v1786 = vld [vmem:[%s1379 + $0xd9] sm:$0xff]
      %v1787 = vld [vmem:[%s1379 + $0xe1] sm:$0xff]
      %v1788 = vld [vmem:[%s1379 + $0xf1] sm:$0xff]
      %v1789 = vld [vmem:[%s1379 + $0xf9] sm:$0xff]
      %v1790 = vld [vmem:[%s1379 + $0x109] sm:$0xff]
      %v1791 = vld [vmem:[%s1379 + $0x111] sm:$0xff]
      %v1792 = vld [vmem:[%s1379 + $0x121] sm:$0xff]
      %v1793 = vld [vmem:[%s1379 + $0x129] sm:$0xff]
      %v1794 = vld [vmem:[%s1379 + $0x139] sm:$0xff]
      %v1795 = vld [vmem:[%s1379 + $0x141] sm:$0xff]
      %v1796 = vld [vmem:[%s1379 + $0x151] sm:$0xff]
      %v1797 = vld [vmem:[%s1379 + $0x159] sm:$0xff]
      %v1798 = vld [vmem:[%s1379 + $0x169] sm:$0xff]
      %v1799 = vld [vmem:[%s1379 + $0x171] sm:$0xff]
      %s1800 = scalar_lea.vmem %s1, 64
      %v1801 = vld [vmem:[%s1800] sm:$0xff]
      %v1802 = vld [vmem:[%s1800 + $0x8] sm:$0xff]
      %v1804 = vsel %vm348, %v1768, 0
      %v1807 = vsel %vm348, %v1769, 0
      %v1810 = vsel %vm348, %v1770, 0
      %v1813 = vsel %vm348, %v1771, 0
      %v1816 = vsel %vm348, %v1772, 0
      %v1819 = vsel %vm348, %v1773, 0
      %v1822 = vsel %vm348, %v1774, 0
      %v1825 = vsel %vm348, %v1775, 0
      %v1828 = vsel %vm348, %v1776, 0
      %v1831 = vsel %vm348, %v1777, 0
      %v1834 = vsel %vm348, %v1778, 0
      %v1837 = vsel %vm348, %v1779, 0
      %v1840 = vsel %vm348, %v1780, 0
      %v1843 = vsel %vm348, %v1781, 0
      %v1846 = vsel %vm348, %v1782, 0
      %v1849 = vsel %vm348, %v1783, 0
      %v1852 = vsel %vm348, %v1784, 0
      %v1855 = vsel %vm348, %v1785, 0
      %v1858 = vsel %vm348, %v1786, 0
      %v1861 = vsel %vm348, %v1787, 0
      %v1864 = vsel %vm348, %v1788, 0
      %v1867 = vsel %vm348, %v1789, 0
      %v1870 = vsel %vm348, %v1790, 0
      %v1873 = vsel %vm348, %v1791, 0
      %v1876 = vsel %vm348, %v1792, 0
      %v1879 = vsel %vm348, %v1793, 0
      %v1882 = vsel %vm348, %v1794, 0
      %v1885 = vsel %vm348, %v1795, 0
      %v1888 = vsel %vm348, %v1796, 0
      %v1891 = vsel %vm348, %v1797, 0
      %v1894 = vsel %vm348, %v1798, 0
      %v1897 = vsel %vm348, %v1799, 0
      %1899 = vmatprep.subr.mxu0 0.0
      %1900 = vmatpush1.msra.mxu0 0.0
      %1901 = vmatprep.subr.mxu0 0.0
      %1902 = vmatpush1.msra.mxu0 0.0
      %1903 = vmatprep.subr.mxu0 0.0
      %1904 = vmatpush1.msra.mxu0 0.0
      %1905 = vmatprep.subr.mxu0 0.0
      %1906 = vmatpush1.msra.mxu0 0.0
      %1907 = vmatprep.subr.mxu0 0.0
      %1908 = vmatpush1.msra.mxu0 0.0
      %1909 = vmatprep.subr.mxu0 0.0
      %1910 = vmatpush1.msra.mxu0 0.0
      %1911 = vmatprep.subr.mxu0 0.0
      %1912 = vmatpush1.msra.mxu0 0.0
      %1913 = vmatprep.subr.mxu0 0.0
      %1914 = vmatpush1.msra.mxu0 0.0
      %1915 = vmatprep.subr.mxu0 0.0
      %1916 = vmatpush1.msra.mxu0 0.0
      %1917 = vmatprep.subr.mxu0 0.0
      %1918 = vmatpush1.msra.mxu0 0.0
      %1919 = vmatprep.subr.mxu0 0.0
      %1920 = vmatpush1.msra.mxu0 0.0
      %1921 = vmatprep.subr.mxu0 0.0
      %1922 = vmatpush1.msra.mxu0 0.0
      %1923 = vmatprep.subr.mxu0 0.0
      %1924 = vmatpush1.msra.mxu0 0.0
      %1925 = vmatprep.subr.mxu0 0.0
      %1926 = vmatpush1.msra.mxu0 0.0
      %1927 = vmatprep.subr.mxu0 0.0
      %1928 = vmatpush1.msra.mxu0 %v1802
      %1929 = vmatprep.subr.mxu0 0.0
      %1930 = vmatpush1.msra.mxu0 %v1801
      %1931 = vmatprep.subr.mxu0 0.0
      %1932 = vmatpush2.msra.mxu0 0.0
      %1933 = vmatprep.subr.mxu0 0.0
      %1934 = vmatpush2.msra.mxu0 0.0
      %1935 = vmatprep.subr.mxu0 0.0
      %1936 = vmatpush2.msra.mxu0 0.0
      %1937 = vmatprep.subr.mxu0 0.0
      %1938 = vmatpush2.msra.mxu0 0.0
      %1939 = vmatprep.subr.mxu0 0.0
      %1940 = vmatpush2.msra.mxu0 0.0
      %1941 = vmatprep.subr.mxu0 0.0
      %1942 = vmatpush2.msra.mxu0 0.0
      %1943 = vmatprep.subr.mxu0 0.0
      %1944 = vmatpush2.msra.mxu0 0.0
      %1945 = vmatprep.subr.mxu0 0.0
      %1946 = vmatpush2.msra.mxu0 0.0
      %1947 = vmatprep.subr.mxu0 0.0
      %1948 = vmatpush2.msra.mxu0 0.0
      %1949 = vmatprep.subr.mxu0 0.0
      %1950 = vmatpush2.msra.mxu0 0.0
      %1951 = vmatprep.subr.mxu0 0.0
      %1952 = vmatpush2.msra.mxu0 0.0
      %1953 = vmatprep.subr.mxu0 0.0
      %1954 = vmatpush2.msra.mxu0 0.0
      %1955 = vmatprep.subr.mxu0 0.0
      %1956 = vmatpush2.msra.mxu0 0.0
      %1957 = vmatprep.subr.mxu0 0.0
      %1958 = vmatpush2.msra.mxu0 0.0
      %1959 = vmatprep.subr.mxu0 0.0
      %1960 = vmatpush2.msra.mxu0 0.0
      %1961 = vmatprep.subr.mxu0 0.0
      %1962 = vmatpush2.msra.mxu0 0.0
      %1963 = vmatprep.mubr.f32.mxu0 0.0
      %1964 = vmatmul.mubr.f32.gmra.mxu0 %v1804
      %v1965 = vpop.f32.mrf.mxu0
      %v1966 = vadd.f32 0.0, %v1965
      %v1967 = vpop.f32.mrf.mxu0
      %1968 = vmatprep.mubr.f32.mxu0 0.0
      %1969 = vmatmul.mubr.f32.gmra.mxu0 %v1807
      %v1970 = vpop.f32.mrf.mxu0
      %v1971 = vadd.f32 0.0, %v1970
      %v1972 = vpop.f32.mrf.mxu0
      %1973 = vmatprep.mubr.f32.mxu0 0.0
      %1974 = vmatmul.mubr.f32.gmra.mxu0 %v1810
      %v1975 = vpop.f32.mrf.mxu0
      %v1976 = vadd.f32 0.0, %v1975
      %v1977 = vpop.f32.mrf.mxu0
      %1978 = vmatprep.mubr.f32.mxu0 0.0
      %1979 = vmatmul.mubr.f32.gmra.mxu0 %v1813
      %v1980 = vpop.f32.mrf.mxu0
      %v1981 = vadd.f32 0.0, %v1980
      %v1982 = vpop.f32.mrf.mxu0
      %1983 = vmatprep.mubr.f32.mxu0 0.0
      %1984 = vmatmul.mubr.f32.gmra.mxu0 %v1816
      %v1985 = vpop.f32.mrf.mxu0
      %v1986 = vadd.f32 0.0, %v1985
      %v1987 = vpop.f32.mrf.mxu0
      %1988 = vmatprep.mubr.f32.mxu0 0.0
      %1989 = vmatmul.mubr.f32.gmra.mxu0 %v1819
      %v1990 = vpop.f32.mrf.mxu0
      %v1991 = vadd.f32 0.0, %v1990
      %v1992 = vpop.f32.mrf.mxu0
      %1993 = vmatprep.mubr.f32.mxu0 0.0
      %1994 = vmatmul.mubr.f32.gmra.mxu0 %v1822
      %v1995 = vpop.f32.mrf.mxu0
      %v1996 = vadd.f32 0.0, %v1995
      %v1997 = vpop.f32.mrf.mxu0
      %1998 = vmatprep.mubr.f32.mxu0 0.0
      %1999 = vmatmul.mubr.f32.gmra.mxu0 %v1825
      %v2000 = vpop.f32.mrf.mxu0
      %v2001 = vadd.f32 0.0, %v2000
      %v2002 = vpop.f32.mrf.mxu0
      %2003 = vmatprep.mubr.f32.mxu0 0.0
      %2004 = vmatmul.mubr.f32.gmra.mxu0 %v1828
      %v2005 = vpop.f32.mrf.mxu0
      %v2006 = vadd.f32 0.0, %v2005
      %v2007 = vpop.f32.mrf.mxu0
      %2008 = vmatprep.mubr.f32.mxu0 0.0
      %2009 = vmatmul.mubr.f32.gmra.mxu0 %v1831
      %v2010 = vpop.f32.mrf.mxu0
      %v2011 = vadd.f32 0.0, %v2010
      %v2012 = vpop.f32.mrf.mxu0
      %2013 = vmatprep.mubr.f32.mxu0 0.0
      %2014 = vmatmul.mubr.f32.gmra.mxu0 %v1834
      %v2015 = vpop.f32.mrf.mxu0
      %v2016 = vadd.f32 0.0, %v2015
      %v2017 = vpop.f32.mrf.mxu0
      %2018 = vmatprep.mubr.f32.mxu0 0.0
      %2019 = vmatmul.mubr.f32.gmra.mxu0 %v1837
      %v2020 = vpop.f32.mrf.mxu0
      %v2021 = vadd.f32 0.0, %v2020
      %v2022 = vpop.f32.mrf.mxu0
      %2023 = vmatprep.mubr.f32.mxu0 0.0
      %2024 = vmatmul.mubr.f32.gmra.mxu0 %v1840
      %v2025 = vpop.f32.mrf.mxu0
      %v2026 = vadd.f32 0.0, %v2025
      %v2027 = vpop.f32.mrf.mxu0
      %2028 = vmatprep.mubr.f32.mxu0 0.0
      %2029 = vmatmul.mubr.f32.gmra.mxu0 %v1843
      %v2030 = vpop.f32.mrf.mxu0
      %v2031 = vadd.f32 0.0, %v2030
      %v2032 = vpop.f32.mrf.mxu0
      %2033 = vmatprep.mubr.f32.mxu0 0.0
      %2034 = vmatmul.mubr.f32.gmra.mxu0 %v1846
      %v2035 = vpop.f32.mrf.mxu0
      %v2036 = vadd.f32 0.0, %v2035
      %v2037 = vpop.f32.mrf.mxu0
      %2038 = vmatprep.mubr.f32.mxu0 0.0
      %2039 = vmatmul.mubr.f32.gmra.mxu0 %v1849
      %v2040 = vpop.f32.mrf.mxu0
      %v2041 = vadd.f32 0.0, %v2040
      %v2042 = vpop.f32.mrf.mxu0
      %2043 = vmatprep.mubr.f32.mxu0 0.0
      %2044 = vmatmul.mubr.f32.gmra.mxu0 %v1852
      %v2045 = vpop.f32.mrf.mxu0
      %v2046 = vadd.f32 0.0, %v2045
      %v2047 = vpop.f32.mrf.mxu0
      %2048 = vmatprep.mubr.f32.mxu0 0.0
      %2049 = vmatmul.mubr.f32.gmra.mxu0 %v1855
      %v2050 = vpop.f32.mrf.mxu0
      %v2051 = vadd.f32 0.0, %v2050
      %v2052 = vpop.f32.mrf.mxu0
      %2053 = vmatprep.mubr.f32.mxu0 0.0
      %2054 = vmatmul.mubr.f32.gmra.mxu0 %v1858
      %v2055 = vpop.f32.mrf.mxu0
      %v2056 = vadd.f32 0.0, %v2055
      %v2057 = vpop.f32.mrf.mxu0
      %2058 = vmatprep.mubr.f32.mxu0 0.0
      %2059 = vmatmul.mubr.f32.gmra.mxu0 %v1861
      %v2060 = vpop.f32.mrf.mxu0
      %v2061 = vadd.f32 0.0, %v2060
      %v2062 = vpop.f32.mrf.mxu0
      %2063 = vmatprep.mubr.f32.mxu0 0.0
      %2064 = vmatmul.mubr.f32.gmra.mxu0 %v1864
      %v2065 = vpop.f32.mrf.mxu0
      %v2066 = vadd.f32 0.0, %v2065
      %v2067 = vpop.f32.mrf.mxu0
      %2068 = vmatprep.mubr.f32.mxu0 0.0
      %2069 = vmatmul.mubr.f32.gmra.mxu0 %v1867
      %v2070 = vpop.f32.mrf.mxu0
      %v2071 = vadd.f32 0.0, %v2070
      %v2072 = vpop.f32.mrf.mxu0
      %2073 = vmatprep.mubr.f32.mxu0 0.0
      %2074 = vmatmul.mubr.f32.gmra.mxu0 %v1870
      %v2075 = vpop.f32.mrf.mxu0
      %v2076 = vadd.f32 0.0, %v2075
      %v2077 = vpop.f32.mrf.mxu0
      %2078 = vmatprep.mubr.f32.mxu0 0.0
      %2079 = vmatmul.mubr.f32.gmra.mxu0 %v1873
      %v2080 = vpop.f32.mrf.mxu0
      %v2081 = vadd.f32 0.0, %v2080
      %v2082 = vpop.f32.mrf.mxu0
      %2083 = vmatprep.mubr.f32.mxu0 0.0
      %2084 = vmatmul.mubr.f32.gmra.mxu0 %v1876
      %v2085 = vpop.f32.mrf.mxu0
      %v2086 = vadd.f32 0.0, %v2085
      %v2087 = vpop.f32.mrf.mxu0
      %2088 = vmatprep.mubr.f32.mxu0 0.0
      %2089 = vmatmul.mubr.f32.gmra.mxu0 %v1879
      %v2090 = vpop.f32.mrf.mxu0
      %v2091 = vadd.f32 0.0, %v2090
      %v2092 = vpop.f32.mrf.mxu0
      %2093 = vmatprep.mubr.f32.mxu0 0.0
      %2094 = vmatmul.mubr.f32.gmra.mxu0 %v1882
      %v2095 = vpop.f32.mrf.mxu0
      %v2096 = vadd.f32 0.0, %v2095
      %v2097 = vpop.f32.mrf.mxu0
      %2098 = vmatprep.mubr.f32.mxu0 0.0
      %2099 = vmatmul.mubr.f32.gmra.mxu0 %v1885
      %v2100 = vpop.f32.mrf.mxu0
      %v2101 = vadd.f32 0.0, %v2100
      %v2102 = vpop.f32.mrf.mxu0
      %2103 = vmatprep.mubr.f32.mxu0 0.0
      %2104 = vmatmul.mubr.f32.gmra.mxu0 %v1888
      %v2105 = vpop.f32.mrf.mxu0
      %v2106 = vadd.f32 0.0, %v2105
      %v2107 = vpop.f32.mrf.mxu0
      %2108 = vmatprep.mubr.f32.mxu0 0.0
      %2109 = vmatmul.mubr.f32.gmra.mxu0 %v1891
      %v2110 = vpop.f32.mrf.mxu0
      %v2111 = vadd.f32 0.0, %v2110
      %v2112 = vpop.f32.mrf.mxu0
      %2113 = vmatprep.mubr.f32.mxu0 0.0
      %2114 = vmatmul.mubr.f32.gmra.mxu0 %v1894
      %v2115 = vpop.f32.mrf.mxu0
      %v2116 = vadd.f32 0.0, %v2115
      %v2117 = vpop.f32.mrf.mxu0
      %2118 = vmatprep.mubr.f32.mxu0 0.0
      %2119 = vmatmul.mubr.f32.gmra.mxu0 %v1897
      %v2120 = vpop.f32.mrf.mxu0
      %v2121 = vadd.f32 0.0, %v2120
      %v2122 = vpop.f32.mrf.mxu0
      %2123 = vdwg.mxu0
      %v2124 = vadd.f32 %v1736, %v1966
      %v2125 = vadd.f32 %v1737, %v1971
      %v2126 = vadd.f32 %v1738, %v1976
      %v2127 = vadd.f32 %v1739, %v1981
      %v2128 = vadd.f32 %v1740, %v1986
      %v2129 = vadd.f32 %v1741, %v1991
      %v2130 = vadd.f32 %v1742, %v1996
      %v2131 = vadd.f32 %v1743, %v2001
      %v2132 = vadd.f32 %v1744, %v2006
      %v2133 = vadd.f32 %v1745, %v2011
      %v2134 = vadd.f32 %v1746, %v2016
      %v2135 = vadd.f32 %v1747, %v2021
      %v2136 = vadd.f32 %v1748, %v2026
      %v2137 = vadd.f32 %v1749, %v2031
      %v2138 = vadd.f32 %v1750, %v2036
      %v2139 = vadd.f32 %v1751, %v2041
      %v2140 = vadd.f32 %v1752, %v2046
      %v2141 = vadd.f32 %v1753, %v2051
      %v2142 = vadd.f32 %v1754, %v2056
      %v2143 = vadd.f32 %v1755, %v2061
      %v2144 = vadd.f32 %v1756, %v2066
      %v2145 = vadd.f32 %v1757, %v2071
      %v2146 = vadd.f32 %v1758, %v2076
      %v2147 = vadd.f32 %v1759, %v2081
      %v2148 = vadd.f32 %v1760, %v2086
      %v2149 = vadd.f32 %v1761, %v2091
      %v2150 = vadd.f32 %v1762, %v2096
      %v2151 = vadd.f32 %v1763, %v2101
      %v2152 = vadd.f32 %v1764, %v2106
      %v2153 = vadd.f32 %v1765, %v2111
      %v2154 = vadd.f32 %v1766, %v2116
      %v2155 = vadd.f32 %v1767, %v2121
      %v2156 = vld [vmem:[%s1379 + $0x2] sm:$0xff]
      %v2157 = vld [vmem:[%s1379 + $0xa] sm:$0xff]
      %v2158 = vld [vmem:[%s1379 + $0x1a] sm:$0xff]
      %v2159 = vld [vmem:[%s1379 + $0x22] sm:$0xff]
      %v2160 = vld [vmem:[%s1379 + $0x32] sm:$0xff]
      %v2161 = vld [vmem:[%s1379 + $0x3a] sm:$0xff]
      %v2162 = vld [vmem:[%s1379 + $0x4a] sm:$0xff]
      %v2163 = vld [vmem:[%s1379 + $0x52] sm:$0xff]
      %v2164 = vld [vmem:[%s1379 + $0x62] sm:$0xff]
      %v2165 = vld [vmem:[%s1379 + $0x6a] sm:$0xff]
      %v2166 = vld [vmem:[%s1379 + $0x7a] sm:$0xff]
      %v2167 = vld [vmem:[%s1379 + $0x82] sm:$0xff]
      %v2168 = vld [vmem:[%s1379 + $0x92] sm:$0xff]
      %v2169 = vld [vmem:[%s1379 + $0x9a] sm:$0xff]
      %v2170 = vld [vmem:[%s1379 + $0xaa] sm:$0xff]
      %v2171 = vld [vmem:[%s1379 + $0xb2] sm:$0xff]
      %v2172 = vld [vmem:[%s1379 + $0xc2] sm:$0xff]
      %v2173 = vld [vmem:[%s1379 + $0xca] sm:$0xff]
      %v2174 = vld [vmem:[%s1379 + $0xda] sm:$0xff]
      %v2175 = vld [vmem:[%s1379 + $0xe2] sm:$0xff]
      %v2176 = vld [vmem:[%s1379 + $0xf2] sm:$0xff]
      %v2177 = vld [vmem:[%s1379 + $0xfa] sm:$0xff]
      %v2178 = vld [vmem:[%s1379 + $0x10a] sm:$0xff]
      %v2179 = vld [vmem:[%s1379 + $0x112] sm:$0xff]
      %v2180 = vld [vmem:[%s1379 + $0x122] sm:$0xff]
      %v2181 = vld [vmem:[%s1379 + $0x12a] sm:$0xff]
      %v2182 = vld [vmem:[%s1379 + $0x13a] sm:$0xff]
      %v2183 = vld [vmem:[%s1379 + $0x142] sm:$0xff]
      %v2184 = vld [vmem:[%s1379 + $0x152] sm:$0xff]
      %v2185 = vld [vmem:[%s1379 + $0x15a] sm:$0xff]
      %v2186 = vld [vmem:[%s1379 + $0x16a] sm:$0xff]
      %v2187 = vld [vmem:[%s1379 + $0x172] sm:$0xff]
      %s2188 = scalar_lea.vmem %s1, 80
      %v2189 = vld [vmem:[%s2188] sm:$0xff]
      %v2190 = vld [vmem:[%s2188 + $0x8] sm:$0xff]
      %v2192 = vsel %vm348, %v2156, 0
      %v2195 = vsel %vm348, %v2157, 0
      %v2198 = vsel %vm348, %v2158, 0
      %v2201 = vsel %vm348, %v2159, 0
      %v2204 = vsel %vm348, %v2160, 0
      %v2207 = vsel %vm348, %v2161, 0
      %v2210 = vsel %vm348, %v2162, 0
      %v2213 = vsel %vm348, %v2163, 0
      %v2216 = vsel %vm348, %v2164, 0
      %v2219 = vsel %vm348, %v2165, 0
      %v2222 = vsel %vm348, %v2166, 0
      %v2225 = vsel %vm348, %v2167, 0
      %v2228 = vsel %vm348, %v2168, 0
      %v2231 = vsel %vm348, %v2169, 0
      %v2234 = vsel %vm348, %v2170, 0
      %v2237 = vsel %vm348, %v2171, 0
      %v2240 = vsel %vm348, %v2172, 0
      %v2243 = vsel %vm348, %v2173, 0
      %v2246 = vsel %vm348, %v2174, 0
      %v2249 = vsel %vm348, %v2175, 0
      %v2252 = vsel %vm348, %v2176, 0
      %v2255 = vsel %vm348, %v2177, 0
      %v2258 = vsel %vm348, %v2178, 0
      %v2261 = vsel %vm348, %v2179, 0
      %v2264 = vsel %vm348, %v2180, 0
      %v2267 = vsel %vm348, %v2181, 0
      %v2270 = vsel %vm348, %v2182, 0
      %v2273 = vsel %vm348, %v2183, 0
      %v2276 = vsel %vm348, %v2184, 0
      %v2279 = vsel %vm348, %v2185, 0
      %v2282 = vsel %vm348, %v2186, 0
      %v2285 = vsel %vm348, %v2187, 0
      %2287 = vmatprep.subr.mxu0 0.0
      %2288 = vmatpush1.msra.mxu0 0.0
      %2289 = vmatprep.subr.mxu0 0.0
      %2290 = vmatpush1.msra.mxu0 0.0
      %2291 = vmatprep.subr.mxu0 0.0
      %2292 = vmatpush1.msra.mxu0 0.0
      %2293 = vmatprep.subr.mxu0 0.0
      %2294 = vmatpush1.msra.mxu0 0.0
      %2295 = vmatprep.subr.mxu0 0.0
      %2296 = vmatpush1.msra.mxu0 0.0
      %2297 = vmatprep.subr.mxu0 0.0
      %2298 = vmatpush1.msra.mxu0 0.0
      %2299 = vmatprep.subr.mxu0 0.0
      %2300 = vmatpush1.msra.mxu0 0.0
      %2301 = vmatprep.subr.mxu0 0.0
      %2302 = vmatpush1.msra.mxu0 0.0
      %2303 = vmatprep.subr.mxu0 0.0
      %2304 = vmatpush1.msra.mxu0 0.0
      %2305 = vmatprep.subr.mxu0 0.0
      %2306 = vmatpush1.msra.mxu0 0.0
      %2307 = vmatprep.subr.mxu0 0.0
      %2308 = vmatpush1.msra.mxu0 0.0
      %2309 = vmatprep.subr.mxu0 0.0
      %2310 = vmatpush1.msra.mxu0 0.0
      %2311 = vmatprep.subr.mxu0 0.0
      %2312 = vmatpush1.msra.mxu0 0.0
      %2313 = vmatprep.subr.mxu0 0.0
      %2314 = vmatpush1.msra.mxu0 0.0
      %2315 = vmatprep.subr.mxu0 0.0
      %2316 = vmatpush1.msra.mxu0 %v2190
      %2317 = vmatprep.subr.mxu0 0.0
      %2318 = vmatpush1.msra.mxu0 %v2189
      %2319 = vmatprep.subr.mxu0 0.0
      %2320 = vmatpush2.msra.mxu0 0.0
      %2321 = vmatprep.subr.mxu0 0.0
      %2322 = vmatpush2.msra.mxu0 0.0
      %2323 = vmatprep.subr.mxu0 0.0
      %2324 = vmatpush2.msra.mxu0 0.0
      %2325 = vmatprep.subr.mxu0 0.0
      %2326 = vmatpush2.msra.mxu0 0.0
      %2327 = vmatprep.subr.mxu0 0.0
      %2328 = vmatpush2.msra.mxu0 0.0
      %2329 = vmatprep.subr.mxu0 0.0
      %2330 = vmatpush2.msra.mxu0 0.0
      %2331 = vmatprep.subr.mxu0 0.0
      %2332 = vmatpush2.msra.mxu0 0.0
      %2333 = vmatprep.subr.mxu0 0.0
      %2334 = vmatpush2.msra.mxu0 0.0
      %2335 = vmatprep.subr.mxu0 0.0
      %2336 = vmatpush2.msra.mxu0 0.0
      %2337 = vmatprep.subr.mxu0 0.0
      %2338 = vmatpush2.msra.mxu0 0.0
      %2339 = vmatprep.subr.mxu0 0.0
      %2340 = vmatpush2.msra.mxu0 0.0
      %2341 = vmatprep.subr.mxu0 0.0
      %2342 = vmatpush2.msra.mxu0 0.0
      %2343 = vmatprep.subr.mxu0 0.0
      %2344 = vmatpush2.msra.mxu0 0.0
      %2345 = vmatprep.subr.mxu0 0.0
      %2346 = vmatpush2.msra.mxu0 0.0
      %2347 = vmatprep.subr.mxu0 0.0
      %2348 = vmatpush2.msra.mxu0 0.0
      %2349 = vmatprep.subr.mxu0 0.0
      %2350 = vmatpush2.msra.mxu0 0.0
      %2351 = vmatprep.mubr.f32.mxu0 0.0
      %2352 = vmatmul.mubr.f32.gmra.mxu0 %v2192
      %v2353 = vpop.f32.mrf.mxu0
      %v2354 = vadd.f32 0.0, %v2353
      %v2355 = vpop.f32.mrf.mxu0
      %2356 = vmatprep.mubr.f32.mxu0 0.0
      %2357 = vmatmul.mubr.f32.gmra.mxu0 %v2195
      %v2358 = vpop.f32.mrf.mxu0
      %v2359 = vadd.f32 0.0, %v2358
      %v2360 = vpop.f32.mrf.mxu0
      %2361 = vmatprep.mubr.f32.mxu0 0.0
      %2362 = vmatmul.mubr.f32.gmra.mxu0 %v2198
      %v2363 = vpop.f32.mrf.mxu0
      %v2364 = vadd.f32 0.0, %v2363
      %v2365 = vpop.f32.mrf.mxu0
      %2366 = vmatprep.mubr.f32.mxu0 0.0
      %2367 = vmatmul.mubr.f32.gmra.mxu0 %v2201
      %v2368 = vpop.f32.mrf.mxu0
      %v2369 = vadd.f32 0.0, %v2368
      %v2370 = vpop.f32.mrf.mxu0
      %2371 = vmatprep.mubr.f32.mxu0 0.0
      %2372 = vmatmul.mubr.f32.gmra.mxu0 %v2204
      %v2373 = vpop.f32.mrf.mxu0
      %v2374 = vadd.f32 0.0, %v2373
      %v2375 = vpop.f32.mrf.mxu0
      %2376 = vmatprep.mubr.f32.mxu0 0.0
      %2377 = vmatmul.mubr.f32.gmra.mxu0 %v2207
      %v2378 = vpop.f32.mrf.mxu0
      %v2379 = vadd.f32 0.0, %v2378
      %v2380 = vpop.f32.mrf.mxu0
      %2381 = vmatprep.mubr.f32.mxu0 0.0
      %2382 = vmatmul.mubr.f32.gmra.mxu0 %v2210
      %v2383 = vpop.f32.mrf.mxu0
      %v2384 = vadd.f32 0.0, %v2383
      %v2385 = vpop.f32.mrf.mxu0
      %2386 = vmatprep.mubr.f32.mxu0 0.0
      %2387 = vmatmul.mubr.f32.gmra.mxu0 %v2213
      %v2388 = vpop.f32.mrf.mxu0
      %v2389 = vadd.f32 0.0, %v2388
      %v2390 = vpop.f32.mrf.mxu0
      %2391 = vmatprep.mubr.f32.mxu0 0.0
      %2392 = vmatmul.mubr.f32.gmra.mxu0 %v2216
      %v2393 = vpop.f32.mrf.mxu0
      %v2394 = vadd.f32 0.0, %v2393
      %v2395 = vpop.f32.mrf.mxu0
      %2396 = vmatprep.mubr.f32.mxu0 0.0
      %2397 = vmatmul.mubr.f32.gmra.mxu0 %v2219
      %v2398 = vpop.f32.mrf.mxu0
      %v2399 = vadd.f32 0.0, %v2398
      %v2400 = vpop.f32.mrf.mxu0
      %2401 = vmatprep.mubr.f32.mxu0 0.0
      %2402 = vmatmul.mubr.f32.gmra.mxu0 %v2222
      %v2403 = vpop.f32.mrf.mxu0
      %v2404 = vadd.f32 0.0, %v2403
      %v2405 = vpop.f32.mrf.mxu0
      %2406 = vmatprep.mubr.f32.mxu0 0.0
      %2407 = vmatmul.mubr.f32.gmra.mxu0 %v2225
      %v2408 = vpop.f32.mrf.mxu0
      %v2409 = vadd.f32 0.0, %v2408
      %v2410 = vpop.f32.mrf.mxu0
      %2411 = vmatprep.mubr.f32.mxu0 0.0
      %2412 = vmatmul.mubr.f32.gmra.mxu0 %v2228
      %v2413 = vpop.f32.mrf.mxu0
      %v2414 = vadd.f32 0.0, %v2413
      %v2415 = vpop.f32.mrf.mxu0
      %2416 = vmatprep.mubr.f32.mxu0 0.0
      %2417 = vmatmul.mubr.f32.gmra.mxu0 %v2231
      %v2418 = vpop.f32.mrf.mxu0
      %v2419 = vadd.f32 0.0, %v2418
      %v2420 = vpop.f32.mrf.mxu0
      %2421 = vmatprep.mubr.f32.mxu0 0.0
      %2422 = vmatmul.mubr.f32.gmra.mxu0 %v2234
      %v2423 = vpop.f32.mrf.mxu0
      %v2424 = vadd.f32 0.0, %v2423
      %v2425 = vpop.f32.mrf.mxu0
      %2426 = vmatprep.mubr.f32.mxu0 0.0
      %2427 = vmatmul.mubr.f32.gmra.mxu0 %v2237
      %v2428 = vpop.f32.mrf.mxu0
      %v2429 = vadd.f32 0.0, %v2428
      %v2430 = vpop.f32.mrf.mxu0
      %2431 = vmatprep.mubr.f32.mxu0 0.0
      %2432 = vmatmul.mubr.f32.gmra.mxu0 %v2240
      %v2433 = vpop.f32.mrf.mxu0
      %v2434 = vadd.f32 0.0, %v2433
      %v2435 = vpop.f32.mrf.mxu0
      %2436 = vmatprep.mubr.f32.mxu0 0.0
      %2437 = vmatmul.mubr.f32.gmra.mxu0 %v2243
      %v2438 = vpop.f32.mrf.mxu0
      %v2439 = vadd.f32 0.0, %v2438
      %v2440 = vpop.f32.mrf.mxu0
      %2441 = vmatprep.mubr.f32.mxu0 0.0
      %2442 = vmatmul.mubr.f32.gmra.mxu0 %v2246
      %v2443 = vpop.f32.mrf.mxu0
      %v2444 = vadd.f32 0.0, %v2443
      %v2445 = vpop.f32.mrf.mxu0
      %2446 = vmatprep.mubr.f32.mxu0 0.0
      %2447 = vmatmul.mubr.f32.gmra.mxu0 %v2249
      %v2448 = vpop.f32.mrf.mxu0
      %v2449 = vadd.f32 0.0, %v2448
      %v2450 = vpop.f32.mrf.mxu0
      %2451 = vmatprep.mubr.f32.mxu0 0.0
      %2452 = vmatmul.mubr.f32.gmra.mxu0 %v2252
      %v2453 = vpop.f32.mrf.mxu0
      %v2454 = vadd.f32 0.0, %v2453
      %v2455 = vpop.f32.mrf.mxu0
      %2456 = vmatprep.mubr.f32.mxu0 0.0
      %2457 = vmatmul.mubr.f32.gmra.mxu0 %v2255
      %v2458 = vpop.f32.mrf.mxu0
      %v2459 = vadd.f32 0.0, %v2458
      %v2460 = vpop.f32.mrf.mxu0
      %2461 = vmatprep.mubr.f32.mxu0 0.0
      %2462 = vmatmul.mubr.f32.gmra.mxu0 %v2258
      %v2463 = vpop.f32.mrf.mxu0
      %v2464 = vadd.f32 0.0, %v2463
      %v2465 = vpop.f32.mrf.mxu0
      %2466 = vmatprep.mubr.f32.mxu0 0.0
      %2467 = vmatmul.mubr.f32.gmra.mxu0 %v2261
      %v2468 = vpop.f32.mrf.mxu0
      %v2469 = vadd.f32 0.0, %v2468
      %v2470 = vpop.f32.mrf.mxu0
      %2471 = vmatprep.mubr.f32.mxu0 0.0
      %2472 = vmatmul.mubr.f32.gmra.mxu0 %v2264
      %v2473 = vpop.f32.mrf.mxu0
      %v2474 = vadd.f32 0.0, %v2473
      %v2475 = vpop.f32.mrf.mxu0
      %2476 = vmatprep.mubr.f32.mxu0 0.0
      %2477 = vmatmul.mubr.f32.gmra.mxu0 %v2267
      %v2478 = vpop.f32.mrf.mxu0
      %v2479 = vadd.f32 0.0, %v2478
      %v2480 = vpop.f32.mrf.mxu0
      %2481 = vmatprep.mubr.f32.mxu0 0.0
      %2482 = vmatmul.mubr.f32.gmra.mxu0 %v2270
      %v2483 = vpop.f32.mrf.mxu0
      %v2484 = vadd.f32 0.0, %v2483
      %v2485 = vpop.f32.mrf.mxu0
      %2486 = vmatprep.mubr.f32.mxu0 0.0
      %2487 = vmatmul.mubr.f32.gmra.mxu0 %v2273
      %v2488 = vpop.f32.mrf.mxu0
      %v2489 = vadd.f32 0.0, %v2488
      %v2490 = vpop.f32.mrf.mxu0
      %2491 = vmatprep.mubr.f32.mxu0 0.0
      %2492 = vmatmul.mubr.f32.gmra.mxu0 %v2276
      %v2493 = vpop.f32.mrf.mxu0
      %v2494 = vadd.f32 0.0, %v2493
      %v2495 = vpop.f32.mrf.mxu0
      %2496 = vmatprep.mubr.f32.mxu0 0.0
      %2497 = vmatmul.mubr.f32.gmra.mxu0 %v2279
      %v2498 = vpop.f32.mrf.mxu0
      %v2499 = vadd.f32 0.0, %v2498
      %v2500 = vpop.f32.mrf.mxu0
      %2501 = vmatprep.mubr.f32.mxu0 0.0
      %2502 = vmatmul.mubr.f32.gmra.mxu0 %v2282
      %v2503 = vpop.f32.mrf.mxu0
      %v2504 = vadd.f32 0.0, %v2503
      %v2505 = vpop.f32.mrf.mxu0
      %2506 = vmatprep.mubr.f32.mxu0 0.0
      %2507 = vmatmul.mubr.f32.gmra.mxu0 %v2285
      %v2508 = vpop.f32.mrf.mxu0
      %v2509 = vadd.f32 0.0, %v2508
      %v2510 = vpop.f32.mrf.mxu0
      %2511 = vdwg.mxu0
      %v2512 = vadd.f32 %v2124, %v2354
      %v2513 = vadd.f32 %v2125, %v2359
      %v2514 = vadd.f32 %v2126, %v2364
      %v2515 = vadd.f32 %v2127, %v2369
      %v2516 = vadd.f32 %v2128, %v2374
      %v2517 = vadd.f32 %v2129, %v2379
      %v2518 = vadd.f32 %v2130, %v2384
      %v2519 = vadd.f32 %v2131, %v2389
      %v2520 = vadd.f32 %v2132, %v2394
      %v2521 = vadd.f32 %v2133, %v2399
      %v2522 = vadd.f32 %v2134, %v2404
      %v2523 = vadd.f32 %v2135, %v2409
      %v2524 = vadd.f32 %v2136, %v2414
      %v2525 = vadd.f32 %v2137, %v2419
      %v2526 = vadd.f32 %v2138, %v2424
      %v2527 = vadd.f32 %v2139, %v2429
      %v2528 = vadd.f32 %v2140, %v2434
      %v2529 = vadd.f32 %v2141, %v2439
      %v2530 = vadd.f32 %v2142, %v2444
      %v2531 = vadd.f32 %v2143, %v2449
      %v2532 = vadd.f32 %v2144, %v2454
      %v2533 = vadd.f32 %v2145, %v2459
      %v2534 = vadd.f32 %v2146, %v2464
      %v2535 = vadd.f32 %v2147, %v2469
      %v2536 = vadd.f32 %v2148, %v2474
      %v2537 = vadd.f32 %v2149, %v2479
      %v2538 = vadd.f32 %v2150, %v2484
      %v2539 = vadd.f32 %v2151, %v2489
      %v2540 = vadd.f32 %v2152, %v2494
      %v2541 = vadd.f32 %v2153, %v2499
      %v2542 = vadd.f32 %v2154, %v2504
      %v2543 = vadd.f32 %v2155, %v2509
      %s2544 = scalar_lea.vmem %s273, 48
      %v2545 = vld [vmem:[%s2544] sm:$0xff]
      %v2546 = vld [vmem:[%s2544 + $0x8] sm:$0xff]
      %v2547 = vld [vmem:[%s2544 + $0x18] sm:$0xff]
      %v2548 = vld [vmem:[%s2544 + $0x20] sm:$0xff]
      %v2549 = vld [vmem:[%s2544 + $0x30] sm:$0xff]
      %v2550 = vld [vmem:[%s2544 + $0x38] sm:$0xff]
      %v2551 = vld [vmem:[%s2544 + $0x48] sm:$0xff]
      %v2552 = vld [vmem:[%s2544 + $0x50] sm:$0xff]
      %v2553 = vld [vmem:[%s2544 + $0x60] sm:$0xff]
      %v2554 = vld [vmem:[%s2544 + $0x68] sm:$0xff]
      %v2555 = vld [vmem:[%s2544 + $0x78] sm:$0xff]
      %v2556 = vld [vmem:[%s2544 + $0x80] sm:$0xff]
      %v2557 = vld [vmem:[%s2544 + $0x90] sm:$0xff]
      %v2558 = vld [vmem:[%s2544 + $0x98] sm:$0xff]
      %v2559 = vld [vmem:[%s2544 + $0xa8] sm:$0xff]
      %v2560 = vld [vmem:[%s2544 + $0xb0] sm:$0xff]
      %v2561 = vld [vmem:[%s2544 + $0xc0] sm:$0xff]
      %v2562 = vld [vmem:[%s2544 + $0xc8] sm:$0xff]
      %v2563 = vld [vmem:[%s2544 + $0xd8] sm:$0xff]
      %v2564 = vld [vmem:[%s2544 + $0xe0] sm:$0xff]
      %v2565 = vld [vmem:[%s2544 + $0xf0] sm:$0xff]
      %v2566 = vld [vmem:[%s2544 + $0xf8] sm:$0xff]
      %v2567 = vld [vmem:[%s2544 + $0x108] sm:$0xff]
      %v2568 = vld [vmem:[%s2544 + $0x110] sm:$0xff]
      %v2569 = vld [vmem:[%s2544 + $0x120] sm:$0xff]
      %v2570 = vld [vmem:[%s2544 + $0x128] sm:$0xff]
      %v2571 = vld [vmem:[%s2544 + $0x138] sm:$0xff]
      %v2572 = vld [vmem:[%s2544 + $0x140] sm:$0xff]
      %v2573 = vld [vmem:[%s2544 + $0x150] sm:$0xff]
      %v2574 = vld [vmem:[%s2544 + $0x158] sm:$0xff]
      %v2575 = vld [vmem:[%s2544 + $0x168] sm:$0xff]
      %v2576 = vld [vmem:[%s2544 + $0x170] sm:$0xff]
      %s2577 = scalar_lea.vmem %s1, 96
      %v2578 = vld [vmem:[%s2577] sm:$0xff]
      %v2579 = vld [vmem:[%s2577 + $0x8] sm:$0xff]
      %v2581 = vsel %vm348, %v2545, 0
      %v2584 = vsel %vm348, %v2546, 0
      %v2587 = vsel %vm348, %v2547, 0
      %v2590 = vsel %vm348, %v2548, 0
      %v2593 = vsel %vm348, %v2549, 0
      %v2596 = vsel %vm348, %v2550, 0
      %v2599 = vsel %vm348, %v2551, 0
      %v2602 = vsel %vm348, %v2552, 0
      %v2605 = vsel %vm348, %v2553, 0
      %v2608 = vsel %vm348, %v2554, 0
      %v2611 = vsel %vm348, %v2555, 0
      %v2614 = vsel %vm348, %v2556, 0
      %v2617 = vsel %vm348, %v2557, 0
      %v2620 = vsel %vm348, %v2558, 0
      %v2623 = vsel %vm348, %v2559, 0
      %v2626 = vsel %vm348, %v2560, 0
      %v2629 = vsel %vm348, %v2561, 0
      %v2632 = vsel %vm348, %v2562, 0
      %v2635 = vsel %vm348, %v2563, 0
      %v2638 = vsel %vm348, %v2564, 0
      %v2641 = vsel %vm348, %v2565, 0
      %v2644 = vsel %vm348, %v2566, 0
      %v2647 = vsel %vm348, %v2567, 0
      %v2650 = vsel %vm348, %v2568, 0
      %v2653 = vsel %vm348, %v2569, 0
      %v2656 = vsel %vm348, %v2570, 0
      %v2659 = vsel %vm348, %v2571, 0
      %v2662 = vsel %vm348, %v2572, 0
      %v2665 = vsel %vm348, %v2573, 0
      %v2668 = vsel %vm348, %v2574, 0
      %v2671 = vsel %vm348, %v2575, 0
      %v2674 = vsel %vm348, %v2576, 0
      %2676 = vmatprep.subr.mxu0 0.0
      %2677 = vmatpush1.msra.mxu0 0.0
      %2678 = vmatprep.subr.mxu0 0.0
      %2679 = vmatpush1.msra.mxu0 0.0
      %2680 = vmatprep.subr.mxu0 0.0
      %2681 = vmatpush1.msra.mxu0 0.0
      %2682 = vmatprep.subr.mxu0 0.0
      %2683 = vmatpush1.msra.mxu0 0.0
      %2684 = vmatprep.subr.mxu0 0.0
      %2685 = vmatpush1.msra.mxu0 0.0
      %2686 = vmatprep.subr.mxu0 0.0
      %2687 = vmatpush1.msra.mxu0 0.0
      %2688 = vmatprep.subr.mxu0 0.0
      %2689 = vmatpush1.msra.mxu0 0.0
      %2690 = vmatprep.subr.mxu0 0.0
      %2691 = vmatpush1.msra.mxu0 0.0
      %2692 = vmatprep.subr.mxu0 0.0
      %2693 = vmatpush1.msra.mxu0 0.0
      %2694 = vmatprep.subr.mxu0 0.0
      %2695 = vmatpush1.msra.mxu0 0.0
      %2696 = vmatprep.subr.mxu0 0.0
      %2697 = vmatpush1.msra.mxu0 0.0
      %2698 = vmatprep.subr.mxu0 0.0
      %2699 = vmatpush1.msra.mxu0 0.0
      %2700 = vmatprep.subr.mxu0 0.0
      %2701 = vmatpush1.msra.mxu0 0.0
      %2702 = vmatprep.subr.mxu0 0.0
      %2703 = vmatpush1.msra.mxu0 0.0
      %2704 = vmatprep.subr.mxu0 0.0
      %2705 = vmatpush1.msra.mxu0 %v2579
      %2706 = vmatprep.subr.mxu0 0.0
      %2707 = vmatpush1.msra.mxu0 %v2578
      %2708 = vmatprep.subr.mxu0 0.0
      %2709 = vmatpush2.msra.mxu0 0.0
      %2710 = vmatprep.subr.mxu0 0.0
      %2711 = vmatpush2.msra.mxu0 0.0
      %2712 = vmatprep.subr.mxu0 0.0
      %2713 = vmatpush2.msra.mxu0 0.0
      %2714 = vmatprep.subr.mxu0 0.0
      %2715 = vmatpush2.msra.mxu0 0.0
      %2716 = vmatprep.subr.mxu0 0.0
      %2717 = vmatpush2.msra.mxu0 0.0
      %2718 = vmatprep.subr.mxu0 0.0
      %2719 = vmatpush2.msra.mxu0 0.0
      %2720 = vmatprep.subr.mxu0 0.0
      %2721 = vmatpush2.msra.mxu0 0.0
      %2722 = vmatprep.subr.mxu0 0.0
      %2723 = vmatpush2.msra.mxu0 0.0
      %2724 = vmatprep.subr.mxu0 0.0
      %2725 = vmatpush2.msra.mxu0 0.0
      %2726 = vmatprep.subr.mxu0 0.0
      %2727 = vmatpush2.msra.mxu0 0.0
      %2728 = vmatprep.subr.mxu0 0.0
      %2729 = vmatpush2.msra.mxu0 0.0
      %2730 = vmatprep.subr.mxu0 0.0
      %2731 = vmatpush2.msra.mxu0 0.0
      %2732 = vmatprep.subr.mxu0 0.0
      %2733 = vmatpush2.msra.mxu0 0.0
      %2734 = vmatprep.subr.mxu0 0.0
      %2735 = vmatpush2.msra.mxu0 0.0
      %2736 = vmatprep.subr.mxu0 0.0
      %2737 = vmatpush2.msra.mxu0 0.0
      %2738 = vmatprep.subr.mxu0 0.0
      %2739 = vmatpush2.msra.mxu0 0.0
      %2740 = vmatprep.mubr.f32.mxu0 0.0
      %2741 = vmatmul.mubr.f32.gmra.mxu0 %v2581
      %v2742 = vpop.f32.mrf.mxu0
      %v2743 = vadd.f32 0.0, %v2742
      %v2744 = vpop.f32.mrf.mxu0
      %2745 = vmatprep.mubr.f32.mxu0 0.0
      %2746 = vmatmul.mubr.f32.gmra.mxu0 %v2584
      %v2747 = vpop.f32.mrf.mxu0
      %v2748 = vadd.f32 0.0, %v2747
      %v2749 = vpop.f32.mrf.mxu0
      %2750 = vmatprep.mubr.f32.mxu0 0.0
      %2751 = vmatmul.mubr.f32.gmra.mxu0 %v2587
      %v2752 = vpop.f32.mrf.mxu0
      %v2753 = vadd.f32 0.0, %v2752
      %v2754 = vpop.f32.mrf.mxu0
      %2755 = vmatprep.mubr.f32.mxu0 0.0
      %2756 = vmatmul.mubr.f32.gmra.mxu0 %v2590
      %v2757 = vpop.f32.mrf.mxu0
      %v2758 = vadd.f32 0.0, %v2757
      %v2759 = vpop.f32.mrf.mxu0
      %2760 = vmatprep.mubr.f32.mxu0 0.0
      %2761 = vmatmul.mubr.f32.gmra.mxu0 %v2593
      %v2762 = vpop.f32.mrf.mxu0
      %v2763 = vadd.f32 0.0, %v2762
      %v2764 = vpop.f32.mrf.mxu0
      %2765 = vmatprep.mubr.f32.mxu0 0.0
      %2766 = vmatmul.mubr.f32.gmra.mxu0 %v2596
      %v2767 = vpop.f32.mrf.mxu0
      %v2768 = vadd.f32 0.0, %v2767
      %v2769 = vpop.f32.mrf.mxu0
      %2770 = vmatprep.mubr.f32.mxu0 0.0
      %2771 = vmatmul.mubr.f32.gmra.mxu0 %v2599
      %v2772 = vpop.f32.mrf.mxu0
      %v2773 = vadd.f32 0.0, %v2772
      %v2774 = vpop.f32.mrf.mxu0
      %2775 = vmatprep.mubr.f32.mxu0 0.0
      %2776 = vmatmul.mubr.f32.gmra.mxu0 %v2602
      %v2777 = vpop.f32.mrf.mxu0
      %v2778 = vadd.f32 0.0, %v2777
      %v2779 = vpop.f32.mrf.mxu0
      %2780 = vmatprep.mubr.f32.mxu0 0.0
      %2781 = vmatmul.mubr.f32.gmra.mxu0 %v2605
      %v2782 = vpop.f32.mrf.mxu0
      %v2783 = vadd.f32 0.0, %v2782
      %v2784 = vpop.f32.mrf.mxu0
      %2785 = vmatprep.mubr.f32.mxu0 0.0
      %2786 = vmatmul.mubr.f32.gmra.mxu0 %v2608
      %v2787 = vpop.f32.mrf.mxu0
      %v2788 = vadd.f32 0.0, %v2787
      %v2789 = vpop.f32.mrf.mxu0
      %2790 = vmatprep.mubr.f32.mxu0 0.0
      %2791 = vmatmul.mubr.f32.gmra.mxu0 %v2611
      %v2792 = vpop.f32.mrf.mxu0
      %v2793 = vadd.f32 0.0, %v2792
      %v2794 = vpop.f32.mrf.mxu0
      %2795 = vmatprep.mubr.f32.mxu0 0.0
      %2796 = vmatmul.mubr.f32.gmra.mxu0 %v2614
      %v2797 = vpop.f32.mrf.mxu0
      %v2798 = vadd.f32 0.0, %v2797
      %v2799 = vpop.f32.mrf.mxu0
      %2800 = vmatprep.mubr.f32.mxu0 0.0
      %2801 = vmatmul.mubr.f32.gmra.mxu0 %v2617
      %v2802 = vpop.f32.mrf.mxu0
      %v2803 = vadd.f32 0.0, %v2802
      %v2804 = vpop.f32.mrf.mxu0
      %2805 = vmatprep.mubr.f32.mxu0 0.0
      %2806 = vmatmul.mubr.f32.gmra.mxu0 %v2620
      %v2807 = vpop.f32.mrf.mxu0
      %v2808 = vadd.f32 0.0, %v2807
      %v2809 = vpop.f32.mrf.mxu0
      %2810 = vmatprep.mubr.f32.mxu0 0.0
      %2811 = vmatmul.mubr.f32.gmra.mxu0 %v2623
      %v2812 = vpop.f32.mrf.mxu0
      %v2813 = vadd.f32 0.0, %v2812
      %v2814 = vpop.f32.mrf.mxu0
      %2815 = vmatprep.mubr.f32.mxu0 0.0
      %2816 = vmatmul.mubr.f32.gmra.mxu0 %v2626
      %v2817 = vpop.f32.mrf.mxu0
      %v2818 = vadd.f32 0.0, %v2817
      %v2819 = vpop.f32.mrf.mxu0
      %2820 = vmatprep.mubr.f32.mxu0 0.0
      %2821 = vmatmul.mubr.f32.gmra.mxu0 %v2629
      %v2822 = vpop.f32.mrf.mxu0
      %v2823 = vadd.f32 0.0, %v2822
      %v2824 = vpop.f32.mrf.mxu0
      %2825 = vmatprep.mubr.f32.mxu0 0.0
      %2826 = vmatmul.mubr.f32.gmra.mxu0 %v2632
      %v2827 = vpop.f32.mrf.mxu0
      %v2828 = vadd.f32 0.0, %v2827
      %v2829 = vpop.f32.mrf.mxu0
      %2830 = vmatprep.mubr.f32.mxu0 0.0
      %2831 = vmatmul.mubr.f32.gmra.mxu0 %v2635
      %v2832 = vpop.f32.mrf.mxu0
      %v2833 = vadd.f32 0.0, %v2832
      %v2834 = vpop.f32.mrf.mxu0
      %2835 = vmatprep.mubr.f32.mxu0 0.0
      %2836 = vmatmul.mubr.f32.gmra.mxu0 %v2638
      %v2837 = vpop.f32.mrf.mxu0
      %v2838 = vadd.f32 0.0, %v2837
      %v2839 = vpop.f32.mrf.mxu0
      %2840 = vmatprep.mubr.f32.mxu0 0.0
      %2841 = vmatmul.mubr.f32.gmra.mxu0 %v2641
      %v2842 = vpop.f32.mrf.mxu0
      %v2843 = vadd.f32 0.0, %v2842
      %v2844 = vpop.f32.mrf.mxu0
      %2845 = vmatprep.mubr.f32.mxu0 0.0
      %2846 = vmatmul.mubr.f32.gmra.mxu0 %v2644
      %v2847 = vpop.f32.mrf.mxu0
      %v2848 = vadd.f32 0.0, %v2847
      %v2849 = vpop.f32.mrf.mxu0
      %2850 = vmatprep.mubr.f32.mxu0 0.0
      %2851 = vmatmul.mubr.f32.gmra.mxu0 %v2647
      %v2852 = vpop.f32.mrf.mxu0
      %v2853 = vadd.f32 0.0, %v2852
      %v2854 = vpop.f32.mrf.mxu0
      %2855 = vmatprep.mubr.f32.mxu0 0.0
      %2856 = vmatmul.mubr.f32.gmra.mxu0 %v2650
      %v2857 = vpop.f32.mrf.mxu0
      %v2858 = vadd.f32 0.0, %v2857
      %v2859 = vpop.f32.mrf.mxu0
      %2860 = vmatprep.mubr.f32.mxu0 0.0
      %2861 = vmatmul.mubr.f32.gmra.mxu0 %v2653
      %v2862 = vpop.f32.mrf.mxu0
      %v2863 = vadd.f32 0.0, %v2862
      %v2864 = vpop.f32.mrf.mxu0
      %2865 = vmatprep.mubr.f32.mxu0 0.0
      %2866 = vmatmul.mubr.f32.gmra.mxu0 %v2656
      %v2867 = vpop.f32.mrf.mxu0
      %v2868 = vadd.f32 0.0, %v2867
      %v2869 = vpop.f32.mrf.mxu0
      %2870 = vmatprep.mubr.f32.mxu0 0.0
      %2871 = vmatmul.mubr.f32.gmra.mxu0 %v2659
      %v2872 = vpop.f32.mrf.mxu0
      %v2873 = vadd.f32 0.0, %v2872
      %v2874 = vpop.f32.mrf.mxu0
      %2875 = vmatprep.mubr.f32.mxu0 0.0
      %2876 = vmatmul.mubr.f32.gmra.mxu0 %v2662
      %v2877 = vpop.f32.mrf.mxu0
      %v2878 = vadd.f32 0.0, %v2877
      %v2879 = vpop.f32.mrf.mxu0
      %2880 = vmatprep.mubr.f32.mxu0 0.0
      %2881 = vmatmul.mubr.f32.gmra.mxu0 %v2665
      %v2882 = vpop.f32.mrf.mxu0
      %v2883 = vadd.f32 0.0, %v2882
      %v2884 = vpop.f32.mrf.mxu0
      %2885 = vmatprep.mubr.f32.mxu0 0.0
      %2886 = vmatmul.mubr.f32.gmra.mxu0 %v2668
      %v2887 = vpop.f32.mrf.mxu0
      %v2888 = vadd.f32 0.0, %v2887
      %v2889 = vpop.f32.mrf.mxu0
      %2890 = vmatprep.mubr.f32.mxu0 0.0
      %2891 = vmatmul.mubr.f32.gmra.mxu0 %v2671
      %v2892 = vpop.f32.mrf.mxu0
      %v2893 = vadd.f32 0.0, %v2892
      %v2894 = vpop.f32.mrf.mxu0
      %2895 = vmatprep.mubr.f32.mxu0 0.0
      %2896 = vmatmul.mubr.f32.gmra.mxu0 %v2674
      %v2897 = vpop.f32.mrf.mxu0
      %v2898 = vadd.f32 0.0, %v2897
      %v2899 = vpop.f32.mrf.mxu0
      %2900 = vdwg.mxu0
      %v2901 = vadd.f32 %v2512, %v2743
      %v2902 = vadd.f32 %v2513, %v2748
      %v2903 = vadd.f32 %v2514, %v2753
      %v2904 = vadd.f32 %v2515, %v2758
      %v2905 = vadd.f32 %v2516, %v2763
      %v2906 = vadd.f32 %v2517, %v2768
      %v2907 = vadd.f32 %v2518, %v2773
      %v2908 = vadd.f32 %v2519, %v2778
      %v2909 = vadd.f32 %v2520, %v2783
      %v2910 = vadd.f32 %v2521, %v2788
      %v2911 = vadd.f32 %v2522, %v2793
      %v2912 = vadd.f32 %v2523, %v2798
      %v2913 = vadd.f32 %v2524, %v2803
      %v2914 = vadd.f32 %v2525, %v2808
      %v2915 = vadd.f32 %v2526, %v2813
      %v2916 = vadd.f32 %v2527, %v2818
      %v2917 = vadd.f32 %v2528, %v2823
      %v2918 = vadd.f32 %v2529, %v2828
      %v2919 = vadd.f32 %v2530, %v2833
      %v2920 = vadd.f32 %v2531, %v2838
      %v2921 = vadd.f32 %v2532, %v2843
      %v2922 = vadd.f32 %v2533, %v2848
      %v2923 = vadd.f32 %v2534, %v2853
      %v2924 = vadd.f32 %v2535, %v2858
      %v2925 = vadd.f32 %v2536, %v2863
      %v2926 = vadd.f32 %v2537, %v2868
      %v2927 = vadd.f32 %v2538, %v2873
      %v2928 = vadd.f32 %v2539, %v2878
      %v2929 = vadd.f32 %v2540, %v2883
      %v2930 = vadd.f32 %v2541, %v2888
      %v2931 = vadd.f32 %v2542, %v2893
      %v2932 = vadd.f32 %v2543, %v2898
      %v2933 = vld [vmem:[%s2544 + $0x1] sm:$0xff]
      %v2934 = vld [vmem:[%s2544 + $0x9] sm:$0xff]
      %v2935 = vld [vmem:[%s2544 + $0x19] sm:$0xff]
      %v2936 = vld [vmem:[%s2544 + $0x21] sm:$0xff]
      %v2937 = vld [vmem:[%s2544 + $0x31] sm:$0xff]
      %v2938 = vld [vmem:[%s2544 + $0x39] sm:$0xff]
      %v2939 = vld [vmem:[%s2544 + $0x49] sm:$0xff]
      %v2940 = vld [vmem:[%s2544 + $0x51] sm:$0xff]
      %v2941 = vld [vmem:[%s2544 + $0x61] sm:$0xff]
      %v2942 = vld [vmem:[%s2544 + $0x69] sm:$0xff]
      %v2943 = vld [vmem:[%s2544 + $0x79] sm:$0xff]
      %v2944 = vld [vmem:[%s2544 + $0x81] sm:$0xff]
      %v2945 = vld [vmem:[%s2544 + $0x91] sm:$0xff]
      %v2946 = vld [vmem:[%s2544 + $0x99] sm:$0xff]
      %v2947 = vld [vmem:[%s2544 + $0xa9] sm:$0xff]
      %v2948 = vld [vmem:[%s2544 + $0xb1] sm:$0xff]
      %v2949 = vld [vmem:[%s2544 + $0xc1] sm:$0xff]
      %v2950 = vld [vmem:[%s2544 + $0xc9] sm:$0xff]
      %v2951 = vld [vmem:[%s2544 + $0xd9] sm:$0xff]
      %v2952 = vld [vmem:[%s2544 + $0xe1] sm:$0xff]
      %v2953 = vld [vmem:[%s2544 + $0xf1] sm:$0xff]
      %v2954 = vld [vmem:[%s2544 + $0xf9] sm:$0xff]
      %v2955 = vld [vmem:[%s2544 + $0x109] sm:$0xff]
      %v2956 = vld [vmem:[%s2544 + $0x111] sm:$0xff]
      %v2957 = vld [vmem:[%s2544 + $0x121] sm:$0xff]
      %v2958 = vld [vmem:[%s2544 + $0x129] sm:$0xff]
      %v2959 = vld [vmem:[%s2544 + $0x139] sm:$0xff]
      %v2960 = vld [vmem:[%s2544 + $0x141] sm:$0xff]
      %v2961 = vld [vmem:[%s2544 + $0x151] sm:$0xff]
      %v2962 = vld [vmem:[%s2544 + $0x159] sm:$0xff]
      %v2963 = vld [vmem:[%s2544 + $0x169] sm:$0xff]
      %v2964 = vld [vmem:[%s2544 + $0x171] sm:$0xff]
      %s2965 = scalar_lea.vmem %s1, 112
      %v2966 = vld [vmem:[%s2965] sm:$0xff]
      %v2967 = vld [vmem:[%s2965 + $0x8] sm:$0xff]
      %v2969 = vsel %vm348, %v2933, 0
      %v2972 = vsel %vm348, %v2934, 0
      %v2975 = vsel %vm348, %v2935, 0
      %v2978 = vsel %vm348, %v2936, 0
      %v2981 = vsel %vm348, %v2937, 0
      %v2984 = vsel %vm348, %v2938, 0
      %v2987 = vsel %vm348, %v2939, 0
      %v2990 = vsel %vm348, %v2940, 0
      %v2993 = vsel %vm348, %v2941, 0
      %v2996 = vsel %vm348, %v2942, 0
      %v2999 = vsel %vm348, %v2943, 0
      %v3002 = vsel %vm348, %v2944, 0
      %v3005 = vsel %vm348, %v2945, 0
      %v3008 = vsel %vm348, %v2946, 0
      %v3011 = vsel %vm348, %v2947, 0
      %v3014 = vsel %vm348, %v2948, 0
      %v3017 = vsel %vm348, %v2949, 0
      %v3020 = vsel %vm348, %v2950, 0
      %v3023 = vsel %vm348, %v2951, 0
      %v3026 = vsel %vm348, %v2952, 0
      %v3029 = vsel %vm348, %v2953, 0
      %v3032 = vsel %vm348, %v2954, 0
      %v3035 = vsel %vm348, %v2955, 0
      %v3038 = vsel %vm348, %v2956, 0
      %v3041 = vsel %vm348, %v2957, 0
      %v3044 = vsel %vm348, %v2958, 0
      %v3047 = vsel %vm348, %v2959, 0
      %v3050 = vsel %vm348, %v2960, 0
      %v3053 = vsel %vm348, %v2961, 0
      %v3056 = vsel %vm348, %v2962, 0
      %v3059 = vsel %vm348, %v2963, 0
      %v3062 = vsel %vm348, %v2964, 0
      %3064 = vmatprep.subr.mxu0 0.0
      %3065 = vmatpush1.msra.mxu0 0.0
      %3066 = vmatprep.subr.mxu0 0.0
      %3067 = vmatpush1.msra.mxu0 0.0
      %3068 = vmatprep.subr.mxu0 0.0
      %3069 = vmatpush1.msra.mxu0 0.0
      %3070 = vmatprep.subr.mxu0 0.0
      %3071 = vmatpush1.msra.mxu0 0.0
      %3072 = vmatprep.subr.mxu0 0.0
      %3073 = vmatpush1.msra.mxu0 0.0
      %3074 = vmatprep.subr.mxu0 0.0
      %3075 = vmatpush1.msra.mxu0 0.0
      %3076 = vmatprep.subr.mxu0 0.0
      %3077 = vmatpush1.msra.mxu0 0.0
      %3078 = vmatprep.subr.mxu0 0.0
      %3079 = vmatpush1.msra.mxu0 0.0
      %3080 = vmatprep.subr.mxu0 0.0
      %3081 = vmatpush1.msra.mxu0 0.0
      %3082 = vmatprep.subr.mxu0 0.0
      %3083 = vmatpush1.msra.mxu0 0.0
      %3084 = vmatprep.subr.mxu0 0.0
      %3085 = vmatpush1.msra.mxu0 0.0
      %3086 = vmatprep.subr.mxu0 0.0
      %3087 = vmatpush1.msra.mxu0 0.0
      %3088 = vmatprep.subr.mxu0 0.0
      %3089 = vmatpush1.msra.mxu0 0.0
      %3090 = vmatprep.subr.mxu0 0.0
      %3091 = vmatpush1.msra.mxu0 0.0
      %3092 = vmatprep.subr.mxu0 0.0
      %3093 = vmatpush1.msra.mxu0 %v2967
      %3094 = vmatprep.subr.mxu0 0.0
      %3095 = vmatpush1.msra.mxu0 %v2966
      %3096 = vmatprep.subr.mxu0 0.0
      %3097 = vmatpush2.msra.mxu0 0.0
      %3098 = vmatprep.subr.mxu0 0.0
      %3099 = vmatpush2.msra.mxu0 0.0
      %3100 = vmatprep.subr.mxu0 0.0
      %3101 = vmatpush2.msra.mxu0 0.0
      %3102 = vmatprep.subr.mxu0 0.0
      %3103 = vmatpush2.msra.mxu0 0.0
      %3104 = vmatprep.subr.mxu0 0.0
      %3105 = vmatpush2.msra.mxu0 0.0
      %3106 = vmatprep.subr.mxu0 0.0
      %3107 = vmatpush2.msra.mxu0 0.0
      %3108 = vmatprep.subr.mxu0 0.0
      %3109 = vmatpush2.msra.mxu0 0.0
      %3110 = vmatprep.subr.mxu0 0.0
      %3111 = vmatpush2.msra.mxu0 0.0
      %3112 = vmatprep.subr.mxu0 0.0
      %3113 = vmatpush2.msra.mxu0 0.0
      %3114 = vmatprep.subr.mxu0 0.0
      %3115 = vmatpush2.msra.mxu0 0.0
      %3116 = vmatprep.subr.mxu0 0.0
      %3117 = vmatpush2.msra.mxu0 0.0
      %3118 = vmatprep.subr.mxu0 0.0
      %3119 = vmatpush2.msra.mxu0 0.0
      %3120 = vmatprep.subr.mxu0 0.0
      %3121 = vmatpush2.msra.mxu0 0.0
      %3122 = vmatprep.subr.mxu0 0.0
      %3123 = vmatpush2.msra.mxu0 0.0
      %3124 = vmatprep.subr.mxu0 0.0
      %3125 = vmatpush2.msra.mxu0 0.0
      %3126 = vmatprep.subr.mxu0 0.0
      %3127 = vmatpush2.msra.mxu0 0.0
      %3128 = vmatprep.mubr.f32.mxu0 0.0
      %3129 = vmatmul.mubr.f32.gmra.mxu0 %v2969
      %v3130 = vpop.f32.mrf.mxu0
      %v3131 = vadd.f32 0.0, %v3130
      %v3132 = vpop.f32.mrf.mxu0
      %3133 = vmatprep.mubr.f32.mxu0 0.0
      %3134 = vmatmul.mubr.f32.gmra.mxu0 %v2972
      %v3135 = vpop.f32.mrf.mxu0
      %v3136 = vadd.f32 0.0, %v3135
      %v3137 = vpop.f32.mrf.mxu0
      %3138 = vmatprep.mubr.f32.mxu0 0.0
      %3139 = vmatmul.mubr.f32.gmra.mxu0 %v2975
      %v3140 = vpop.f32.mrf.mxu0
      %v3141 = vadd.f32 0.0, %v3140
      %v3142 = vpop.f32.mrf.mxu0
      %3143 = vmatprep.mubr.f32.mxu0 0.0
      %3144 = vmatmul.mubr.f32.gmra.mxu0 %v2978
      %v3145 = vpop.f32.mrf.mxu0
      %v3146 = vadd.f32 0.0, %v3145
      %v3147 = vpop.f32.mrf.mxu0
      %3148 = vmatprep.mubr.f32.mxu0 0.0
      %3149 = vmatmul.mubr.f32.gmra.mxu0 %v2981
      %v3150 = vpop.f32.mrf.mxu0
      %v3151 = vadd.f32 0.0, %v3150
      %v3152 = vpop.f32.mrf.mxu0
      %3153 = vmatprep.mubr.f32.mxu0 0.0
      %3154 = vmatmul.mubr.f32.gmra.mxu0 %v2984
      %v3155 = vpop.f32.mrf.mxu0
      %v3156 = vadd.f32 0.0, %v3155
      %v3157 = vpop.f32.mrf.mxu0
      %3158 = vmatprep.mubr.f32.mxu0 0.0
      %3159 = vmatmul.mubr.f32.gmra.mxu0 %v2987
      %v3160 = vpop.f32.mrf.mxu0
      %v3161 = vadd.f32 0.0, %v3160
      %v3162 = vpop.f32.mrf.mxu0
      %3163 = vmatprep.mubr.f32.mxu0 0.0
      %3164 = vmatmul.mubr.f32.gmra.mxu0 %v2990
      %v3165 = vpop.f32.mrf.mxu0
      %v3166 = vadd.f32 0.0, %v3165
      %v3167 = vpop.f32.mrf.mxu0
      %3168 = vmatprep.mubr.f32.mxu0 0.0
      %3169 = vmatmul.mubr.f32.gmra.mxu0 %v2993
      %v3170 = vpop.f32.mrf.mxu0
      %v3171 = vadd.f32 0.0, %v3170
      %v3172 = vpop.f32.mrf.mxu0
      %3173 = vmatprep.mubr.f32.mxu0 0.0
      %3174 = vmatmul.mubr.f32.gmra.mxu0 %v2996
      %v3175 = vpop.f32.mrf.mxu0
      %v3176 = vadd.f32 0.0, %v3175
      %v3177 = vpop.f32.mrf.mxu0
      %3178 = vmatprep.mubr.f32.mxu0 0.0
      %3179 = vmatmul.mubr.f32.gmra.mxu0 %v2999
      %v3180 = vpop.f32.mrf.mxu0
      %v3181 = vadd.f32 0.0, %v3180
      %v3182 = vpop.f32.mrf.mxu0
      %3183 = vmatprep.mubr.f32.mxu0 0.0
      %3184 = vmatmul.mubr.f32.gmra.mxu0 %v3002
      %v3185 = vpop.f32.mrf.mxu0
      %v3186 = vadd.f32 0.0, %v3185
      %v3187 = vpop.f32.mrf.mxu0
      %3188 = vmatprep.mubr.f32.mxu0 0.0
      %3189 = vmatmul.mubr.f32.gmra.mxu0 %v3005
      %v3190 = vpop.f32.mrf.mxu0
      %v3191 = vadd.f32 0.0, %v3190
      %v3192 = vpop.f32.mrf.mxu0
      %3193 = vmatprep.mubr.f32.mxu0 0.0
      %3194 = vmatmul.mubr.f32.gmra.mxu0 %v3008
      %v3195 = vpop.f32.mrf.mxu0
      %v3196 = vadd.f32 0.0, %v3195
      %v3197 = vpop.f32.mrf.mxu0
      %3198 = vmatprep.mubr.f32.mxu0 0.0
      %3199 = vmatmul.mubr.f32.gmra.mxu0 %v3011
      %v3200 = vpop.f32.mrf.mxu0
      %v3201 = vadd.f32 0.0, %v3200
      %v3202 = vpop.f32.mrf.mxu0
      %3203 = vmatprep.mubr.f32.mxu0 0.0
      %3204 = vmatmul.mubr.f32.gmra.mxu0 %v3014
      %v3205 = vpop.f32.mrf.mxu0
      %v3206 = vadd.f32 0.0, %v3205
      %v3207 = vpop.f32.mrf.mxu0
      %3208 = vmatprep.mubr.f32.mxu0 0.0
      %3209 = vmatmul.mubr.f32.gmra.mxu0 %v3017
      %v3210 = vpop.f32.mrf.mxu0
      %v3211 = vadd.f32 0.0, %v3210
      %v3212 = vpop.f32.mrf.mxu0
      %3213 = vmatprep.mubr.f32.mxu0 0.0
      %3214 = vmatmul.mubr.f32.gmra.mxu0 %v3020
      %v3215 = vpop.f32.mrf.mxu0
      %v3216 = vadd.f32 0.0, %v3215
      %v3217 = vpop.f32.mrf.mxu0
      %3218 = vmatprep.mubr.f32.mxu0 0.0
      %3219 = vmatmul.mubr.f32.gmra.mxu0 %v3023
      %v3220 = vpop.f32.mrf.mxu0
      %v3221 = vadd.f32 0.0, %v3220
      %v3222 = vpop.f32.mrf.mxu0
      %3223 = vmatprep.mubr.f32.mxu0 0.0
      %3224 = vmatmul.mubr.f32.gmra.mxu0 %v3026
      %v3225 = vpop.f32.mrf.mxu0
      %v3226 = vadd.f32 0.0, %v3225
      %v3227 = vpop.f32.mrf.mxu0
      %3228 = vmatprep.mubr.f32.mxu0 0.0
      %3229 = vmatmul.mubr.f32.gmra.mxu0 %v3029
      %v3230 = vpop.f32.mrf.mxu0
      %v3231 = vadd.f32 0.0, %v3230
      %v3232 = vpop.f32.mrf.mxu0
      %3233 = vmatprep.mubr.f32.mxu0 0.0
      %3234 = vmatmul.mubr.f32.gmra.mxu0 %v3032
      %v3235 = vpop.f32.mrf.mxu0
      %v3236 = vadd.f32 0.0, %v3235
      %v3237 = vpop.f32.mrf.mxu0
      %3238 = vmatprep.mubr.f32.mxu0 0.0
      %3239 = vmatmul.mubr.f32.gmra.mxu0 %v3035
      %v3240 = vpop.f32.mrf.mxu0
      %v3241 = vadd.f32 0.0, %v3240
      %v3242 = vpop.f32.mrf.mxu0
      %3243 = vmatprep.mubr.f32.mxu0 0.0
      %3244 = vmatmul.mubr.f32.gmra.mxu0 %v3038
      %v3245 = vpop.f32.mrf.mxu0
      %v3246 = vadd.f32 0.0, %v3245
      %v3247 = vpop.f32.mrf.mxu0
      %3248 = vmatprep.mubr.f32.mxu0 0.0
      %3249 = vmatmul.mubr.f32.gmra.mxu0 %v3041
      %v3250 = vpop.f32.mrf.mxu0
      %v3251 = vadd.f32 0.0, %v3250
      %v3252 = vpop.f32.mrf.mxu0
      %3253 = vmatprep.mubr.f32.mxu0 0.0
      %3254 = vmatmul.mubr.f32.gmra.mxu0 %v3044
      %v3255 = vpop.f32.mrf.mxu0
      %v3256 = vadd.f32 0.0, %v3255
      %v3257 = vpop.f32.mrf.mxu0
      %3258 = vmatprep.mubr.f32.mxu0 0.0
      %3259 = vmatmul.mubr.f32.gmra.mxu0 %v3047
      %v3260 = vpop.f32.mrf.mxu0
      %v3261 = vadd.f32 0.0, %v3260
      %v3262 = vpop.f32.mrf.mxu0
      %3263 = vmatprep.mubr.f32.mxu0 0.0
      %3264 = vmatmul.mubr.f32.gmra.mxu0 %v3050
      %v3265 = vpop.f32.mrf.mxu0
      %v3266 = vadd.f32 0.0, %v3265
      %v3267 = vpop.f32.mrf.mxu0
      %3268 = vmatprep.mubr.f32.mxu0 0.0
      %3269 = vmatmul.mubr.f32.gmra.mxu0 %v3053
      %v3270 = vpop.f32.mrf.mxu0
      %v3271 = vadd.f32 0.0, %v3270
      %v3272 = vpop.f32.mrf.mxu0
      %3273 = vmatprep.mubr.f32.mxu0 0.0
      %3274 = vmatmul.mubr.f32.gmra.mxu0 %v3056
      %v3275 = vpop.f32.mrf.mxu0
      %v3276 = vadd.f32 0.0, %v3275
      %v3277 = vpop.f32.mrf.mxu0
      %3278 = vmatprep.mubr.f32.mxu0 0.0
      %3279 = vmatmul.mubr.f32.gmra.mxu0 %v3059
      %v3280 = vpop.f32.mrf.mxu0
      %v3281 = vadd.f32 0.0, %v3280
      %v3282 = vpop.f32.mrf.mxu0
      %3283 = vmatprep.mubr.f32.mxu0 0.0
      %3284 = vmatmul.mubr.f32.gmra.mxu0 %v3062
      %v3285 = vpop.f32.mrf.mxu0
      %v3286 = vadd.f32 0.0, %v3285
      %v3287 = vpop.f32.mrf.mxu0
      %3288 = vdwg.mxu0
      %v3289 = vadd.f32 %v2901, %v3131
      %v3290 = vadd.f32 %v2902, %v3136
      %v3291 = vadd.f32 %v2903, %v3141
      %v3292 = vadd.f32 %v2904, %v3146
      %v3293 = vadd.f32 %v2905, %v3151
      %v3294 = vadd.f32 %v2906, %v3156
      %v3295 = vadd.f32 %v2907, %v3161
      %v3296 = vadd.f32 %v2908, %v3166
      %v3297 = vadd.f32 %v2909, %v3171
      %v3298 = vadd.f32 %v2910, %v3176
      %v3299 = vadd.f32 %v2911, %v3181
      %v3300 = vadd.f32 %v2912, %v3186
      %v3301 = vadd.f32 %v2913, %v3191
      %v3302 = vadd.f32 %v2914, %v3196
      %v3303 = vadd.f32 %v2915, %v3201
      %v3304 = vadd.f32 %v2916, %v3206
      %v3305 = vadd.f32 %v2917, %v3211
      %v3306 = vadd.f32 %v2918, %v3216
      %v3307 = vadd.f32 %v2919, %v3221
      %v3308 = vadd.f32 %v2920, %v3226
      %v3309 = vadd.f32 %v2921, %v3231
      %v3310 = vadd.f32 %v2922, %v3236
      %v3311 = vadd.f32 %v2923, %v3241
      %v3312 = vadd.f32 %v2924, %v3246
      %v3313 = vadd.f32 %v2925, %v3251
      %v3314 = vadd.f32 %v2926, %v3256
      %v3315 = vadd.f32 %v2927, %v3261
      %v3316 = vadd.f32 %v2928, %v3266
      %v3317 = vadd.f32 %v2929, %v3271
      %v3318 = vadd.f32 %v2930, %v3276
      %v3319 = vadd.f32 %v2931, %v3281
      %v3320 = vadd.f32 %v2932, %v3286
      %v3321 = vld [vmem:[%s2544 + $0x2] sm:$0xff]
      %v3322 = vld [vmem:[%s2544 + $0xa] sm:$0xff]
      %v3323 = vld [vmem:[%s2544 + $0x1a] sm:$0xff]
      %v3324 = vld [vmem:[%s2544 + $0x22] sm:$0xff]
      %v3325 = vld [vmem:[%s2544 + $0x32] sm:$0xff]
      %v3326 = vld [vmem:[%s2544 + $0x3a] sm:$0xff]
      %v3327 = vld [vmem:[%s2544 + $0x4a] sm:$0xff]
      %v3328 = vld [vmem:[%s2544 + $0x52] sm:$0xff]
      %v3329 = vld [vmem:[%s2544 + $0x62] sm:$0xff]
      %v3330 = vld [vmem:[%s2544 + $0x6a] sm:$0xff]
      %v3331 = vld [vmem:[%s2544 + $0x7a] sm:$0xff]
      %v3332 = vld [vmem:[%s2544 + $0x82] sm:$0xff]
      %v3333 = vld [vmem:[%s2544 + $0x92] sm:$0xff]
      %v3334 = vld [vmem:[%s2544 + $0x9a] sm:$0xff]
      %v3335 = vld [vmem:[%s2544 + $0xaa] sm:$0xff]
      %v3336 = vld [vmem:[%s2544 + $0xb2] sm:$0xff]
      %v3337 = vld [vmem:[%s2544 + $0xc2] sm:$0xff]
      %v3338 = vld [vmem:[%s2544 + $0xca] sm:$0xff]
      %v3339 = vld [vmem:[%s2544 + $0xda] sm:$0xff]
      %v3340 = vld [vmem:[%s2544 + $0xe2] sm:$0xff]
      %v3341 = vld [vmem:[%s2544 + $0xf2] sm:$0xff]
      %v3342 = vld [vmem:[%s2544 + $0xfa] sm:$0xff]
      %v3343 = vld [vmem:[%s2544 + $0x10a] sm:$0xff]
      %v3344 = vld [vmem:[%s2544 + $0x112] sm:$0xff]
      %v3345 = vld [vmem:[%s2544 + $0x122] sm:$0xff]
      %v3346 = vld [vmem:[%s2544 + $0x12a] sm:$0xff]
      %v3347 = vld [vmem:[%s2544 + $0x13a] sm:$0xff]
      %v3348 = vld [vmem:[%s2544 + $0x142] sm:$0xff]
      %v3349 = vld [vmem:[%s2544 + $0x152] sm:$0xff]
      %v3350 = vld [vmem:[%s2544 + $0x15a] sm:$0xff]
      %v3351 = vld [vmem:[%s2544 + $0x16a] sm:$0xff]
      %v3352 = vld [vmem:[%s2544 + $0x172] sm:$0xff]
      %s3353 = scalar_lea.vmem %s1, 128
      %v3354 = vld [vmem:[%s3353] sm:$0xff]
      %v3355 = vld [vmem:[%s3353 + $0x8] sm:$0xff]
      %v3357 = vsel %vm348, %v3321, 0
      %v3360 = vsel %vm348, %v3322, 0
      %v3363 = vsel %vm348, %v3323, 0
      %v3366 = vsel %vm348, %v3324, 0
      %v3369 = vsel %vm348, %v3325, 0
      %v3372 = vsel %vm348, %v3326, 0
      %v3375 = vsel %vm348, %v3327, 0
      %v3378 = vsel %vm348, %v3328, 0
      %v3381 = vsel %vm348, %v3329, 0
      %v3384 = vsel %vm348, %v3330, 0
      %v3387 = vsel %vm348, %v3331, 0
      %v3390 = vsel %vm348, %v3332, 0
      %v3393 = vsel %vm348, %v3333, 0
      %v3396 = vsel %vm348, %v3334, 0
      %v3399 = vsel %vm348, %v3335, 0
      %v3402 = vsel %vm348, %v3336, 0
      %v3405 = vsel %vm348, %v3337, 0
      %v3408 = vsel %vm348, %v3338, 0
      %v3411 = vsel %vm348, %v3339, 0
      %v3414 = vsel %vm348, %v3340, 0
      %v3417 = vsel %vm348, %v3341, 0
      %v3420 = vsel %vm348, %v3342, 0
      %v3423 = vsel %vm348, %v3343, 0
      %v3426 = vsel %vm348, %v3344, 0
      %v3429 = vsel %vm348, %v3345, 0
      %v3432 = vsel %vm348, %v3346, 0
      %v3435 = vsel %vm348, %v3347, 0
      %v3438 = vsel %vm348, %v3348, 0
      %v3441 = vsel %vm348, %v3349, 0
      %v3444 = vsel %vm348, %v3350, 0
      %v3447 = vsel %vm348, %v3351, 0
      %v3450 = vsel %vm348, %v3352, 0
      %3452 = vmatprep.subr.mxu0 0.0
      %3453 = vmatpush1.msra.mxu0 0.0
      %3454 = vmatprep.subr.mxu0 0.0
      %3455 = vmatpush1.msra.mxu0 0.0
      %3456 = vmatprep.subr.mxu0 0.0
      %3457 = vmatpush1.msra.mxu0 0.0
      %3458 = vmatprep.subr.mxu0 0.0
      %3459 = vmatpush1.msra.mxu0 0.0
      %3460 = vmatprep.subr.mxu0 0.0
      %3461 = vmatpush1.msra.mxu0 0.0
      %3462 = vmatprep.subr.mxu0 0.0
      %3463 = vmatpush1.msra.mxu0 0.0
      %3464 = vmatprep.subr.mxu0 0.0
      %3465 = vmatpush1.msra.mxu0 0.0
      %3466 = vmatprep.subr.mxu0 0.0
      %3467 = vmatpush1.msra.mxu0 0.0
      %3468 = vmatprep.subr.mxu0 0.0
      %3469 = vmatpush1.msra.mxu0 0.0
      %3470 = vmatprep.subr.mxu0 0.0
      %3471 = vmatpush1.msra.mxu0 0.0
      %3472 = vmatprep.subr.mxu0 0.0
      %3473 = vmatpush1.msra.mxu0 0.0
      %3474 = vmatprep.subr.mxu0 0.0
      %3475 = vmatpush1.msra.mxu0 0.0
      %3476 = vmatprep.subr.mxu0 0.0
      %3477 = vmatpush1.msra.mxu0 0.0
      %3478 = vmatprep.subr.mxu0 0.0
      %3479 = vmatpush1.msra.mxu0 0.0
      %3480 = vmatprep.subr.mxu0 0.0
      %3481 = vmatpush1.msra.mxu0 %v3355
      %3482 = vmatprep.subr.mxu0 0.0
      %3483 = vmatpush1.msra.mxu0 %v3354
      %3484 = vmatprep.subr.mxu0 0.0
      %3485 = vmatpush2.msra.mxu0 0.0
      %3486 = vmatprep.subr.mxu0 0.0
      %3487 = vmatpush2.msra.mxu0 0.0
      %3488 = vmatprep.subr.mxu0 0.0
      %3489 = vmatpush2.msra.mxu0 0.0
      %3490 = vmatprep.subr.mxu0 0.0
      %3491 = vmatpush2.msra.mxu0 0.0
      %3492 = vmatprep.subr.mxu0 0.0
      %3493 = vmatpush2.msra.mxu0 0.0
      %3494 = vmatprep.subr.mxu0 0.0
      %3495 = vmatpush2.msra.mxu0 0.0
      %3496 = vmatprep.subr.mxu0 0.0
      %3497 = vmatpush2.msra.mxu0 0.0
      %3498 = vmatprep.subr.mxu0 0.0
      %3499 = vmatpush2.msra.mxu0 0.0
      %3500 = vmatprep.subr.mxu0 0.0
      %3501 = vmatpush2.msra.mxu0 0.0
      %3502 = vmatprep.subr.mxu0 0.0
      %3503 = vmatpush2.msra.mxu0 0.0
      %3504 = vmatprep.subr.mxu0 0.0
      %3505 = vmatpush2.msra.mxu0 0.0
      %3506 = vmatprep.subr.mxu0 0.0
      %3507 = vmatpush2.msra.mxu0 0.0
      %3508 = vmatprep.subr.mxu0 0.0
      %3509 = vmatpush2.msra.mxu0 0.0
      %3510 = vmatprep.subr.mxu0 0.0
      %3511 = vmatpush2.msra.mxu0 0.0
      %3512 = vmatprep.subr.mxu0 0.0
      %3513 = vmatpush2.msra.mxu0 0.0
      %3514 = vmatprep.subr.mxu0 0.0
      %3515 = vmatpush2.msra.mxu0 0.0
      %3516 = vmatprep.mubr.f32.mxu0 0.0
      %3517 = vmatmul.mubr.f32.gmra.mxu0 %v3357
      %v3518 = vpop.f32.mrf.mxu0
      %v3519 = vadd.f32 0.0, %v3518
      %v3520 = vpop.f32.mrf.mxu0
      %3521 = vmatprep.mubr.f32.mxu0 0.0
      %3522 = vmatmul.mubr.f32.gmra.mxu0 %v3360
      %v3523 = vpop.f32.mrf.mxu0
      %v3524 = vadd.f32 0.0, %v3523
      %v3525 = vpop.f32.mrf.mxu0
      %3526 = vmatprep.mubr.f32.mxu0 0.0
      %3527 = vmatmul.mubr.f32.gmra.mxu0 %v3363
      %v3528 = vpop.f32.mrf.mxu0
      %v3529 = vadd.f32 0.0, %v3528
      %v3530 = vpop.f32.mrf.mxu0
      %3531 = vmatprep.mubr.f32.mxu0 0.0
      %3532 = vmatmul.mubr.f32.gmra.mxu0 %v3366
      %v3533 = vpop.f32.mrf.mxu0
      %v3534 = vadd.f32 0.0, %v3533
      %v3535 = vpop.f32.mrf.mxu0
      %3536 = vmatprep.mubr.f32.mxu0 0.0
      %3537 = vmatmul.mubr.f32.gmra.mxu0 %v3369
      %v3538 = vpop.f32.mrf.mxu0
      %v3539 = vadd.f32 0.0, %v3538
      %v3540 = vpop.f32.mrf.mxu0
      %3541 = vmatprep.mubr.f32.mxu0 0.0
      %3542 = vmatmul.mubr.f32.gmra.mxu0 %v3372
      %v3543 = vpop.f32.mrf.mxu0
      %v3544 = vadd.f32 0.0, %v3543
      %v3545 = vpop.f32.mrf.mxu0
      %3546 = vmatprep.mubr.f32.mxu0 0.0
      %3547 = vmatmul.mubr.f32.gmra.mxu0 %v3375
      %v3548 = vpop.f32.mrf.mxu0
      %v3549 = vadd.f32 0.0, %v3548
      %v3550 = vpop.f32.mrf.mxu0
      %3551 = vmatprep.mubr.f32.mxu0 0.0
      %3552 = vmatmul.mubr.f32.gmra.mxu0 %v3378
      %v3553 = vpop.f32.mrf.mxu0
      %v3554 = vadd.f32 0.0, %v3553
      %v3555 = vpop.f32.mrf.mxu0
      %3556 = vmatprep.mubr.f32.mxu0 0.0
      %3557 = vmatmul.mubr.f32.gmra.mxu0 %v3381
      %v3558 = vpop.f32.mrf.mxu0
      %v3559 = vadd.f32 0.0, %v3558
      %v3560 = vpop.f32.mrf.mxu0
      %3561 = vmatprep.mubr.f32.mxu0 0.0
      %3562 = vmatmul.mubr.f32.gmra.mxu0 %v3384
      %v3563 = vpop.f32.mrf.mxu0
      %v3564 = vadd.f32 0.0, %v3563
      %v3565 = vpop.f32.mrf.mxu0
      %3566 = vmatprep.mubr.f32.mxu0 0.0
      %3567 = vmatmul.mubr.f32.gmra.mxu0 %v3387
      %v3568 = vpop.f32.mrf.mxu0
      %v3569 = vadd.f32 0.0, %v3568
      %v3570 = vpop.f32.mrf.mxu0
      %3571 = vmatprep.mubr.f32.mxu0 0.0
      %3572 = vmatmul.mubr.f32.gmra.mxu0 %v3390
      %v3573 = vpop.f32.mrf.mxu0
      %v3574 = vadd.f32 0.0, %v3573
      %v3575 = vpop.f32.mrf.mxu0
      %3576 = vmatprep.mubr.f32.mxu0 0.0
      %3577 = vmatmul.mubr.f32.gmra.mxu0 %v3393
      %v3578 = vpop.f32.mrf.mxu0
      %v3579 = vadd.f32 0.0, %v3578
      %v3580 = vpop.f32.mrf.mxu0
      %3581 = vmatprep.mubr.f32.mxu0 0.0
      %3582 = vmatmul.mubr.f32.gmra.mxu0 %v3396
      %v3583 = vpop.f32.mrf.mxu0
      %v3584 = vadd.f32 0.0, %v3583
      %v3585 = vpop.f32.mrf.mxu0
      %3586 = vmatprep.mubr.f32.mxu0 0.0
      %3587 = vmatmul.mubr.f32.gmra.mxu0 %v3399
      %v3588 = vpop.f32.mrf.mxu0
      %v3589 = vadd.f32 0.0, %v3588
      %v3590 = vpop.f32.mrf.mxu0
      %3591 = vmatprep.mubr.f32.mxu0 0.0
      %3592 = vmatmul.mubr.f32.gmra.mxu0 %v3402
      %v3593 = vpop.f32.mrf.mxu0
      %v3594 = vadd.f32 0.0, %v3593
      %v3595 = vpop.f32.mrf.mxu0
      %3596 = vmatprep.mubr.f32.mxu0 0.0
      %3597 = vmatmul.mubr.f32.gmra.mxu0 %v3405
      %v3598 = vpop.f32.mrf.mxu0
      %v3599 = vadd.f32 0.0, %v3598
      %v3600 = vpop.f32.mrf.mxu0
      %3601 = vmatprep.mubr.f32.mxu0 0.0
      %3602 = vmatmul.mubr.f32.gmra.mxu0 %v3408
      %v3603 = vpop.f32.mrf.mxu0
      %v3604 = vadd.f32 0.0, %v3603
      %v3605 = vpop.f32.mrf.mxu0
      %3606 = vmatprep.mubr.f32.mxu0 0.0
      %3607 = vmatmul.mubr.f32.gmra.mxu0 %v3411
      %v3608 = vpop.f32.mrf.mxu0
      %v3609 = vadd.f32 0.0, %v3608
      %v3610 = vpop.f32.mrf.mxu0
      %3611 = vmatprep.mubr.f32.mxu0 0.0
      %3612 = vmatmul.mubr.f32.gmra.mxu0 %v3414
      %v3613 = vpop.f32.mrf.mxu0
      %v3614 = vadd.f32 0.0, %v3613
      %v3615 = vpop.f32.mrf.mxu0
      %3616 = vmatprep.mubr.f32.mxu0 0.0
      %3617 = vmatmul.mubr.f32.gmra.mxu0 %v3417
      %v3618 = vpop.f32.mrf.mxu0
      %v3619 = vadd.f32 0.0, %v3618
      %v3620 = vpop.f32.mrf.mxu0
      %3621 = vmatprep.mubr.f32.mxu0 0.0
      %3622 = vmatmul.mubr.f32.gmra.mxu0 %v3420
      %v3623 = vpop.f32.mrf.mxu0
      %v3624 = vadd.f32 0.0, %v3623
      %v3625 = vpop.f32.mrf.mxu0
      %3626 = vmatprep.mubr.f32.mxu0 0.0
      %3627 = vmatmul.mubr.f32.gmra.mxu0 %v3423
      %v3628 = vpop.f32.mrf.mxu0
      %v3629 = vadd.f32 0.0, %v3628
      %v3630 = vpop.f32.mrf.mxu0
      %3631 = vmatprep.mubr.f32.mxu0 0.0
      %3632 = vmatmul.mubr.f32.gmra.mxu0 %v3426
      %v3633 = vpop.f32.mrf.mxu0
      %v3634 = vadd.f32 0.0, %v3633
      %v3635 = vpop.f32.mrf.mxu0
      %3636 = vmatprep.mubr.f32.mxu0 0.0
      %3637 = vmatmul.mubr.f32.gmra.mxu0 %v3429
      %v3638 = vpop.f32.mrf.mxu0
      %v3639 = vadd.f32 0.0, %v3638
      %v3640 = vpop.f32.mrf.mxu0
      %3641 = vmatprep.mubr.f32.mxu0 0.0
      %3642 = vmatmul.mubr.f32.gmra.mxu0 %v3432
      %v3643 = vpop.f32.mrf.mxu0
      %v3644 = vadd.f32 0.0, %v3643
      %v3645 = vpop.f32.mrf.mxu0
      %3646 = vmatprep.mubr.f32.mxu0 0.0
      %3647 = vmatmul.mubr.f32.gmra.mxu0 %v3435
      %v3648 = vpop.f32.mrf.mxu0
      %v3649 = vadd.f32 0.0, %v3648
      %v3650 = vpop.f32.mrf.mxu0
      %3651 = vmatprep.mubr.f32.mxu0 0.0
      %3652 = vmatmul.mubr.f32.gmra.mxu0 %v3438
      %v3653 = vpop.f32.mrf.mxu0
      %v3654 = vadd.f32 0.0, %v3653
      %v3655 = vpop.f32.mrf.mxu0
      %3656 = vmatprep.mubr.f32.mxu0 0.0
      %3657 = vmatmul.mubr.f32.gmra.mxu0 %v3441
      %v3658 = vpop.f32.mrf.mxu0
      %v3659 = vadd.f32 0.0, %v3658
      %v3660 = vpop.f32.mrf.mxu0
      %3661 = vmatprep.mubr.f32.mxu0 0.0
      %3662 = vmatmul.mubr.f32.gmra.mxu0 %v3444
      %v3663 = vpop.f32.mrf.mxu0
      %v3664 = vadd.f32 0.0, %v3663
      %v3665 = vpop.f32.mrf.mxu0
      %3666 = vmatprep.mubr.f32.mxu0 0.0
      %3667 = vmatmul.mubr.f32.gmra.mxu0 %v3447
      %v3668 = vpop.f32.mrf.mxu0
      %v3669 = vadd.f32 0.0, %v3668
      %v3670 = vpop.f32.mrf.mxu0
      %3671 = vmatprep.mubr.f32.mxu0 0.0
      %3672 = vmatmul.mubr.f32.gmra.mxu0 %v3450
      %v3673 = vpop.f32.mrf.mxu0
      %v3674 = vadd.f32 0.0, %v3673
      %v3675 = vpop.f32.mrf.mxu0
      %3676 = vdwg.mxu0
      %v3677 = vadd.f32 %v3289, %v3519
      %v3678 = vadd.f32 %v3290, %v3524
      %v3679 = vadd.f32 %v3291, %v3529
      %v3680 = vadd.f32 %v3292, %v3534
      %v3681 = vadd.f32 %v3293, %v3539
      %v3682 = vadd.f32 %v3294, %v3544
      %v3683 = vadd.f32 %v3295, %v3549
      %v3684 = vadd.f32 %v3296, %v3554
      %v3685 = vadd.f32 %v3297, %v3559
      %v3686 = vadd.f32 %v3298, %v3564
      %v3687 = vadd.f32 %v3299, %v3569
      %v3688 = vadd.f32 %v3300, %v3574
      %v3689 = vadd.f32 %v3301, %v3579
      %v3690 = vadd.f32 %v3302, %v3584
      %v3691 = vadd.f32 %v3303, %v3589
      %v3692 = vadd.f32 %v3304, %v3594
      %v3693 = vadd.f32 %v3305, %v3599
      %v3694 = vadd.f32 %v3306, %v3604
      %v3695 = vadd.f32 %v3307, %v3609
      %v3696 = vadd.f32 %v3308, %v3614
      %v3697 = vadd.f32 %v3309, %v3619
      %v3698 = vadd.f32 %v3310, %v3624
      %v3699 = vadd.f32 %v3311, %v3629
      %v3700 = vadd.f32 %v3312, %v3634
      %v3701 = vadd.f32 %v3313, %v3639
      %v3702 = vadd.f32 %v3314, %v3644
      %v3703 = vadd.f32 %v3315, %v3649
      %v3704 = vadd.f32 %v3316, %v3654
      %v3705 = vadd.f32 %v3317, %v3659
      %v3706 = vadd.f32 %v3318, %v3664
      %v3707 = vadd.f32 %v3319, %v3669
      %v3708 = vadd.f32 %v3320, %v3674
      %v3709 = vld [vmem:[%s2] sm:$0x1]
      %v3711 = vlaneseq
      %v3712 = vshrl.u32 %v3711, 7
      %v3713 = vsub.s32 0, %v3712
      %v3714 = vrot.slane %v3709, %v3713
      %v3716 = vadd.f32 %v3677, %v3714
      %v3717 = vadd.f32 %v3678, %v3714
      %v3718 = vadd.f32 %v3679, %v3714
      %v3719 = vadd.f32 %v3680, %v3714
      %v3720 = vadd.f32 %v3681, %v3714
      %v3721 = vadd.f32 %v3682, %v3714
      %v3722 = vadd.f32 %v3683, %v3714
      %v3723 = vadd.f32 %v3684, %v3714
      %v3724 = vadd.f32 %v3685, %v3714
      %v3725 = vadd.f32 %v3686, %v3714
      %v3726 = vadd.f32 %v3687, %v3714
      %v3727 = vadd.f32 %v3688, %v3714
      %v3728 = vadd.f32 %v3689, %v3714
      %v3729 = vadd.f32 %v3690, %v3714
      %v3730 = vadd.f32 %v3691, %v3714
      %v3731 = vadd.f32 %v3692, %v3714
      %v3732 = vadd.f32 %v3693, %v3714
      %v3733 = vadd.f32 %v3694, %v3714
      %v3734 = vadd.f32 %v3695, %v3714
      %v3735 = vadd.f32 %v3696, %v3714
      %v3736 = vadd.f32 %v3697, %v3714
      %v3737 = vadd.f32 %v3698, %v3714
      %v3738 = vadd.f32 %v3699, %v3714
      %v3739 = vadd.f32 %v3700, %v3714
      %v3740 = vadd.f32 %v3701, %v3714
      %v3741 = vadd.f32 %v3702, %v3714
      %v3742 = vadd.f32 %v3703, %v3714
      %v3743 = vadd.f32 %v3704, %v3714
      %v3744 = vadd.f32 %v3705, %v3714
      %v3745 = vadd.f32 %v3706, %v3714
      %v3746 = vadd.f32 %v3707, %v3714
      %v3747 = vadd.f32 %v3708, %v3714
      %v3748 = vmax.f32 %v3716, 0.0
      %v3749 = vmax.f32 %v3717, 0.0
      %v3750 = vmax.f32 %v3718, 0.0
      %v3751 = vmax.f32 %v3719, 0.0
      %v3752 = vmax.f32 %v3720, 0.0
      %v3753 = vmax.f32 %v3721, 0.0
      %v3754 = vmax.f32 %v3722, 0.0
      %v3755 = vmax.f32 %v3723, 0.0
      %v3756 = vmax.f32 %v3724, 0.0
      %v3757 = vmax.f32 %v3725, 0.0
      %v3758 = vmax.f32 %v3726, 0.0
      %v3759 = vmax.f32 %v3727, 0.0
      %v3760 = vmax.f32 %v3728, 0.0
      %v3761 = vmax.f32 %v3729, 0.0
      %v3762 = vmax.f32 %v3730, 0.0
      %v3763 = vmax.f32 %v3731, 0.0
      %v3764 = vmax.f32 %v3732, 0.0
      %v3765 = vmax.f32 %v3733, 0.0
      %v3766 = vmax.f32 %v3734, 0.0
      %v3767 = vmax.f32 %v3735, 0.0
      %v3768 = vmax.f32 %v3736, 0.0
      %v3769 = vmax.f32 %v3737, 0.0
      %v3770 = vmax.f32 %v3738, 0.0
      %v3771 = vmax.f32 %v3739, 0.0
      %v3772 = vmax.f32 %v3740, 0.0
      %v3773 = vmax.f32 %v3741, 0.0
      %v3774 = vmax.f32 %v3742, 0.0
      %v3775 = vmax.f32 %v3743, 0.0
      %v3776 = vmax.f32 %v3744, 0.0
      %v3777 = vmax.f32 %v3745, 0.0
      %v3778 = vmax.f32 %v3746, 0.0
      %v3779 = vmax.f32 %v3747, 0.0
      %3780 = vst.msk [vmem:[#allocation2] sm:$0xff] %vm348, 0.0
      %3781 = vst.msk [vmem:[#allocation2 + $0x8] sm:$0xff] %vm348, 0.0
      %3782 = vst.msk [vmem:[#allocation2 + $0x10] sm:$0xff] %vm348, 0.0
      %3783 = vst.msk [vmem:[#allocation2 + $0x18] sm:$0xff] %vm348, 0.0
      %3784 = vst.msk [vmem:[#allocation2 + $0x20] sm:$0xff] %vm348, 0.0
      %3785 = vst.msk [vmem:[#allocation2 + $0x28] sm:$0xff] %vm348, 0.0
      %3786 = vst.msk [vmem:[#allocation2 + $0x30] sm:$0xff] %vm348, 0.0
      %3787 = vst.msk [vmem:[#allocation2 + $0x38] sm:$0xff] %vm348, 0.0
      %3788 = vst.msk [vmem:[#allocation2 + $0x40] sm:$0xff] %vm348, 0.0
      %3789 = vst.msk [vmem:[#allocation2 + $0x48] sm:$0xff] %vm348, 0.0
      %3790 = vst.msk [vmem:[#allocation2 + $0x50] sm:$0xff] %vm348, 0.0
      %3791 = vst.msk [vmem:[#allocation2 + $0x58] sm:$0xff] %vm348, 0.0
      %3792 = vst.msk [vmem:[#allocation2 + $0x60] sm:$0xff] %vm348, 0.0
      %3793 = vst.msk [vmem:[#allocation2 + $0x68] sm:$0xff] %vm348, 0.0
      %3794 = vst.msk [vmem:[#allocation2 + $0x70] sm:$0xff] %vm348, 0.0
      %3795 = vst.msk [vmem:[#allocation2 + $0x78] sm:$0xff] %vm348, 0.0
      %3796 = vst.msk [vmem:[#allocation2 + $0x80] sm:$0xff] %vm348, 0.0
      %3797 = vst.msk [vmem:[#allocation2 + $0x88] sm:$0xff] %vm348, 0.0
      %3798 = vst.msk [vmem:[#allocation2 + $0x90] sm:$0xff] %vm348, 0.0
      %3799 = vst.msk [vmem:[#allocation2 + $0x98] sm:$0xff] %vm348, 0.0
      %3800 = vst.msk [vmem:[#allocation2 + $0xa0] sm:$0xff] %vm348, 0.0
      %3801 = vst.msk [vmem:[#allocation2 + $0xa8] sm:$0xff] %vm348, 0.0
      %3802 = vst.msk [vmem:[#allocation2 + $0xb0] sm:$0xff] %vm348, 0.0
      %3803 = vst.msk [vmem:[#allocation2 + $0xb8] sm:$0xff] %vm348, 0.0
      %3804 = vst.msk [vmem:[#allocation2 + $0xc0] sm:$0xff] %vm348, 0.0
      %3805 = vst.msk [vmem:[#allocation2 + $0xc8] sm:$0xff] %vm348, 0.0
      %3806 = vst.msk [vmem:[#allocation2 + $0xd0] sm:$0xff] %vm348, 0.0
      %3807 = vst.msk [vmem:[#allocation2 + $0xd8] sm:$0xff] %vm348, 0.0
      %3808 = vst.msk [vmem:[#allocation2 + $0xe0] sm:$0xff] %vm348, 0.0
      %3809 = vst.msk [vmem:[#allocation2 + $0xe8] sm:$0xff] %vm348, 0.0
      %3810 = vst.msk [vmem:[#allocation2 + $0xf0] sm:$0xff] %vm348, 0.0
      %3811 = vst.msk [vmem:[#allocation2 + $0xf8] sm:$0xff] %vm348, 0.0
      %3812 = vst.msk [vmem:[#allocation2 + $0x100] sm:$0xff] %vm348, 0.0
      %3813 = vst.msk [vmem:[#allocation2 + $0x108] sm:$0xff] %vm348, 0.0
      %3814 = vst.msk [vmem:[#allocation2 + $0x110] sm:$0xff] %vm348, 0.0
      %3815 = vst.msk [vmem:[#allocation2 + $0x118] sm:$0xff] %vm348, 0.0
      %3816 = vst.msk [vmem:[#allocation2 + $0x120] sm:$0xff] %vm348, 0.0
      %3817 = vst.msk [vmem:[#allocation2 + $0x128] sm:$0xff] %vm348, 0.0
      %3818 = vst.msk [vmem:[#allocation2 + $0x130] sm:$0xff] %vm348, 0.0
      %3819 = vst.msk [vmem:[#allocation2 + $0x138] sm:$0xff] %vm348, 0.0
      %3820 = vst.msk [vmem:[#allocation2 + $0x140] sm:$0xff] %vm348, 0.0
      %3821 = vst.msk [vmem:[#allocation2 + $0x148] sm:$0xff] %vm348, 0.0
      %3822 = vst.msk [vmem:[#allocation2 + $0x150] sm:$0xff] %vm348, 0.0
      %3823 = vst.msk [vmem:[#allocation2 + $0x158] sm:$0xff] %vm348, 0.0
      %3824 = vst.msk [vmem:[#allocation2 + $0x160] sm:$0xff] %vm348, 0.0
      %3825 = vst.msk [vmem:[#allocation2 + $0x168] sm:$0xff] %vm348, 0.0
      %3826 = vst.msk [vmem:[#allocation2 + $0x170] sm:$0xff] %vm348, 0.0
      %3827 = vst.msk [vmem:[#allocation2 + $0x178] sm:$0xff] %vm348, 0.0
      %3828 = vst.msk [vmem:[#allocation2 + $0x180] sm:$0xff] %vm348, 0.0
      %3829 = vst.msk [vmem:[#allocation2 + $0x188] sm:$0xff] %vm348, 0.0
      %3830 = vst.msk [vmem:[#allocation2 + $0x190] sm:$0xff] %vm348, 0.0
      %3831 = vst.msk [vmem:[#allocation2 + $0x198] sm:$0xff] %vm348, 0.0
      %3832 = vst.msk [vmem:[#allocation2 + $0x1a0] sm:$0xff] %vm348, 0.0
      %3833 = vst.msk [vmem:[#allocation2 + $0x1a8] sm:$0xff] %vm348, 0.0
      %3834 = vst.msk [vmem:[#allocation2 + $0x1b0] sm:$0xff] %vm348, 0.0
      %3835 = vst.msk [vmem:[#allocation2 + $0x1b8] sm:$0xff] %vm348, 0.0
      %3836 = vst.msk [vmem:[#allocation2 + $0x1c0] sm:$0xff] %vm348, 0.0
      %3837 = vst.msk [vmem:[#allocation2 + $0x1c8] sm:$0xff] %vm348, 0.0
      %3838 = vst.msk [vmem:[#allocation2 + $0x1d0] sm:$0xff] %vm348, 0.0
      %3839 = vst.msk [vmem:[#allocation2 + $0x1d8] sm:$0xff] %vm348, 0.0
      %3840 = vst.msk [vmem:[#allocation2 + $0x1e0] sm:$0xff] %vm348, 0.0
      %3841 = vst.msk [vmem:[#allocation2 + $0x1e8] sm:$0xff] %vm348, 0.0
      %3842 = vst.msk [vmem:[#allocation2 + $0x1f0] sm:$0xff] %vm348, 0.0
      %3843 = vst.msk [vmem:[#allocation2 + $0x1f8] sm:$0xff] %vm348, 0.0
      %3844 = vst.msk [vmem:[#allocation2 + $0x200] sm:$0xff] %vm348, 0.0
      %3845 = vst.msk [vmem:[#allocation2 + $0x208] sm:$0xff] %vm348, 0.0
      %3846 = vst.msk [vmem:[#allocation2 + $0x210] sm:$0xff] %vm348, 0.0
      %3847 = vst.msk [vmem:[#allocation2 + $0x218] sm:$0xff] %vm348, 0.0
      %3848 = vst.msk [vmem:[#allocation2 + $0x220] sm:$0xff] %vm348, 0.0
      %3849 = vst.msk [vmem:[#allocation2 + $0x228] sm:$0xff] %vm348, 0.0
      %3850 = vst.msk [vmem:[#allocation2 + $0x230] sm:$0xff] %vm348, 0.0
      %3851 = vst.msk [vmem:[#allocation2 + $0x238] sm:$0xff] %vm348, 0.0
      %s3852 = scalar_lea.vmem [#allocation2], 32
      %3853 = vst.msk [vmem:[%s3852 + $0x8] sm:$0xff] %vm348, %v3748
      %3854 = vst.msk [vmem:[%s3852 + $0x10] sm:$0xff] %vm348, %v3749
      %3855 = vst.msk [vmem:[%s3852 + $0x28] sm:$0xff] %vm348, %v3750
      %3856 = vst.msk [vmem:[%s3852 + $0x30] sm:$0xff] %vm348, %v3751
      %3857 = vst.msk [vmem:[%s3852 + $0x48] sm:$0xff] %vm348, %v3752
      %3858 = vst.msk [vmem:[%s3852 + $0x50] sm:$0xff] %vm348, %v3753
      %3859 = vst.msk [vmem:[%s3852 + $0x68] sm:$0xff] %vm348, %v3754
      %3860 = vst.msk [vmem:[%s3852 + $0x70] sm:$0xff] %vm348, %v3755
      %3861 = vst.msk [vmem:[%s3852 + $0x88] sm:$0xff] %vm348, %v3756
      %3862 = vst.msk [vmem:[%s3852 + $0x90] sm:$0xff] %vm348, %v3757
      %3863 = vst.msk [vmem:[%s3852 + $0xa8] sm:$0xff] %vm348, %v3758
      %3864 = vst.msk [vmem:[%s3852 + $0xb0] sm:$0xff] %vm348, %v3759
      %3865 = vst.msk [vmem:[%s3852 + $0xc8] sm:$0xff] %vm348, %v3760
      %3866 = vst.msk [vmem:[%s3852 + $0xd0] sm:$0xff] %vm348, %v3761
      %3867 = vst.msk [vmem:[%s3852 + $0xe8] sm:$0xff] %vm348, %v3762
      %3868 = vst.msk [vmem:[%s3852 + $0xf0] sm:$0xff] %vm348, %v3763
      %3869 = vst.msk [vmem:[%s3852 + $0x108] sm:$0xff] %vm348, %v3764
      %3870 = vst.msk [vmem:[%s3852 + $0x110] sm:$0xff] %vm348, %v3765
      %3871 = vst.msk [vmem:[%s3852 + $0x128] sm:$0xff] %vm348, %v3766
      %3872 = vst.msk [vmem:[%s3852 + $0x130] sm:$0xff] %vm348, %v3767
      %3873 = vst.msk [vmem:[%s3852 + $0x148] sm:$0xff] %vm348, %v3768
      %3874 = vst.msk [vmem:[%s3852 + $0x150] sm:$0xff] %vm348, %v3769
      %3875 = vst.msk [vmem:[%s3852 + $0x168] sm:$0xff] %vm348, %v3770
      %3876 = vst.msk [vmem:[%s3852 + $0x170] sm:$0xff] %vm348, %v3771
      %3877 = vst.msk [vmem:[%s3852 + $0x188] sm:$0xff] %vm348, %v3772
      %3878 = vst.msk [vmem:[%s3852 + $0x190] sm:$0xff] %vm348, %v3773
      %3879 = vst.msk [vmem:[%s3852 + $0x1a8] sm:$0xff] %vm348, %v3774
      %3880 = vst.msk [vmem:[%s3852 + $0x1b0] sm:$0xff] %vm348, %v3775
      %3881 = vst.msk [vmem:[%s3852 + $0x1c8] sm:$0xff] %vm348, %v3776
      %3882 = vst.msk [vmem:[%s3852 + $0x1d0] sm:$0xff] %vm348, %v3777
      %3883 = vst.msk [vmem:[%s3852 + $0x1e8] sm:$0xff] %vm348, %v3778
      %3884 = vst.msk [vmem:[%s3852 + $0x1f0] sm:$0xff] %vm348, %v3779
      %v3885 = vld [vmem:[#allocation2 + $0x7] sm:$0xff]
      %v3886 = vld [vmem:[#allocation2 + $0xf] sm:$0xff]
      %v3887 = vld [vmem:[#allocation2 + $0x27] sm:$0xff]
      %v3888 = vld [vmem:[#allocation2 + $0x2f] sm:$0xff]
      %v3889 = vld [vmem:[#allocation2 + $0x47] sm:$0xff]
      %v3890 = vld [vmem:[#allocation2 + $0x4f] sm:$0xff]
      %v3891 = vld [vmem:[#allocation2 + $0x67] sm:$0xff]
      %v3892 = vld [vmem:[#allocation2 + $0x6f] sm:$0xff]
      %v3893 = vld [vmem:[#allocation2 + $0x87] sm:$0xff]
      %v3894 = vld [vmem:[#allocation2 + $0x8f] sm:$0xff]
      %v3895 = vld [vmem:[#allocation2 + $0xa7] sm:$0xff]
      %v3896 = vld [vmem:[#allocation2 + $0xaf] sm:$0xff]
      %v3897 = vld [vmem:[#allocation2 + $0xc7] sm:$0xff]
      %v3898 = vld [vmem:[#allocation2 + $0xcf] sm:$0xff]
      %v3899 = vld [vmem:[#allocation2 + $0xe7] sm:$0xff]
      %v3900 = vld [vmem:[#allocation2 + $0xef] sm:$0xff]
      %v3901 = vld [vmem:[#allocation2 + $0x107] sm:$0xff]
      %v3902 = vld [vmem:[#allocation2 + $0x10f] sm:$0xff]
      %v3903 = vld [vmem:[#allocation2 + $0x127] sm:$0xff]
      %v3904 = vld [vmem:[#allocation2 + $0x12f] sm:$0xff]
      %v3905 = vld [vmem:[#allocation2 + $0x147] sm:$0xff]
      %v3906 = vld [vmem:[#allocation2 + $0x14f] sm:$0xff]
      %v3907 = vld [vmem:[#allocation2 + $0x167] sm:$0xff]
      %v3908 = vld [vmem:[#allocation2 + $0x16f] sm:$0xff]
      %v3909 = vld [vmem:[#allocation2 + $0x187] sm:$0xff]
      %v3910 = vld [vmem:[#allocation2 + $0x18f] sm:$0xff]
      %v3911 = vld [vmem:[#allocation2 + $0x1a7] sm:$0xff]
      %v3912 = vld [vmem:[#allocation2 + $0x1af] sm:$0xff]
      %v3913 = vld [vmem:[#allocation2 + $0x1c7] sm:$0xff]
      %v3914 = vld [vmem:[#allocation2 + $0x1cf] sm:$0xff]
      %v3915 = vld [vmem:[#allocation2 + $0x1e7] sm:$0xff]
      %v3916 = vld [vmem:[#allocation2 + $0x1ef] sm:$0xff]
      %v3917 = vld [vmem:[%s3] sm:$0xff]
      %v3918 = vld [vmem:[%s3 + $0x8] sm:$0xff]
      %v3919 = vld [vmem:[#allocation2 + $0x8] sm:$0xff]
      %v3920 = vld [vmem:[#allocation2 + $0x10] sm:$0xff]
      %v3921 = vld [vmem:[#allocation2 + $0x28] sm:$0xff]
      %v3922 = vld [vmem:[#allocation2 + $0x30] sm:$0xff]
      %v3923 = vld [vmem:[#allocation2 + $0x48] sm:$0xff]
      %v3924 = vld [vmem:[#allocation2 + $0x50] sm:$0xff]
      %v3925 = vld [vmem:[#allocation2 + $0x68] sm:$0xff]
      %v3926 = vld [vmem:[#allocation2 + $0x70] sm:$0xff]
      %v3927 = vld [vmem:[#allocation2 + $0x88] sm:$0xff]
      %v3928 = vld [vmem:[#allocation2 + $0x90] sm:$0xff]
      %v3929 = vld [vmem:[#allocation2 + $0xa8] sm:$0xff]
      %v3930 = vld [vmem:[#allocation2 + $0xb0] sm:$0xff]
      %v3931 = vld [vmem:[#allocation2 + $0xc8] sm:$0xff]
      %v3932 = vld [vmem:[#allocation2 + $0xd0] sm:$0xff]
      %v3933 = vld [vmem:[#allocation2 + $0xe8] sm:$0xff]
      %v3934 = vld [vmem:[#allocation2 + $0xf0] sm:$0xff]
      %v3935 = vld [vmem:[#allocation2 + $0x108] sm:$0xff]
      %v3936 = vld [vmem:[#allocation2 + $0x110] sm:$0xff]
      %v3937 = vld [vmem:[#allocation2 + $0x128] sm:$0xff]
      %v3938 = vld [vmem:[#allocation2 + $0x130] sm:$0xff]
      %v3939 = vld [vmem:[#allocation2 + $0x148] sm:$0xff]
      %v3940 = vld [vmem:[#allocation2 + $0x150] sm:$0xff]
      %v3941 = vld [vmem:[#allocation2 + $0x168] sm:$0xff]
      %v3942 = vld [vmem:[#allocation2 + $0x170] sm:$0xff]
      %v3943 = vld [vmem:[#allocation2 + $0x188] sm:$0xff]
      %v3944 = vld [vmem:[#allocation2 + $0x190] sm:$0xff]
      %v3945 = vld [vmem:[#allocation2 + $0x1a8] sm:$0xff]
      %v3946 = vld [vmem:[#allocation2 + $0x1b0] sm:$0xff]
      %v3947 = vld [vmem:[#allocation2 + $0x1c8] sm:$0xff]
      %v3948 = vld [vmem:[#allocation2 + $0x1d0] sm:$0xff]
      %v3949 = vld [vmem:[#allocation2 + $0x1e8] sm:$0xff]
      %v3950 = vld [vmem:[#allocation2 + $0x1f0] sm:$0xff]
      %s3951 = scalar_lea.vmem %s3, 16
      %v3952 = vld [vmem:[%s3951] sm:$0xff]
      %v3953 = vld [vmem:[%s3951 + $0x8] sm:$0xff]
      %v3955 = vsel %vm348, %v3919, 0
      %v3958 = vsel %vm348, %v3920, 0
      %v3961 = vsel %vm348, %v3921, 0
      %v3964 = vsel %vm348, %v3922, 0
      %v3967 = vsel %vm348, %v3923, 0
      %v3970 = vsel %vm348, %v3924, 0
      %v3973 = vsel %vm348, %v3925, 0
      %v3976 = vsel %vm348, %v3926, 0
      %v3979 = vsel %vm348, %v3927, 0
      %v3982 = vsel %vm348, %v3928, 0
      %v3985 = vsel %vm348, %v3929, 0
      %v3988 = vsel %vm348, %v3930, 0
      %v3991 = vsel %vm348, %v3931, 0
      %v3994 = vsel %vm348, %v3932, 0
      %v3997 = vsel %vm348, %v3933, 0
      %v4000 = vsel %vm348, %v3934, 0
      %v4003 = vsel %vm348, %v3935, 0
      %v4006 = vsel %vm348, %v3936, 0
      %v4009 = vsel %vm348, %v3937, 0
      %v4012 = vsel %vm348, %v3938, 0
      %v4015 = vsel %vm348, %v3939, 0
      %v4018 = vsel %vm348, %v3940, 0
      %v4021 = vsel %vm348, %v3941, 0
      %v4024 = vsel %vm348, %v3942, 0
      %v4027 = vsel %vm348, %v3943, 0
      %v4030 = vsel %vm348, %v3944, 0
      %v4033 = vsel %vm348, %v3945, 0
      %v4036 = vsel %vm348, %v3946, 0
      %v4039 = vsel %vm348, %v3947, 0
      %v4042 = vsel %vm348, %v3948, 0
      %v4045 = vsel %vm348, %v3949, 0
      %v4048 = vsel %vm348, %v3950, 0
      %4050 = vmatprep.subr.mxu0 0.0
      %4051 = vmatpush1.msra.mxu0 0.0
      %4052 = vmatprep.subr.mxu0 0.0
      %4053 = vmatpush1.msra.mxu0 0.0
      %4054 = vmatprep.subr.mxu0 0.0
      %4055 = vmatpush1.msra.mxu0 0.0
      %4056 = vmatprep.subr.mxu0 0.0
      %4057 = vmatpush1.msra.mxu0 0.0
      %4058 = vmatprep.subr.mxu0 0.0
      %4059 = vmatpush1.msra.mxu0 0.0
      %4060 = vmatprep.subr.mxu0 0.0
      %4061 = vmatpush1.msra.mxu0 0.0
      %4062 = vmatprep.subr.mxu0 0.0
      %4063 = vmatpush1.msra.mxu0 0.0
      %4064 = vmatprep.subr.mxu0 0.0
      %4065 = vmatpush1.msra.mxu0 0.0
      %4066 = vmatprep.subr.mxu0 0.0
      %4067 = vmatpush1.msra.mxu0 0.0
      %4068 = vmatprep.subr.mxu0 0.0
      %4069 = vmatpush1.msra.mxu0 0.0
      %4070 = vmatprep.subr.mxu0 0.0
      %4071 = vmatpush1.msra.mxu0 0.0
      %4072 = vmatprep.subr.mxu0 0.0
      %4073 = vmatpush1.msra.mxu0 0.0
      %4074 = vmatprep.subr.mxu0 0.0
      %4075 = vmatpush1.msra.mxu0 0.0
      %4076 = vmatprep.subr.mxu0 0.0
      %4077 = vmatpush1.msra.mxu0 0.0
      %4078 = vmatprep.subr.mxu0 0.0
      %4079 = vmatpush1.msra.mxu0 %v3953
      %4080 = vmatprep.subr.mxu0 0.0
      %4081 = vmatpush1.msra.mxu0 %v3952
      %4082 = vmatprep.subr.mxu0 0.0
      %4083 = vmatpush2.msra.mxu0 0.0
      %4084 = vmatprep.subr.mxu0 0.0
      %4085 = vmatpush2.msra.mxu0 0.0
      %4086 = vmatprep.subr.mxu0 0.0
      %4087 = vmatpush2.msra.mxu0 0.0
      %4088 = vmatprep.subr.mxu0 0.0
      %4089 = vmatpush2.msra.mxu0 0.0
      %4090 = vmatprep.subr.mxu0 0.0
      %4091 = vmatpush2.msra.mxu0 0.0
      %4092 = vmatprep.subr.mxu0 0.0
      %4093 = vmatpush2.msra.mxu0 0.0
      %4094 = vmatprep.subr.mxu0 0.0
      %4095 = vmatpush2.msra.mxu0 0.0
      %4096 = vmatprep.subr.mxu0 0.0
      %4097 = vmatpush2.msra.mxu0 0.0
      %4098 = vmatprep.subr.mxu0 0.0
      %4099 = vmatpush2.msra.mxu0 0.0
      %4100 = vmatprep.subr.mxu0 0.0
      %4101 = vmatpush2.msra.mxu0 0.0
      %4102 = vmatprep.subr.mxu0 0.0
      %4103 = vmatpush2.msra.mxu0 0.0
      %4104 = vmatprep.subr.mxu0 0.0
      %4105 = vmatpush2.msra.mxu0 0.0
      %4106 = vmatprep.subr.mxu0 0.0
      %4107 = vmatpush2.msra.mxu0 0.0
      %4108 = vmatprep.subr.mxu0 0.0
      %4109 = vmatpush2.msra.mxu0 0.0
      %4110 = vmatprep.subr.mxu0 0.0
      %4111 = vmatpush2.msra.mxu0 0.0
      %4112 = vmatprep.subr.mxu0 0.0
      %4113 = vmatpush2.msra.mxu0 0.0
      %4114 = vmatprep.mubr.f32.mxu0 0.0
      %4115 = vmatmul.mubr.f32.gmra.mxu0 %v3955
      %v4116 = vpop.f32.mrf.mxu0
      %v4117 = vadd.f32 0.0, %v4116
      %v4118 = vpop.f32.mrf.mxu0
      %4119 = vmatprep.mubr.f32.mxu0 0.0
      %4120 = vmatmul.mubr.f32.gmra.mxu0 %v3958
      %v4121 = vpop.f32.mrf.mxu0
      %v4122 = vadd.f32 0.0, %v4121
      %v4123 = vpop.f32.mrf.mxu0
      %4124 = vmatprep.mubr.f32.mxu0 0.0
      %4125 = vmatmul.mubr.f32.gmra.mxu0 %v3961
      %v4126 = vpop.f32.mrf.mxu0
      %v4127 = vadd.f32 0.0, %v4126
      %v4128 = vpop.f32.mrf.mxu0
      %4129 = vmatprep.mubr.f32.mxu0 0.0
      %4130 = vmatmul.mubr.f32.gmra.mxu0 %v3964
      %v4131 = vpop.f32.mrf.mxu0
      %v4132 = vadd.f32 0.0, %v4131
      %v4133 = vpop.f32.mrf.mxu0
      %4134 = vmatprep.mubr.f32.mxu0 0.0
      %4135 = vmatmul.mubr.f32.gmra.mxu0 %v3967
      %v4136 = vpop.f32.mrf.mxu0
      %v4137 = vadd.f32 0.0, %v4136
      %v4138 = vpop.f32.mrf.mxu0
      %4139 = vmatprep.mubr.f32.mxu0 0.0
      %4140 = vmatmul.mubr.f32.gmra.mxu0 %v3970
      %v4141 = vpop.f32.mrf.mxu0
      %v4142 = vadd.f32 0.0, %v4141
      %v4143 = vpop.f32.mrf.mxu0
      %4144 = vmatprep.mubr.f32.mxu0 0.0
      %4145 = vmatmul.mubr.f32.gmra.mxu0 %v3973
      %v4146 = vpop.f32.mrf.mxu0
      %v4147 = vadd.f32 0.0, %v4146
      %v4148 = vpop.f32.mrf.mxu0
      %4149 = vmatprep.mubr.f32.mxu0 0.0
      %4150 = vmatmul.mubr.f32.gmra.mxu0 %v3976
      %v4151 = vpop.f32.mrf.mxu0
      %v4152 = vadd.f32 0.0, %v4151
      %v4153 = vpop.f32.mrf.mxu0
      %4154 = vmatprep.mubr.f32.mxu0 0.0
      %4155 = vmatmul.mubr.f32.gmra.mxu0 %v3979
      %v4156 = vpop.f32.mrf.mxu0
      %v4157 = vadd.f32 0.0, %v4156
      %v4158 = vpop.f32.mrf.mxu0
      %4159 = vmatprep.mubr.f32.mxu0 0.0
      %4160 = vmatmul.mubr.f32.gmra.mxu0 %v3982
      %v4161 = vpop.f32.mrf.mxu0
      %v4162 = vadd.f32 0.0, %v4161
      %v4163 = vpop.f32.mrf.mxu0
      %4164 = vmatprep.mubr.f32.mxu0 0.0
      %4165 = vmatmul.mubr.f32.gmra.mxu0 %v3985
      %v4166 = vpop.f32.mrf.mxu0
      %v4167 = vadd.f32 0.0, %v4166
      %v4168 = vpop.f32.mrf.mxu0
      %4169 = vmatprep.mubr.f32.mxu0 0.0
      %4170 = vmatmul.mubr.f32.gmra.mxu0 %v3988
      %v4171 = vpop.f32.mrf.mxu0
      %v4172 = vadd.f32 0.0, %v4171
      %v4173 = vpop.f32.mrf.mxu0
      %4174 = vmatprep.mubr.f32.mxu0 0.0
      %4175 = vmatmul.mubr.f32.gmra.mxu0 %v3991
      %v4176 = vpop.f32.mrf.mxu0
      %v4177 = vadd.f32 0.0, %v4176
      %v4178 = vpop.f32.mrf.mxu0
      %4179 = vmatprep.mubr.f32.mxu0 0.0
      %4180 = vmatmul.mubr.f32.gmra.mxu0 %v3994
      %v4181 = vpop.f32.mrf.mxu0
      %v4182 = vadd.f32 0.0, %v4181
      %v4183 = vpop.f32.mrf.mxu0
      %4184 = vmatprep.mubr.f32.mxu0 0.0
      %4185 = vmatmul.mubr.f32.gmra.mxu0 %v3997
      %v4186 = vpop.f32.mrf.mxu0
      %v4187 = vadd.f32 0.0, %v4186
      %v4188 = vpop.f32.mrf.mxu0
      %4189 = vmatprep.mubr.f32.mxu0 0.0
      %4190 = vmatmul.mubr.f32.gmra.mxu0 %v4000
      %v4191 = vpop.f32.mrf.mxu0
      %v4192 = vadd.f32 0.0, %v4191
      %v4193 = vpop.f32.mrf.mxu0
      %4194 = vmatprep.mubr.f32.mxu0 0.0
      %4195 = vmatmul.mubr.f32.gmra.mxu0 %v4003
      %v4196 = vpop.f32.mrf.mxu0
      %v4197 = vadd.f32 0.0, %v4196
      %v4198 = vpop.f32.mrf.mxu0
      %4199 = vmatprep.mubr.f32.mxu0 0.0
      %4200 = vmatmul.mubr.f32.gmra.mxu0 %v4006
      %v4201 = vpop.f32.mrf.mxu0
      %v4202 = vadd.f32 0.0, %v4201
      %v4203 = vpop.f32.mrf.mxu0
      %4204 = vmatprep.mubr.f32.mxu0 0.0
      %4205 = vmatmul.mubr.f32.gmra.mxu0 %v4009
      %v4206 = vpop.f32.mrf.mxu0
      %v4207 = vadd.f32 0.0, %v4206
      %v4208 = vpop.f32.mrf.mxu0
      %4209 = vmatprep.mubr.f32.mxu0 0.0
      %4210 = vmatmul.mubr.f32.gmra.mxu0 %v4012
      %v4211 = vpop.f32.mrf.mxu0
      %v4212 = vadd.f32 0.0, %v4211
      %v4213 = vpop.f32.mrf.mxu0
      %4214 = vmatprep.mubr.f32.mxu0 0.0
      %4215 = vmatmul.mubr.f32.gmra.mxu0 %v4015
      %v4216 = vpop.f32.mrf.mxu0
      %v4217 = vadd.f32 0.0, %v4216
      %v4218 = vpop.f32.mrf.mxu0
      %4219 = vmatprep.mubr.f32.mxu0 0.0
      %4220 = vmatmul.mubr.f32.gmra.mxu0 %v4018
      %v4221 = vpop.f32.mrf.mxu0
      %v4222 = vadd.f32 0.0, %v4221
      %v4223 = vpop.f32.mrf.mxu0
      %4224 = vmatprep.mubr.f32.mxu0 0.0
      %4225 = vmatmul.mubr.f32.gmra.mxu0 %v4021
      %v4226 = vpop.f32.mrf.mxu0
      %v4227 = vadd.f32 0.0, %v4226
      %v4228 = vpop.f32.mrf.mxu0
      %4229 = vmatprep.mubr.f32.mxu0 0.0
      %4230 = vmatmul.mubr.f32.gmra.mxu0 %v4024
      %v4231 = vpop.f32.mrf.mxu0
      %v4232 = vadd.f32 0.0, %v4231
      %v4233 = vpop.f32.mrf.mxu0
      %4234 = vmatprep.mubr.f32.mxu0 0.0
      %4235 = vmatmul.mubr.f32.gmra.mxu0 %v4027
      %v4236 = vpop.f32.mrf.mxu0
      %v4237 = vadd.f32 0.0, %v4236
      %v4238 = vpop.f32.mrf.mxu0
      %4239 = vmatprep.mubr.f32.mxu0 0.0
      %4240 = vmatmul.mubr.f32.gmra.mxu0 %v4030
      %v4241 = vpop.f32.mrf.mxu0
      %v4242 = vadd.f32 0.0, %v4241
      %v4243 = vpop.f32.mrf.mxu0
      %4244 = vmatprep.mubr.f32.mxu0 0.0
      %4245 = vmatmul.mubr.f32.gmra.mxu0 %v4033
      %v4246 = vpop.f32.mrf.mxu0
      %v4247 = vadd.f32 0.0, %v4246
      %v4248 = vpop.f32.mrf.mxu0
      %4249 = vmatprep.mubr.f32.mxu0 0.0
      %4250 = vmatmul.mubr.f32.gmra.mxu0 %v4036
      %v4251 = vpop.f32.mrf.mxu0
      %v4252 = vadd.f32 0.0, %v4251
      %v4253 = vpop.f32.mrf.mxu0
      %4254 = vmatprep.mubr.f32.mxu0 0.0
      %4255 = vmatmul.mubr.f32.gmra.mxu0 %v4039
      %v4256 = vpop.f32.mrf.mxu0
      %v4257 = vadd.f32 0.0, %v4256
      %v4258 = vpop.f32.mrf.mxu0
      %4259 = vmatprep.mubr.f32.mxu0 0.0
      %4260 = vmatmul.mubr.f32.gmra.mxu0 %v4042
      %v4261 = vpop.f32.mrf.mxu0
      %v4262 = vadd.f32 0.0, %v4261
      %v4263 = vpop.f32.mrf.mxu0
      %4264 = vmatprep.mubr.f32.mxu0 0.0
      %4265 = vmatmul.mubr.f32.gmra.mxu0 %v4045
      %v4266 = vpop.f32.mrf.mxu0
      %v4267 = vadd.f32 0.0, %v4266
      %v4268 = vpop.f32.mrf.mxu0
      %4269 = vmatprep.mubr.f32.mxu0 0.0
      %4270 = vmatmul.mubr.f32.gmra.mxu0 %v4048
      %v4271 = vpop.f32.mrf.mxu0
      %v4272 = vadd.f32 0.0, %v4271
      %v4273 = vpop.f32.mrf.mxu0
      %4274 = vdwg.mxu0
      %v4276 = vsel %vm348, %v3885, 0
      %v4279 = vsel %vm348, %v3886, 0
      %v4282 = vsel %vm348, %v3887, 0
      %v4285 = vsel %vm348, %v3888, 0
      %v4288 = vsel %vm348, %v3889, 0
      %v4291 = vsel %vm348, %v3890, 0
      %v4294 = vsel %vm348, %v3891, 0
      %v4297 = vsel %vm348, %v3892, 0
      %v4300 = vsel %vm348, %v3893, 0
      %v4303 = vsel %vm348, %v3894, 0
      %v4306 = vsel %vm348, %v3895, 0
      %v4309 = vsel %vm348, %v3896, 0
      %v4312 = vsel %vm348, %v3897, 0
      %v4315 = vsel %vm348, %v3898, 0
      %v4318 = vsel %vm348, %v3899, 0
      %v4321 = vsel %vm348, %v3900, 0
      %v4324 = vsel %vm348, %v3901, 0
      %v4327 = vsel %vm348, %v3902, 0
      %v4330 = vsel %vm348, %v3903, 0
      %v4333 = vsel %vm348, %v3904, 0
      %v4336 = vsel %vm348, %v3905, 0
      %v4339 = vsel %vm348, %v3906, 0
      %v4342 = vsel %vm348, %v3907, 0
      %v4345 = vsel %vm348, %v3908, 0
      %v4348 = vsel %vm348, %v3909, 0
      %v4351 = vsel %vm348, %v3910, 0
      %v4354 = vsel %vm348, %v3911, 0
      %v4357 = vsel %vm348, %v3912, 0
      %v4360 = vsel %vm348, %v3913, 0
      %v4363 = vsel %vm348, %v3914, 0
      %v4366 = vsel %vm348, %v3915, 0
      %v4369 = vsel %vm348, %v3916, 0
      %4371 = vmatprep.subr.mxu0 0.0
      %4372 = vmatpush1.msra.mxu0 0.0
      %4373 = vmatprep.subr.mxu0 0.0
      %4374 = vmatpush1.msra.mxu0 0.0
      %4375 = vmatprep.subr.mxu0 0.0
      %4376 = vmatpush1.msra.mxu0 0.0
      %4377 = vmatprep.subr.mxu0 0.0
      %4378 = vmatpush1.msra.mxu0 0.0
      %4379 = vmatprep.subr.mxu0 0.0
      %4380 = vmatpush1.msra.mxu0 0.0
      %4381 = vmatprep.subr.mxu0 0.0
      %4382 = vmatpush1.msra.mxu0 0.0
      %4383 = vmatprep.subr.mxu0 0.0
      %4384 = vmatpush1.msra.mxu0 0.0
      %4385 = vmatprep.subr.mxu0 0.0
      %4386 = vmatpush1.msra.mxu0 0.0
      %4387 = vmatprep.subr.mxu0 0.0
      %4388 = vmatpush1.msra.mxu0 0.0
      %4389 = vmatprep.subr.mxu0 0.0
      %4390 = vmatpush1.msra.mxu0 0.0
      %4391 = vmatprep.subr.mxu0 0.0
      %4392 = vmatpush1.msra.mxu0 0.0
      %4393 = vmatprep.subr.mxu0 0.0
      %4394 = vmatpush1.msra.mxu0 0.0
      %4395 = vmatprep.subr.mxu0 0.0
      %4396 = vmatpush1.msra.mxu0 0.0
      %4397 = vmatprep.subr.mxu0 0.0
      %4398 = vmatpush1.msra.mxu0 0.0
      %4399 = vmatprep.subr.mxu0 0.0
      %4400 = vmatpush1.msra.mxu0 %v3918
      %4401 = vmatprep.subr.mxu0 0.0
      %4402 = vmatpush1.msra.mxu0 %v3917
      %4403 = vmatprep.subr.mxu0 0.0
      %4404 = vmatpush2.msra.mxu0 0.0
      %4405 = vmatprep.subr.mxu0 0.0
      %4406 = vmatpush2.msra.mxu0 0.0
      %4407 = vmatprep.subr.mxu0 0.0
      %4408 = vmatpush2.msra.mxu0 0.0
      %4409 = vmatprep.subr.mxu0 0.0
      %4410 = vmatpush2.msra.mxu0 0.0
      %4411 = vmatprep.subr.mxu0 0.0
      %4412 = vmatpush2.msra.mxu0 0.0
      %4413 = vmatprep.subr.mxu0 0.0
      %4414 = vmatpush2.msra.mxu0 0.0
      %4415 = vmatprep.subr.mxu0 0.0
      %4416 = vmatpush2.msra.mxu0 0.0
      %4417 = vmatprep.subr.mxu0 0.0
      %4418 = vmatpush2.msra.mxu0 0.0
      %4419 = vmatprep.subr.mxu0 0.0
      %4420 = vmatpush2.msra.mxu0 0.0
      %4421 = vmatprep.subr.mxu0 0.0
      %4422 = vmatpush2.msra.mxu0 0.0
      %4423 = vmatprep.subr.mxu0 0.0
      %4424 = vmatpush2.msra.mxu0 0.0
      %4425 = vmatprep.subr.mxu0 0.0
      %4426 = vmatpush2.msra.mxu0 0.0
      %4427 = vmatprep.subr.mxu0 0.0
      %4428 = vmatpush2.msra.mxu0 0.0
      %4429 = vmatprep.subr.mxu0 0.0
      %4430 = vmatpush2.msra.mxu0 0.0
      %4431 = vmatprep.subr.mxu0 0.0
      %4432 = vmatpush2.msra.mxu0 0.0
      %4433 = vmatprep.subr.mxu0 0.0
      %4434 = vmatpush2.msra.mxu0 0.0
      %4435 = vmatprep.mubr.f32.mxu0 0.0
      %4436 = vmatmul.mubr.f32.gmra.mxu0 %v4276
      %v4437 = vpop.f32.mrf.mxu0
      %v4438 = vadd.f32 %v4117, %v4437
      %v4439 = vpop.f32.mrf.mxu0
      %4440 = vmatprep.mubr.f32.mxu0 0.0
      %4441 = vmatmul.mubr.f32.gmra.mxu0 %v4279
      %v4442 = vpop.f32.mrf.mxu0
      %v4443 = vadd.f32 %v4122, %v4442
      %v4444 = vpop.f32.mrf.mxu0
      %4445 = vmatprep.mubr.f32.mxu0 0.0
      %4446 = vmatmul.mubr.f32.gmra.mxu0 %v4282
      %v4447 = vpop.f32.mrf.mxu0
      %v4448 = vadd.f32 %v4127, %v4447
      %v4449 = vpop.f32.mrf.mxu0
      %4450 = vmatprep.mubr.f32.mxu0 0.0
      %4451 = vmatmul.mubr.f32.gmra.mxu0 %v4285
      %v4452 = vpop.f32.mrf.mxu0
      %v4453 = vadd.f32 %v4132, %v4452
      %v4454 = vpop.f32.mrf.mxu0
      %4455 = vmatprep.mubr.f32.mxu0 0.0
      %4456 = vmatmul.mubr.f32.gmra.mxu0 %v4288
      %v4457 = vpop.f32.mrf.mxu0
      %v4458 = vadd.f32 %v4137, %v4457
      %v4459 = vpop.f32.mrf.mxu0
      %4460 = vmatprep.mubr.f32.mxu0 0.0
      %4461 = vmatmul.mubr.f32.gmra.mxu0 %v4291
      %v4462 = vpop.f32.mrf.mxu0
      %v4463 = vadd.f32 %v4142, %v4462
      %v4464 = vpop.f32.mrf.mxu0
      %4465 = vmatprep.mubr.f32.mxu0 0.0
      %4466 = vmatmul.mubr.f32.gmra.mxu0 %v4294
      %v4467 = vpop.f32.mrf.mxu0
      %v4468 = vadd.f32 %v4147, %v4467
      %v4469 = vpop.f32.mrf.mxu0
      %4470 = vmatprep.mubr.f32.mxu0 0.0
      %4471 = vmatmul.mubr.f32.gmra.mxu0 %v4297
      %v4472 = vpop.f32.mrf.mxu0
      %v4473 = vadd.f32 %v4152, %v4472
      %v4474 = vpop.f32.mrf.mxu0
      %4475 = vmatprep.mubr.f32.mxu0 0.0
      %4476 = vmatmul.mubr.f32.gmra.mxu0 %v4300
      %v4477 = vpop.f32.mrf.mxu0
      %v4478 = vadd.f32 %v4157, %v4477
      %v4479 = vpop.f32.mrf.mxu0
      %4480 = vmatprep.mubr.f32.mxu0 0.0
      %4481 = vmatmul.mubr.f32.gmra.mxu0 %v4303
      %v4482 = vpop.f32.mrf.mxu0
      %v4483 = vadd.f32 %v4162, %v4482
      %v4484 = vpop.f32.mrf.mxu0
      %4485 = vmatprep.mubr.f32.mxu0 0.0
      %4486 = vmatmul.mubr.f32.gmra.mxu0 %v4306
      %v4487 = vpop.f32.mrf.mxu0
      %v4488 = vadd.f32 %v4167, %v4487
      %v4489 = vpop.f32.mrf.mxu0
      %4490 = vmatprep.mubr.f32.mxu0 0.0
      %4491 = vmatmul.mubr.f32.gmra.mxu0 %v4309
      %v4492 = vpop.f32.mrf.mxu0
      %v4493 = vadd.f32 %v4172, %v4492
      %v4494 = vpop.f32.mrf.mxu0
      %4495 = vmatprep.mubr.f32.mxu0 0.0
      %4496 = vmatmul.mubr.f32.gmra.mxu0 %v4312
      %v4497 = vpop.f32.mrf.mxu0
      %v4498 = vadd.f32 %v4177, %v4497
      %v4499 = vpop.f32.mrf.mxu0
      %4500 = vmatprep.mubr.f32.mxu0 0.0
      %4501 = vmatmul.mubr.f32.gmra.mxu0 %v4315
      %v4502 = vpop.f32.mrf.mxu0
      %v4503 = vadd.f32 %v4182, %v4502
      %v4504 = vpop.f32.mrf.mxu0
      %4505 = vmatprep.mubr.f32.mxu0 0.0
      %4506 = vmatmul.mubr.f32.gmra.mxu0 %v4318
      %v4507 = vpop.f32.mrf.mxu0
      %v4508 = vadd.f32 %v4187, %v4507
      %v4509 = vpop.f32.mrf.mxu0
      %4510 = vmatprep.mubr.f32.mxu0 0.0
      %4511 = vmatmul.mubr.f32.gmra.mxu0 %v4321
      %v4512 = vpop.f32.mrf.mxu0
      %v4513 = vadd.f32 %v4192, %v4512
      %v4514 = vpop.f32.mrf.mxu0
      %4515 = vmatprep.mubr.f32.mxu0 0.0
      %4516 = vmatmul.mubr.f32.gmra.mxu0 %v4324
      %v4517 = vpop.f32.mrf.mxu0
      %v4518 = vadd.f32 %v4197, %v4517
      %v4519 = vpop.f32.mrf.mxu0
      %4520 = vmatprep.mubr.f32.mxu0 0.0
      %4521 = vmatmul.mubr.f32.gmra.mxu0 %v4327
      %v4522 = vpop.f32.mrf.mxu0
      %v4523 = vadd.f32 %v4202, %v4522
      %v4524 = vpop.f32.mrf.mxu0
      %4525 = vmatprep.mubr.f32.mxu0 0.0
      %4526 = vmatmul.mubr.f32.gmra.mxu0 %v4330
      %v4527 = vpop.f32.mrf.mxu0
      %v4528 = vadd.f32 %v4207, %v4527
      %v4529 = vpop.f32.mrf.mxu0
      %4530 = vmatprep.mubr.f32.mxu0 0.0
      %4531 = vmatmul.mubr.f32.gmra.mxu0 %v4333
      %v4532 = vpop.f32.mrf.mxu0
      %v4533 = vadd.f32 %v4212, %v4532
      %v4534 = vpop.f32.mrf.mxu0
      %4535 = vmatprep.mubr.f32.mxu0 0.0
      %4536 = vmatmul.mubr.f32.gmra.mxu0 %v4336
      %v4537 = vpop.f32.mrf.mxu0
      %v4538 = vadd.f32 %v4217, %v4537
      %v4539 = vpop.f32.mrf.mxu0
      %4540 = vmatprep.mubr.f32.mxu0 0.0
      %4541 = vmatmul.mubr.f32.gmra.mxu0 %v4339
      %v4542 = vpop.f32.mrf.mxu0
      %v4543 = vadd.f32 %v4222, %v4542
      %v4544 = vpop.f32.mrf.mxu0
      %4545 = vmatprep.mubr.f32.mxu0 0.0
      %4546 = vmatmul.mubr.f32.gmra.mxu0 %v4342
      %v4547 = vpop.f32.mrf.mxu0
      %v4548 = vadd.f32 %v4227, %v4547
      %v4549 = vpop.f32.mrf.mxu0
      %4550 = vmatprep.mubr.f32.mxu0 0.0
      %4551 = vmatmul.mubr.f32.gmra.mxu0 %v4345
      %v4552 = vpop.f32.mrf.mxu0
      %v4553 = vadd.f32 %v4232, %v4552
      %v4554 = vpop.f32.mrf.mxu0
      %4555 = vmatprep.mubr.f32.mxu0 0.0
      %4556 = vmatmul.mubr.f32.gmra.mxu0 %v4348
      %v4557 = vpop.f32.mrf.mxu0
      %v4558 = vadd.f32 %v4237, %v4557
      %v4559 = vpop.f32.mrf.mxu0
      %4560 = vmatprep.mubr.f32.mxu0 0.0
      %4561 = vmatmul.mubr.f32.gmra.mxu0 %v4351
      %v4562 = vpop.f32.mrf.mxu0
      %v4563 = vadd.f32 %v4242, %v4562
      %v4564 = vpop.f32.mrf.mxu0
      %4565 = vmatprep.mubr.f32.mxu0 0.0
      %4566 = vmatmul.mubr.f32.gmra.mxu0 %v4354
      %v4567 = vpop.f32.mrf.mxu0
      %v4568 = vadd.f32 %v4247, %v4567
      %v4569 = vpop.f32.mrf.mxu0
      %4570 = vmatprep.mubr.f32.mxu0 0.0
      %4571 = vmatmul.mubr.f32.gmra.mxu0 %v4357
      %v4572 = vpop.f32.mrf.mxu0
      %v4573 = vadd.f32 %v4252, %v4572
      %v4574 = vpop.f32.mrf.mxu0
      %4575 = vmatprep.mubr.f32.mxu0 0.0
      %4576 = vmatmul.mubr.f32.gmra.mxu0 %v4360
      %v4577 = vpop.f32.mrf.mxu0
      %v4578 = vadd.f32 %v4257, %v4577
      %v4579 = vpop.f32.mrf.mxu0
      %4580 = vmatprep.mubr.f32.mxu0 0.0
      %4581 = vmatmul.mubr.f32.gmra.mxu0 %v4363
      %v4582 = vpop.f32.mrf.mxu0
      %v4583 = vadd.f32 %v4262, %v4582
      %v4584 = vpop.f32.mrf.mxu0
      %4585 = vmatprep.mubr.f32.mxu0 0.0
      %4586 = vmatmul.mubr.f32.gmra.mxu0 %v4366
      %v4587 = vpop.f32.mrf.mxu0
      %v4588 = vadd.f32 %v4267, %v4587
      %v4589 = vpop.f32.mrf.mxu0
      %4590 = vmatprep.mubr.f32.mxu0 0.0
      %4591 = vmatmul.mubr.f32.gmra.mxu0 %v4369
      %v4592 = vpop.f32.mrf.mxu0
      %v4593 = vadd.f32 %v4272, %v4592
      %v4594 = vpop.f32.mrf.mxu0
      %4595 = vdwg.mxu0
      %v4596 = vld [vmem:[#allocation2 + $0x9] sm:$0xff]
      %v4597 = vld [vmem:[#allocation2 + $0x11] sm:$0xff]
      %v4598 = vld [vmem:[#allocation2 + $0x29] sm:$0xff]
      %v4599 = vld [vmem:[#allocation2 + $0x31] sm:$0xff]
      %v4600 = vld [vmem:[#allocation2 + $0x49] sm:$0xff]
      %v4601 = vld [vmem:[#allocation2 + $0x51] sm:$0xff]
      %v4602 = vld [vmem:[#allocation2 + $0x69] sm:$0xff]
      %v4603 = vld [vmem:[#allocation2 + $0x71] sm:$0xff]
      %v4604 = vld [vmem:[#allocation2 + $0x89] sm:$0xff]
      %v4605 = vld [vmem:[#allocation2 + $0x91] sm:$0xff]
      %v4606 = vld [vmem:[#allocation2 + $0xa9] sm:$0xff]
      %v4607 = vld [vmem:[#allocation2 + $0xb1] sm:$0xff]
      %v4608 = vld [vmem:[#allocation2 + $0xc9] sm:$0xff]
      %v4609 = vld [vmem:[#allocation2 + $0xd1] sm:$0xff]
      %v4610 = vld [vmem:[#allocation2 + $0xe9] sm:$0xff]
      %v4611 = vld [vmem:[#allocation2 + $0xf1] sm:$0xff]
      %v4612 = vld [vmem:[#allocation2 + $0x109] sm:$0xff]
      %v4613 = vld [vmem:[#allocation2 + $0x111] sm:$0xff]
      %v4614 = vld [vmem:[#allocation2 + $0x129] sm:$0xff]
      %v4615 = vld [vmem:[#allocation2 + $0x131] sm:$0xff]
      %v4616 = vld [vmem:[#allocation2 + $0x149] sm:$0xff]
      %v4617 = vld [vmem:[#allocation2 + $0x151] sm:$0xff]
      %v4618 = vld [vmem:[#allocation2 + $0x169] sm:$0xff]
      %v4619 = vld [vmem:[#allocation2 + $0x171] sm:$0xff]
      %v4620 = vld [vmem:[#allocation2 + $0x189] sm:$0xff]
      %v4621 = vld [vmem:[#allocation2 + $0x191] sm:$0xff]
      %v4622 = vld [vmem:[#allocation2 + $0x1a9] sm:$0xff]
      %v4623 = vld [vmem:[#allocation2 + $0x1b1] sm:$0xff]
      %v4624 = vld [vmem:[#allocation2 + $0x1c9] sm:$0xff]
      %v4625 = vld [vmem:[#allocation2 + $0x1d1] sm:$0xff]
      %v4626 = vld [vmem:[#allocation2 + $0x1e9] sm:$0xff]
      %v4627 = vld [vmem:[#allocation2 + $0x1f1] sm:$0xff]
      %s4628 = scalar_lea.vmem %s3, 32
      %v4629 = vld [vmem:[%s4628] sm:$0xff]
      %v4630 = vld [vmem:[%s4628 + $0x8] sm:$0xff]
      %v4632 = vsel %vm348, %v4596, 0
      %v4635 = vsel %vm348, %v4597, 0
      %v4638 = vsel %vm348, %v4598, 0
      %v4641 = vsel %vm348, %v4599, 0
      %v4644 = vsel %vm348, %v4600, 0
      %v4647 = vsel %vm348, %v4601, 0
      %v4650 = vsel %vm348, %v4602, 0
      %v4653 = vsel %vm348, %v4603, 0
      %v4656 = vsel %vm348, %v4604, 0
      %v4659 = vsel %vm348, %v4605, 0
      %v4662 = vsel %vm348, %v4606, 0
      %v4665 = vsel %vm348, %v4607, 0
      %v4668 = vsel %vm348, %v4608, 0
      %v4671 = vsel %vm348, %v4609, 0
      %v4674 = vsel %vm348, %v4610, 0
      %v4677 = vsel %vm348, %v4611, 0
      %v4680 = vsel %vm348, %v4612, 0
      %v4683 = vsel %vm348, %v4613, 0
      %v4686 = vsel %vm348, %v4614, 0
      %v4689 = vsel %vm348, %v4615, 0
      %v4692 = vsel %vm348, %v4616, 0
      %v4695 = vsel %vm348, %v4617, 0
      %v4698 = vsel %vm348, %v4618, 0
      %v4701 = vsel %vm348, %v4619, 0
      %v4704 = vsel %vm348, %v4620, 0
      %v4707 = vsel %vm348, %v4621, 0
      %v4710 = vsel %vm348, %v4622, 0
      %v4713 = vsel %vm348, %v4623, 0
      %v4716 = vsel %vm348, %v4624, 0
      %v4719 = vsel %vm348, %v4625, 0
      %v4722 = vsel %vm348, %v4626, 0
      %v4725 = vsel %vm348, %v4627, 0
      %4727 = vmatprep.subr.mxu0 0.0
      %4728 = vmatpush1.msra.mxu0 0.0
      %4729 = vmatprep.subr.mxu0 0.0
      %4730 = vmatpush1.msra.mxu0 0.0
      %4731 = vmatprep.subr.mxu0 0.0
      %4732 = vmatpush1.msra.mxu0 0.0
      %4733 = vmatprep.subr.mxu0 0.0
      %4734 = vmatpush1.msra.mxu0 0.0
      %4735 = vmatprep.subr.mxu0 0.0
      %4736 = vmatpush1.msra.mxu0 0.0
      %4737 = vmatprep.subr.mxu0 0.0
      %4738 = vmatpush1.msra.mxu0 0.0
      %4739 = vmatprep.subr.mxu0 0.0
      %4740 = vmatpush1.msra.mxu0 0.0
      %4741 = vmatprep.subr.mxu0 0.0
      %4742 = vmatpush1.msra.mxu0 0.0
      %4743 = vmatprep.subr.mxu0 0.0
      %4744 = vmatpush1.msra.mxu0 0.0
      %4745 = vmatprep.subr.mxu0 0.0
      %4746 = vmatpush1.msra.mxu0 0.0
      %4747 = vmatprep.subr.mxu0 0.0
      %4748 = vmatpush1.msra.mxu0 0.0
      %4749 = vmatprep.subr.mxu0 0.0
      %4750 = vmatpush1.msra.mxu0 0.0
      %4751 = vmatprep.subr.mxu0 0.0
      %4752 = vmatpush1.msra.mxu0 0.0
      %4753 = vmatprep.subr.mxu0 0.0
      %4754 = vmatpush1.msra.mxu0 0.0
      %4755 = vmatprep.subr.mxu0 0.0
      %4756 = vmatpush1.msra.mxu0 %v4630
      %4757 = vmatprep.subr.mxu0 0.0
      %4758 = vmatpush1.msra.mxu0 %v4629
      %4759 = vmatprep.subr.mxu0 0.0
      %4760 = vmatpush2.msra.mxu0 0.0
      %4761 = vmatprep.subr.mxu0 0.0
      %4762 = vmatpush2.msra.mxu0 0.0
      %4763 = vmatprep.subr.mxu0 0.0
      %4764 = vmatpush2.msra.mxu0 0.0
      %4765 = vmatprep.subr.mxu0 0.0
      %4766 = vmatpush2.msra.mxu0 0.0
      %4767 = vmatprep.subr.mxu0 0.0
      %4768 = vmatpush2.msra.mxu0 0.0
      %4769 = vmatprep.subr.mxu0 0.0
      %4770 = vmatpush2.msra.mxu0 0.0
      %4771 = vmatprep.subr.mxu0 0.0
      %4772 = vmatpush2.msra.mxu0 0.0
      %4773 = vmatprep.subr.mxu0 0.0
      %4774 = vmatpush2.msra.mxu0 0.0
      %4775 = vmatprep.subr.mxu0 0.0
      %4776 = vmatpush2.msra.mxu0 0.0
      %4777 = vmatprep.subr.mxu0 0.0
      %4778 = vmatpush2.msra.mxu0 0.0
      %4779 = vmatprep.subr.mxu0 0.0
      %4780 = vmatpush2.msra.mxu0 0.0
      %4781 = vmatprep.subr.mxu0 0.0
      %4782 = vmatpush2.msra.mxu0 0.0
      %4783 = vmatprep.subr.mxu0 0.0
      %4784 = vmatpush2.msra.mxu0 0.0
      %4785 = vmatprep.subr.mxu0 0.0
      %4786 = vmatpush2.msra.mxu0 0.0
      %4787 = vmatprep.subr.mxu0 0.0
      %4788 = vmatpush2.msra.mxu0 0.0
      %4789 = vmatprep.subr.mxu0 0.0
      %4790 = vmatpush2.msra.mxu0 0.0
      %4791 = vmatprep.mubr.f32.mxu0 0.0
      %4792 = vmatmul.mubr.f32.gmra.mxu0 %v4632
      %v4793 = vpop.f32.mrf.mxu0
      %v4794 = vadd.f32 0.0, %v4793
      %v4795 = vpop.f32.mrf.mxu0
      %4796 = vmatprep.mubr.f32.mxu0 0.0
      %4797 = vmatmul.mubr.f32.gmra.mxu0 %v4635
      %v4798 = vpop.f32.mrf.mxu0
      %v4799 = vadd.f32 0.0, %v4798
      %v4800 = vpop.f32.mrf.mxu0
      %4801 = vmatprep.mubr.f32.mxu0 0.0
      %4802 = vmatmul.mubr.f32.gmra.mxu0 %v4638
      %v4803 = vpop.f32.mrf.mxu0
      %v4804 = vadd.f32 0.0, %v4803
      %v4805 = vpop.f32.mrf.mxu0
      %4806 = vmatprep.mubr.f32.mxu0 0.0
      %4807 = vmatmul.mubr.f32.gmra.mxu0 %v4641
      %v4808 = vpop.f32.mrf.mxu0
      %v4809 = vadd.f32 0.0, %v4808
      %v4810 = vpop.f32.mrf.mxu0
      %4811 = vmatprep.mubr.f32.mxu0 0.0
      %4812 = vmatmul.mubr.f32.gmra.mxu0 %v4644
      %v4813 = vpop.f32.mrf.mxu0
      %v4814 = vadd.f32 0.0, %v4813
      %v4815 = vpop.f32.mrf.mxu0
      %4816 = vmatprep.mubr.f32.mxu0 0.0
      %4817 = vmatmul.mubr.f32.gmra.mxu0 %v4647
      %v4818 = vpop.f32.mrf.mxu0
      %v4819 = vadd.f32 0.0, %v4818
      %v4820 = vpop.f32.mrf.mxu0
      %4821 = vmatprep.mubr.f32.mxu0 0.0
      %4822 = vmatmul.mubr.f32.gmra.mxu0 %v4650
      %v4823 = vpop.f32.mrf.mxu0
      %v4824 = vadd.f32 0.0, %v4823
      %v4825 = vpop.f32.mrf.mxu0
      %4826 = vmatprep.mubr.f32.mxu0 0.0
      %4827 = vmatmul.mubr.f32.gmra.mxu0 %v4653
      %v4828 = vpop.f32.mrf.mxu0
      %v4829 = vadd.f32 0.0, %v4828
      %v4830 = vpop.f32.mrf.mxu0
      %4831 = vmatprep.mubr.f32.mxu0 0.0
      %4832 = vmatmul.mubr.f32.gmra.mxu0 %v4656
      %v4833 = vpop.f32.mrf.mxu0
      %v4834 = vadd.f32 0.0, %v4833
      %v4835 = vpop.f32.mrf.mxu0
      %4836 = vmatprep.mubr.f32.mxu0 0.0
      %4837 = vmatmul.mubr.f32.gmra.mxu0 %v4659
      %v4838 = vpop.f32.mrf.mxu0
      %v4839 = vadd.f32 0.0, %v4838
      %v4840 = vpop.f32.mrf.mxu0
      %4841 = vmatprep.mubr.f32.mxu0 0.0
      %4842 = vmatmul.mubr.f32.gmra.mxu0 %v4662
      %v4843 = vpop.f32.mrf.mxu0
      %v4844 = vadd.f32 0.0, %v4843
      %v4845 = vpop.f32.mrf.mxu0
      %4846 = vmatprep.mubr.f32.mxu0 0.0
      %4847 = vmatmul.mubr.f32.gmra.mxu0 %v4665
      %v4848 = vpop.f32.mrf.mxu0
      %v4849 = vadd.f32 0.0, %v4848
      %v4850 = vpop.f32.mrf.mxu0
      %4851 = vmatprep.mubr.f32.mxu0 0.0
      %4852 = vmatmul.mubr.f32.gmra.mxu0 %v4668
      %v4853 = vpop.f32.mrf.mxu0
      %v4854 = vadd.f32 0.0, %v4853
      %v4855 = vpop.f32.mrf.mxu0
      %4856 = vmatprep.mubr.f32.mxu0 0.0
      %4857 = vmatmul.mubr.f32.gmra.mxu0 %v4671
      %v4858 = vpop.f32.mrf.mxu0
      %v4859 = vadd.f32 0.0, %v4858
      %v4860 = vpop.f32.mrf.mxu0
      %4861 = vmatprep.mubr.f32.mxu0 0.0
      %4862 = vmatmul.mubr.f32.gmra.mxu0 %v4674
      %v4863 = vpop.f32.mrf.mxu0
      %v4864 = vadd.f32 0.0, %v4863
      %v4865 = vpop.f32.mrf.mxu0
      %4866 = vmatprep.mubr.f32.mxu0 0.0
      %4867 = vmatmul.mubr.f32.gmra.mxu0 %v4677
      %v4868 = vpop.f32.mrf.mxu0
      %v4869 = vadd.f32 0.0, %v4868
      %v4870 = vpop.f32.mrf.mxu0
      %4871 = vmatprep.mubr.f32.mxu0 0.0
      %4872 = vmatmul.mubr.f32.gmra.mxu0 %v4680
      %v4873 = vpop.f32.mrf.mxu0
      %v4874 = vadd.f32 0.0, %v4873
      %v4875 = vpop.f32.mrf.mxu0
      %4876 = vmatprep.mubr.f32.mxu0 0.0
      %4877 = vmatmul.mubr.f32.gmra.mxu0 %v4683
      %v4878 = vpop.f32.mrf.mxu0
      %v4879 = vadd.f32 0.0, %v4878
      %v4880 = vpop.f32.mrf.mxu0
      %4881 = vmatprep.mubr.f32.mxu0 0.0
      %4882 = vmatmul.mubr.f32.gmra.mxu0 %v4686
      %v4883 = vpop.f32.mrf.mxu0
      %v4884 = vadd.f32 0.0, %v4883
      %v4885 = vpop.f32.mrf.mxu0
      %4886 = vmatprep.mubr.f32.mxu0 0.0
      %4887 = vmatmul.mubr.f32.gmra.mxu0 %v4689
      %v4888 = vpop.f32.mrf.mxu0
      %v4889 = vadd.f32 0.0, %v4888
      %v4890 = vpop.f32.mrf.mxu0
      %4891 = vmatprep.mubr.f32.mxu0 0.0
      %4892 = vmatmul.mubr.f32.gmra.mxu0 %v4692
      %v4893 = vpop.f32.mrf.mxu0
      %v4894 = vadd.f32 0.0, %v4893
      %v4895 = vpop.f32.mrf.mxu0
      %4896 = vmatprep.mubr.f32.mxu0 0.0
      %4897 = vmatmul.mubr.f32.gmra.mxu0 %v4695
      %v4898 = vpop.f32.mrf.mxu0
      %v4899 = vadd.f32 0.0, %v4898
      %v4900 = vpop.f32.mrf.mxu0
      %4901 = vmatprep.mubr.f32.mxu0 0.0
      %4902 = vmatmul.mubr.f32.gmra.mxu0 %v4698
      %v4903 = vpop.f32.mrf.mxu0
      %v4904 = vadd.f32 0.0, %v4903
      %v4905 = vpop.f32.mrf.mxu0
      %4906 = vmatprep.mubr.f32.mxu0 0.0
      %4907 = vmatmul.mubr.f32.gmra.mxu0 %v4701
      %v4908 = vpop.f32.mrf.mxu0
      %v4909 = vadd.f32 0.0, %v4908
      %v4910 = vpop.f32.mrf.mxu0
      %4911 = vmatprep.mubr.f32.mxu0 0.0
      %4912 = vmatmul.mubr.f32.gmra.mxu0 %v4704
      %v4913 = vpop.f32.mrf.mxu0
      %v4914 = vadd.f32 0.0, %v4913
      %v4915 = vpop.f32.mrf.mxu0
      %4916 = vmatprep.mubr.f32.mxu0 0.0
      %4917 = vmatmul.mubr.f32.gmra.mxu0 %v4707
      %v4918 = vpop.f32.mrf.mxu0
      %v4919 = vadd.f32 0.0, %v4918
      %v4920 = vpop.f32.mrf.mxu0
      %4921 = vmatprep.mubr.f32.mxu0 0.0
      %4922 = vmatmul.mubr.f32.gmra.mxu0 %v4710
      %v4923 = vpop.f32.mrf.mxu0
      %v4924 = vadd.f32 0.0, %v4923
      %v4925 = vpop.f32.mrf.mxu0
      %4926 = vmatprep.mubr.f32.mxu0 0.0
      %4927 = vmatmul.mubr.f32.gmra.mxu0 %v4713
      %v4928 = vpop.f32.mrf.mxu0
      %v4929 = vadd.f32 0.0, %v4928
      %v4930 = vpop.f32.mrf.mxu0
      %4931 = vmatprep.mubr.f32.mxu0 0.0
      %4932 = vmatmul.mubr.f32.gmra.mxu0 %v4716
      %v4933 = vpop.f32.mrf.mxu0
      %v4934 = vadd.f32 0.0, %v4933
      %v4935 = vpop.f32.mrf.mxu0
      %4936 = vmatprep.mubr.f32.mxu0 0.0
      %4937 = vmatmul.mubr.f32.gmra.mxu0 %v4719
      %v4938 = vpop.f32.mrf.mxu0
      %v4939 = vadd.f32 0.0, %v4938
      %v4940 = vpop.f32.mrf.mxu0
      %4941 = vmatprep.mubr.f32.mxu0 0.0
      %4942 = vmatmul.mubr.f32.gmra.mxu0 %v4722
      %v4943 = vpop.f32.mrf.mxu0
      %v4944 = vadd.f32 0.0, %v4943
      %v4945 = vpop.f32.mrf.mxu0
      %4946 = vmatprep.mubr.f32.mxu0 0.0
      %4947 = vmatmul.mubr.f32.gmra.mxu0 %v4725
      %v4948 = vpop.f32.mrf.mxu0
      %v4949 = vadd.f32 0.0, %v4948
      %v4950 = vpop.f32.mrf.mxu0
      %4951 = vdwg.mxu0
      %v4952 = vadd.f32 %v4438, %v4794
      %v4953 = vadd.f32 %v4443, %v4799
      %v4954 = vadd.f32 %v4448, %v4804
      %v4955 = vadd.f32 %v4453, %v4809
      %v4956 = vadd.f32 %v4458, %v4814
      %v4957 = vadd.f32 %v4463, %v4819
      %v4958 = vadd.f32 %v4468, %v4824
      %v4959 = vadd.f32 %v4473, %v4829
      %v4960 = vadd.f32 %v4478, %v4834
      %v4961 = vadd.f32 %v4483, %v4839
      %v4962 = vadd.f32 %v4488, %v4844
      %v4963 = vadd.f32 %v4493, %v4849
      %v4964 = vadd.f32 %v4498, %v4854
      %v4965 = vadd.f32 %v4503, %v4859
      %v4966 = vadd.f32 %v4508, %v4864
      %v4967 = vadd.f32 %v4513, %v4869
      %v4968 = vadd.f32 %v4518, %v4874
      %v4969 = vadd.f32 %v4523, %v4879
      %v4970 = vadd.f32 %v4528, %v4884
      %v4971 = vadd.f32 %v4533, %v4889
      %v4972 = vadd.f32 %v4538, %v4894
      %v4973 = vadd.f32 %v4543, %v4899
      %v4974 = vadd.f32 %v4548, %v4904
      %v4975 = vadd.f32 %v4553, %v4909
      %v4976 = vadd.f32 %v4558, %v4914
      %v4977 = vadd.f32 %v4563, %v4919
      %v4978 = vadd.f32 %v4568, %v4924
      %v4979 = vadd.f32 %v4573, %v4929
      %v4980 = vadd.f32 %v4578, %v4934
      %v4981 = vadd.f32 %v4583, %v4939
      %v4982 = vadd.f32 %v4588, %v4944
      %v4983 = vadd.f32 %v4593, %v4949
      %v4984 = vld [vmem:[%s3852 + $0x7] sm:$0xff]
      %v4985 = vld [vmem:[%s3852 + $0xf] sm:$0xff]
      %v4986 = vld [vmem:[%s3852 + $0x27] sm:$0xff]
      %v4987 = vld [vmem:[%s3852 + $0x2f] sm:$0xff]
      %v4988 = vld [vmem:[%s3852 + $0x47] sm:$0xff]
      %v4989 = vld [vmem:[%s3852 + $0x4f] sm:$0xff]
      %v4990 = vld [vmem:[%s3852 + $0x67] sm:$0xff]
      %v4991 = vld [vmem:[%s3852 + $0x6f] sm:$0xff]
      %v4992 = vld [vmem:[%s3852 + $0x87] sm:$0xff]
      %v4993 = vld [vmem:[%s3852 + $0x8f] sm:$0xff]
      %v4994 = vld [vmem:[%s3852 + $0xa7] sm:$0xff]
      %v4995 = vld [vmem:[%s3852 + $0xaf] sm:$0xff]
      %v4996 = vld [vmem:[%s3852 + $0xc7] sm:$0xff]
      %v4997 = vld [vmem:[%s3852 + $0xcf] sm:$0xff]
      %v4998 = vld [vmem:[%s3852 + $0xe7] sm:$0xff]
      %v4999 = vld [vmem:[%s3852 + $0xef] sm:$0xff]
      %v5000 = vld [vmem:[%s3852 + $0x107] sm:$0xff]
      %v5001 = vld [vmem:[%s3852 + $0x10f] sm:$0xff]
      %v5002 = vld [vmem:[%s3852 + $0x127] sm:$0xff]
      %v5003 = vld [vmem:[%s3852 + $0x12f] sm:$0xff]
      %v5004 = vld [vmem:[%s3852 + $0x147] sm:$0xff]
      %v5005 = vld [vmem:[%s3852 + $0x14f] sm:$0xff]
      %v5006 = vld [vmem:[%s3852 + $0x167] sm:$0xff]
      %v5007 = vld [vmem:[%s3852 + $0x16f] sm:$0xff]
      %v5008 = vld [vmem:[%s3852 + $0x187] sm:$0xff]
      %v5009 = vld [vmem:[%s3852 + $0x18f] sm:$0xff]
      %v5010 = vld [vmem:[%s3852 + $0x1a7] sm:$0xff]
      %v5011 = vld [vmem:[%s3852 + $0x1af] sm:$0xff]
      %v5012 = vld [vmem:[%s3852 + $0x1c7] sm:$0xff]
      %v5013 = vld [vmem:[%s3852 + $0x1cf] sm:$0xff]
      %v5014 = vld [vmem:[%s3852 + $0x1e7] sm:$0xff]
      %v5015 = vld [vmem:[%s3852 + $0x1ef] sm:$0xff]
      %s5016 = scalar_lea.vmem %s3, 48
      %v5017 = vld [vmem:[%s5016] sm:$0xff]
      %v5018 = vld [vmem:[%s5016 + $0x8] sm:$0xff]
      %v5020 = vsel %vm348, %v4984, 0
      %v5023 = vsel %vm348, %v4985, 0
      %v5026 = vsel %vm348, %v4986, 0
      %v5029 = vsel %vm348, %v4987, 0
      %v5032 = vsel %vm348, %v4988, 0
      %v5035 = vsel %vm348, %v4989, 0
      %v5038 = vsel %vm348, %v4990, 0
      %v5041 = vsel %vm348, %v4991, 0
      %v5044 = vsel %vm348, %v4992, 0
      %v5047 = vsel %vm348, %v4993, 0
      %v5050 = vsel %vm348, %v4994, 0
      %v5053 = vsel %vm348, %v4995, 0
      %v5056 = vsel %vm348, %v4996, 0
      %v5059 = vsel %vm348, %v4997, 0
      %v5062 = vsel %vm348, %v4998, 0
      %v5065 = vsel %vm348, %v4999, 0
      %v5068 = vsel %vm348, %v5000, 0
      %v5071 = vsel %vm348, %v5001, 0
      %v5074 = vsel %vm348, %v5002, 0
      %v5077 = vsel %vm348, %v5003, 0
      %v5080 = vsel %vm348, %v5004, 0
      %v5083 = vsel %vm348, %v5005, 0
      %v5086 = vsel %vm348, %v5006, 0
      %v5089 = vsel %vm348, %v5007, 0
      %v5092 = vsel %vm348, %v5008, 0
      %v5095 = vsel %vm348, %v5009, 0
      %v5098 = vsel %vm348, %v5010, 0
      %v5101 = vsel %vm348, %v5011, 0
      %v5104 = vsel %vm348, %v5012, 0
      %v5107 = vsel %vm348, %v5013, 0
      %v5110 = vsel %vm348, %v5014, 0
      %v5113 = vsel %vm348, %v5015, 0
      %5115 = vmatprep.subr.mxu0 0.0
      %5116 = vmatpush1.msra.mxu0 0.0
      %5117 = vmatprep.subr.mxu0 0.0
      %5118 = vmatpush1.msra.mxu0 0.0
      %5119 = vmatprep.subr.mxu0 0.0
      %5120 = vmatpush1.msra.mxu0 0.0
      %5121 = vmatprep.subr.mxu0 0.0
      %5122 = vmatpush1.msra.mxu0 0.0
      %5123 = vmatprep.subr.mxu0 0.0
      %5124 = vmatpush1.msra.mxu0 0.0
      %5125 = vmatprep.subr.mxu0 0.0
      %5126 = vmatpush1.msra.mxu0 0.0
      %5127 = vmatprep.subr.mxu0 0.0
      %5128 = vmatpush1.msra.mxu0 0.0
      %5129 = vmatprep.subr.mxu0 0.0
      %5130 = vmatpush1.msra.mxu0 0.0
      %5131 = vmatprep.subr.mxu0 0.0
      %5132 = vmatpush1.msra.mxu0 0.0
      %5133 = vmatprep.subr.mxu0 0.0
      %5134 = vmatpush1.msra.mxu0 0.0
      %5135 = vmatprep.subr.mxu0 0.0
      %5136 = vmatpush1.msra.mxu0 0.0
      %5137 = vmatprep.subr.mxu0 0.0
      %5138 = vmatpush1.msra.mxu0 0.0
      %5139 = vmatprep.subr.mxu0 0.0
      %5140 = vmatpush1.msra.mxu0 0.0
      %5141 = vmatprep.subr.mxu0 0.0
      %5142 = vmatpush1.msra.mxu0 0.0
      %5143 = vmatprep.subr.mxu0 0.0
      %5144 = vmatpush1.msra.mxu0 %v5018
      %5145 = vmatprep.subr.mxu0 0.0
      %5146 = vmatpush1.msra.mxu0 %v5017
      %5147 = vmatprep.subr.mxu0 0.0
      %5148 = vmatpush2.msra.mxu0 0.0
      %5149 = vmatprep.subr.mxu0 0.0
      %5150 = vmatpush2.msra.mxu0 0.0
      %5151 = vmatprep.subr.mxu0 0.0
      %5152 = vmatpush2.msra.mxu0 0.0
      %5153 = vmatprep.subr.mxu0 0.0
      %5154 = vmatpush2.msra.mxu0 0.0
      %5155 = vmatprep.subr.mxu0 0.0
      %5156 = vmatpush2.msra.mxu0 0.0
      %5157 = vmatprep.subr.mxu0 0.0
      %5158 = vmatpush2.msra.mxu0 0.0
      %5159 = vmatprep.subr.mxu0 0.0
      %5160 = vmatpush2.msra.mxu0 0.0
      %5161 = vmatprep.subr.mxu0 0.0
      %5162 = vmatpush2.msra.mxu0 0.0
      %5163 = vmatprep.subr.mxu0 0.0
      %5164 = vmatpush2.msra.mxu0 0.0
      %5165 = vmatprep.subr.mxu0 0.0
      %5166 = vmatpush2.msra.mxu0 0.0
      %5167 = vmatprep.subr.mxu0 0.0
      %5168 = vmatpush2.msra.mxu0 0.0
      %5169 = vmatprep.subr.mxu0 0.0
      %5170 = vmatpush2.msra.mxu0 0.0
      %5171 = vmatprep.subr.mxu0 0.0
      %5172 = vmatpush2.msra.mxu0 0.0
      %5173 = vmatprep.subr.mxu0 0.0
      %5174 = vmatpush2.msra.mxu0 0.0
      %5175 = vmatprep.subr.mxu0 0.0
      %5176 = vmatpush2.msra.mxu0 0.0
      %5177 = vmatprep.subr.mxu0 0.0
      %5178 = vmatpush2.msra.mxu0 0.0
      %5179 = vmatprep.mubr.f32.mxu0 0.0
      %5180 = vmatmul.mubr.f32.gmra.mxu0 %v5020
      %v5181 = vpop.f32.mrf.mxu0
      %v5182 = vadd.f32 0.0, %v5181
      %v5183 = vpop.f32.mrf.mxu0
      %5184 = vmatprep.mubr.f32.mxu0 0.0
      %5185 = vmatmul.mubr.f32.gmra.mxu0 %v5023
      %v5186 = vpop.f32.mrf.mxu0
      %v5187 = vadd.f32 0.0, %v5186
      %v5188 = vpop.f32.mrf.mxu0
      %5189 = vmatprep.mubr.f32.mxu0 0.0
      %5190 = vmatmul.mubr.f32.gmra.mxu0 %v5026
      %v5191 = vpop.f32.mrf.mxu0
      %v5192 = vadd.f32 0.0, %v5191
      %v5193 = vpop.f32.mrf.mxu0
      %5194 = vmatprep.mubr.f32.mxu0 0.0
      %5195 = vmatmul.mubr.f32.gmra.mxu0 %v5029
      %v5196 = vpop.f32.mrf.mxu0
      %v5197 = vadd.f32 0.0, %v5196
      %v5198 = vpop.f32.mrf.mxu0
      %5199 = vmatprep.mubr.f32.mxu0 0.0
      %5200 = vmatmul.mubr.f32.gmra.mxu0 %v5032
      %v5201 = vpop.f32.mrf.mxu0
      %v5202 = vadd.f32 0.0, %v5201
      %v5203 = vpop.f32.mrf.mxu0
      %5204 = vmatprep.mubr.f32.mxu0 0.0
      %5205 = vmatmul.mubr.f32.gmra.mxu0 %v5035
      %v5206 = vpop.f32.mrf.mxu0
      %v5207 = vadd.f32 0.0, %v5206
      %v5208 = vpop.f32.mrf.mxu0
      %5209 = vmatprep.mubr.f32.mxu0 0.0
      %5210 = vmatmul.mubr.f32.gmra.mxu0 %v5038
      %v5211 = vpop.f32.mrf.mxu0
      %v5212 = vadd.f32 0.0, %v5211
      %v5213 = vpop.f32.mrf.mxu0
      %5214 = vmatprep.mubr.f32.mxu0 0.0
      %5215 = vmatmul.mubr.f32.gmra.mxu0 %v5041
      %v5216 = vpop.f32.mrf.mxu0
      %v5217 = vadd.f32 0.0, %v5216
      %v5218 = vpop.f32.mrf.mxu0
      %5219 = vmatprep.mubr.f32.mxu0 0.0
      %5220 = vmatmul.mubr.f32.gmra.mxu0 %v5044
      %v5221 = vpop.f32.mrf.mxu0
      %v5222 = vadd.f32 0.0, %v5221
      %v5223 = vpop.f32.mrf.mxu0
      %5224 = vmatprep.mubr.f32.mxu0 0.0
      %5225 = vmatmul.mubr.f32.gmra.mxu0 %v5047
      %v5226 = vpop.f32.mrf.mxu0
      %v5227 = vadd.f32 0.0, %v5226
      %v5228 = vpop.f32.mrf.mxu0
      %5229 = vmatprep.mubr.f32.mxu0 0.0
      %5230 = vmatmul.mubr.f32.gmra.mxu0 %v5050
      %v5231 = vpop.f32.mrf.mxu0
      %v5232 = vadd.f32 0.0, %v5231
      %v5233 = vpop.f32.mrf.mxu0
      %5234 = vmatprep.mubr.f32.mxu0 0.0
      %5235 = vmatmul.mubr.f32.gmra.mxu0 %v5053
      %v5236 = vpop.f32.mrf.mxu0
      %v5237 = vadd.f32 0.0, %v5236
      %v5238 = vpop.f32.mrf.mxu0
      %5239 = vmatprep.mubr.f32.mxu0 0.0
      %5240 = vmatmul.mubr.f32.gmra.mxu0 %v5056
      %v5241 = vpop.f32.mrf.mxu0
      %v5242 = vadd.f32 0.0, %v5241
      %v5243 = vpop.f32.mrf.mxu0
      %5244 = vmatprep.mubr.f32.mxu0 0.0
      %5245 = vmatmul.mubr.f32.gmra.mxu0 %v5059
      %v5246 = vpop.f32.mrf.mxu0
      %v5247 = vadd.f32 0.0, %v5246
      %v5248 = vpop.f32.mrf.mxu0
      %5249 = vmatprep.mubr.f32.mxu0 0.0
      %5250 = vmatmul.mubr.f32.gmra.mxu0 %v5062
      %v5251 = vpop.f32.mrf.mxu0
      %v5252 = vadd.f32 0.0, %v5251
      %v5253 = vpop.f32.mrf.mxu0
      %5254 = vmatprep.mubr.f32.mxu0 0.0
      %5255 = vmatmul.mubr.f32.gmra.mxu0 %v5065
      %v5256 = vpop.f32.mrf.mxu0
      %v5257 = vadd.f32 0.0, %v5256
      %v5258 = vpop.f32.mrf.mxu0
      %5259 = vmatprep.mubr.f32.mxu0 0.0
      %5260 = vmatmul.mubr.f32.gmra.mxu0 %v5068
      %v5261 = vpop.f32.mrf.mxu0
      %v5262 = vadd.f32 0.0, %v5261
      %v5263 = vpop.f32.mrf.mxu0
      %5264 = vmatprep.mubr.f32.mxu0 0.0
      %5265 = vmatmul.mubr.f32.gmra.mxu0 %v5071
      %v5266 = vpop.f32.mrf.mxu0
      %v5267 = vadd.f32 0.0, %v5266
      %v5268 = vpop.f32.mrf.mxu0
      %5269 = vmatprep.mubr.f32.mxu0 0.0
      %5270 = vmatmul.mubr.f32.gmra.mxu0 %v5074
      %v5271 = vpop.f32.mrf.mxu0
      %v5272 = vadd.f32 0.0, %v5271
      %v5273 = vpop.f32.mrf.mxu0
      %5274 = vmatprep.mubr.f32.mxu0 0.0
      %5275 = vmatmul.mubr.f32.gmra.mxu0 %v5077
      %v5276 = vpop.f32.mrf.mxu0
      %v5277 = vadd.f32 0.0, %v5276
      %v5278 = vpop.f32.mrf.mxu0
      %5279 = vmatprep.mubr.f32.mxu0 0.0
      %5280 = vmatmul.mubr.f32.gmra.mxu0 %v5080
      %v5281 = vpop.f32.mrf.mxu0
      %v5282 = vadd.f32 0.0, %v5281
      %v5283 = vpop.f32.mrf.mxu0
      %5284 = vmatprep.mubr.f32.mxu0 0.0
      %5285 = vmatmul.mubr.f32.gmra.mxu0 %v5083
      %v5286 = vpop.f32.mrf.mxu0
      %v5287 = vadd.f32 0.0, %v5286
      %v5288 = vpop.f32.mrf.mxu0
      %5289 = vmatprep.mubr.f32.mxu0 0.0
      %5290 = vmatmul.mubr.f32.gmra.mxu0 %v5086
      %v5291 = vpop.f32.mrf.mxu0
      %v5292 = vadd.f32 0.0, %v5291
      %v5293 = vpop.f32.mrf.mxu0
      %5294 = vmatprep.mubr.f32.mxu0 0.0
      %5295 = vmatmul.mubr.f32.gmra.mxu0 %v5089
      %v5296 = vpop.f32.mrf.mxu0
      %v5297 = vadd.f32 0.0, %v5296
      %v5298 = vpop.f32.mrf.mxu0
      %5299 = vmatprep.mubr.f32.mxu0 0.0
      %5300 = vmatmul.mubr.f32.gmra.mxu0 %v5092
      %v5301 = vpop.f32.mrf.mxu0
      %v5302 = vadd.f32 0.0, %v5301
      %v5303 = vpop.f32.mrf.mxu0
      %5304 = vmatprep.mubr.f32.mxu0 0.0
      %5305 = vmatmul.mubr.f32.gmra.mxu0 %v5095
      %v5306 = vpop.f32.mrf.mxu0
      %v5307 = vadd.f32 0.0, %v5306
      %v5308 = vpop.f32.mrf.mxu0
      %5309 = vmatprep.mubr.f32.mxu0 0.0
      %5310 = vmatmul.mubr.f32.gmra.mxu0 %v5098
      %v5311 = vpop.f32.mrf.mxu0
      %v5312 = vadd.f32 0.0, %v5311
      %v5313 = vpop.f32.mrf.mxu0
      %5314 = vmatprep.mubr.f32.mxu0 0.0
      %5315 = vmatmul.mubr.f32.gmra.mxu0 %v5101
      %v5316 = vpop.f32.mrf.mxu0
      %v5317 = vadd.f32 0.0, %v5316
      %v5318 = vpop.f32.mrf.mxu0
      %5319 = vmatprep.mubr.f32.mxu0 0.0
      %5320 = vmatmul.mubr.f32.gmra.mxu0 %v5104
      %v5321 = vpop.f32.mrf.mxu0
      %v5322 = vadd.f32 0.0, %v5321
      %v5323 = vpop.f32.mrf.mxu0
      %5324 = vmatprep.mubr.f32.mxu0 0.0
      %5325 = vmatmul.mubr.f32.gmra.mxu0 %v5107
      %v5326 = vpop.f32.mrf.mxu0
      %v5327 = vadd.f32 0.0, %v5326
      %v5328 = vpop.f32.mrf.mxu0
      %5329 = vmatprep.mubr.f32.mxu0 0.0
      %5330 = vmatmul.mubr.f32.gmra.mxu0 %v5110
      %v5331 = vpop.f32.mrf.mxu0
      %v5332 = vadd.f32 0.0, %v5331
      %v5333 = vpop.f32.mrf.mxu0
      %5334 = vmatprep.mubr.f32.mxu0 0.0
      %5335 = vmatmul.mubr.f32.gmra.mxu0 %v5113
      %v5336 = vpop.f32.mrf.mxu0
      %v5337 = vadd.f32 0.0, %v5336
      %v5338 = vpop.f32.mrf.mxu0
      %5339 = vdwg.mxu0
      %v5340 = vadd.f32 %v4952, %v5182
      %v5341 = vadd.f32 %v4953, %v5187
      %v5342 = vadd.f32 %v4954, %v5192
      %v5343 = vadd.f32 %v4955, %v5197
      %v5344 = vadd.f32 %v4956, %v5202
      %v5345 = vadd.f32 %v4957, %v5207
      %v5346 = vadd.f32 %v4958, %v5212
      %v5347 = vadd.f32 %v4959, %v5217
      %v5348 = vadd.f32 %v4960, %v5222
      %v5349 = vadd.f32 %v4961, %v5227
      %v5350 = vadd.f32 %v4962, %v5232
      %v5351 = vadd.f32 %v4963, %v5237
      %v5352 = vadd.f32 %v4964, %v5242
      %v5353 = vadd.f32 %v4965, %v5247
      %v5354 = vadd.f32 %v4966, %v5252
      %v5355 = vadd.f32 %v4967, %v5257
      %v5356 = vadd.f32 %v4968, %v5262
      %v5357 = vadd.f32 %v4969, %v5267
      %v5358 = vadd.f32 %v4970, %v5272
      %v5359 = vadd.f32 %v4971, %v5277
      %v5360 = vadd.f32 %v4972, %v5282
      %v5361 = vadd.f32 %v4973, %v5287
      %v5362 = vadd.f32 %v4974, %v5292
      %v5363 = vadd.f32 %v4975, %v5297
      %v5364 = vadd.f32 %v4976, %v5302
      %v5365 = vadd.f32 %v4977, %v5307
      %v5366 = vadd.f32 %v4978, %v5312
      %v5367 = vadd.f32 %v4979, %v5317
      %v5368 = vadd.f32 %v4980, %v5322
      %v5369 = vadd.f32 %v4981, %v5327
      %v5370 = vadd.f32 %v4982, %v5332
      %v5371 = vadd.f32 %v4983, %v5337
      %v5372 = vld [vmem:[%s3852 + $0x8] sm:$0xff]
      %v5373 = vld [vmem:[%s3852 + $0x10] sm:$0xff]
      %v5374 = vld [vmem:[%s3852 + $0x28] sm:$0xff]
      %v5375 = vld [vmem:[%s3852 + $0x30] sm:$0xff]
      %v5376 = vld [vmem:[%s3852 + $0x48] sm:$0xff]
      %v5377 = vld [vmem:[%s3852 + $0x50] sm:$0xff]
      %v5378 = vld [vmem:[%s3852 + $0x68] sm:$0xff]
      %v5379 = vld [vmem:[%s3852 + $0x70] sm:$0xff]
      %v5380 = vld [vmem:[%s3852 + $0x88] sm:$0xff]
      %v5381 = vld [vmem:[%s3852 + $0x90] sm:$0xff]
      %v5382 = vld [vmem:[%s3852 + $0xa8] sm:$0xff]
      %v5383 = vld [vmem:[%s3852 + $0xb0] sm:$0xff]
      %v5384 = vld [vmem:[%s3852 + $0xc8] sm:$0xff]
      %v5385 = vld [vmem:[%s3852 + $0xd0] sm:$0xff]
      %v5386 = vld [vmem:[%s3852 + $0xe8] sm:$0xff]
      %v5387 = vld [vmem:[%s3852 + $0xf0] sm:$0xff]
      %v5388 = vld [vmem:[%s3852 + $0x108] sm:$0xff]
      %v5389 = vld [vmem:[%s3852 + $0x110] sm:$0xff]
      %v5390 = vld [vmem:[%s3852 + $0x128] sm:$0xff]
      %v5391 = vld [vmem:[%s3852 + $0x130] sm:$0xff]
      %v5392 = vld [vmem:[%s3852 + $0x148] sm:$0xff]
      %v5393 = vld [vmem:[%s3852 + $0x150] sm:$0xff]
      %v5394 = vld [vmem:[%s3852 + $0x168] sm:$0xff]
      %v5395 = vld [vmem:[%s3852 + $0x170] sm:$0xff]
      %v5396 = vld [vmem:[%s3852 + $0x188] sm:$0xff]
      %v5397 = vld [vmem:[%s3852 + $0x190] sm:$0xff]
      %v5398 = vld [vmem:[%s3852 + $0x1a8] sm:$0xff]
      %v5399 = vld [vmem:[%s3852 + $0x1b0] sm:$0xff]
      %v5400 = vld [vmem:[%s3852 + $0x1c8] sm:$0xff]
      %v5401 = vld [vmem:[%s3852 + $0x1d0] sm:$0xff]
      %v5402 = vld [vmem:[%s3852 + $0x1e8] sm:$0xff]
      %v5403 = vld [vmem:[%s3852 + $0x1f0] sm:$0xff]
      %s5404 = scalar_lea.vmem %s3, 64
      %v5405 = vld [vmem:[%s5404] sm:$0xff]
      %v5406 = vld [vmem:[%s5404 + $0x8] sm:$0xff]
      %v5408 = vsel %vm348, %v5372, 0
      %v5411 = vsel %vm348, %v5373, 0
      %v5414 = vsel %vm348, %v5374, 0
      %v5417 = vsel %vm348, %v5375, 0
      %v5420 = vsel %vm348, %v5376, 0
      %v5423 = vsel %vm348, %v5377, 0
      %v5426 = vsel %vm348, %v5378, 0
      %v5429 = vsel %vm348, %v5379, 0
      %v5432 = vsel %vm348, %v5380, 0
      %v5435 = vsel %vm348, %v5381, 0
      %v5438 = vsel %vm348, %v5382, 0
      %v5441 = vsel %vm348, %v5383, 0
      %v5444 = vsel %vm348, %v5384, 0
      %v5447 = vsel %vm348, %v5385, 0
      %v5450 = vsel %vm348, %v5386, 0
      %v5453 = vsel %vm348, %v5387, 0
      %v5456 = vsel %vm348, %v5388, 0
      %v5459 = vsel %vm348, %v5389, 0
      %v5462 = vsel %vm348, %v5390, 0
      %v5465 = vsel %vm348, %v5391, 0
      %v5468 = vsel %vm348, %v5392, 0
      %v5471 = vsel %vm348, %v5393, 0
      %v5474 = vsel %vm348, %v5394, 0
      %v5477 = vsel %vm348, %v5395, 0
      %v5480 = vsel %vm348, %v5396, 0
      %v5483 = vsel %vm348, %v5397, 0
      %v5486 = vsel %vm348, %v5398, 0
      %v5489 = vsel %vm348, %v5399, 0
      %v5492 = vsel %vm348, %v5400, 0
      %v5495 = vsel %vm348, %v5401, 0
      %v5498 = vsel %vm348, %v5402, 0
      %v5501 = vsel %vm348, %v5403, 0
      %5503 = vmatprep.subr.mxu0 0.0
      %5504 = vmatpush1.msra.mxu0 0.0
      %5505 = vmatprep.subr.mxu0 0.0
      %5506 = vmatpush1.msra.mxu0 0.0
      %5507 = vmatprep.subr.mxu0 0.0
      %5508 = vmatpush1.msra.mxu0 0.0
      %5509 = vmatprep.subr.mxu0 0.0
      %5510 = vmatpush1.msra.mxu0 0.0
      %5511 = vmatprep.subr.mxu0 0.0
      %5512 = vmatpush1.msra.mxu0 0.0
      %5513 = vmatprep.subr.mxu0 0.0
      %5514 = vmatpush1.msra.mxu0 0.0
      %5515 = vmatprep.subr.mxu0 0.0
      %5516 = vmatpush1.msra.mxu0 0.0
      %5517 = vmatprep.subr.mxu0 0.0
      %5518 = vmatpush1.msra.mxu0 0.0
      %5519 = vmatprep.subr.mxu0 0.0
      %5520 = vmatpush1.msra.mxu0 0.0
      %5521 = vmatprep.subr.mxu0 0.0
      %5522 = vmatpush1.msra.mxu0 0.0
      %5523 = vmatprep.subr.mxu0 0.0
      %5524 = vmatpush1.msra.mxu0 0.0
      %5525 = vmatprep.subr.mxu0 0.0
      %5526 = vmatpush1.msra.mxu0 0.0
      %5527 = vmatprep.subr.mxu0 0.0
      %5528 = vmatpush1.msra.mxu0 0.0
      %5529 = vmatprep.subr.mxu0 0.0
      %5530 = vmatpush1.msra.mxu0 0.0
      %5531 = vmatprep.subr.mxu0 0.0
      %5532 = vmatpush1.msra.mxu0 %v5406
      %5533 = vmatprep.subr.mxu0 0.0
      %5534 = vmatpush1.msra.mxu0 %v5405
      %5535 = vmatprep.subr.mxu0 0.0
      %5536 = vmatpush2.msra.mxu0 0.0
      %5537 = vmatprep.subr.mxu0 0.0
      %5538 = vmatpush2.msra.mxu0 0.0
      %5539 = vmatprep.subr.mxu0 0.0
      %5540 = vmatpush2.msra.mxu0 0.0
      %5541 = vmatprep.subr.mxu0 0.0
      %5542 = vmatpush2.msra.mxu0 0.0
      %5543 = vmatprep.subr.mxu0 0.0
      %5544 = vmatpush2.msra.mxu0 0.0
      %5545 = vmatprep.subr.mxu0 0.0
      %5546 = vmatpush2.msra.mxu0 0.0
      %5547 = vmatprep.subr.mxu0 0.0
      %5548 = vmatpush2.msra.mxu0 0.0
      %5549 = vmatprep.subr.mxu0 0.0
      %5550 = vmatpush2.msra.mxu0 0.0
      %5551 = vmatprep.subr.mxu0 0.0
      %5552 = vmatpush2.msra.mxu0 0.0
      %5553 = vmatprep.subr.mxu0 0.0
      %5554 = vmatpush2.msra.mxu0 0.0
      %5555 = vmatprep.subr.mxu0 0.0
      %5556 = vmatpush2.msra.mxu0 0.0
      %5557 = vmatprep.subr.mxu0 0.0
      %5558 = vmatpush2.msra.mxu0 0.0
      %5559 = vmatprep.subr.mxu0 0.0
      %5560 = vmatpush2.msra.mxu0 0.0
      %5561 = vmatprep.subr.mxu0 0.0
      %5562 = vmatpush2.msra.mxu0 0.0
      %5563 = vmatprep.subr.mxu0 0.0
      %5564 = vmatpush2.msra.mxu0 0.0
      %5565 = vmatprep.subr.mxu0 0.0
      %5566 = vmatpush2.msra.mxu0 0.0
      %5567 = vmatprep.mubr.f32.mxu0 0.0
      %5568 = vmatmul.mubr.f32.gmra.mxu0 %v5408
      %v5569 = vpop.f32.mrf.mxu0
      %v5570 = vadd.f32 0.0, %v5569
      %v5571 = vpop.f32.mrf.mxu0
      %5572 = vmatprep.mubr.f32.mxu0 0.0
      %5573 = vmatmul.mubr.f32.gmra.mxu0 %v5411
      %v5574 = vpop.f32.mrf.mxu0
      %v5575 = vadd.f32 0.0, %v5574
      %v5576 = vpop.f32.mrf.mxu0
      %5577 = vmatprep.mubr.f32.mxu0 0.0
      %5578 = vmatmul.mubr.f32.gmra.mxu0 %v5414
      %v5579 = vpop.f32.mrf.mxu0
      %v5580 = vadd.f32 0.0, %v5579
      %v5581 = vpop.f32.mrf.mxu0
      %5582 = vmatprep.mubr.f32.mxu0 0.0
      %5583 = vmatmul.mubr.f32.gmra.mxu0 %v5417
      %v5584 = vpop.f32.mrf.mxu0
      %v5585 = vadd.f32 0.0, %v5584
      %v5586 = vpop.f32.mrf.mxu0
      %5587 = vmatprep.mubr.f32.mxu0 0.0
      %5588 = vmatmul.mubr.f32.gmra.mxu0 %v5420
      %v5589 = vpop.f32.mrf.mxu0
      %v5590 = vadd.f32 0.0, %v5589
      %v5591 = vpop.f32.mrf.mxu0
      %5592 = vmatprep.mubr.f32.mxu0 0.0
      %5593 = vmatmul.mubr.f32.gmra.mxu0 %v5423
      %v5594 = vpop.f32.mrf.mxu0
      %v5595 = vadd.f32 0.0, %v5594
      %v5596 = vpop.f32.mrf.mxu0
      %5597 = vmatprep.mubr.f32.mxu0 0.0
      %5598 = vmatmul.mubr.f32.gmra.mxu0 %v5426
      %v5599 = vpop.f32.mrf.mxu0
      %v5600 = vadd.f32 0.0, %v5599
      %v5601 = vpop.f32.mrf.mxu0
      %5602 = vmatprep.mubr.f32.mxu0 0.0
      %5603 = vmatmul.mubr.f32.gmra.mxu0 %v5429
      %v5604 = vpop.f32.mrf.mxu0
      %v5605 = vadd.f32 0.0, %v5604
      %v5606 = vpop.f32.mrf.mxu0
      %5607 = vmatprep.mubr.f32.mxu0 0.0
      %5608 = vmatmul.mubr.f32.gmra.mxu0 %v5432
      %v5609 = vpop.f32.mrf.mxu0
      %v5610 = vadd.f32 0.0, %v5609
      %v5611 = vpop.f32.mrf.mxu0
      %5612 = vmatprep.mubr.f32.mxu0 0.0
      %5613 = vmatmul.mubr.f32.gmra.mxu0 %v5435
      %v5614 = vpop.f32.mrf.mxu0
      %v5615 = vadd.f32 0.0, %v5614
      %v5616 = vpop.f32.mrf.mxu0
      %5617 = vmatprep.mubr.f32.mxu0 0.0
      %5618 = vmatmul.mubr.f32.gmra.mxu0 %v5438
      %v5619 = vpop.f32.mrf.mxu0
      %v5620 = vadd.f32 0.0, %v5619
      %v5621 = vpop.f32.mrf.mxu0
      %5622 = vmatprep.mubr.f32.mxu0 0.0
      %5623 = vmatmul.mubr.f32.gmra.mxu0 %v5441
      %v5624 = vpop.f32.mrf.mxu0
      %v5625 = vadd.f32 0.0, %v5624
      %v5626 = vpop.f32.mrf.mxu0
      %5627 = vmatprep.mubr.f32.mxu0 0.0
      %5628 = vmatmul.mubr.f32.gmra.mxu0 %v5444
      %v5629 = vpop.f32.mrf.mxu0
      %v5630 = vadd.f32 0.0, %v5629
      %v5631 = vpop.f32.mrf.mxu0
      %5632 = vmatprep.mubr.f32.mxu0 0.0
      %5633 = vmatmul.mubr.f32.gmra.mxu0 %v5447
      %v5634 = vpop.f32.mrf.mxu0
      %v5635 = vadd.f32 0.0, %v5634
      %v5636 = vpop.f32.mrf.mxu0
      %5637 = vmatprep.mubr.f32.mxu0 0.0
      %5638 = vmatmul.mubr.f32.gmra.mxu0 %v5450
      %v5639 = vpop.f32.mrf.mxu0
      %v5640 = vadd.f32 0.0, %v5639
      %v5641 = vpop.f32.mrf.mxu0
      %5642 = vmatprep.mubr.f32.mxu0 0.0
      %5643 = vmatmul.mubr.f32.gmra.mxu0 %v5453
      %v5644 = vpop.f32.mrf.mxu0
      %v5645 = vadd.f32 0.0, %v5644
      %v5646 = vpop.f32.mrf.mxu0
      %5647 = vmatprep.mubr.f32.mxu0 0.0
      %5648 = vmatmul.mubr.f32.gmra.mxu0 %v5456
      %v5649 = vpop.f32.mrf.mxu0
      %v5650 = vadd.f32 0.0, %v5649
      %v5651 = vpop.f32.mrf.mxu0
      %5652 = vmatprep.mubr.f32.mxu0 0.0
      %5653 = vmatmul.mubr.f32.gmra.mxu0 %v5459
      %v5654 = vpop.f32.mrf.mxu0
      %v5655 = vadd.f32 0.0, %v5654
      %v5656 = vpop.f32.mrf.mxu0
      %5657 = vmatprep.mubr.f32.mxu0 0.0
      %5658 = vmatmul.mubr.f32.gmra.mxu0 %v5462
      %v5659 = vpop.f32.mrf.mxu0
      %v5660 = vadd.f32 0.0, %v5659
      %v5661 = vpop.f32.mrf.mxu0
      %5662 = vmatprep.mubr.f32.mxu0 0.0
      %5663 = vmatmul.mubr.f32.gmra.mxu0 %v5465
      %v5664 = vpop.f32.mrf.mxu0
      %v5665 = vadd.f32 0.0, %v5664
      %v5666 = vpop.f32.mrf.mxu0
      %5667 = vmatprep.mubr.f32.mxu0 0.0
      %5668 = vmatmul.mubr.f32.gmra.mxu0 %v5468
      %v5669 = vpop.f32.mrf.mxu0
      %v5670 = vadd.f32 0.0, %v5669
      %v5671 = vpop.f32.mrf.mxu0
      %5672 = vmatprep.mubr.f32.mxu0 0.0
      %5673 = vmatmul.mubr.f32.gmra.mxu0 %v5471
      %v5674 = vpop.f32.mrf.mxu0
      %v5675 = vadd.f32 0.0, %v5674
      %v5676 = vpop.f32.mrf.mxu0
      %5677 = vmatprep.mubr.f32.mxu0 0.0
      %5678 = vmatmul.mubr.f32.gmra.mxu0 %v5474
      %v5679 = vpop.f32.mrf.mxu0
      %v5680 = vadd.f32 0.0, %v5679
      %v5681 = vpop.f32.mrf.mxu0
      %5682 = vmatprep.mubr.f32.mxu0 0.0
      %5683 = vmatmul.mubr.f32.gmra.mxu0 %v5477
      %v5684 = vpop.f32.mrf.mxu0
      %v5685 = vadd.f32 0.0, %v5684
      %v5686 = vpop.f32.mrf.mxu0
      %5687 = vmatprep.mubr.f32.mxu0 0.0
      %5688 = vmatmul.mubr.f32.gmra.mxu0 %v5480
      %v5689 = vpop.f32.mrf.mxu0
      %v5690 = vadd.f32 0.0, %v5689
      %v5691 = vpop.f32.mrf.mxu0
      %5692 = vmatprep.mubr.f32.mxu0 0.0
      %5693 = vmatmul.mubr.f32.gmra.mxu0 %v5483
      %v5694 = vpop.f32.mrf.mxu0
      %v5695 = vadd.f32 0.0, %v5694
      %v5696 = vpop.f32.mrf.mxu0
      %5697 = vmatprep.mubr.f32.mxu0 0.0
      %5698 = vmatmul.mubr.f32.gmra.mxu0 %v5486
      %v5699 = vpop.f32.mrf.mxu0
      %v5700 = vadd.f32 0.0, %v5699
      %v5701 = vpop.f32.mrf.mxu0
      %5702 = vmatprep.mubr.f32.mxu0 0.0
      %5703 = vmatmul.mubr.f32.gmra.mxu0 %v5489
      %v5704 = vpop.f32.mrf.mxu0
      %v5705 = vadd.f32 0.0, %v5704
      %v5706 = vpop.f32.mrf.mxu0
      %5707 = vmatprep.mubr.f32.mxu0 0.0
      %5708 = vmatmul.mubr.f32.gmra.mxu0 %v5492
      %v5709 = vpop.f32.mrf.mxu0
      %v5710 = vadd.f32 0.0, %v5709
      %v5711 = vpop.f32.mrf.mxu0
      %5712 = vmatprep.mubr.f32.mxu0 0.0
      %5713 = vmatmul.mubr.f32.gmra.mxu0 %v5495
      %v5714 = vpop.f32.mrf.mxu0
      %v5715 = vadd.f32 0.0, %v5714
      %v5716 = vpop.f32.mrf.mxu0
      %5717 = vmatprep.mubr.f32.mxu0 0.0
      %5718 = vmatmul.mubr.f32.gmra.mxu0 %v5498
      %v5719 = vpop.f32.mrf.mxu0
      %v5720 = vadd.f32 0.0, %v5719
      %v5721 = vpop.f32.mrf.mxu0
      %5722 = vmatprep.mubr.f32.mxu0 0.0
      %5723 = vmatmul.mubr.f32.gmra.mxu0 %v5501
      %v5724 = vpop.f32.mrf.mxu0
      %v5725 = vadd.f32 0.0, %v5724
      %v5726 = vpop.f32.mrf.mxu0
      %5727 = vdwg.mxu0
      %v5728 = vadd.f32 %v5340, %v5570
      %v5729 = vadd.f32 %v5341, %v5575
      %v5730 = vadd.f32 %v5342, %v5580
      %v5731 = vadd.f32 %v5343, %v5585
      %v5732 = vadd.f32 %v5344, %v5590
      %v5733 = vadd.f32 %v5345, %v5595
      %v5734 = vadd.f32 %v5346, %v5600
      %v5735 = vadd.f32 %v5347, %v5605
      %v5736 = vadd.f32 %v5348, %v5610
      %v5737 = vadd.f32 %v5349, %v5615
      %v5738 = vadd.f32 %v5350, %v5620
      %v5739 = vadd.f32 %v5351, %v5625
      %v5740 = vadd.f32 %v5352, %v5630
      %v5741 = vadd.f32 %v5353, %v5635
      %v5742 = vadd.f32 %v5354, %v5640
      %v5743 = vadd.f32 %v5355, %v5645
      %v5744 = vadd.f32 %v5356, %v5650
      %v5745 = vadd.f32 %v5357, %v5655
      %v5746 = vadd.f32 %v5358, %v5660
      %v5747 = vadd.f32 %v5359, %v5665
      %v5748 = vadd.f32 %v5360, %v5670
      %v5749 = vadd.f32 %v5361, %v5675
      %v5750 = vadd.f32 %v5362, %v5680
      %v5751 = vadd.f32 %v5363, %v5685
      %v5752 = vadd.f32 %v5364, %v5690
      %v5753 = vadd.f32 %v5365, %v5695
      %v5754 = vadd.f32 %v5366, %v5700
      %v5755 = vadd.f32 %v5367, %v5705
      %v5756 = vadd.f32 %v5368, %v5710
      %v5757 = vadd.f32 %v5369, %v5715
      %v5758 = vadd.f32 %v5370, %v5720
      %v5759 = vadd.f32 %v5371, %v5725
      %v5760 = vld [vmem:[%s3852 + $0x9] sm:$0xff]
      %v5761 = vld [vmem:[%s3852 + $0x11] sm:$0xff]
      %v5762 = vld [vmem:[%s3852 + $0x29] sm:$0xff]
      %v5763 = vld [vmem:[%s3852 + $0x31] sm:$0xff]
      %v5764 = vld [vmem:[%s3852 + $0x49] sm:$0xff]
      %v5765 = vld [vmem:[%s3852 + $0x51] sm:$0xff]
      %v5766 = vld [vmem:[%s3852 + $0x69] sm:$0xff]
      %v5767 = vld [vmem:[%s3852 + $0x71] sm:$0xff]
      %v5768 = vld [vmem:[%s3852 + $0x89] sm:$0xff]
      %v5769 = vld [vmem:[%s3852 + $0x91] sm:$0xff]
      %v5770 = vld [vmem:[%s3852 + $0xa9] sm:$0xff]
      %v5771 = vld [vmem:[%s3852 + $0xb1] sm:$0xff]
      %v5772 = vld [vmem:[%s3852 + $0xc9] sm:$0xff]
      %v5773 = vld [vmem:[%s3852 + $0xd1] sm:$0xff]
      %v5774 = vld [vmem:[%s3852 + $0xe9] sm:$0xff]
      %v5775 = vld [vmem:[%s3852 + $0xf1] sm:$0xff]
      %v5776 = vld [vmem:[%s3852 + $0x109] sm:$0xff]
      %v5777 = vld [vmem:[%s3852 + $0x111] sm:$0xff]
      %v5778 = vld [vmem:[%s3852 + $0x129] sm:$0xff]
      %v5779 = vld [vmem:[%s3852 + $0x131] sm:$0xff]
      %v5780 = vld [vmem:[%s3852 + $0x149] sm:$0xff]
      %v5781 = vld [vmem:[%s3852 + $0x151] sm:$0xff]
      %v5782 = vld [vmem:[%s3852 + $0x169] sm:$0xff]
      %v5783 = vld [vmem:[%s3852 + $0x171] sm:$0xff]
      %v5784 = vld [vmem:[%s3852 + $0x189] sm:$0xff]
      %v5785 = vld [vmem:[%s3852 + $0x191] sm:$0xff]
      %v5786 = vld [vmem:[%s3852 + $0x1a9] sm:$0xff]
      %v5787 = vld [vmem:[%s3852 + $0x1b1] sm:$0xff]
      %v5788 = vld [vmem:[%s3852 + $0x1c9] sm:$0xff]
      %v5789 = vld [vmem:[%s3852 + $0x1d1] sm:$0xff]
      %v5790 = vld [vmem:[%s3852 + $0x1e9] sm:$0xff]
      %v5791 = vld [vmem:[%s3852 + $0x1f1] sm:$0xff]
      %s5792 = scalar_lea.vmem %s3, 80
      %v5793 = vld [vmem:[%s5792] sm:$0xff]
      %v5794 = vld [vmem:[%s5792 + $0x8] sm:$0xff]
      %v5796 = vsel %vm348, %v5760, 0
      %v5799 = vsel %vm348, %v5761, 0
      %v5802 = vsel %vm348, %v5762, 0
      %v5805 = vsel %vm348, %v5763, 0
      %v5808 = vsel %vm348, %v5764, 0
      %v5811 = vsel %vm348, %v5765, 0
      %v5814 = vsel %vm348, %v5766, 0
      %v5817 = vsel %vm348, %v5767, 0
      %v5820 = vsel %vm348, %v5768, 0
      %v5823 = vsel %vm348, %v5769, 0
      %v5826 = vsel %vm348, %v5770, 0
      %v5829 = vsel %vm348, %v5771, 0
      %v5832 = vsel %vm348, %v5772, 0
      %v5835 = vsel %vm348, %v5773, 0
      %v5838 = vsel %vm348, %v5774, 0
      %v5841 = vsel %vm348, %v5775, 0
      %v5844 = vsel %vm348, %v5776, 0
      %v5847 = vsel %vm348, %v5777, 0
      %v5850 = vsel %vm348, %v5778, 0
      %v5853 = vsel %vm348, %v5779, 0
      %v5856 = vsel %vm348, %v5780, 0
      %v5859 = vsel %vm348, %v5781, 0
      %v5862 = vsel %vm348, %v5782, 0
      %v5865 = vsel %vm348, %v5783, 0
      %v5868 = vsel %vm348, %v5784, 0
      %v5871 = vsel %vm348, %v5785, 0
      %v5874 = vsel %vm348, %v5786, 0
      %v5877 = vsel %vm348, %v5787, 0
      %v5880 = vsel %vm348, %v5788, 0
      %v5883 = vsel %vm348, %v5789, 0
      %v5886 = vsel %vm348, %v5790, 0
      %v5889 = vsel %vm348, %v5791, 0
      %5891 = vmatprep.subr.mxu0 0.0
      %5892 = vmatpush1.msra.mxu0 0.0
      %5893 = vmatprep.subr.mxu0 0.0
      %5894 = vmatpush1.msra.mxu0 0.0
      %5895 = vmatprep.subr.mxu0 0.0
      %5896 = vmatpush1.msra.mxu0 0.0
      %5897 = vmatprep.subr.mxu0 0.0
      %5898 = vmatpush1.msra.mxu0 0.0
      %5899 = vmatprep.subr.mxu0 0.0
      %5900 = vmatpush1.msra.mxu0 0.0
      %5901 = vmatprep.subr.mxu0 0.0
      %5902 = vmatpush1.msra.mxu0 0.0
      %5903 = vmatprep.subr.mxu0 0.0
      %5904 = vmatpush1.msra.mxu0 0.0
      %5905 = vmatprep.subr.mxu0 0.0
      %5906 = vmatpush1.msra.mxu0 0.0
      %5907 = vmatprep.subr.mxu0 0.0
      %5908 = vmatpush1.msra.mxu0 0.0
      %5909 = vmatprep.subr.mxu0 0.0
      %5910 = vmatpush1.msra.mxu0 0.0
      %5911 = vmatprep.subr.mxu0 0.0
      %5912 = vmatpush1.msra.mxu0 0.0
      %5913 = vmatprep.subr.mxu0 0.0
      %5914 = vmatpush1.msra.mxu0 0.0
      %5915 = vmatprep.subr.mxu0 0.0
      %5916 = vmatpush1.msra.mxu0 0.0
      %5917 = vmatprep.subr.mxu0 0.0
      %5918 = vmatpush1.msra.mxu0 0.0
      %5919 = vmatprep.subr.mxu0 0.0
      %5920 = vmatpush1.msra.mxu0 %v5794
      %5921 = vmatprep.subr.mxu0 0.0
      %5922 = vmatpush1.msra.mxu0 %v5793
      %5923 = vmatprep.subr.mxu0 0.0
      %5924 = vmatpush2.msra.mxu0 0.0
      %5925 = vmatprep.subr.mxu0 0.0
      %5926 = vmatpush2.msra.mxu0 0.0
      %5927 = vmatprep.subr.mxu0 0.0
      %5928 = vmatpush2.msra.mxu0 0.0
      %5929 = vmatprep.subr.mxu0 0.0
      %5930 = vmatpush2.msra.mxu0 0.0
      %5931 = vmatprep.subr.mxu0 0.0
      %5932 = vmatpush2.msra.mxu0 0.0
      %5933 = vmatprep.subr.mxu0 0.0
      %5934 = vmatpush2.msra.mxu0 0.0
      %5935 = vmatprep.subr.mxu0 0.0
      %5936 = vmatpush2.msra.mxu0 0.0
      %5937 = vmatprep.subr.mxu0 0.0
      %5938 = vmatpush2.msra.mxu0 0.0
      %5939 = vmatprep.subr.mxu0 0.0
      %5940 = vmatpush2.msra.mxu0 0.0
      %5941 = vmatprep.subr.mxu0 0.0
      %5942 = vmatpush2.msra.mxu0 0.0
      %5943 = vmatprep.subr.mxu0 0.0
      %5944 = vmatpush2.msra.mxu0 0.0
      %5945 = vmatprep.subr.mxu0 0.0
      %5946 = vmatpush2.msra.mxu0 0.0
      %5947 = vmatprep.subr.mxu0 0.0
      %5948 = vmatpush2.msra.mxu0 0.0
      %5949 = vmatprep.subr.mxu0 0.0
      %5950 = vmatpush2.msra.mxu0 0.0
      %5951 = vmatprep.subr.mxu0 0.0
      %5952 = vmatpush2.msra.mxu0 0.0
      %5953 = vmatprep.subr.mxu0 0.0
      %5954 = vmatpush2.msra.mxu0 0.0
      %5955 = vmatprep.mubr.f32.mxu0 0.0
      %5956 = vmatmul.mubr.f32.gmra.mxu0 %v5796
      %v5957 = vpop.f32.mrf.mxu0
      %v5958 = vadd.f32 0.0, %v5957
      %v5959 = vpop.f32.mrf.mxu0
      %5960 = vmatprep.mubr.f32.mxu0 0.0
      %5961 = vmatmul.mubr.f32.gmra.mxu0 %v5799
      %v5962 = vpop.f32.mrf.mxu0
      %v5963 = vadd.f32 0.0, %v5962
      %v5964 = vpop.f32.mrf.mxu0
      %5965 = vmatprep.mubr.f32.mxu0 0.0
      %5966 = vmatmul.mubr.f32.gmra.mxu0 %v5802
      %v5967 = vpop.f32.mrf.mxu0
      %v5968 = vadd.f32 0.0, %v5967
      %v5969 = vpop.f32.mrf.mxu0
      %5970 = vmatprep.mubr.f32.mxu0 0.0
      %5971 = vmatmul.mubr.f32.gmra.mxu0 %v5805
      %v5972 = vpop.f32.mrf.mxu0
      %v5973 = vadd.f32 0.0, %v5972
      %v5974 = vpop.f32.mrf.mxu0
      %5975 = vmatprep.mubr.f32.mxu0 0.0
      %5976 = vmatmul.mubr.f32.gmra.mxu0 %v5808
      %v5977 = vpop.f32.mrf.mxu0
      %v5978 = vadd.f32 0.0, %v5977
      %v5979 = vpop.f32.mrf.mxu0
      %5980 = vmatprep.mubr.f32.mxu0 0.0
      %5981 = vmatmul.mubr.f32.gmra.mxu0 %v5811
      %v5982 = vpop.f32.mrf.mxu0
      %v5983 = vadd.f32 0.0, %v5982
      %v5984 = vpop.f32.mrf.mxu0
      %5985 = vmatprep.mubr.f32.mxu0 0.0
      %5986 = vmatmul.mubr.f32.gmra.mxu0 %v5814
      %v5987 = vpop.f32.mrf.mxu0
      %v5988 = vadd.f32 0.0, %v5987
      %v5989 = vpop.f32.mrf.mxu0
      %5990 = vmatprep.mubr.f32.mxu0 0.0
      %5991 = vmatmul.mubr.f32.gmra.mxu0 %v5817
      %v5992 = vpop.f32.mrf.mxu0
      %v5993 = vadd.f32 0.0, %v5992
      %v5994 = vpop.f32.mrf.mxu0
      %5995 = vmatprep.mubr.f32.mxu0 0.0
      %5996 = vmatmul.mubr.f32.gmra.mxu0 %v5820
      %v5997 = vpop.f32.mrf.mxu0
      %v5998 = vadd.f32 0.0, %v5997
      %v5999 = vpop.f32.mrf.mxu0
      %6000 = vmatprep.mubr.f32.mxu0 0.0
      %6001 = vmatmul.mubr.f32.gmra.mxu0 %v5823
      %v6002 = vpop.f32.mrf.mxu0
      %v6003 = vadd.f32 0.0, %v6002
      %v6004 = vpop.f32.mrf.mxu0
      %6005 = vmatprep.mubr.f32.mxu0 0.0
      %6006 = vmatmul.mubr.f32.gmra.mxu0 %v5826
      %v6007 = vpop.f32.mrf.mxu0
      %v6008 = vadd.f32 0.0, %v6007
      %v6009 = vpop.f32.mrf.mxu0
      %6010 = vmatprep.mubr.f32.mxu0 0.0
      %6011 = vmatmul.mubr.f32.gmra.mxu0 %v5829
      %v6012 = vpop.f32.mrf.mxu0
      %v6013 = vadd.f32 0.0, %v6012
      %v6014 = vpop.f32.mrf.mxu0
      %6015 = vmatprep.mubr.f32.mxu0 0.0
      %6016 = vmatmul.mubr.f32.gmra.mxu0 %v5832
      %v6017 = vpop.f32.mrf.mxu0
      %v6018 = vadd.f32 0.0, %v6017
      %v6019 = vpop.f32.mrf.mxu0
      %6020 = vmatprep.mubr.f32.mxu0 0.0
      %6021 = vmatmul.mubr.f32.gmra.mxu0 %v5835
      %v6022 = vpop.f32.mrf.mxu0
      %v6023 = vadd.f32 0.0, %v6022
      %v6024 = vpop.f32.mrf.mxu0
      %6025 = vmatprep.mubr.f32.mxu0 0.0
      %6026 = vmatmul.mubr.f32.gmra.mxu0 %v5838
      %v6027 = vpop.f32.mrf.mxu0
      %v6028 = vadd.f32 0.0, %v6027
      %v6029 = vpop.f32.mrf.mxu0
      %6030 = vmatprep.mubr.f32.mxu0 0.0
      %6031 = vmatmul.mubr.f32.gmra.mxu0 %v5841
      %v6032 = vpop.f32.mrf.mxu0
      %v6033 = vadd.f32 0.0, %v6032
      %v6034 = vpop.f32.mrf.mxu0
      %6035 = vmatprep.mubr.f32.mxu0 0.0
      %6036 = vmatmul.mubr.f32.gmra.mxu0 %v5844
      %v6037 = vpop.f32.mrf.mxu0
      %v6038 = vadd.f32 0.0, %v6037
      %v6039 = vpop.f32.mrf.mxu0
      %6040 = vmatprep.mubr.f32.mxu0 0.0
      %6041 = vmatmul.mubr.f32.gmra.mxu0 %v5847
      %v6042 = vpop.f32.mrf.mxu0
      %v6043 = vadd.f32 0.0, %v6042
      %v6044 = vpop.f32.mrf.mxu0
      %6045 = vmatprep.mubr.f32.mxu0 0.0
      %6046 = vmatmul.mubr.f32.gmra.mxu0 %v5850
      %v6047 = vpop.f32.mrf.mxu0
      %v6048 = vadd.f32 0.0, %v6047
      %v6049 = vpop.f32.mrf.mxu0
      %6050 = vmatprep.mubr.f32.mxu0 0.0
      %6051 = vmatmul.mubr.f32.gmra.mxu0 %v5853
      %v6052 = vpop.f32.mrf.mxu0
      %v6053 = vadd.f32 0.0, %v6052
      %v6054 = vpop.f32.mrf.mxu0
      %6055 = vmatprep.mubr.f32.mxu0 0.0
      %6056 = vmatmul.mubr.f32.gmra.mxu0 %v5856
      %v6057 = vpop.f32.mrf.mxu0
      %v6058 = vadd.f32 0.0, %v6057
      %v6059 = vpop.f32.mrf.mxu0
      %6060 = vmatprep.mubr.f32.mxu0 0.0
      %6061 = vmatmul.mubr.f32.gmra.mxu0 %v5859
      %v6062 = vpop.f32.mrf.mxu0
      %v6063 = vadd.f32 0.0, %v6062
      %v6064 = vpop.f32.mrf.mxu0
      %6065 = vmatprep.mubr.f32.mxu0 0.0
      %6066 = vmatmul.mubr.f32.gmra.mxu0 %v5862
      %v6067 = vpop.f32.mrf.mxu0
      %v6068 = vadd.f32 0.0, %v6067
      %v6069 = vpop.f32.mrf.mxu0
      %6070 = vmatprep.mubr.f32.mxu0 0.0
      %6071 = vmatmul.mubr.f32.gmra.mxu0 %v5865
      %v6072 = vpop.f32.mrf.mxu0
      %v6073 = vadd.f32 0.0, %v6072
      %v6074 = vpop.f32.mrf.mxu0
      %6075 = vmatprep.mubr.f32.mxu0 0.0
      %6076 = vmatmul.mubr.f32.gmra.mxu0 %v5868
      %v6077 = vpop.f32.mrf.mxu0
      %v6078 = vadd.f32 0.0, %v6077
      %v6079 = vpop.f32.mrf.mxu0
      %6080 = vmatprep.mubr.f32.mxu0 0.0
      %6081 = vmatmul.mubr.f32.gmra.mxu0 %v5871
      %v6082 = vpop.f32.mrf.mxu0
      %v6083 = vadd.f32 0.0, %v6082
      %v6084 = vpop.f32.mrf.mxu0
      %6085 = vmatprep.mubr.f32.mxu0 0.0
      %6086 = vmatmul.mubr.f32.gmra.mxu0 %v5874
      %v6087 = vpop.f32.mrf.mxu0
      %v6088 = vadd.f32 0.0, %v6087
      %v6089 = vpop.f32.mrf.mxu0
      %6090 = vmatprep.mubr.f32.mxu0 0.0
      %6091 = vmatmul.mubr.f32.gmra.mxu0 %v5877
      %v6092 = vpop.f32.mrf.mxu0
      %v6093 = vadd.f32 0.0, %v6092
      %v6094 = vpop.f32.mrf.mxu0
      %6095 = vmatprep.mubr.f32.mxu0 0.0
      %6096 = vmatmul.mubr.f32.gmra.mxu0 %v5880
      %v6097 = vpop.f32.mrf.mxu0
      %v6098 = vadd.f32 0.0, %v6097
      %v6099 = vpop.f32.mrf.mxu0
      %6100 = vmatprep.mubr.f32.mxu0 0.0
      %6101 = vmatmul.mubr.f32.gmra.mxu0 %v5883
      %v6102 = vpop.f32.mrf.mxu0
      %v6103 = vadd.f32 0.0, %v6102
      %v6104 = vpop.f32.mrf.mxu0
      %6105 = vmatprep.mubr.f32.mxu0 0.0
      %6106 = vmatmul.mubr.f32.gmra.mxu0 %v5886
      %v6107 = vpop.f32.mrf.mxu0
      %v6108 = vadd.f32 0.0, %v6107
      %v6109 = vpop.f32.mrf.mxu0
      %6110 = vmatprep.mubr.f32.mxu0 0.0
      %6111 = vmatmul.mubr.f32.gmra.mxu0 %v5889
      %v6112 = vpop.f32.mrf.mxu0
      %v6113 = vadd.f32 0.0, %v6112
      %v6114 = vpop.f32.mrf.mxu0
      %6115 = vdwg.mxu0
      %v6116 = vadd.f32 %v5728, %v5958
      %v6117 = vadd.f32 %v5729, %v5963
      %v6118 = vadd.f32 %v5730, %v5968
      %v6119 = vadd.f32 %v5731, %v5973
      %v6120 = vadd.f32 %v5732, %v5978
      %v6121 = vadd.f32 %v5733, %v5983
      %v6122 = vadd.f32 %v5734, %v5988
      %v6123 = vadd.f32 %v5735, %v5993
      %v6124 = vadd.f32 %v5736, %v5998
      %v6125 = vadd.f32 %v5737, %v6003
      %v6126 = vadd.f32 %v5738, %v6008
      %v6127 = vadd.f32 %v5739, %v6013
      %v6128 = vadd.f32 %v5740, %v6018
      %v6129 = vadd.f32 %v5741, %v6023
      %v6130 = vadd.f32 %v5742, %v6028
      %v6131 = vadd.f32 %v5743, %v6033
      %v6132 = vadd.f32 %v5744, %v6038
      %v6133 = vadd.f32 %v5745, %v6043
      %v6134 = vadd.f32 %v5746, %v6048
      %v6135 = vadd.f32 %v5747, %v6053
      %v6136 = vadd.f32 %v5748, %v6058
      %v6137 = vadd.f32 %v5749, %v6063
      %v6138 = vadd.f32 %v5750, %v6068
      %v6139 = vadd.f32 %v5751, %v6073
      %v6140 = vadd.f32 %v5752, %v6078
      %v6141 = vadd.f32 %v5753, %v6083
      %v6142 = vadd.f32 %v5754, %v6088
      %v6143 = vadd.f32 %v5755, %v6093
      %v6144 = vadd.f32 %v5756, %v6098
      %v6145 = vadd.f32 %v5757, %v6103
      %v6146 = vadd.f32 %v5758, %v6108
      %v6147 = vadd.f32 %v5759, %v6113
      %s6148 = scalar_lea.vmem [#allocation2], 64
      %v6149 = vld [vmem:[%s6148 + $0x7] sm:$0xff]
      %v6150 = vld [vmem:[%s6148 + $0xf] sm:$0xff]
      %v6151 = vld [vmem:[%s6148 + $0x27] sm:$0xff]
      %v6152 = vld [vmem:[%s6148 + $0x2f] sm:$0xff]
      %v6153 = vld [vmem:[%s6148 + $0x47] sm:$0xff]
      %v6154 = vld [vmem:[%s6148 + $0x4f] sm:$0xff]
      %v6155 = vld [vmem:[%s6148 + $0x67] sm:$0xff]
      %v6156 = vld [vmem:[%s6148 + $0x6f] sm:$0xff]
      %v6157 = vld [vmem:[%s6148 + $0x87] sm:$0xff]
      %v6158 = vld [vmem:[%s6148 + $0x8f] sm:$0xff]
      %v6159 = vld [vmem:[%s6148 + $0xa7] sm:$0xff]
      %v6160 = vld [vmem:[%s6148 + $0xaf] sm:$0xff]
      %v6161 = vld [vmem:[%s6148 + $0xc7] sm:$0xff]
      %v6162 = vld [vmem:[%s6148 + $0xcf] sm:$0xff]
      %v6163 = vld [vmem:[%s6148 + $0xe7] sm:$0xff]
      %v6164 = vld [vmem:[%s6148 + $0xef] sm:$0xff]
      %v6165 = vld [vmem:[%s6148 + $0x107] sm:$0xff]
      %v6166 = vld [vmem:[%s6148 + $0x10f] sm:$0xff]
      %v6167 = vld [vmem:[%s6148 + $0x127] sm:$0xff]
      %v6168 = vld [vmem:[%s6148 + $0x12f] sm:$0xff]
      %v6169 = vld [vmem:[%s6148 + $0x147] sm:$0xff]
      %v6170 = vld [vmem:[%s6148 + $0x14f] sm:$0xff]
      %v6171 = vld [vmem:[%s6148 + $0x167] sm:$0xff]
      %v6172 = vld [vmem:[%s6148 + $0x16f] sm:$0xff]
      %v6173 = vld [vmem:[%s6148 + $0x187] sm:$0xff]
      %v6174 = vld [vmem:[%s6148 + $0x18f] sm:$0xff]
      %v6175 = vld [vmem:[%s6148 + $0x1a7] sm:$0xff]
      %v6176 = vld [vmem:[%s6148 + $0x1af] sm:$0xff]
      %v6177 = vld [vmem:[%s6148 + $0x1c7] sm:$0xff]
      %v6178 = vld [vmem:[%s6148 + $0x1cf] sm:$0xff]
      %v6179 = vld [vmem:[%s6148 + $0x1e7] sm:$0xff]
      %v6180 = vld [vmem:[%s6148 + $0x1ef] sm:$0xff]
      %s6181 = scalar_lea.vmem %s3, 96
      %v6182 = vld [vmem:[%s6181] sm:$0xff]
      %v6183 = vld [vmem:[%s6181 + $0x8] sm:$0xff]
      %v6185 = vsel %vm348, %v6149, 0
      %v6188 = vsel %vm348, %v6150, 0
      %v6191 = vsel %vm348, %v6151, 0
      %v6194 = vsel %vm348, %v6152, 0
      %v6197 = vsel %vm348, %v6153, 0
      %v6200 = vsel %vm348, %v6154, 0
      %v6203 = vsel %vm348, %v6155, 0
      %v6206 = vsel %vm348, %v6156, 0
      %v6209 = vsel %vm348, %v6157, 0
      %v6212 = vsel %vm348, %v6158, 0
      %v6215 = vsel %vm348, %v6159, 0
      %v6218 = vsel %vm348, %v6160, 0
      %v6221 = vsel %vm348, %v6161, 0
      %v6224 = vsel %vm348, %v6162, 0
      %v6227 = vsel %vm348, %v6163, 0
      %v6230 = vsel %vm348, %v6164, 0
      %v6233 = vsel %vm348, %v6165, 0
      %v6236 = vsel %vm348, %v6166, 0
      %v6239 = vsel %vm348, %v6167, 0
      %v6242 = vsel %vm348, %v6168, 0
      %v6245 = vsel %vm348, %v6169, 0
      %v6248 = vsel %vm348, %v6170, 0
      %v6251 = vsel %vm348, %v6171, 0
      %v6254 = vsel %vm348, %v6172, 0
      %v6257 = vsel %vm348, %v6173, 0
      %v6260 = vsel %vm348, %v6174, 0
      %v6263 = vsel %vm348, %v6175, 0
      %v6266 = vsel %vm348, %v6176, 0
      %v6269 = vsel %vm348, %v6177, 0
      %v6272 = vsel %vm348, %v6178, 0
      %v6275 = vsel %vm348, %v6179, 0
      %v6278 = vsel %vm348, %v6180, 0
      %6280 = vmatprep.subr.mxu0 0.0
      %6281 = vmatpush1.msra.mxu0 0.0
      %6282 = vmatprep.subr.mxu0 0.0
      %6283 = vmatpush1.msra.mxu0 0.0
      %6284 = vmatprep.subr.mxu0 0.0
      %6285 = vmatpush1.msra.mxu0 0.0
      %6286 = vmatprep.subr.mxu0 0.0
      %6287 = vmatpush1.msra.mxu0 0.0
      %6288 = vmatprep.subr.mxu0 0.0
      %6289 = vmatpush1.msra.mxu0 0.0
      %6290 = vmatprep.subr.mxu0 0.0
      %6291 = vmatpush1.msra.mxu0 0.0
      %6292 = vmatprep.subr.mxu0 0.0
      %6293 = vmatpush1.msra.mxu0 0.0
      %6294 = vmatprep.subr.mxu0 0.0
      %6295 = vmatpush1.msra.mxu0 0.0
      %6296 = vmatprep.subr.mxu0 0.0
      %6297 = vmatpush1.msra.mxu0 0.0
      %6298 = vmatprep.subr.mxu0 0.0
      %6299 = vmatpush1.msra.mxu0 0.0
      %6300 = vmatprep.subr.mxu0 0.0
      %6301 = vmatpush1.msra.mxu0 0.0
      %6302 = vmatprep.subr.mxu0 0.0
      %6303 = vmatpush1.msra.mxu0 0.0
      %6304 = vmatprep.subr.mxu0 0.0
      %6305 = vmatpush1.msra.mxu0 0.0
      %6306 = vmatprep.subr.mxu0 0.0
      %6307 = vmatpush1.msra.mxu0 0.0
      %6308 = vmatprep.subr.mxu0 0.0
      %6309 = vmatpush1.msra.mxu0 %v6183
      %6310 = vmatprep.subr.mxu0 0.0
      %6311 = vmatpush1.msra.mxu0 %v6182
      %6312 = vmatprep.subr.mxu0 0.0
      %6313 = vmatpush2.msra.mxu0 0.0
      %6314 = vmatprep.subr.mxu0 0.0
      %6315 = vmatpush2.msra.mxu0 0.0
      %6316 = vmatprep.subr.mxu0 0.0
      %6317 = vmatpush2.msra.mxu0 0.0
      %6318 = vmatprep.subr.mxu0 0.0
      %6319 = vmatpush2.msra.mxu0 0.0
      %6320 = vmatprep.subr.mxu0 0.0
      %6321 = vmatpush2.msra.mxu0 0.0
      %6322 = vmatprep.subr.mxu0 0.0
      %6323 = vmatpush2.msra.mxu0 0.0
      %6324 = vmatprep.subr.mxu0 0.0
      %6325 = vmatpush2.msra.mxu0 0.0
      %6326 = vmatprep.subr.mxu0 0.0
      %6327 = vmatpush2.msra.mxu0 0.0
      %6328 = vmatprep.subr.mxu0 0.0
      %6329 = vmatpush2.msra.mxu0 0.0
      %6330 = vmatprep.subr.mxu0 0.0
      %6331 = vmatpush2.msra.mxu0 0.0
      %6332 = vmatprep.subr.mxu0 0.0
      %6333 = vmatpush2.msra.mxu0 0.0
      %6334 = vmatprep.subr.mxu0 0.0
      %6335 = vmatpush2.msra.mxu0 0.0
      %6336 = vmatprep.subr.mxu0 0.0
      %6337 = vmatpush2.msra.mxu0 0.0
      %6338 = vmatprep.subr.mxu0 0.0
      %6339 = vmatpush2.msra.mxu0 0.0
      %6340 = vmatprep.subr.mxu0 0.0
      %6341 = vmatpush2.msra.mxu0 0.0
      %6342 = vmatprep.subr.mxu0 0.0
      %6343 = vmatpush2.msra.mxu0 0.0
      %6344 = vmatprep.mubr.f32.mxu0 0.0
      %6345 = vmatmul.mubr.f32.gmra.mxu0 %v6185
      %v6346 = vpop.f32.mrf.mxu0
      %v6347 = vadd.f32 0.0, %v6346
      %v6348 = vpop.f32.mrf.mxu0
      %6349 = vmatprep.mubr.f32.mxu0 0.0
      %6350 = vmatmul.mubr.f32.gmra.mxu0 %v6188
      %v6351 = vpop.f32.mrf.mxu0
      %v6352 = vadd.f32 0.0, %v6351
      %v6353 = vpop.f32.mrf.mxu0
      %6354 = vmatprep.mubr.f32.mxu0 0.0
      %6355 = vmatmul.mubr.f32.gmra.mxu0 %v6191
      %v6356 = vpop.f32.mrf.mxu0
      %v6357 = vadd.f32 0.0, %v6356
      %v6358 = vpop.f32.mrf.mxu0
      %6359 = vmatprep.mubr.f32.mxu0 0.0
      %6360 = vmatmul.mubr.f32.gmra.mxu0 %v6194
      %v6361 = vpop.f32.mrf.mxu0
      %v6362 = vadd.f32 0.0, %v6361
      %v6363 = vpop.f32.mrf.mxu0
      %6364 = vmatprep.mubr.f32.mxu0 0.0
      %6365 = vmatmul.mubr.f32.gmra.mxu0 %v6197
      %v6366 = vpop.f32.mrf.mxu0
      %v6367 = vadd.f32 0.0, %v6366
      %v6368 = vpop.f32.mrf.mxu0
      %6369 = vmatprep.mubr.f32.mxu0 0.0
      %6370 = vmatmul.mubr.f32.gmra.mxu0 %v6200
      %v6371 = vpop.f32.mrf.mxu0
      %v6372 = vadd.f32 0.0, %v6371
      %v6373 = vpop.f32.mrf.mxu0
      %6374 = vmatprep.mubr.f32.mxu0 0.0
      %6375 = vmatmul.mubr.f32.gmra.mxu0 %v6203
      %v6376 = vpop.f32.mrf.mxu0
      %v6377 = vadd.f32 0.0, %v6376
      %v6378 = vpop.f32.mrf.mxu0
      %6379 = vmatprep.mubr.f32.mxu0 0.0
      %6380 = vmatmul.mubr.f32.gmra.mxu0 %v6206
      %v6381 = vpop.f32.mrf.mxu0
      %v6382 = vadd.f32 0.0, %v6381
      %v6383 = vpop.f32.mrf.mxu0
      %6384 = vmatprep.mubr.f32.mxu0 0.0
      %6385 = vmatmul.mubr.f32.gmra.mxu0 %v6209
      %v6386 = vpop.f32.mrf.mxu0
      %v6387 = vadd.f32 0.0, %v6386
      %v6388 = vpop.f32.mrf.mxu0
      %6389 = vmatprep.mubr.f32.mxu0 0.0
      %6390 = vmatmul.mubr.f32.gmra.mxu0 %v6212
      %v6391 = vpop.f32.mrf.mxu0
      %v6392 = vadd.f32 0.0, %v6391
      %v6393 = vpop.f32.mrf.mxu0
      %6394 = vmatprep.mubr.f32.mxu0 0.0
      %6395 = vmatmul.mubr.f32.gmra.mxu0 %v6215
      %v6396 = vpop.f32.mrf.mxu0
      %v6397 = vadd.f32 0.0, %v6396
      %v6398 = vpop.f32.mrf.mxu0
      %6399 = vmatprep.mubr.f32.mxu0 0.0
      %6400 = vmatmul.mubr.f32.gmra.mxu0 %v6218
      %v6401 = vpop.f32.mrf.mxu0
      %v6402 = vadd.f32 0.0, %v6401
      %v6403 = vpop.f32.mrf.mxu0
      %6404 = vmatprep.mubr.f32.mxu0 0.0
      %6405 = vmatmul.mubr.f32.gmra.mxu0 %v6221
      %v6406 = vpop.f32.mrf.mxu0
      %v6407 = vadd.f32 0.0, %v6406
      %v6408 = vpop.f32.mrf.mxu0
      %6409 = vmatprep.mubr.f32.mxu0 0.0
      %6410 = vmatmul.mubr.f32.gmra.mxu0 %v6224
      %v6411 = vpop.f32.mrf.mxu0
      %v6412 = vadd.f32 0.0, %v6411
      %v6413 = vpop.f32.mrf.mxu0
      %6414 = vmatprep.mubr.f32.mxu0 0.0
      %6415 = vmatmul.mubr.f32.gmra.mxu0 %v6227
      %v6416 = vpop.f32.mrf.mxu0
      %v6417 = vadd.f32 0.0, %v6416
      %v6418 = vpop.f32.mrf.mxu0
      %6419 = vmatprep.mubr.f32.mxu0 0.0
      %6420 = vmatmul.mubr.f32.gmra.mxu0 %v6230
      %v6421 = vpop.f32.mrf.mxu0
      %v6422 = vadd.f32 0.0, %v6421
      %v6423 = vpop.f32.mrf.mxu0
      %6424 = vmatprep.mubr.f32.mxu0 0.0
      %6425 = vmatmul.mubr.f32.gmra.mxu0 %v6233
      %v6426 = vpop.f32.mrf.mxu0
      %v6427 = vadd.f32 0.0, %v6426
      %v6428 = vpop.f32.mrf.mxu0
      %6429 = vmatprep.mubr.f32.mxu0 0.0
      %6430 = vmatmul.mubr.f32.gmra.mxu0 %v6236
      %v6431 = vpop.f32.mrf.mxu0
      %v6432 = vadd.f32 0.0, %v6431
      %v6433 = vpop.f32.mrf.mxu0
      %6434 = vmatprep.mubr.f32.mxu0 0.0
      %6435 = vmatmul.mubr.f32.gmra.mxu0 %v6239
      %v6436 = vpop.f32.mrf.mxu0
      %v6437 = vadd.f32 0.0, %v6436
      %v6438 = vpop.f32.mrf.mxu0
      %6439 = vmatprep.mubr.f32.mxu0 0.0
      %6440 = vmatmul.mubr.f32.gmra.mxu0 %v6242
      %v6441 = vpop.f32.mrf.mxu0
      %v6442 = vadd.f32 0.0, %v6441
      %v6443 = vpop.f32.mrf.mxu0
      %6444 = vmatprep.mubr.f32.mxu0 0.0
      %6445 = vmatmul.mubr.f32.gmra.mxu0 %v6245
      %v6446 = vpop.f32.mrf.mxu0
      %v6447 = vadd.f32 0.0, %v6446
      %v6448 = vpop.f32.mrf.mxu0
      %6449 = vmatprep.mubr.f32.mxu0 0.0
      %6450 = vmatmul.mubr.f32.gmra.mxu0 %v6248
      %v6451 = vpop.f32.mrf.mxu0
      %v6452 = vadd.f32 0.0, %v6451
      %v6453 = vpop.f32.mrf.mxu0
      %6454 = vmatprep.mubr.f32.mxu0 0.0
      %6455 = vmatmul.mubr.f32.gmra.mxu0 %v6251
      %v6456 = vpop.f32.mrf.mxu0
      %v6457 = vadd.f32 0.0, %v6456
      %v6458 = vpop.f32.mrf.mxu0
      %6459 = vmatprep.mubr.f32.mxu0 0.0
      %6460 = vmatmul.mubr.f32.gmra.mxu0 %v6254
      %v6461 = vpop.f32.mrf.mxu0
      %v6462 = vadd.f32 0.0, %v6461
      %v6463 = vpop.f32.mrf.mxu0
      %6464 = vmatprep.mubr.f32.mxu0 0.0
      %6465 = vmatmul.mubr.f32.gmra.mxu0 %v6257
      %v6466 = vpop.f32.mrf.mxu0
      %v6467 = vadd.f32 0.0, %v6466
      %v6468 = vpop.f32.mrf.mxu0
      %6469 = vmatprep.mubr.f32.mxu0 0.0
      %6470 = vmatmul.mubr.f32.gmra.mxu0 %v6260
      %v6471 = vpop.f32.mrf.mxu0
      %v6472 = vadd.f32 0.0, %v6471
      %v6473 = vpop.f32.mrf.mxu0
      %6474 = vmatprep.mubr.f32.mxu0 0.0
      %6475 = vmatmul.mubr.f32.gmra.mxu0 %v6263
      %v6476 = vpop.f32.mrf.mxu0
      %v6477 = vadd.f32 0.0, %v6476
      %v6478 = vpop.f32.mrf.mxu0
      %6479 = vmatprep.mubr.f32.mxu0 0.0
      %6480 = vmatmul.mubr.f32.gmra.mxu0 %v6266
      %v6481 = vpop.f32.mrf.mxu0
      %v6482 = vadd.f32 0.0, %v6481
      %v6483 = vpop.f32.mrf.mxu0
      %6484 = vmatprep.mubr.f32.mxu0 0.0
      %6485 = vmatmul.mubr.f32.gmra.mxu0 %v6269
      %v6486 = vpop.f32.mrf.mxu0
      %v6487 = vadd.f32 0.0, %v6486
      %v6488 = vpop.f32.mrf.mxu0
      %6489 = vmatprep.mubr.f32.mxu0 0.0
      %6490 = vmatmul.mubr.f32.gmra.mxu0 %v6272
      %v6491 = vpop.f32.mrf.mxu0
      %v6492 = vadd.f32 0.0, %v6491
      %v6493 = vpop.f32.mrf.mxu0
      %6494 = vmatprep.mubr.f32.mxu0 0.0
      %6495 = vmatmul.mubr.f32.gmra.mxu0 %v6275
      %v6496 = vpop.f32.mrf.mxu0
      %v6497 = vadd.f32 0.0, %v6496
      %v6498 = vpop.f32.mrf.mxu0
      %6499 = vmatprep.mubr.f32.mxu0 0.0
      %6500 = vmatmul.mubr.f32.gmra.mxu0 %v6278
      %v6501 = vpop.f32.mrf.mxu0
      %v6502 = vadd.f32 0.0, %v6501
      %v6503 = vpop.f32.mrf.mxu0
      %6504 = vdwg.mxu0
      %v6505 = vadd.f32 %v6116, %v6347
      %v6506 = vadd.f32 %v6117, %v6352
      %v6507 = vadd.f32 %v6118, %v6357
      %v6508 = vadd.f32 %v6119, %v6362
      %v6509 = vadd.f32 %v6120, %v6367
      %v6510 = vadd.f32 %v6121, %v6372
      %v6511 = vadd.f32 %v6122, %v6377
      %v6512 = vadd.f32 %v6123, %v6382
      %v6513 = vadd.f32 %v6124, %v6387
      %v6514 = vadd.f32 %v6125, %v6392
      %v6515 = vadd.f32 %v6126, %v6397
      %v6516 = vadd.f32 %v6127, %v6402
      %v6517 = vadd.f32 %v6128, %v6407
      %v6518 = vadd.f32 %v6129, %v6412
      %v6519 = vadd.f32 %v6130, %v6417
      %v6520 = vadd.f32 %v6131, %v6422
      %v6521 = vadd.f32 %v6132, %v6427
      %v6522 = vadd.f32 %v6133, %v6432
      %v6523 = vadd.f32 %v6134, %v6437
      %v6524 = vadd.f32 %v6135, %v6442
      %v6525 = vadd.f32 %v6136, %v6447
      %v6526 = vadd.f32 %v6137, %v6452
      %v6527 = vadd.f32 %v6138, %v6457
      %v6528 = vadd.f32 %v6139, %v6462
      %v6529 = vadd.f32 %v6140, %v6467
      %v6530 = vadd.f32 %v6141, %v6472
      %v6531 = vadd.f32 %v6142, %v6477
      %v6532 = vadd.f32 %v6143, %v6482
      %v6533 = vadd.f32 %v6144, %v6487
      %v6534 = vadd.f32 %v6145, %v6492
      %v6535 = vadd.f32 %v6146, %v6497
      %v6536 = vadd.f32 %v6147, %v6502
      %v6537 = vld [vmem:[%s6148 + $0x8] sm:$0xff]
      %v6538 = vld [vmem:[%s6148 + $0x10] sm:$0xff]
      %v6539 = vld [vmem:[%s6148 + $0x28] sm:$0xff]
      %v6540 = vld [vmem:[%s6148 + $0x30] sm:$0xff]
      %v6541 = vld [vmem:[%s6148 + $0x48] sm:$0xff]
      %v6542 = vld [vmem:[%s6148 + $0x50] sm:$0xff]
      %v6543 = vld [vmem:[%s6148 + $0x68] sm:$0xff]
      %v6544 = vld [vmem:[%s6148 + $0x70] sm:$0xff]
      %v6545 = vld [vmem:[%s6148 + $0x88] sm:$0xff]
      %v6546 = vld [vmem:[%s6148 + $0x90] sm:$0xff]
      %v6547 = vld [vmem:[%s6148 + $0xa8] sm:$0xff]
      %v6548 = vld [vmem:[%s6148 + $0xb0] sm:$0xff]
      %v6549 = vld [vmem:[%s6148 + $0xc8] sm:$0xff]
      %v6550 = vld [vmem:[%s6148 + $0xd0] sm:$0xff]
      %v6551 = vld [vmem:[%s6148 + $0xe8] sm:$0xff]
      %v6552 = vld [vmem:[%s6148 + $0xf0] sm:$0xff]
      %v6553 = vld [vmem:[%s6148 + $0x108] sm:$0xff]
      %v6554 = vld [vmem:[%s6148 + $0x110] sm:$0xff]
      %v6555 = vld [vmem:[%s6148 + $0x128] sm:$0xff]
      %v6556 = vld [vmem:[%s6148 + $0x130] sm:$0xff]
      %v6557 = vld [vmem:[%s6148 + $0x148] sm:$0xff]
      %v6558 = vld [vmem:[%s6148 + $0x150] sm:$0xff]
      %v6559 = vld [vmem:[%s6148 + $0x168] sm:$0xff]
      %v6560 = vld [vmem:[%s6148 + $0x170] sm:$0xff]
      %v6561 = vld [vmem:[%s6148 + $0x188] sm:$0xff]
      %v6562 = vld [vmem:[%s6148 + $0x190] sm:$0xff]
      %v6563 = vld [vmem:[%s6148 + $0x1a8] sm:$0xff]
      %v6564 = vld [vmem:[%s6148 + $0x1b0] sm:$0xff]
      %v6565 = vld [vmem:[%s6148 + $0x1c8] sm:$0xff]
      %v6566 = vld [vmem:[%s6148 + $0x1d0] sm:$0xff]
      %v6567 = vld [vmem:[%s6148 + $0x1e8] sm:$0xff]
      %v6568 = vld [vmem:[%s6148 + $0x1f0] sm:$0xff]
      %s6569 = scalar_lea.vmem %s3, 112
      %v6570 = vld [vmem:[%s6569] sm:$0xff]
      %v6571 = vld [vmem:[%s6569 + $0x8] sm:$0xff]
      %v6573 = vsel %vm348, %v6537, 0
      %v6576 = vsel %vm348, %v6538, 0
      %v6579 = vsel %vm348, %v6539, 0
      %v6582 = vsel %vm348, %v6540, 0
      %v6585 = vsel %vm348, %v6541, 0
      %v6588 = vsel %vm348, %v6542, 0
      %v6591 = vsel %vm348, %v6543, 0
      %v6594 = vsel %vm348, %v6544, 0
      %v6597 = vsel %vm348, %v6545, 0
      %v6600 = vsel %vm348, %v6546, 0
      %v6603 = vsel %vm348, %v6547, 0
      %v6606 = vsel %vm348, %v6548, 0
      %v6609 = vsel %vm348, %v6549, 0
      %v6612 = vsel %vm348, %v6550, 0
      %v6615 = vsel %vm348, %v6551, 0
      %v6618 = vsel %vm348, %v6552, 0
      %v6621 = vsel %vm348, %v6553, 0
      %v6624 = vsel %vm348, %v6554, 0
      %v6627 = vsel %vm348, %v6555, 0
      %v6630 = vsel %vm348, %v6556, 0
      %v6633 = vsel %vm348, %v6557, 0
      %v6636 = vsel %vm348, %v6558, 0
      %v6639 = vsel %vm348, %v6559, 0
      %v6642 = vsel %vm348, %v6560, 0
      %v6645 = vsel %vm348, %v6561, 0
      %v6648 = vsel %vm348, %v6562, 0
      %v6651 = vsel %vm348, %v6563, 0
      %v6654 = vsel %vm348, %v6564, 0
      %v6657 = vsel %vm348, %v6565, 0
      %v6660 = vsel %vm348, %v6566, 0
      %v6663 = vsel %vm348, %v6567, 0
      %v6666 = vsel %vm348, %v6568, 0
      %6668 = vmatprep.subr.mxu0 0.0
      %6669 = vmatpush1.msra.mxu0 0.0
      %6670 = vmatprep.subr.mxu0 0.0
      %6671 = vmatpush1.msra.mxu0 0.0
      %6672 = vmatprep.subr.mxu0 0.0
      %6673 = vmatpush1.msra.mxu0 0.0
      %6674 = vmatprep.subr.mxu0 0.0
      %6675 = vmatpush1.msra.mxu0 0.0
      %6676 = vmatprep.subr.mxu0 0.0
      %6677 = vmatpush1.msra.mxu0 0.0
      %6678 = vmatprep.subr.mxu0 0.0
      %6679 = vmatpush1.msra.mxu0 0.0
      %6680 = vmatprep.subr.mxu0 0.0
      %6681 = vmatpush1.msra.mxu0 0.0
      %6682 = vmatprep.subr.mxu0 0.0
      %6683 = vmatpush1.msra.mxu0 0.0
      %6684 = vmatprep.subr.mxu0 0.0
      %6685 = vmatpush1.msra.mxu0 0.0
      %6686 = vmatprep.subr.mxu0 0.0
      %6687 = vmatpush1.msra.mxu0 0.0
      %6688 = vmatprep.subr.mxu0 0.0
      %6689 = vmatpush1.msra.mxu0 0.0
      %6690 = vmatprep.subr.mxu0 0.0
      %6691 = vmatpush1.msra.mxu0 0.0
      %6692 = vmatprep.subr.mxu0 0.0
      %6693 = vmatpush1.msra.mxu0 0.0
      %6694 = vmatprep.subr.mxu0 0.0
      %6695 = vmatpush1.msra.mxu0 0.0
      %6696 = vmatprep.subr.mxu0 0.0
      %6697 = vmatpush1.msra.mxu0 %v6571
      %6698 = vmatprep.subr.mxu0 0.0
      %6699 = vmatpush1.msra.mxu0 %v6570
      %6700 = vmatprep.subr.mxu0 0.0
      %6701 = vmatpush2.msra.mxu0 0.0
      %6702 = vmatprep.subr.mxu0 0.0
      %6703 = vmatpush2.msra.mxu0 0.0
      %6704 = vmatprep.subr.mxu0 0.0
      %6705 = vmatpush2.msra.mxu0 0.0
      %6706 = vmatprep.subr.mxu0 0.0
      %6707 = vmatpush2.msra.mxu0 0.0
      %6708 = vmatprep.subr.mxu0 0.0
      %6709 = vmatpush2.msra.mxu0 0.0
      %6710 = vmatprep.subr.mxu0 0.0
      %6711 = vmatpush2.msra.mxu0 0.0
      %6712 = vmatprep.subr.mxu0 0.0
      %6713 = vmatpush2.msra.mxu0 0.0
      %6714 = vmatprep.subr.mxu0 0.0
      %6715 = vmatpush2.msra.mxu0 0.0
      %6716 = vmatprep.subr.mxu0 0.0
      %6717 = vmatpush2.msra.mxu0 0.0
      %6718 = vmatprep.subr.mxu0 0.0
      %6719 = vmatpush2.msra.mxu0 0.0
      %6720 = vmatprep.subr.mxu0 0.0
      %6721 = vmatpush2.msra.mxu0 0.0
      %6722 = vmatprep.subr.mxu0 0.0
      %6723 = vmatpush2.msra.mxu0 0.0
      %6724 = vmatprep.subr.mxu0 0.0
      %6725 = vmatpush2.msra.mxu0 0.0
      %6726 = vmatprep.subr.mxu0 0.0
      %6727 = vmatpush2.msra.mxu0 0.0
      %6728 = vmatprep.subr.mxu0 0.0
      %6729 = vmatpush2.msra.mxu0 0.0
      %6730 = vmatprep.subr.mxu0 0.0
      %6731 = vmatpush2.msra.mxu0 0.0
      %6732 = vmatprep.mubr.f32.mxu0 0.0
      %6733 = vmatmul.mubr.f32.gmra.mxu0 %v6573
      %v6734 = vpop.f32.mrf.mxu0
      %v6735 = vadd.f32 0.0, %v6734
      %v6736 = vpop.f32.mrf.mxu0
      %6737 = vmatprep.mubr.f32.mxu0 0.0
      %6738 = vmatmul.mubr.f32.gmra.mxu0 %v6576
      %v6739 = vpop.f32.mrf.mxu0
      %v6740 = vadd.f32 0.0, %v6739
      %v6741 = vpop.f32.mrf.mxu0
      %6742 = vmatprep.mubr.f32.mxu0 0.0
      %6743 = vmatmul.mubr.f32.gmra.mxu0 %v6579
      %v6744 = vpop.f32.mrf.mxu0
      %v6745 = vadd.f32 0.0, %v6744
      %v6746 = vpop.f32.mrf.mxu0
      %6747 = vmatprep.mubr.f32.mxu0 0.0
      %6748 = vmatmul.mubr.f32.gmra.mxu0 %v6582
      %v6749 = vpop.f32.mrf.mxu0
      %v6750 = vadd.f32 0.0, %v6749
      %v6751 = vpop.f32.mrf.mxu0
      %6752 = vmatprep.mubr.f32.mxu0 0.0
      %6753 = vmatmul.mubr.f32.gmra.mxu0 %v6585
      %v6754 = vpop.f32.mrf.mxu0
      %v6755 = vadd.f32 0.0, %v6754
      %v6756 = vpop.f32.mrf.mxu0
      %6757 = vmatprep.mubr.f32.mxu0 0.0
      %6758 = vmatmul.mubr.f32.gmra.mxu0 %v6588
      %v6759 = vpop.f32.mrf.mxu0
      %v6760 = vadd.f32 0.0, %v6759
      %v6761 = vpop.f32.mrf.mxu0
      %6762 = vmatprep.mubr.f32.mxu0 0.0
      %6763 = vmatmul.mubr.f32.gmra.mxu0 %v6591
      %v6764 = vpop.f32.mrf.mxu0
      %v6765 = vadd.f32 0.0, %v6764
      %v6766 = vpop.f32.mrf.mxu0
      %6767 = vmatprep.mubr.f32.mxu0 0.0
      %6768 = vmatmul.mubr.f32.gmra.mxu0 %v6594
      %v6769 = vpop.f32.mrf.mxu0
      %v6770 = vadd.f32 0.0, %v6769
      %v6771 = vpop.f32.mrf.mxu0
      %6772 = vmatprep.mubr.f32.mxu0 0.0
      %6773 = vmatmul.mubr.f32.gmra.mxu0 %v6597
      %v6774 = vpop.f32.mrf.mxu0
      %v6775 = vadd.f32 0.0, %v6774
      %v6776 = vpop.f32.mrf.mxu0
      %6777 = vmatprep.mubr.f32.mxu0 0.0
      %6778 = vmatmul.mubr.f32.gmra.mxu0 %v6600
      %v6779 = vpop.f32.mrf.mxu0
      %v6780 = vadd.f32 0.0, %v6779
      %v6781 = vpop.f32.mrf.mxu0
      %6782 = vmatprep.mubr.f32.mxu0 0.0
      %6783 = vmatmul.mubr.f32.gmra.mxu0 %v6603
      %v6784 = vpop.f32.mrf.mxu0
      %v6785 = vadd.f32 0.0, %v6784
      %v6786 = vpop.f32.mrf.mxu0
      %6787 = vmatprep.mubr.f32.mxu0 0.0
      %6788 = vmatmul.mubr.f32.gmra.mxu0 %v6606
      %v6789 = vpop.f32.mrf.mxu0
      %v6790 = vadd.f32 0.0, %v6789
      %v6791 = vpop.f32.mrf.mxu0
      %6792 = vmatprep.mubr.f32.mxu0 0.0
      %6793 = vmatmul.mubr.f32.gmra.mxu0 %v6609
      %v6794 = vpop.f32.mrf.mxu0
      %v6795 = vadd.f32 0.0, %v6794
      %v6796 = vpop.f32.mrf.mxu0
      %6797 = vmatprep.mubr.f32.mxu0 0.0
      %6798 = vmatmul.mubr.f32.gmra.mxu0 %v6612
      %v6799 = vpop.f32.mrf.mxu0
      %v6800 = vadd.f32 0.0, %v6799
      %v6801 = vpop.f32.mrf.mxu0
      %6802 = vmatprep.mubr.f32.mxu0 0.0
      %6803 = vmatmul.mubr.f32.gmra.mxu0 %v6615
      %v6804 = vpop.f32.mrf.mxu0
      %v6805 = vadd.f32 0.0, %v6804
      %v6806 = vpop.f32.mrf.mxu0
      %6807 = vmatprep.mubr.f32.mxu0 0.0
      %6808 = vmatmul.mubr.f32.gmra.mxu0 %v6618
      %v6809 = vpop.f32.mrf.mxu0
      %v6810 = vadd.f32 0.0, %v6809
      %v6811 = vpop.f32.mrf.mxu0
      %6812 = vmatprep.mubr.f32.mxu0 0.0
      %6813 = vmatmul.mubr.f32.gmra.mxu0 %v6621
      %v6814 = vpop.f32.mrf.mxu0
      %v6815 = vadd.f32 0.0, %v6814
      %v6816 = vpop.f32.mrf.mxu0
      %6817 = vmatprep.mubr.f32.mxu0 0.0
      %6818 = vmatmul.mubr.f32.gmra.mxu0 %v6624
      %v6819 = vpop.f32.mrf.mxu0
      %v6820 = vadd.f32 0.0, %v6819
      %v6821 = vpop.f32.mrf.mxu0
      %6822 = vmatprep.mubr.f32.mxu0 0.0
      %6823 = vmatmul.mubr.f32.gmra.mxu0 %v6627
      %v6824 = vpop.f32.mrf.mxu0
      %v6825 = vadd.f32 0.0, %v6824
      %v6826 = vpop.f32.mrf.mxu0
      %6827 = vmatprep.mubr.f32.mxu0 0.0
      %6828 = vmatmul.mubr.f32.gmra.mxu0 %v6630
      %v6829 = vpop.f32.mrf.mxu0
      %v6830 = vadd.f32 0.0, %v6829
      %v6831 = vpop.f32.mrf.mxu0
      %6832 = vmatprep.mubr.f32.mxu0 0.0
      %6833 = vmatmul.mubr.f32.gmra.mxu0 %v6633
      %v6834 = vpop.f32.mrf.mxu0
      %v6835 = vadd.f32 0.0, %v6834
      %v6836 = vpop.f32.mrf.mxu0
      %6837 = vmatprep.mubr.f32.mxu0 0.0
      %6838 = vmatmul.mubr.f32.gmra.mxu0 %v6636
      %v6839 = vpop.f32.mrf.mxu0
      %v6840 = vadd.f32 0.0, %v6839
      %v6841 = vpop.f32.mrf.mxu0
      %6842 = vmatprep.mubr.f32.mxu0 0.0
      %6843 = vmatmul.mubr.f32.gmra.mxu0 %v6639
      %v6844 = vpop.f32.mrf.mxu0
      %v6845 = vadd.f32 0.0, %v6844
      %v6846 = vpop.f32.mrf.mxu0
      %6847 = vmatprep.mubr.f32.mxu0 0.0
      %6848 = vmatmul.mubr.f32.gmra.mxu0 %v6642
      %v6849 = vpop.f32.mrf.mxu0
      %v6850 = vadd.f32 0.0, %v6849
      %v6851 = vpop.f32.mrf.mxu0
      %6852 = vmatprep.mubr.f32.mxu0 0.0
      %6853 = vmatmul.mubr.f32.gmra.mxu0 %v6645
      %v6854 = vpop.f32.mrf.mxu0
      %v6855 = vadd.f32 0.0, %v6854
      %v6856 = vpop.f32.mrf.mxu0
      %6857 = vmatprep.mubr.f32.mxu0 0.0
      %6858 = vmatmul.mubr.f32.gmra.mxu0 %v6648
      %v6859 = vpop.f32.mrf.mxu0
      %v6860 = vadd.f32 0.0, %v6859
      %v6861 = vpop.f32.mrf.mxu0
      %6862 = vmatprep.mubr.f32.mxu0 0.0
      %6863 = vmatmul.mubr.f32.gmra.mxu0 %v6651
      %v6864 = vpop.f32.mrf.mxu0
      %v6865 = vadd.f32 0.0, %v6864
      %v6866 = vpop.f32.mrf.mxu0
      %6867 = vmatprep.mubr.f32.mxu0 0.0
      %6868 = vmatmul.mubr.f32.gmra.mxu0 %v6654
      %v6869 = vpop.f32.mrf.mxu0
      %v6870 = vadd.f32 0.0, %v6869
      %v6871 = vpop.f32.mrf.mxu0
      %6872 = vmatprep.mubr.f32.mxu0 0.0
      %6873 = vmatmul.mubr.f32.gmra.mxu0 %v6657
      %v6874 = vpop.f32.mrf.mxu0
      %v6875 = vadd.f32 0.0, %v6874
      %v6876 = vpop.f32.mrf.mxu0
      %6877 = vmatprep.mubr.f32.mxu0 0.0
      %6878 = vmatmul.mubr.f32.gmra.mxu0 %v6660
      %v6879 = vpop.f32.mrf.mxu0
      %v6880 = vadd.f32 0.0, %v6879
      %v6881 = vpop.f32.mrf.mxu0
      %6882 = vmatprep.mubr.f32.mxu0 0.0
      %6883 = vmatmul.mubr.f32.gmra.mxu0 %v6663
      %v6884 = vpop.f32.mrf.mxu0
      %v6885 = vadd.f32 0.0, %v6884
      %v6886 = vpop.f32.mrf.mxu0
      %6887 = vmatprep.mubr.f32.mxu0 0.0
      %6888 = vmatmul.mubr.f32.gmra.mxu0 %v6666
      %v6889 = vpop.f32.mrf.mxu0
      %v6890 = vadd.f32 0.0, %v6889
      %v6891 = vpop.f32.mrf.mxu0
      %6892 = vdwg.mxu0
      %v6893 = vadd.f32 %v6505, %v6735
      %v6894 = vadd.f32 %v6506, %v6740
      %v6895 = vadd.f32 %v6507, %v6745
      %v6896 = vadd.f32 %v6508, %v6750
      %v6897 = vadd.f32 %v6509, %v6755
      %v6898 = vadd.f32 %v6510, %v6760
      %v6899 = vadd.f32 %v6511, %v6765
      %v6900 = vadd.f32 %v6512, %v6770
      %v6901 = vadd.f32 %v6513, %v6775
      %v6902 = vadd.f32 %v6514, %v6780
      %v6903 = vadd.f32 %v6515, %v6785
      %v6904 = vadd.f32 %v6516, %v6790
      %v6905 = vadd.f32 %v6517, %v6795
      %v6906 = vadd.f32 %v6518, %v6800
      %v6907 = vadd.f32 %v6519, %v6805
      %v6908 = vadd.f32 %v6520, %v6810
      %v6909 = vadd.f32 %v6521, %v6815
      %v6910 = vadd.f32 %v6522, %v6820
      %v6911 = vadd.f32 %v6523, %v6825
      %v6912 = vadd.f32 %v6524, %v6830
      %v6913 = vadd.f32 %v6525, %v6835
      %v6914 = vadd.f32 %v6526, %v6840
      %v6915 = vadd.f32 %v6527, %v6845
      %v6916 = vadd.f32 %v6528, %v6850
      %v6917 = vadd.f32 %v6529, %v6855
      %v6918 = vadd.f32 %v6530, %v6860
      %v6919 = vadd.f32 %v6531, %v6865
      %v6920 = vadd.f32 %v6532, %v6870
      %v6921 = vadd.f32 %v6533, %v6875
      %v6922 = vadd.f32 %v6534, %v6880
      %v6923 = vadd.f32 %v6535, %v6885
      %v6924 = vadd.f32 %v6536, %v6890
      %v6925 = vld [vmem:[%s6148 + $0x9] sm:$0xff]
      %v6926 = vld [vmem:[%s6148 + $0x11] sm:$0xff]
      %v6927 = vld [vmem:[%s6148 + $0x29] sm:$0xff]
      %v6928 = vld [vmem:[%s6148 + $0x31] sm:$0xff]
      %v6929 = vld [vmem:[%s6148 + $0x49] sm:$0xff]
      %v6930 = vld [vmem:[%s6148 + $0x51] sm:$0xff]
      %v6931 = vld [vmem:[%s6148 + $0x69] sm:$0xff]
      %v6932 = vld [vmem:[%s6148 + $0x71] sm:$0xff]
      %v6933 = vld [vmem:[%s6148 + $0x89] sm:$0xff]
      %v6934 = vld [vmem:[%s6148 + $0x91] sm:$0xff]
      %v6935 = vld [vmem:[%s6148 + $0xa9] sm:$0xff]
      %v6936 = vld [vmem:[%s6148 + $0xb1] sm:$0xff]
      %v6937 = vld [vmem:[%s6148 + $0xc9] sm:$0xff]
      %v6938 = vld [vmem:[%s6148 + $0xd1] sm:$0xff]
      %v6939 = vld [vmem:[%s6148 + $0xe9] sm:$0xff]
      %v6940 = vld [vmem:[%s6148 + $0xf1] sm:$0xff]
      %v6941 = vld [vmem:[%s6148 + $0x109] sm:$0xff]
      %v6942 = vld [vmem:[%s6148 + $0x111] sm:$0xff]
      %v6943 = vld [vmem:[%s6148 + $0x129] sm:$0xff]
      %v6944 = vld [vmem:[%s6148 + $0x131] sm:$0xff]
      %v6945 = vld [vmem:[%s6148 + $0x149] sm:$0xff]
      %v6946 = vld [vmem:[%s6148 + $0x151] sm:$0xff]
      %v6947 = vld [vmem:[%s6148 + $0x169] sm:$0xff]
      %v6948 = vld [vmem:[%s6148 + $0x171] sm:$0xff]
      %v6949 = vld [vmem:[%s6148 + $0x189] sm:$0xff]
      %v6950 = vld [vmem:[%s6148 + $0x191] sm:$0xff]
      %v6951 = vld [vmem:[%s6148 + $0x1a9] sm:$0xff]
      %v6952 = vld [vmem:[%s6148 + $0x1b1] sm:$0xff]
      %v6953 = vld [vmem:[%s6148 + $0x1c9] sm:$0xff]
      %v6954 = vld [vmem:[%s6148 + $0x1d1] sm:$0xff]
      %v6955 = vld [vmem:[%s6148 + $0x1e9] sm:$0xff]
      %v6956 = vld [vmem:[%s6148 + $0x1f1] sm:$0xff]
      %s6957 = scalar_lea.vmem %s3, 128
      %v6958 = vld [vmem:[%s6957] sm:$0xff]
      %v6959 = vld [vmem:[%s6957 + $0x8] sm:$0xff]
      %v6961 = vsel %vm348, %v6925, 0
      %v6964 = vsel %vm348, %v6926, 0
      %v6967 = vsel %vm348, %v6927, 0
      %v6970 = vsel %vm348, %v6928, 0
      %v6973 = vsel %vm348, %v6929, 0
      %v6976 = vsel %vm348, %v6930, 0
      %v6979 = vsel %vm348, %v6931, 0
      %v6982 = vsel %vm348, %v6932, 0
      %v6985 = vsel %vm348, %v6933, 0
      %v6988 = vsel %vm348, %v6934, 0
      %v6991 = vsel %vm348, %v6935, 0
      %v6994 = vsel %vm348, %v6936, 0
      %v6997 = vsel %vm348, %v6937, 0
      %v7000 = vsel %vm348, %v6938, 0
      %v7003 = vsel %vm348, %v6939, 0
      %v7006 = vsel %vm348, %v6940, 0
      %v7009 = vsel %vm348, %v6941, 0
      %v7012 = vsel %vm348, %v6942, 0
      %v7015 = vsel %vm348, %v6943, 0
      %v7018 = vsel %vm348, %v6944, 0
      %v7021 = vsel %vm348, %v6945, 0
      %v7024 = vsel %vm348, %v6946, 0
      %v7027 = vsel %vm348, %v6947, 0
      %v7030 = vsel %vm348, %v6948, 0
      %v7033 = vsel %vm348, %v6949, 0
      %v7036 = vsel %vm348, %v6950, 0
      %v7039 = vsel %vm348, %v6951, 0
      %v7042 = vsel %vm348, %v6952, 0
      %v7045 = vsel %vm348, %v6953, 0
      %v7048 = vsel %vm348, %v6954, 0
      %v7051 = vsel %vm348, %v6955, 0
      %v7054 = vsel %vm348, %v6956, 0
      %7056 = vmatprep.subr.mxu0 0.0
      %7057 = vmatpush1.msra.mxu0 0.0
      %7058 = vmatprep.subr.mxu0 0.0
      %7059 = vmatpush1.msra.mxu0 0.0
      %7060 = vmatprep.subr.mxu0 0.0
      %7061 = vmatpush1.msra.mxu0 0.0
      %7062 = vmatprep.subr.mxu0 0.0
      %7063 = vmatpush1.msra.mxu0 0.0
      %7064 = vmatprep.subr.mxu0 0.0
      %7065 = vmatpush1.msra.mxu0 0.0
      %7066 = vmatprep.subr.mxu0 0.0
      %7067 = vmatpush1.msra.mxu0 0.0
      %7068 = vmatprep.subr.mxu0 0.0
      %7069 = vmatpush1.msra.mxu0 0.0
      %7070 = vmatprep.subr.mxu0 0.0
      %7071 = vmatpush1.msra.mxu0 0.0
      %7072 = vmatprep.subr.mxu0 0.0
      %7073 = vmatpush1.msra.mxu0 0.0
      %7074 = vmatprep.subr.mxu0 0.0
      %7075 = vmatpush1.msra.mxu0 0.0
      %7076 = vmatprep.subr.mxu0 0.0
      %7077 = vmatpush1.msra.mxu0 0.0
      %7078 = vmatprep.subr.mxu0 0.0
      %7079 = vmatpush1.msra.mxu0 0.0
      %7080 = vmatprep.subr.mxu0 0.0
      %7081 = vmatpush1.msra.mxu0 0.0
      %7082 = vmatprep.subr.mxu0 0.0
      %7083 = vmatpush1.msra.mxu0 0.0
      %7084 = vmatprep.subr.mxu0 0.0
      %7085 = vmatpush1.msra.mxu0 %v6959
      %7086 = vmatprep.subr.mxu0 0.0
      %7087 = vmatpush1.msra.mxu0 %v6958
      %7088 = vmatprep.subr.mxu0 0.0
      %7089 = vmatpush2.msra.mxu0 0.0
      %7090 = vmatprep.subr.mxu0 0.0
      %7091 = vmatpush2.msra.mxu0 0.0
      %7092 = vmatprep.subr.mxu0 0.0
      %7093 = vmatpush2.msra.mxu0 0.0
      %7094 = vmatprep.subr.mxu0 0.0
      %7095 = vmatpush2.msra.mxu0 0.0
      %7096 = vmatprep.subr.mxu0 0.0
      %7097 = vmatpush2.msra.mxu0 0.0
      %7098 = vmatprep.subr.mxu0 0.0
      %7099 = vmatpush2.msra.mxu0 0.0
      %7100 = vmatprep.subr.mxu0 0.0
      %7101 = vmatpush2.msra.mxu0 0.0
      %7102 = vmatprep.subr.mxu0 0.0
      %7103 = vmatpush2.msra.mxu0 0.0
      %7104 = vmatprep.subr.mxu0 0.0
      %7105 = vmatpush2.msra.mxu0 0.0
      %7106 = vmatprep.subr.mxu0 0.0
      %7107 = vmatpush2.msra.mxu0 0.0
      %7108 = vmatprep.subr.mxu0 0.0
      %7109 = vmatpush2.msra.mxu0 0.0
      %7110 = vmatprep.subr.mxu0 0.0
      %7111 = vmatpush2.msra.mxu0 0.0
      %7112 = vmatprep.subr.mxu0 0.0
      %7113 = vmatpush2.msra.mxu0 0.0
      %7114 = vmatprep.subr.mxu0 0.0
      %7115 = vmatpush2.msra.mxu0 0.0
      %7116 = vmatprep.subr.mxu0 0.0
      %7117 = vmatpush2.msra.mxu0 0.0
      %7118 = vmatprep.subr.mxu0 0.0
      %7119 = vmatpush2.msra.mxu0 0.0
      %7120 = vmatprep.mubr.f32.mxu0 0.0
      %7121 = vmatmul.mubr.f32.gmra.mxu0 %v6961
      %v7122 = vpop.f32.mrf.mxu0
      %v7123 = vadd.f32 0.0, %v7122
      %v7124 = vpop.f32.mrf.mxu0
      %7125 = vmatprep.mubr.f32.mxu0 0.0
      %7126 = vmatmul.mubr.f32.gmra.mxu0 %v6964
      %v7127 = vpop.f32.mrf.mxu0
      %v7128 = vadd.f32 0.0, %v7127
      %v7129 = vpop.f32.mrf.mxu0
      %7130 = vmatprep.mubr.f32.mxu0 0.0
      %7131 = vmatmul.mubr.f32.gmra.mxu0 %v6967
      %v7132 = vpop.f32.mrf.mxu0
      %v7133 = vadd.f32 0.0, %v7132
      %v7134 = vpop.f32.mrf.mxu0
      %7135 = vmatprep.mubr.f32.mxu0 0.0
      %7136 = vmatmul.mubr.f32.gmra.mxu0 %v6970
      %v7137 = vpop.f32.mrf.mxu0
      %v7138 = vadd.f32 0.0, %v7137
      %v7139 = vpop.f32.mrf.mxu0
      %7140 = vmatprep.mubr.f32.mxu0 0.0
      %7141 = vmatmul.mubr.f32.gmra.mxu0 %v6973
      %v7142 = vpop.f32.mrf.mxu0
      %v7143 = vadd.f32 0.0, %v7142
      %v7144 = vpop.f32.mrf.mxu0
      %7145 = vmatprep.mubr.f32.mxu0 0.0
      %7146 = vmatmul.mubr.f32.gmra.mxu0 %v6976
      %v7147 = vpop.f32.mrf.mxu0
      %v7148 = vadd.f32 0.0, %v7147
      %v7149 = vpop.f32.mrf.mxu0
      %7150 = vmatprep.mubr.f32.mxu0 0.0
      %7151 = vmatmul.mubr.f32.gmra.mxu0 %v6979
      %v7152 = vpop.f32.mrf.mxu0
      %v7153 = vadd.f32 0.0, %v7152
      %v7154 = vpop.f32.mrf.mxu0
      %7155 = vmatprep.mubr.f32.mxu0 0.0
      %7156 = vmatmul.mubr.f32.gmra.mxu0 %v6982
      %v7157 = vpop.f32.mrf.mxu0
      %v7158 = vadd.f32 0.0, %v7157
      %v7159 = vpop.f32.mrf.mxu0
      %7160 = vmatprep.mubr.f32.mxu0 0.0
      %7161 = vmatmul.mubr.f32.gmra.mxu0 %v6985
      %v7162 = vpop.f32.mrf.mxu0
      %v7163 = vadd.f32 0.0, %v7162
      %v7164 = vpop.f32.mrf.mxu0
      %7165 = vmatprep.mubr.f32.mxu0 0.0
      %7166 = vmatmul.mubr.f32.gmra.mxu0 %v6988
      %v7167 = vpop.f32.mrf.mxu0
      %v7168 = vadd.f32 0.0, %v7167
      %v7169 = vpop.f32.mrf.mxu0
      %7170 = vmatprep.mubr.f32.mxu0 0.0
      %7171 = vmatmul.mubr.f32.gmra.mxu0 %v6991
      %v7172 = vpop.f32.mrf.mxu0
      %v7173 = vadd.f32 0.0, %v7172
      %v7174 = vpop.f32.mrf.mxu0
      %7175 = vmatprep.mubr.f32.mxu0 0.0
      %7176 = vmatmul.mubr.f32.gmra.mxu0 %v6994
      %v7177 = vpop.f32.mrf.mxu0
      %v7178 = vadd.f32 0.0, %v7177
      %v7179 = vpop.f32.mrf.mxu0
      %7180 = vmatprep.mubr.f32.mxu0 0.0
      %7181 = vmatmul.mubr.f32.gmra.mxu0 %v6997
      %v7182 = vpop.f32.mrf.mxu0
      %v7183 = vadd.f32 0.0, %v7182
      %v7184 = vpop.f32.mrf.mxu0
      %7185 = vmatprep.mubr.f32.mxu0 0.0
      %7186 = vmatmul.mubr.f32.gmra.mxu0 %v7000
      %v7187 = vpop.f32.mrf.mxu0
      %v7188 = vadd.f32 0.0, %v7187
      %v7189 = vpop.f32.mrf.mxu0
      %7190 = vmatprep.mubr.f32.mxu0 0.0
      %7191 = vmatmul.mubr.f32.gmra.mxu0 %v7003
      %v7192 = vpop.f32.mrf.mxu0
      %v7193 = vadd.f32 0.0, %v7192
      %v7194 = vpop.f32.mrf.mxu0
      %7195 = vmatprep.mubr.f32.mxu0 0.0
      %7196 = vmatmul.mubr.f32.gmra.mxu0 %v7006
      %v7197 = vpop.f32.mrf.mxu0
      %v7198 = vadd.f32 0.0, %v7197
      %v7199 = vpop.f32.mrf.mxu0
      %7200 = vmatprep.mubr.f32.mxu0 0.0
      %7201 = vmatmul.mubr.f32.gmra.mxu0 %v7009
      %v7202 = vpop.f32.mrf.mxu0
      %v7203 = vadd.f32 0.0, %v7202
      %v7204 = vpop.f32.mrf.mxu0
      %7205 = vmatprep.mubr.f32.mxu0 0.0
      %7206 = vmatmul.mubr.f32.gmra.mxu0 %v7012
      %v7207 = vpop.f32.mrf.mxu0
      %v7208 = vadd.f32 0.0, %v7207
      %v7209 = vpop.f32.mrf.mxu0
      %7210 = vmatprep.mubr.f32.mxu0 0.0
      %7211 = vmatmul.mubr.f32.gmra.mxu0 %v7015
      %v7212 = vpop.f32.mrf.mxu0
      %v7213 = vadd.f32 0.0, %v7212
      %v7214 = vpop.f32.mrf.mxu0
      %7215 = vmatprep.mubr.f32.mxu0 0.0
      %7216 = vmatmul.mubr.f32.gmra.mxu0 %v7018
      %v7217 = vpop.f32.mrf.mxu0
      %v7218 = vadd.f32 0.0, %v7217
      %v7219 = vpop.f32.mrf.mxu0
      %7220 = vmatprep.mubr.f32.mxu0 0.0
      %7221 = vmatmul.mubr.f32.gmra.mxu0 %v7021
      %v7222 = vpop.f32.mrf.mxu0
      %v7223 = vadd.f32 0.0, %v7222
      %v7224 = vpop.f32.mrf.mxu0
      %7225 = vmatprep.mubr.f32.mxu0 0.0
      %7226 = vmatmul.mubr.f32.gmra.mxu0 %v7024
      %v7227 = vpop.f32.mrf.mxu0
      %v7228 = vadd.f32 0.0, %v7227
      %v7229 = vpop.f32.mrf.mxu0
      %7230 = vmatprep.mubr.f32.mxu0 0.0
      %7231 = vmatmul.mubr.f32.gmra.mxu0 %v7027
      %v7232 = vpop.f32.mrf.mxu0
      %v7233 = vadd.f32 0.0, %v7232
      %v7234 = vpop.f32.mrf.mxu0
      %7235 = vmatprep.mubr.f32.mxu0 0.0
      %7236 = vmatmul.mubr.f32.gmra.mxu0 %v7030
      %v7237 = vpop.f32.mrf.mxu0
      %v7238 = vadd.f32 0.0, %v7237
      %v7239 = vpop.f32.mrf.mxu0
      %7240 = vmatprep.mubr.f32.mxu0 0.0
      %7241 = vmatmul.mubr.f32.gmra.mxu0 %v7033
      %v7242 = vpop.f32.mrf.mxu0
      %v7243 = vadd.f32 0.0, %v7242
      %v7244 = vpop.f32.mrf.mxu0
      %7245 = vmatprep.mubr.f32.mxu0 0.0
      %7246 = vmatmul.mubr.f32.gmra.mxu0 %v7036
      %v7247 = vpop.f32.mrf.mxu0
      %v7248 = vadd.f32 0.0, %v7247
      %v7249 = vpop.f32.mrf.mxu0
      %7250 = vmatprep.mubr.f32.mxu0 0.0
      %7251 = vmatmul.mubr.f32.gmra.mxu0 %v7039
      %v7252 = vpop.f32.mrf.mxu0
      %v7253 = vadd.f32 0.0, %v7252
      %v7254 = vpop.f32.mrf.mxu0
      %7255 = vmatprep.mubr.f32.mxu0 0.0
      %7256 = vmatmul.mubr.f32.gmra.mxu0 %v7042
      %v7257 = vpop.f32.mrf.mxu0
      %v7258 = vadd.f32 0.0, %v7257
      %v7259 = vpop.f32.mrf.mxu0
      %7260 = vmatprep.mubr.f32.mxu0 0.0
      %7261 = vmatmul.mubr.f32.gmra.mxu0 %v7045
      %v7262 = vpop.f32.mrf.mxu0
      %v7263 = vadd.f32 0.0, %v7262
      %v7264 = vpop.f32.mrf.mxu0
      %7265 = vmatprep.mubr.f32.mxu0 0.0
      %7266 = vmatmul.mubr.f32.gmra.mxu0 %v7048
      %v7267 = vpop.f32.mrf.mxu0
      %v7268 = vadd.f32 0.0, %v7267
      %v7269 = vpop.f32.mrf.mxu0
      %7270 = vmatprep.mubr.f32.mxu0 0.0
      %7271 = vmatmul.mubr.f32.gmra.mxu0 %v7051
      %v7272 = vpop.f32.mrf.mxu0
      %v7273 = vadd.f32 0.0, %v7272
      %v7274 = vpop.f32.mrf.mxu0
      %7275 = vmatprep.mubr.f32.mxu0 0.0
      %7276 = vmatmul.mubr.f32.gmra.mxu0 %v7054
      %v7277 = vpop.f32.mrf.mxu0
      %v7278 = vadd.f32 0.0, %v7277
      %v7279 = vpop.f32.mrf.mxu0
      %7280 = vdwg.mxu0
      %v7281 = vadd.f32 %v6893, %v7123
      %v7282 = vadd.f32 %v6894, %v7128
      %v7283 = vadd.f32 %v6895, %v7133
      %v7284 = vadd.f32 %v6896, %v7138
      %v7285 = vadd.f32 %v6897, %v7143
      %v7286 = vadd.f32 %v6898, %v7148
      %v7287 = vadd.f32 %v6899, %v7153
      %v7288 = vadd.f32 %v6900, %v7158
      %v7289 = vadd.f32 %v6901, %v7163
      %v7290 = vadd.f32 %v6902, %v7168
      %v7291 = vadd.f32 %v6903, %v7173
      %v7292 = vadd.f32 %v6904, %v7178
      %v7293 = vadd.f32 %v6905, %v7183
      %v7294 = vadd.f32 %v6906, %v7188
      %v7295 = vadd.f32 %v6907, %v7193
      %v7296 = vadd.f32 %v6908, %v7198
      %v7297 = vadd.f32 %v6909, %v7203
      %v7298 = vadd.f32 %v6910, %v7208
      %v7299 = vadd.f32 %v6911, %v7213
      %v7300 = vadd.f32 %v6912, %v7218
      %v7301 = vadd.f32 %v6913, %v7223
      %v7302 = vadd.f32 %v6914, %v7228
      %v7303 = vadd.f32 %v6915, %v7233
      %v7304 = vadd.f32 %v6916, %v7238
      %v7305 = vadd.f32 %v6917, %v7243
      %v7306 = vadd.f32 %v6918, %v7248
      %v7307 = vadd.f32 %v6919, %v7253
      %v7308 = vadd.f32 %v6920, %v7258
      %v7309 = vadd.f32 %v6921, %v7263
      %v7310 = vadd.f32 %v6922, %v7268
      %v7311 = vadd.f32 %v6923, %v7273
      %v7312 = vadd.f32 %v6924, %v7278
      %v7313 = vld [vmem:[%s4] sm:$0x1]
      %v7315 = vlaneseq
      %v7316 = vshrl.u32 %v7315, 7
      %v7317 = vsub.s32 0, %v7316
      %v7318 = vrot.slane %v7313, %v7317
      %v7320 = vadd.f32 %v7281, %v7318
      %v7321 = vadd.f32 %v7282, %v7318
      %v7322 = vadd.f32 %v7283, %v7318
      %v7323 = vadd.f32 %v7284, %v7318
      %v7324 = vadd.f32 %v7285, %v7318
      %v7325 = vadd.f32 %v7286, %v7318
      %v7326 = vadd.f32 %v7287, %v7318
      %v7327 = vadd.f32 %v7288, %v7318
      %v7328 = vadd.f32 %v7289, %v7318
      %v7329 = vadd.f32 %v7290, %v7318
      %v7330 = vadd.f32 %v7291, %v7318
      %v7331 = vadd.f32 %v7292, %v7318
      %v7332 = vadd.f32 %v7293, %v7318
      %v7333 = vadd.f32 %v7294, %v7318
      %v7334 = vadd.f32 %v7295, %v7318
      %v7335 = vadd.f32 %v7296, %v7318
      %v7336 = vadd.f32 %v7297, %v7318
      %v7337 = vadd.f32 %v7298, %v7318
      %v7338 = vadd.f32 %v7299, %v7318
      %v7339 = vadd.f32 %v7300, %v7318
      %v7340 = vadd.f32 %v7301, %v7318
      %v7341 = vadd.f32 %v7302, %v7318
      %v7342 = vadd.f32 %v7303, %v7318
      %v7343 = vadd.f32 %v7304, %v7318
      %v7344 = vadd.f32 %v7305, %v7318
      %v7345 = vadd.f32 %v7306, %v7318
      %v7346 = vadd.f32 %v7307, %v7318
      %v7347 = vadd.f32 %v7308, %v7318
      %v7348 = vadd.f32 %v7309, %v7318
      %v7349 = vadd.f32 %v7310, %v7318
      %v7350 = vadd.f32 %v7311, %v7318
      %v7351 = vadd.f32 %v7312, %v7318
      %v7352 = vld [vmem:[%s5] sm:$0xff]
      %v7353 = vld [vmem:[%s5 + $0x8] sm:$0xff]
      %v7354 = vld [vmem:[%s5 + $0x10] sm:$0xff]
      %v7355 = vld [vmem:[%s5 + $0x18] sm:$0xff]
      %v7356 = vld [vmem:[%s5 + $0x20] sm:$0xff]
      %v7357 = vld [vmem:[%s5 + $0x28] sm:$0xff]
      %v7358 = vld [vmem:[%s5 + $0x30] sm:$0xff]
      %v7359 = vld [vmem:[%s5 + $0x38] sm:$0xff]
      %v7360 = vld [vmem:[%s5 + $0x40] sm:$0xff]
      %v7361 = vld [vmem:[%s5 + $0x48] sm:$0xff]
      %v7362 = vld [vmem:[%s5 + $0x50] sm:$0xff]
      %v7363 = vld [vmem:[%s5 + $0x58] sm:$0xff]
      %v7364 = vld [vmem:[%s6] sm:$0x1]
      %v7366 = vlaneseq
      %v7367 = vshrl.u32 %v7366, 7
      %v7368 = vsub.s32 0, %v7367
      %v7369 = vrot.slane %v7364, %v7368
      %vm7371 = vcmask 785408
      %v7373 = vsel %vm7371, %v7320, 0
      %v7376 = vsel %vm7371, %v7321, 0
      %v7379 = vsel %vm7371, %v7322, 0
      %v7382 = vsel %vm7371, %v7323, 0
      %v7385 = vsel %vm7371, %v7324, 0
      %v7388 = vsel %vm7371, %v7325, 0
      %v7391 = vsel %vm7371, %v7326, 0
      %v7394 = vsel %vm7371, %v7327, 0
      %v7397 = vsel %vm7371, %v7328, 0
      %v7400 = vsel %vm7371, %v7329, 0
      %v7403 = vsel %vm7371, %v7330, 0
      %v7406 = vsel %vm7371, %v7331, 0
      %v7409 = vsel %vm7371, %v7332, 0
      %v7412 = vsel %vm7371, %v7333, 0
      %v7415 = vsel %vm7371, %v7334, 0
      %v7418 = vsel %vm7371, %v7335, 0
      %v7421 = vsel %vm7371, %v7336, 0
      %v7424 = vsel %vm7371, %v7337, 0
      %v7427 = vsel %vm7371, %v7338, 0
      %v7430 = vsel %vm7371, %v7339, 0
      %v7433 = vsel %vm7371, %v7340, 0
      %v7436 = vsel %vm7371, %v7341, 0
      %v7439 = vsel %vm7371, %v7342, 0
      %v7442 = vsel %vm7371, %v7343, 0
      %v7445 = vsel %vm7371, %v7344, 0
      %v7448 = vsel %vm7371, %v7345, 0
      %v7451 = vsel %vm7371, %v7346, 0
      %v7454 = vsel %vm7371, %v7347, 0
      %v7457 = vsel %vm7371, %v7348, 0
      %v7460 = vsel %vm7371, %v7349, 0
      %v7463 = vsel %vm7371, %v7350, 0
      %v7466 = vsel %vm7371, %v7351, 0
      %7468 = vmatprep.subr.mxu0 0.0
      %7469 = vmatpush1.msra.mxu0 0.0
      %7470 = vmatprep.subr.mxu0 0.0
      %7471 = vmatpush1.msra.mxu0 0.0
      %7472 = vmatprep.subr.mxu0 0.0
      %7473 = vmatpush1.msra.mxu0 0.0
      %7474 = vmatprep.subr.mxu0 0.0
      %7475 = vmatpush1.msra.mxu0 0.0
      %7476 = vmatprep.subr.mxu0 0.0
      %7477 = vmatpush1.msra.mxu0 %v7363
      %7478 = vmatprep.subr.mxu0 0.0
      %7479 = vmatpush1.msra.mxu0 %v7362
      %7480 = vmatprep.subr.mxu0 0.0
      %7481 = vmatpush1.msra.mxu0 %v7361
      %7482 = vmatprep.subr.mxu0 0.0
      %7483 = vmatpush1.msra.mxu0 %v7360
      %7484 = vmatprep.subr.mxu0 0.0
      %7485 = vmatpush1.msra.mxu0 %v7359
      %7486 = vmatprep.subr.mxu0 0.0
      %7487 = vmatpush1.msra.mxu0 %v7358
      %7488 = vmatprep.subr.mxu0 0.0
      %7489 = vmatpush1.msra.mxu0 %v7357
      %7490 = vmatprep.subr.mxu0 0.0
      %7491 = vmatpush1.msra.mxu0 %v7356
      %7492 = vmatprep.subr.mxu0 0.0
      %7493 = vmatpush1.msra.mxu0 %v7355
      %7494 = vmatprep.subr.mxu0 0.0
      %7495 = vmatpush1.msra.mxu0 %v7354
      %7496 = vmatprep.subr.mxu0 0.0
      %7497 = vmatpush1.msra.mxu0 %v7353
      %7498 = vmatprep.subr.mxu0 0.0
      %7499 = vmatpush1.msra.mxu0 %v7352
      %7500 = vmatprep.subr.mxu0 0.0
      %7501 = vmatpush2.msra.mxu0 0.0
      %7502 = vmatprep.subr.mxu0 0.0
      %7503 = vmatpush2.msra.mxu0 0.0
      %7504 = vmatprep.subr.mxu0 0.0
      %7505 = vmatpush2.msra.mxu0 0.0
      %7506 = vmatprep.subr.mxu0 0.0
      %7507 = vmatpush2.msra.mxu0 0.0
      %7508 = vmatprep.subr.mxu0 0.0
      %7509 = vmatpush2.msra.mxu0 0.0
      %7510 = vmatprep.subr.mxu0 0.0
      %7511 = vmatpush2.msra.mxu0 0.0
      %7512 = vmatprep.subr.mxu0 0.0
      %7513 = vmatpush2.msra.mxu0 0.0
      %7514 = vmatprep.subr.mxu0 0.0
      %7515 = vmatpush2.msra.mxu0 0.0
      %7516 = vmatprep.subr.mxu0 0.0
      %7517 = vmatpush2.msra.mxu0 0.0
      %7518 = vmatprep.subr.mxu0 0.0
      %7519 = vmatpush2.msra.mxu0 0.0
      %7520 = vmatprep.subr.mxu0 0.0
      %7521 = vmatpush2.msra.mxu0 0.0
      %7522 = vmatprep.subr.mxu0 0.0
      %7523 = vmatpush2.msra.mxu0 0.0
      %7524 = vmatprep.subr.mxu0 0.0
      %7525 = vmatpush2.msra.mxu0 0.0
      %7526 = vmatprep.subr.mxu0 0.0
      %7527 = vmatpush2.msra.mxu0 0.0
      %7528 = vmatprep.subr.mxu0 0.0
      %7529 = vmatpush2.msra.mxu0 0.0
      %7530 = vmatprep.subr.mxu0 0.0
      %7531 = vmatpush2.msra.mxu0 0.0
      %7532 = vmatprep.mubr.f32.mxu0 0.0
      %7533 = vmatmul.mubr.f32.gmra.mxu0 %v7373
      %v7534 = vpop.f32.mrf.mxu0
      %v7535 = vadd.f32 %v7369, %v7534
      %v7536 = vpop.f32.mrf.mxu0
      %7537 = vmatprep.mubr.f32.mxu0 0.0
      %7538 = vmatmul.mubr.f32.gmra.mxu0 %v7376
      %v7539 = vpop.f32.mrf.mxu0
      %v7540 = vadd.f32 %v7369, %v7539
      %v7541 = vpop.f32.mrf.mxu0
      %7542 = vmatprep.mubr.f32.mxu0 0.0
      %7543 = vmatmul.mubr.f32.gmra.mxu0 %v7379
      %v7544 = vpop.f32.mrf.mxu0
      %v7545 = vadd.f32 %v7369, %v7544
      %v7546 = vpop.f32.mrf.mxu0
      %7547 = vmatprep.mubr.f32.mxu0 0.0
      %7548 = vmatmul.mubr.f32.gmra.mxu0 %v7382
      %v7549 = vpop.f32.mrf.mxu0
      %v7550 = vadd.f32 %v7369, %v7549
      %v7551 = vpop.f32.mrf.mxu0
      %7552 = vmatprep.mubr.f32.mxu0 0.0
      %7553 = vmatmul.mubr.f32.gmra.mxu0 %v7385
      %v7554 = vpop.f32.mrf.mxu0
      %v7555 = vadd.f32 %v7369, %v7554
      %v7556 = vpop.f32.mrf.mxu0
      %7557 = vmatprep.mubr.f32.mxu0 0.0
      %7558 = vmatmul.mubr.f32.gmra.mxu0 %v7388
      %v7559 = vpop.f32.mrf.mxu0
      %v7560 = vadd.f32 %v7369, %v7559
      %v7561 = vpop.f32.mrf.mxu0
      %7562 = vmatprep.mubr.f32.mxu0 0.0
      %7563 = vmatmul.mubr.f32.gmra.mxu0 %v7391
      %v7564 = vpop.f32.mrf.mxu0
      %v7565 = vadd.f32 %v7369, %v7564
      %v7566 = vpop.f32.mrf.mxu0
      %7567 = vmatprep.mubr.f32.mxu0 0.0
      %7568 = vmatmul.mubr.f32.gmra.mxu0 %v7394
      %v7569 = vpop.f32.mrf.mxu0
      %v7570 = vadd.f32 %v7369, %v7569
      %v7571 = vpop.f32.mrf.mxu0
      %7572 = vmatprep.mubr.f32.mxu0 0.0
      %7573 = vmatmul.mubr.f32.gmra.mxu0 %v7397
      %v7574 = vpop.f32.mrf.mxu0
      %v7575 = vadd.f32 %v7369, %v7574
      %v7576 = vpop.f32.mrf.mxu0
      %7577 = vmatprep.mubr.f32.mxu0 0.0
      %7578 = vmatmul.mubr.f32.gmra.mxu0 %v7400
      %v7579 = vpop.f32.mrf.mxu0
      %v7580 = vadd.f32 %v7369, %v7579
      %v7581 = vpop.f32.mrf.mxu0
      %7582 = vmatprep.mubr.f32.mxu0 0.0
      %7583 = vmatmul.mubr.f32.gmra.mxu0 %v7403
      %v7584 = vpop.f32.mrf.mxu0
      %v7585 = vadd.f32 %v7369, %v7584
      %v7586 = vpop.f32.mrf.mxu0
      %7587 = vmatprep.mubr.f32.mxu0 0.0
      %7588 = vmatmul.mubr.f32.gmra.mxu0 %v7406
      %v7589 = vpop.f32.mrf.mxu0
      %v7590 = vadd.f32 %v7369, %v7589
      %v7591 = vpop.f32.mrf.mxu0
      %7592 = vmatprep.mubr.f32.mxu0 0.0
      %7593 = vmatmul.mubr.f32.gmra.mxu0 %v7409
      %v7594 = vpop.f32.mrf.mxu0
      %v7595 = vadd.f32 %v7369, %v7594
      %v7596 = vpop.f32.mrf.mxu0
      %7597 = vmatprep.mubr.f32.mxu0 0.0
      %7598 = vmatmul.mubr.f32.gmra.mxu0 %v7412
      %v7599 = vpop.f32.mrf.mxu0
      %v7600 = vadd.f32 %v7369, %v7599
      %v7601 = vpop.f32.mrf.mxu0
      %7602 = vmatprep.mubr.f32.mxu0 0.0
      %7603 = vmatmul.mubr.f32.gmra.mxu0 %v7415
      %v7604 = vpop.f32.mrf.mxu0
      %v7605 = vadd.f32 %v7369, %v7604
      %v7606 = vpop.f32.mrf.mxu0
      %7607 = vmatprep.mubr.f32.mxu0 0.0
      %7608 = vmatmul.mubr.f32.gmra.mxu0 %v7418
      %v7609 = vpop.f32.mrf.mxu0
      %v7610 = vadd.f32 %v7369, %v7609
      %v7611 = vpop.f32.mrf.mxu0
      %7612 = vmatprep.mubr.f32.mxu0 0.0
      %7613 = vmatmul.mubr.f32.gmra.mxu0 %v7421
      %v7614 = vpop.f32.mrf.mxu0
      %v7615 = vadd.f32 %v7369, %v7614
      %v7616 = vpop.f32.mrf.mxu0
      %7617 = vmatprep.mubr.f32.mxu0 0.0
      %7618 = vmatmul.mubr.f32.gmra.mxu0 %v7424
      %v7619 = vpop.f32.mrf.mxu0
      %v7620 = vadd.f32 %v7369, %v7619
      %v7621 = vpop.f32.mrf.mxu0
      %7622 = vmatprep.mubr.f32.mxu0 0.0
      %7623 = vmatmul.mubr.f32.gmra.mxu0 %v7427
      %v7624 = vpop.f32.mrf.mxu0
      %v7625 = vadd.f32 %v7369, %v7624
      %v7626 = vpop.f32.mrf.mxu0
      %7627 = vmatprep.mubr.f32.mxu0 0.0
      %7628 = vmatmul.mubr.f32.gmra.mxu0 %v7430
      %v7629 = vpop.f32.mrf.mxu0
      %v7630 = vadd.f32 %v7369, %v7629
      %v7631 = vpop.f32.mrf.mxu0
      %7632 = vmatprep.mubr.f32.mxu0 0.0
      %7633 = vmatmul.mubr.f32.gmra.mxu0 %v7433
      %v7634 = vpop.f32.mrf.mxu0
      %v7635 = vadd.f32 %v7369, %v7634
      %v7636 = vpop.f32.mrf.mxu0
      %7637 = vmatprep.mubr.f32.mxu0 0.0
      %7638 = vmatmul.mubr.f32.gmra.mxu0 %v7436
      %v7639 = vpop.f32.mrf.mxu0
      %v7640 = vadd.f32 %v7369, %v7639
      %v7641 = vpop.f32.mrf.mxu0
      %7642 = vmatprep.mubr.f32.mxu0 0.0
      %7643 = vmatmul.mubr.f32.gmra.mxu0 %v7439
      %v7644 = vpop.f32.mrf.mxu0
      %v7645 = vadd.f32 %v7369, %v7644
      %v7646 = vpop.f32.mrf.mxu0
      %7647 = vmatprep.mubr.f32.mxu0 0.0
      %7648 = vmatmul.mubr.f32.gmra.mxu0 %v7442
      %v7649 = vpop.f32.mrf.mxu0
      %v7650 = vadd.f32 %v7369, %v7649
      %v7651 = vpop.f32.mrf.mxu0
      %7652 = vmatprep.mubr.f32.mxu0 0.0
      %7653 = vmatmul.mubr.f32.gmra.mxu0 %v7445
      %v7654 = vpop.f32.mrf.mxu0
      %v7655 = vadd.f32 %v7369, %v7654
      %v7656 = vpop.f32.mrf.mxu0
      %7657 = vmatprep.mubr.f32.mxu0 0.0
      %7658 = vmatmul.mubr.f32.gmra.mxu0 %v7448
      %v7659 = vpop.f32.mrf.mxu0
      %v7660 = vadd.f32 %v7369, %v7659
      %v7661 = vpop.f32.mrf.mxu0
      %7662 = vmatprep.mubr.f32.mxu0 0.0
      %7663 = vmatmul.mubr.f32.gmra.mxu0 %v7451
      %v7664 = vpop.f32.mrf.mxu0
      %v7665 = vadd.f32 %v7369, %v7664
      %v7666 = vpop.f32.mrf.mxu0
      %7667 = vmatprep.mubr.f32.mxu0 0.0
      %7668 = vmatmul.mubr.f32.gmra.mxu0 %v7454
      %v7669 = vpop.f32.mrf.mxu0
      %v7670 = vadd.f32 %v7369, %v7669
      %v7671 = vpop.f32.mrf.mxu0
      %7672 = vmatprep.mubr.f32.mxu0 0.0
      %7673 = vmatmul.mubr.f32.gmra.mxu0 %v7457
      %v7674 = vpop.f32.mrf.mxu0
      %v7675 = vadd.f32 %v7369, %v7674
      %v7676 = vpop.f32.mrf.mxu0
      %7677 = vmatprep.mubr.f32.mxu0 0.0
      %7678 = vmatmul.mubr.f32.gmra.mxu0 %v7460
      %v7679 = vpop.f32.mrf.mxu0
      %v7680 = vadd.f32 %v7369, %v7679
      %v7681 = vpop.f32.mrf.mxu0
      %7682 = vmatprep.mubr.f32.mxu0 0.0
      %7683 = vmatmul.mubr.f32.gmra.mxu0 %v7463
      %v7684 = vpop.f32.mrf.mxu0
      %v7685 = vadd.f32 %v7369, %v7684
      %v7686 = vpop.f32.mrf.mxu0
      %7687 = vmatprep.mubr.f32.mxu0 0.0
      %7688 = vmatmul.mubr.f32.gmra.mxu0 %v7466
      %v7689 = vpop.f32.mrf.mxu0
      %v7690 = vadd.f32 %v7369, %v7689
      %v7691 = vpop.f32.mrf.mxu0
      %7692 = vdwg.mxu0
      %v7693 = vld [vmem:[%s1379 + $0x1] sm:$0xff]
      %v7694 = vld [vmem:[%s1379 + $0x9] sm:$0xff]
      %v7695 = vld [vmem:[%s1379 + $0x19] sm:$0xff]
      %v7696 = vld [vmem:[%s1379 + $0x21] sm:$0xff]
      %v7697 = vld [vmem:[%s1379 + $0x31] sm:$0xff]
      %v7698 = vld [vmem:[%s1379 + $0x39] sm:$0xff]
      %v7699 = vld [vmem:[%s1379 + $0x49] sm:$0xff]
      %v7700 = vld [vmem:[%s1379 + $0x51] sm:$0xff]
      %v7701 = vld [vmem:[%s1379 + $0x61] sm:$0xff]
      %v7702 = vld [vmem:[%s1379 + $0x69] sm:$0xff]
      %v7703 = vld [vmem:[%s1379 + $0x79] sm:$0xff]
      %v7704 = vld [vmem:[%s1379 + $0x81] sm:$0xff]
      %v7705 = vld [vmem:[%s1379 + $0x91] sm:$0xff]
      %v7706 = vld [vmem:[%s1379 + $0x99] sm:$0xff]
      %v7707 = vld [vmem:[%s1379 + $0xa9] sm:$0xff]
      %v7708 = vld [vmem:[%s1379 + $0xb1] sm:$0xff]
      %v7709 = vld [vmem:[%s1379 + $0xc1] sm:$0xff]
      %v7710 = vld [vmem:[%s1379 + $0xc9] sm:$0xff]
      %v7711 = vld [vmem:[%s1379 + $0xd9] sm:$0xff]
      %v7712 = vld [vmem:[%s1379 + $0xe1] sm:$0xff]
      %v7713 = vld [vmem:[%s1379 + $0xf1] sm:$0xff]
      %v7714 = vld [vmem:[%s1379 + $0xf9] sm:$0xff]
      %v7715 = vld [vmem:[%s1379 + $0x109] sm:$0xff]
      %v7716 = vld [vmem:[%s1379 + $0x111] sm:$0xff]
      %v7717 = vld [vmem:[%s1379 + $0x121] sm:$0xff]
      %v7718 = vld [vmem:[%s1379 + $0x129] sm:$0xff]
      %v7719 = vld [vmem:[%s1379 + $0x139] sm:$0xff]
      %v7720 = vld [vmem:[%s1379 + $0x141] sm:$0xff]
      %v7721 = vld [vmem:[%s1379 + $0x151] sm:$0xff]
      %v7722 = vld [vmem:[%s1379 + $0x159] sm:$0xff]
      %v7723 = vld [vmem:[%s1379 + $0x169] sm:$0xff]
      %v7724 = vld [vmem:[%s1379 + $0x171] sm:$0xff]
      %v7725 = vadd.f32 %v7535, %v7693
      %v7726 = vadd.f32 %v7540, %v7694
      %v7727 = vadd.f32 %v7545, %v7695
      %v7728 = vadd.f32 %v7550, %v7696
      %v7729 = vadd.f32 %v7555, %v7697
      %v7730 = vadd.f32 %v7560, %v7698
      %v7731 = vadd.f32 %v7565, %v7699
      %v7732 = vadd.f32 %v7570, %v7700
      %v7733 = vadd.f32 %v7575, %v7701
      %v7734 = vadd.f32 %v7580, %v7702
      %v7735 = vadd.f32 %v7585, %v7703
      %v7736 = vadd.f32 %v7590, %v7704
      %v7737 = vadd.f32 %v7595, %v7705
      %v7738 = vadd.f32 %v7600, %v7706
      %v7739 = vadd.f32 %v7605, %v7707
      %v7740 = vadd.f32 %v7610, %v7708
      %v7741 = vadd.f32 %v7615, %v7709
      %v7742 = vadd.f32 %v7620, %v7710
      %v7743 = vadd.f32 %v7625, %v7711
      %v7744 = vadd.f32 %v7630, %v7712
      %v7745 = vadd.f32 %v7635, %v7713
      %v7746 = vadd.f32 %v7640, %v7714
      %v7747 = vadd.f32 %v7645, %v7715
      %v7748 = vadd.f32 %v7650, %v7716
      %v7749 = vadd.f32 %v7655, %v7717
      %v7750 = vadd.f32 %v7660, %v7718
      %v7751 = vadd.f32 %v7665, %v7719
      %v7752 = vadd.f32 %v7670, %v7720
      %v7753 = vadd.f32 %v7675, %v7721
      %v7754 = vadd.f32 %v7680, %v7722
      %v7755 = vadd.f32 %v7685, %v7723
      %v7756 = vadd.f32 %v7690, %v7724
      %v7757 = vmax.f32 %v7725, 0.0
      %v7758 = vmax.f32 %v7726, 0.0
      %v7759 = vmax.f32 %v7727, 0.0
      %v7760 = vmax.f32 %v7728, 0.0
      %v7761 = vmax.f32 %v7729, 0.0
      %v7762 = vmax.f32 %v7730, 0.0
      %v7763 = vmax.f32 %v7731, 0.0
      %v7764 = vmax.f32 %v7732, 0.0
      %v7765 = vmax.f32 %v7733, 0.0
      %v7766 = vmax.f32 %v7734, 0.0
      %v7767 = vmax.f32 %v7735, 0.0
      %v7768 = vmax.f32 %v7736, 0.0
      %v7769 = vmax.f32 %v7737, 0.0
      %v7770 = vmax.f32 %v7738, 0.0
      %v7771 = vmax.f32 %v7739, 0.0
      %v7772 = vmax.f32 %v7740, 0.0
      %v7773 = vmax.f32 %v7741, 0.0
      %v7774 = vmax.f32 %v7742, 0.0
      %v7775 = vmax.f32 %v7743, 0.0
      %v7776 = vmax.f32 %v7744, 0.0
      %v7777 = vmax.f32 %v7745, 0.0
      %v7778 = vmax.f32 %v7746, 0.0
      %v7779 = vmax.f32 %v7747, 0.0
      %v7780 = vmax.f32 %v7748, 0.0
      %v7781 = vmax.f32 %v7749, 0.0
      %v7782 = vmax.f32 %v7750, 0.0
      %v7783 = vmax.f32 %v7751, 0.0
      %v7784 = vmax.f32 %v7752, 0.0
      %v7785 = vmax.f32 %v7753, 0.0
      %v7786 = vmax.f32 %v7754, 0.0
      %v7787 = vmax.f32 %v7755, 0.0
      %v7788 = vmax.f32 %v7756, 0.0
      %7789 = vst.msk [vmem:[%s278] sm:$0xff] %vm348, %v7757
      %7790 = vst.msk [vmem:[%s278 + $0x8] sm:$0xff] %vm348, %v7758
      %7791 = vst.msk [vmem:[%s278 + $0x10] sm:$0xff] %vm348, %v7759
      %7792 = vst.msk [vmem:[%s278 + $0x18] sm:$0xff] %vm348, %v7760
      %7793 = vst.msk [vmem:[%s278 + $0x20] sm:$0xff] %vm348, %v7761
      %7794 = vst.msk [vmem:[%s278 + $0x28] sm:$0xff] %vm348, %v7762
      %7795 = vst.msk [vmem:[%s278 + $0x30] sm:$0xff] %vm348, %v7763
      %7796 = vst.msk [vmem:[%s278 + $0x38] sm:$0xff] %vm348, %v7764
      %7797 = vst.msk [vmem:[%s278 + $0x40] sm:$0xff] %vm348, %v7765
      %7798 = vst.msk [vmem:[%s278 + $0x48] sm:$0xff] %vm348, %v7766
      %7799 = vst.msk [vmem:[%s278 + $0x50] sm:$0xff] %vm348, %v7767
      %7800 = vst.msk [vmem:[%s278 + $0x58] sm:$0xff] %vm348, %v7768
      %7801 = vst.msk [vmem:[%s278 + $0x60] sm:$0xff] %vm348, %v7769
      %7802 = vst.msk [vmem:[%s278 + $0x68] sm:$0xff] %vm348, %v7770
      %7803 = vst.msk [vmem:[%s278 + $0x70] sm:$0xff] %vm348, %v7771
      %7804 = vst.msk [vmem:[%s278 + $0x78] sm:$0xff] %vm348, %v7772
      %7805 = vst.msk [vmem:[%s278 + $0x80] sm:$0xff] %vm348, %v7773
      %7806 = vst.msk [vmem:[%s278 + $0x88] sm:$0xff] %vm348, %v7774
      %7807 = vst.msk [vmem:[%s278 + $0x90] sm:$0xff] %vm348, %v7775
      %7808 = vst.msk [vmem:[%s278 + $0x98] sm:$0xff] %vm348, %v7776
      %7809 = vst.msk [vmem:[%s278 + $0xa0] sm:$0xff] %vm348, %v7777
      %7810 = vst.msk [vmem:[%s278 + $0xa8] sm:$0xff] %vm348, %v7778
      %7811 = vst.msk [vmem:[%s278 + $0xb0] sm:$0xff] %vm348, %v7779
      %7812 = vst.msk [vmem:[%s278 + $0xb8] sm:$0xff] %vm348, %v7780
      %7813 = vst.msk [vmem:[%s278 + $0xc0] sm:$0xff] %vm348, %v7781
      %7814 = vst.msk [vmem:[%s278 + $0xc8] sm:$0xff] %vm348, %v7782
      %7815 = vst.msk [vmem:[%s278 + $0xd0] sm:$0xff] %vm348, %v7783
      %7816 = vst.msk [vmem:[%s278 + $0xd8] sm:$0xff] %vm348, %v7784
      %7817 = vst.msk [vmem:[%s278 + $0xe0] sm:$0xff] %vm348, %v7785
      %7818 = vst.msk [vmem:[%s278 + $0xe8] sm:$0xff] %vm348, %v7786
      %7819 = vst.msk [vmem:[%s278 + $0xf0] sm:$0xff] %vm348, %v7787
      %7820 = vst.msk [vmem:[%s278 + $0xf8] sm:$0xff] %vm348, %v7788
      %p7821 = scmp.lt.s32.totalorder %s18, 1
      %s7822 = scalar_select %p7821, %s18, 1
      %s7823 = smul.addr %s7822, 32
      %s7824 = smul.addr %s7823, 8
      %s7825 = scalar_lea.vmem %s7, %s7824
      // Predicated region
      $region49: #{gelayer_s1.1} parent=47 // pred_check
        %p7826 = pneg %p188
      $region50: #{gelayer_s1.1} parent=47 // pred_check_branch
        %7828 = sbr.rel (%p7826) target = $region52
      $region51: #{gelayer_s1.1} parent=47 // pred_region
        _
      $region52: #{gelayer_s1.1} parent=47 // pred_fallthru
        _
    $region48: #{gelayer_s1.1} parent=5 // pred_fallthru
      _
    %p7829 = scmp.le.s32.totalorder 2, %s13
    // Predicated region
    $region53: #{gelayer_s1.1} parent=5 // pred_check
      %p7830 = pneg %p7829
    $region54: #{gelayer_s1.1} parent=5 // pred_check_branch
      %7832 = sbr.rel (%p7830) target = $region56
    $region55: #{gelayer_s1.1} parent=5 // pred_region
      %s7833 = ssub.s32 %s13, 2
      // Predicated region
      $region57: #{gelayer_s1.1} parent=55 // pred_check
        %p7834 = pneg %p194
      $region58: #{gelayer_s1.1} parent=55 // pred_check_branch
        %7836 = sbr.rel (%p7834) target = $region60
      $region59: #{gelayer_s1.1} parent=55 // pred_region
        %p7837 = scmp.lt.s32.totalorder %s19, 1
        %s7838 = scalar_select %p7837, %s19, 1
        %s7839 = smul.addr %s7838, 32
        %s7840 = smul.addr %s7839, 8
        %s7841 = scalar_lea.vmem %s7, %s7840
      $region60: #{gelayer_s1.1} parent=55 // pred_fallthru
        _
    $region56: #{gelayer_s1.1} parent=5 // pred_fallthru
      _
  $region6: #{gelayer_s1.1} parent=0 // loop_footer
    %s17 = sadd.s32 1, %s13
  $region7: #{gelayer_s1.1} parent=0 // loop_footer_branch
    %12 = sbr.rel target = $region3
  $region8: #{gelayer_s1.1} parent=0 // loop_exit
    _

</llo_original>
